<compile_context>
chip_gen: v7x
topology: tpu7x:2x2x1
jax: 0.10.0
libtpu: 0.0.40
codegen_flags: <defaults>
</compile_context>

<pallas_src>
import functools
import math

import numpy as np
import jax
import jax.numpy as jnp
from jax.experimental import pallas as pl
from jax.experimental.pallas import tpu as pltpu

SELU_ALPHA = 1.6732632423543772
SELU_SCALE = 1.0507009873554805


def _round_up(x, m):
    return ((x + m - 1) // m) * m


def _full_spec(shape):
    return pl.BlockSpec(shape, lambda *_: (0,) * len(shape))


def _sigmoid(v):
    # 0.5*(tanh(v/2)+1): single EUP op on the serial gate chain instead of exp + divide.
    return 0.5 * (jnp.tanh(0.5 * v) + 1.0)


def _selu(v):
    return SELU_SCALE * jnp.where(
        v > 0.0, v, SELU_ALPHA * (jnp.exp(jnp.minimum(v, 0.0)) - 1.0))


# --------------------------------------------------------------------------
# The single fused kernel.
# --------------------------------------------------------------------------
def _make_fused_kernel(T, B, B_pad, Hp, num_layers):
    """Fused DetectionNet forward in padded-lane / padded-sublane layout.

    Inputs (in order):
      x        (B, L)            raw signal
      w_all    (L, T*Hp)         reflect-pad + STFT + proj.weight folded per timestep
      b_all    (1, T*Hp)         proj.bias, per-timestep blocks (zero in dead lanes)
      per layer l:
        wih_l  (Din_pad, 6Hp)    input-side weights, column blocks [r,z,n]_f | [r,z,n]_b
        bx_l   (1, 6Hp)          b_ih with b_hh folded in for r/z gates
        whh_l  (2Hp, 6Hp) bf16   block-diag(Whh_fwd.T, Whh_bwd.T), zero-padded
        bh_l   (1, 6Hp)          b_hn only (n-gate hidden bias)
      w_cls    (1, 2Hp)
      b_cls    (1, 1)
    Outputs:
      logits   (B, T)
      scores   (B, T)
    Scratch:
      x_sc     (T*B_pad, Hp)     SELU'd projections, time-major rows (row = t*B_pad + b)
      gx_sc    (T*B_pad, 6Hp)    hoisted input-side gates for the current layer
      hseq_sc  (T*B_pad, 2Hp)    bi-GRU layer outputs [fwd | bwd]
    """
    Hp2, Hp3, Hp4, Hp5, Hp6 = 2 * Hp, 3 * Hp, 4 * Hp, 5 * Hp, 6 * Hp

    def kernel(*refs):
        x_ref, wall_ref, ball_ref = refs[0:3]
        layer_refs = refs[3:3 + 4 * num_layers]
        wcls_ref, bcls_ref = refs[3 + 4 * num_layers:5 + 4 * num_layers]
        logit_ref, score_ref = refs[5 + 4 * num_layers:7 + 4 * num_layers]
        x_sc, gx_sc, hseq_sc = refs[7 + 4 * num_layers:10 + 4 * num_layers]

        # ---- prologue: reflect pad + STFT frames + Linear, all folded into ONE matmul ----
        y = jnp.dot(x_ref[...], wall_ref[...],
                    preferred_element_type=jnp.float32) + ball_ref[...]   # (B, T*Hp)
        y = _selu(y)
        if B < B_pad:
            x_sc[...] = jnp.zeros_like(x_sc)          # deterministic zeros in dead rows
        for t in range(T):
            # lane slice at a multiple of 128, sublane store at a multiple of 8
            x_sc[t * B_pad:t * B_pad + B, :] = y[:, t * Hp:(t + 1) * Hp]

        src = x_sc
        for l in range(num_layers):
            wih_ref, bx_ref, whh_ref, bh_ref = layer_refs[4 * l:4 * (l + 1)]

            # Hoisted input-side gates: one matmul for all timesteps & both directions,
            # streamed into VMEM scratch (reused across layers).
            gx_sc[...] = (jnp.dot(src[...], wih_ref[...],
                                  preferred_element_type=jnp.float32) + bx_ref[...])

            whh = whh_ref[...]                        # (2Hp, 6Hp) bf16
            bh = bh_ref[...]                          # (1, 6Hp)  f32
            h_f = jnp.zeros((B_pad, Hp), jnp.float32)
            h_b = jnp.zeros((B_pad, Hp), jnp.float32)

            # Fully unrolled serial recurrence; fwd + bwd fused, 1 MXU push per step.
            for s in range(T):
                tf = s
                tb = T - 1 - s
                h_cat = jnp.concatenate([h_f, h_b], axis=-1).astype(jnp.bfloat16)
                gh = jnp.dot(h_cat, whh,
                             preferred_element_type=jnp.float32) + bh    # (B_pad, 6Hp)
                gxf = gx_sc[tf * B_pad:(tf + 1) * B_pad, 0:Hp3]          # (B_pad, 3Hp)
                gxb = gx_sc[tb * B_pad:(tb + 1) * B_pad, Hp3:Hp6]        # (B_pad, 3Hp)
                # forward direction (PyTorch r/z/n gate order)
                rf = _sigmoid(gxf[:, 0:Hp] + gh[:, 0:Hp])
                zf = _sigmoid(gxf[:, Hp:Hp2] + gh[:, Hp:Hp2])
                nf = jnp.tanh(gxf[:, Hp2:Hp3] + rf * gh[:, Hp2:Hp3])
                h_f = (1.0 - zf) * nf + zf * h_f
                # backward direction
                rb = _sigmoid(gxb[:, 0:Hp] + gh[:, Hp3:Hp4])
                zb = _sigmoid(gxb[:, Hp:Hp2] + gh[:, Hp4:Hp5])
                nb = jnp.tanh(gxb[:, Hp2:Hp3] + rb * gh[:, Hp5:Hp6])
                h_b = (1.0 - zb) * nb + zb * h_b
                # stream per-step outputs to scratch (idle vst slot, keeps vregs low)
                hseq_sc[tf * B_pad:(tf + 1) * B_pad, 0:Hp] = h_f
                hseq_sc[tb * B_pad:(tb + 1) * B_pad, Hp:Hp2] = h_b
            src = hseq_sc

        # ---- classifier: one vectorized lane reduce over the stored layer outputs ----
        hs = hseq_sc[...]                                                # (T*B_pad, 2Hp)
        logit_col = jnp.sum(hs * wcls_ref[...], axis=-1,
                            keepdims=True) + bcls_ref[...]               # (T*B_pad, 1)
        # rearrange time-major column -> (B_pad, T) with tile-aligned slices + lane concat
        lt = jnp.concatenate(
            [logit_col[t * B_pad:(t + 1) * B_pad, :] for t in range(T)], axis=1)
        logit_ref[...] = lt[:B, :]
        score_ref[...] = _sigmoid(lt[:B, :])

    return kernel


# --------------------------------------------------------------------------
# Forward-pass wrapper: no pre-kernel ops, only metadata reshapes after.
# --------------------------------------------------------------------------
def detection_net_forward(kparams, x, *, patch_size, n_fft, num_layers):
    B, L = x.shape
    T = L // patch_size                      # GRU sequence length (patch count)
    Hp = kparams["w_cls"].shape[1] // 2      # padded hidden width (multiple of 128)
    B_pad = max(8, _round_up(B, 8))

    args = [x, kparams["w_all"], kparams["b_all"]]
    for l in range(num_layers):
        args += [kparams["wih_%d" % l], kparams["bx_%d" % l],
                 kparams["whh_%d" % l], kparams["bh_%d" % l]]
    args += [kparams["w_cls"], kparams["b_cls"]]

    kernel = _make_fused_kernel(T, B, B_pad, Hp, num_layers)
    logits, scores = pl.pallas_call(
        kernel,
        out_shape=(jax.ShapeDtypeStruct((B, T), jnp.float32),
                   jax.ShapeDtypeStruct((B, T), jnp.float32)),
        in_specs=[_full_spec(a.shape) for a in args],
        out_specs=(_full_spec((B, T)), _full_spec((B, T))),
        scratch_shapes=[
            pltpu.VMEM((T * B_pad, Hp), jnp.float32),       # x_sc
            pltpu.VMEM((T * B_pad, 6 * Hp), jnp.float32),   # gx_sc
            pltpu.VMEM((T * B_pad, 2 * Hp), jnp.float32),   # hseq_sc
        ],
        # Grid-less single invocation: no pipelining / double buffering needed
        # (~2.5 MB resident, fits v5e/v6e/v7x VMEM with large margin).
    )(*args)

    # trailing unit-dim expansion is metadata-only; all real work is in the kernel
    return logits[..., None], scores[..., None]


# --------------------------------------------------------------------------
# Parameters: PyTorch-layout init + offline prep into the padded kernel layout.
# --------------------------------------------------------------------------
def xavier_uniform(key, shape, fan_in, fan_out):
    a = math.sqrt(6.0 / (fan_in + fan_out))
    return jax.random.uniform(key, shape, jnp.float32, -a, a)


def init_torch_params(key, patch_size, expansion_ratio, num_layers, n_fft):
    """Parameters in PyTorch layout with the module's init distributions."""
    F2 = 2 * (n_fft // 2 + 1)
    proj_size = patch_size * F2
    H = int(expansion_ratio * proj_size)
    k_proj, k_cls, k_gru = jax.random.split(key, 3)
    raw = {
        "proj_w": xavier_uniform(k_proj, (H, proj_size), proj_size, H),
        "proj_b": jnp.zeros((H,), jnp.float32),
        "cls_w": xavier_uniform(k_cls, (1, 2 * H), 2 * H, 1),
        "cls_b": jnp.zeros((1,), jnp.float32),
        "gru": [],
    }
    bound = 1.0 / math.sqrt(H)
    key = k_gru
    for layer in range(num_layers):
        d_in = H if layer == 0 else 2 * H
        dirs = {}
        for name in ("fwd", "bwd"):
            key, k1, k2, k3, k4 = jax.random.split(key, 5)
            dirs[name] = {
                "w_ih": jax.random.uniform(k1, (3 * H, d_in), jnp.float32, -bound, bound),
                "w_hh": jax.random.uniform(k2, (3 * H, H), jnp.float32, -bound, bound),
                "b_ih": jax.random.uniform(k3, (3 * H,), jnp.float32, -bound, bound),
                "b_hh": jax.random.uniform(k4, (3 * H,), jnp.float32, -bound, bound),
            }
        raw["gru"].append(dirs)
    return raw


def _stft_dft_matrix(n_fft):
    # torch.stft defaults: rectangular window, onesided, not normalized.
    F = n_fft // 2 + 1
    j = jnp.arange(n_fft, dtype=jnp.float32)[:, None]
    f = jnp.arange(F, dtype=jnp.float32)[None, :]
    ang = 2.0 * jnp.pi * j * f / n_fft
    # view_as_real channel layout: (re, im) interleaved per frequency bin.
    return jnp.stack([jnp.cos(ang), -jnp.sin(ang)], axis=-1).reshape(n_fft, 2 * F)


def prep_kernel_params(raw, patch_size, n_fft, seq_length):
    """Offline (one-time) repack into the padded fused-kernel layout."""
    H = raw["proj_w"].shape[0]
    Hp = _round_up(H, 128)
    F2 = 2 * (n_fft // 2 + 1)
    ps = patch_size
    L = seq_length
    T = L // ps
    hop = max(n_fft // 4, 1)          # torch.stft default hop
    pad = n_fft // 2                  # torch.stft center=True padding
    HIGH = jax.lax.Precision.HIGHEST

    # A[u, j, h] = sum_c dft[j, c] * proj_w[h, u*F2 + c]  (STFT folded into proj)
    dft = _stft_dft_matrix(n_fft)                              # (n_fft, F2)
    wp3 = raw["proj_w"].T.reshape(ps, F2, H)                   # (ps, F2, H)
    A = jnp.einsum("jc,uch->ujh", dft, wp3, precision=HIGH)    # (ps, n_fft, H)

    # Fold center=True reflect padding + frame extraction down to raw-signal indices:
    # S[i, t, u, j] = 1 iff padded index (t*ps+u)*hop + j reflects onto original index i.
    S = np.zeros((L, T, ps, n_fft), np.float32)
    for t in range(T):
        for u in range(ps):
            for j in range(n_fft):
                i = (t * ps + u) * hop + j - pad
                if i < 0:
                    i = -i
                elif i >= L:
                    i = 2 * (L - 1) - i
                S[i, t, u, j] += 1.0
    w_x = jnp.einsum("ituj,ujh->ith", jnp.asarray(S), A, precision=HIGH)   # (L, T, H)
    w_all = jnp.zeros((L, T, Hp), jnp.float32).at[:, :, :H].set(w_x)
    w_all = w_all.reshape(L, T * Hp)
    b_all = jnp.zeros((T, Hp), jnp.float32).at[:, :H].set(
        jnp.broadcast_to(raw["proj_b"], (T, H))).reshape(1, T * Hp)

    params = {"w_all": w_all, "b_all": b_all}

    def pad_gate_cols(wT):            # (rows, 3H) -> (rows, 3Hp), per-gate lane padding
        rows = wT.shape[0]
        out = jnp.zeros((rows, 3 * Hp), jnp.float32)
        for g in range(3):
            out = out.at[:, g * Hp:g * Hp + H].set(wT[:, g * H:(g + 1) * H])
        return out

    def pad_gate_vec(v):              # (3H,) -> (3Hp,)
        out = jnp.zeros((3 * Hp,), jnp.float32)
        for g in range(3):
            out = out.at[g * Hp:g * Hp + H].set(v[g * H:(g + 1) * H])
        return out

    for l, layer in enumerate(raw["gru"]):
        d_in_pad = Hp if l == 0 else 2 * Hp
        wih_blocks, bx_parts, bh_parts, whh_blocks = [], [], [], []
        for name in ("fwd", "bwd"):
            d = layer[name]
            wihT = pad_gate_cols(d["w_ih"].T)                  # (d_in_real, 3Hp)
            wih_pad = jnp.zeros((d_in_pad, 3 * Hp), jnp.float32)
            if l == 0:
                wih_pad = wih_pad.at[:H, :].set(wihT)
            else:
                # layer-1 input = [fwd out | bwd out] in padded lanes 0..Hp-1 | Hp..2Hp-1
                wih_pad = wih_pad.at[:H, :].set(wihT[:H])
                wih_pad = wih_pad.at[Hp:Hp + H, :].set(wihT[H:2 * H])
            wih_blocks.append(wih_pad)

            b_ih, b_hh = d["b_ih"], d["b_hh"]
            bx = jnp.concatenate([b_ih[0:H] + b_hh[0:H],       # r: fold b_hr in
                                  b_ih[H:2 * H] + b_hh[H:2 * H],  # z: fold b_hz in
                                  b_ih[2 * H:3 * H]])          # n: b_in only
            bx_parts.append(pad_gate_vec(bx))
            bh = jnp.concatenate([jnp.zeros((2 * H,), jnp.float32),
                                  b_hh[2 * H:3 * H]])          # n: b_hn only
            bh_parts.append(pad_gate_vec(bh))

            whhT = pad_gate_cols(d["w_hh"].T)                  # (H, 3Hp)
            whh_blocks.append(
                jnp.zeros((Hp, 3 * Hp), jnp.float32).at[:H, :].set(whhT))

        params["wih_%d" % l] = jnp.concatenate(wih_blocks, axis=1)       # (Din_pad, 6Hp)
        params["bx_%d" % l] = jnp.concatenate(bx_parts).reshape(1, 6 * Hp)
        params["bh_%d" % l] = jnp.concatenate(bh_parts).reshape(1, 6 * Hp)
        zblk = jnp.zeros((Hp, 3 * Hp), jnp.float32)
        whh = jnp.concatenate(
            [jnp.concatenate([whh_blocks[0], zblk], axis=1),
             jnp.concatenate([zblk, whh_blocks[1]], axis=1)], axis=0)    # (2Hp, 6Hp)
        # bf16 recurrent weights: on the serial critical path, f32 accumulation kept.
        params["whh_%d" % l] = whh.astype(jnp.bfloat16)

    w_cls = jnp.zeros((1, 2 * Hp), jnp.float32)
    w_cls = w_cls.at[0, :H].set(raw["cls_w"][0, :H])
    w_cls = w_cls.at[0, Hp:Hp + H].set(raw["cls_w"][0, H:2 * H])
    params["w_cls"] = w_cls
    params["b_cls"] = raw["cls_b"].reshape(1, 1)
    return params


# --------------------------------------------------------------------------
# Pure-JAX reference (straight-line port of the PyTorch forward) for validation.
# --------------------------------------------------------------------------
def time_to_timefreq(x, n_fft, seq_length):
    # TODO(synk): time_to_timefreq is undefined in the reference file; assumed to be
    # torch.stft (hop=n_fft//4, rect window, center=True reflect pad) + view_as_real
    # with (re, im) interleaved, trimmed to the first `seq_length` frames.
    B, L = x.shape
    hop = max(n_fft // 4, 1)
    pad = n_fft // 2
    xp = jnp.pad(x, ((0, 0), (pad, pad)), mode="reflect")
    frames = jnp.stack(
        [xp[:, j:j + hop * seq_length:hop] for j in range(n_fft)], axis=-1)  # (B, T, n_fft)
    dft = _stft_dft_matrix(n_fft)
    out = frames.reshape(B * seq_length, n_fft) @ dft
    return out.reshape(B, seq_length, 2 * (n_fft // 2 + 1))


def reference_forward(raw, x, *, patch_size, n_fft, num_layers):
    B, L = x.shape
    P = L // patch_size
    H = raw["proj_w"].shape[0]
    F2 = 2 * (n_fft // 2 + 1)

    x_freq = time_to_timefreq(x, n_fft, L)                     # (B, L, F2)
    patch_freq = x_freq.reshape(B, P, patch_size * F2)
    seq = _selu(patch_freq @ raw["proj_w"].T + raw["proj_b"])  # (B, P, H)

    for l in range(num_layers):
        outs = []
        for name, rev in (("fwd", False), ("bwd", True)):
            p = raw["gru"][l][name]
            xs = seq[:, ::-1, :] if rev else seq
            h = jnp.zeros((B, H), jnp.float32)
            hs = []
            for t in range(P):
                xt = xs[:, t, :]
                gi = xt @ p["w_ih"].T + p["b_ih"]
                gh = h @ p["w_hh"].T + p["b_hh"]
                r = jax.nn.sigmoid(gi[:, 0:H] + gh[:, 0:H])
                z = jax.nn.sigmoid(gi[:, H:2 * H] + gh[:, H:2 * H])
                n = jnp.tanh(gi[:, 2 * H:] + r * gh[:, 2 * H:])
                h = (1.0 - z) * n + z * h
                hs.append(h)
            o = jnp.stack(hs, axis=1)                          # (B, P, H)
            if rev:
                o = o[:, ::-1, :]
            outs.append(o)
        seq = jnp.concatenate(outs, axis=-1)                   # (B, P, 2H)
        # nn.GRU dropout(0.1) between layers is training-only: no-op at inference.

    logits = seq @ raw["cls_w"].T + raw["cls_b"]               # (B, P, 1)
    return logits, jax.nn.sigmoid(logits)


# --------------------------------------------------------------------------
if __name__ == "__main__":
    patch_size, expansion_ratio, num_layers, n_fft = 8, 2, 2, 4
    B, L = 2, 64

    key = jax.random.PRNGKey(0)
    k_params, k_x = jax.random.split(key)
    raw = init_torch_params(k_params, patch_size, expansion_ratio, num_layers, n_fft)
    kparams = prep_kernel_params(raw, patch_size, n_fft, L)
    x = jax.random.normal(k_x, (B, L), jnp.float32)

    fwd = jax.jit(functools.partial(
        detection_net_forward, patch_size=patch_size, n_fft=n_fft, num_layers=num_layers))
    logits, scores = fwd(kparams, x)
    jax.block_until_ready((logits, scores))

    P = L // patch_size
    assert logits.shape == (B, P, 1) and scores.shape == (B, P, 1)
    assert bool(jnp.all(jnp.isfinite(logits))) and bool(jnp.all(jnp.isfinite(scores)))
    assert bool(jnp.all((scores >= 0.0) & (scores <= 1.0)))

    # Correctness check vs. a straight-line JAX port of the PyTorch forward (same raw
    # parameters, unfused f32 math).  Tolerance covers the bf16 recurrent weights on
    # the 16-step chain plus MXU-vs-XLA f32 rounding; structural bugs show as O(0.1+).
    with jax.default_matmul_precision("highest"):
        ref_logits, ref_scores = reference_forward(
            raw, x, patch_size=patch_size, n_fft=n_fft, num_layers=num_layers)
    err = max(float(jnp.max(jnp.abs(logits - ref_logits))),
              float(jnp.max(jnp.abs(scores - ref_scores))))
    assert err < 5e-2, "fused kernel mismatch vs reference: %g" % err

    print("KERNEL_OK")
</pallas_src>

<mosaic_0001>
module attributes {stable_mosaic.version = 11 : i64} {
  func.func @kernel(%arg0: memref<2x64xf32, #tpu.memory_space<vmem>>, %arg1: memref<64x1024xf32, #tpu.memory_space<vmem>>, %arg2: memref<1x1024xf32, #tpu.memory_space<vmem>>, %arg3: memref<128x768xf32, #tpu.memory_space<vmem>>, %arg4: memref<1x768xf32, #tpu.memory_space<vmem>>, %arg5: memref<256x768xbf16, #tpu.memory_space<vmem>>, %arg6: memref<1x768xf32, #tpu.memory_space<vmem>>, %arg7: memref<256x768xf32, #tpu.memory_space<vmem>>, %arg8: memref<1x768xf32, #tpu.memory_space<vmem>>, %arg9: memref<256x768xbf16, #tpu.memory_space<vmem>>, %arg10: memref<1x768xf32, #tpu.memory_space<vmem>>, %arg11: memref<1x256xf32, #tpu.memory_space<vmem>>, %arg12: memref<1x1xf32, #tpu.memory_space<vmem>>, %arg13: memref<2x8xf32, #tpu.memory_space<vmem>>, %arg14: memref<2x8xf32, #tpu.memory_space<vmem>>, %arg15: memref<64x128xf32, #tpu.memory_space<vmem>>, %arg16: memref<64x768xf32, #tpu.memory_space<vmem>>, %arg17: memref<64x256xf32, #tpu.memory_space<vmem>>) attributes {dimension_semantics = [], scalar_prefetch = 0 : i64, scratch_operands = 3 : i64, tpu.core_type = #tpu.core_type<tc>} {
    %c0 = arith.constant 0 : index
    %c0_0 = arith.constant 0 : index
    %0 = vector.load %arg0[%c0, %c0_0] : memref<2x64xf32, #tpu.memory_space<vmem>>, vector<2x64xf32>
    %c0_1 = arith.constant 0 : index
    %c0_2 = arith.constant 0 : index
    %1 = vector.load %arg1[%c0_1, %c0_2] : memref<64x1024xf32, #tpu.memory_space<vmem>>, vector<64x1024xf32>
    %cst = arith.constant dense<0.000000e+00> : vector<2x1024xf32>
    %2 = tpu.matmul %0, %1, %cst {dimension_numbers = #tpu.dot_dimension_numbers<[1], [0], [0], [1], [0, 0, 1, 1], [], []>} : vector<2x64xf32>, vector<64x1024xf32>, vector<2x1024xf32> -> vector<2x1024xf32>
    %c0_3 = arith.constant 0 : index
    %c0_4 = arith.constant 0 : index
    %3 = vector.load %arg2[%c0_3, %c0_4] : memref<1x1024xf32, #tpu.memory_space<vmem>>, vector<1x1024xf32>
    %4 = vector.broadcast %3 : vector<1x1024xf32> to vector<2x1024xf32>
    %5 = arith.addf %2, %4 : vector<2x1024xf32>
    %cst_5 = arith.constant 0.000000e+00 : f32
    %6 = vector.broadcast %cst_5 : f32 to vector<2x1024xf32>
    %7 = arith.cmpf ogt, %5, %6 : vector<2x1024xf32>
    %cst_6 = arith.constant 0.000000e+00 : f32
    %8 = vector.broadcast %cst_6 : f32 to vector<2x1024xf32>
    %9 = arith.minimumf %5, %8 : vector<2x1024xf32>
    %10 = math.exp %9 : vector<2x1024xf32>
    %cst_7 = arith.constant 1.000000e+00 : f32
    %11 = vector.broadcast %cst_7 : f32 to vector<2x1024xf32>
    %12 = arith.subf %10, %11 : vector<2x1024xf32>
    %cst_8 = arith.constant 1.67326319 : f32
    %13 = vector.broadcast %cst_8 : f32 to vector<2x1024xf32>
    %14 = arith.mulf %13, %12 : vector<2x1024xf32>
    %15 = arith.select %7, %5, %14 : vector<2x1024xi1>, vector<2x1024xf32>
    %cst_9 = arith.constant 1.05070102 : f32
    %16 = vector.broadcast %cst_9 : f32 to vector<2x1024xf32>
    %17 = arith.mulf %16, %15 : vector<2x1024xf32>
    %cst_10 = arith.constant 0.000000e+00 : f32
    %18 = vector.broadcast %cst_10 : f32 to vector<64x128xf32>
    %c0_11 = arith.constant 0 : index
    %c0_12 = arith.constant 0 : index
    %19 = vector.load %arg15[%c0_11, %c0_12] : memref<64x128xf32, #tpu.memory_space<vmem>>, vector<64x128xf32>
    tpu.vector_store %arg15[%c0_11, %c0_12], %18 {strides = array<i32>} : memref<64x128xf32, #tpu.memory_space<vmem>>, vector<64x128xf32>,
    %20 = vector.extract_strided_slice %17 {offsets = [0, 0], sizes = [2, 128], strides = [1, 1]} : vector<2x1024xf32> to vector<2x128xf32>
    %c0_13 = arith.constant 0 : index
    %c0_14 = arith.constant 0 : index
    %21 = vector.load %arg15[%c0_13, %c0_14] : memref<64x128xf32, #tpu.memory_space<vmem>>, vector<2x128xf32>
    tpu.vector_store %arg15[%c0_13, %c0_14], %20 {strides = array<i32>} : memref<64x128xf32, #tpu.memory_space<vmem>>, vector<2x128xf32>,
    %22 = vector.extract_strided_slice %17 {offsets = [0, 128], sizes = [2, 128], strides = [1, 1]} : vector<2x1024xf32> to vector<2x128xf32>
    %c8 = arith.constant 8 : index
    %c0_15 = arith.constant 0 : index
    %23 = vector.load %arg15[%c8, %c0_15] : memref<64x128xf32, #tpu.memory_space<vmem>>, vector<2x128xf32>
    tpu.vector_store %arg15[%c8, %c0_15], %22 {strides = array<i32>} : memref<64x128xf32, #tpu.memory_space<vmem>>, vector<2x128xf32>,
    %24 = vector.extract_strided_slice %17 {offsets = [0, 256], sizes = [2, 128], strides = [1, 1]} : vector<2x1024xf32> to vector<2x128xf32>
    %c16 = arith.constant 16 : index
    %c0_16 = arith.constant 0 : index
    %25 = vector.load %arg15[%c16, %c0_16] : memref<64x128xf32, #tpu.memory_space<vmem>>, vector<2x128xf32>
    tpu.vector_store %arg15[%c16, %c0_16], %24 {strides = array<i32>} : memref<64x128xf32, #tpu.memory_space<vmem>>, vector<2x128xf32>,
    %26 = vector.extract_strided_slice %17 {offsets = [0, 384], sizes = [2, 128], strides = [1, 1]} : vector<2x1024xf32> to vector<2x128xf32>
    %c24 = arith.constant 24 : index
    %c0_17 = arith.constant 0 : index
    %27 = vector.load %arg15[%c24, %c0_17] : memref<64x128xf32, #tpu.memory_space<vmem>>, vector<2x128xf32>
    tpu.vector_store %arg15[%c24, %c0_17], %26 {strides = array<i32>} : memref<64x128xf32, #tpu.memory_space<vmem>>, vector<2x128xf32>,
    %28 = vector.extract_strided_slice %17 {offsets = [0, 512], sizes = [2, 128], strides = [1, 1]} : vector<2x1024xf32> to vector<2x128xf32>
    %c32 = arith.constant 32 : index
    %c0_18 = arith.constant 0 : index
    %29 = vector.load %arg15[%c32, %c0_18] : memref<64x128xf32, #tpu.memory_space<vmem>>, vector<2x128xf32>
    tpu.vector_store %arg15[%c32, %c0_18], %28 {strides = array<i32>} : memref<64x128xf32, #tpu.memory_space<vmem>>, vector<2x128xf32>,
    %30 = vector.extract_strided_slice %17 {offsets = [0, 640], sizes = [2, 128], strides = [1, 1]} : vector<2x1024xf32> to vector<2x128xf32>
    %c40 = arith.constant 40 : index
    %c0_19 = arith.constant 0 : index
    %31 = vector.load %arg15[%c40, %c0_19] : memref<64x128xf32, #tpu.memory_space<vmem>>, vector<2x128xf32>
    tpu.vector_store %arg15[%c40, %c0_19], %30 {strides = array<i32>} : memref<64x128xf32, #tpu.memory_space<vmem>>, vector<2x128xf32>,
    %32 = vector.extract_strided_slice %17 {offsets = [0, 768], sizes = [2, 128], strides = [1, 1]} : vector<2x1024xf32> to vector<2x128xf32>
    %c48 = arith.constant 48 : index
    %c0_20 = arith.constant 0 : index
    %33 = vector.load %arg15[%c48, %c0_20] : memref<64x128xf32, #tpu.memory_space<vmem>>, vector<2x128xf32>
    tpu.vector_store %arg15[%c48, %c0_20], %32 {strides = array<i32>} : memref<64x128xf32, #tpu.memory_space<vmem>>, vector<2x128xf32>,
    %34 = vector.extract_strided_slice %17 {offsets = [0, 896], sizes = [2, 128], strides = [1, 1]} : vector<2x1024xf32> to vector<2x128xf32>
    %c56 = arith.constant 56 : index
    %c0_21 = arith.constant 0 : index
    %35 = vector.load %arg15[%c56, %c0_21] : memref<64x128xf32, #tpu.memory_space<vmem>>, vector<2x128xf32>
    tpu.vector_store %arg15[%c56, %c0_21], %34 {strides = array<i32>} : memref<64x128xf32, #tpu.memory_space<vmem>>, vector<2x128xf32>,
    %c0_22 = arith.constant 0 : index
    %c0_23 = arith.constant 0 : index
    %36 = vector.load %arg15[%c0_22, %c0_23] : memref<64x128xf32, #tpu.memory_space<vmem>>, vector<64x128xf32>
    %c0_24 = arith.constant 0 : index
    %c0_25 = arith.constant 0 : index
    %37 = vector.load %arg3[%c0_24, %c0_25] : memref<128x768xf32, #tpu.memory_space<vmem>>, vector<128x768xf32>
    %cst_26 = arith.constant dense<0.000000e+00> : vector<64x768xf32>
    %38 = tpu.matmul %36, %37, %cst_26 {dimension_numbers = #tpu.dot_dimension_numbers<[1], [0], [0], [1], [0, 0, 1, 1], [], []>} : vector<64x128xf32>, vector<128x768xf32>, vector<64x768xf32> -> vector<64x768xf32>
    %c0_27 = arith.constant 0 : index
    %c0_28 = arith.constant 0 : index
    %39 = vector.load %arg4[%c0_27, %c0_28] : memref<1x768xf32, #tpu.memory_space<vmem>>, vector<1x768xf32>
    %40 = vector.broadcast %39 : vector<1x768xf32> to vector<64x768xf32>
    %41 = arith.addf %38, %40 : vector<64x768xf32>
    %c0_29 = arith.constant 0 : index
    %c0_30 = arith.constant 0 : index
    %42 = vector.load %arg16[%c0_29, %c0_30] : memref<64x768xf32, #tpu.memory_space<vmem>>, vector<64x768xf32>
    tpu.vector_store %arg16[%c0_29, %c0_30], %41 {strides = array<i32>} : memref<64x768xf32, #tpu.memory_space<vmem>>, vector<64x768xf32>,
    %c0_31 = arith.constant 0 : index
    %c0_32 = arith.constant 0 : index
    %43 = vector.load %arg5[%c0_31, %c0_32] : memref<256x768xbf16, #tpu.memory_space<vmem>>, vector<256x768xbf16>
    %c0_33 = arith.constant 0 : index
    %c0_34 = arith.constant 0 : index
    %44 = vector.load %arg6[%c0_33, %c0_34] : memref<1x768xf32, #tpu.memory_space<vmem>>, vector<1x768xf32>
    %cst_35 = arith.constant 0.000000e+00 : f32
    %45 = vector.broadcast %cst_35 : f32 to vector<8x128xf32>
    %cst_36 = arith.constant 0.000000e+00 : f32
    %46 = vector.broadcast %cst_36 : f32 to vector<8x128xf32>
    %47 = tpu.concatenate %45, %46 in 1 : vector<8x128xf32>, vector<8x128xf32> -> vector<8x256xf32>
    %48 = arith.truncf %47 : vector<8x256xf32> to vector<8x256xbf16>
    %cst_37 = arith.constant dense<0.000000e+00> : vector<8x768xf32>
    %49 = tpu.matmul %48, %43, %cst_37 {dimension_numbers = #tpu.dot_dimension_numbers<[1], [0], [0], [1], [0, 0, 1, 1], [], []>} : vector<8x256xbf16>, vector<256x768xbf16>, vector<8x768xf32> -> vector<8x768xf32>
    %50 = vector.broadcast %44 : vector<1x768xf32> to vector<8x768xf32>
    %51 = arith.addf %49, %50 : vector<8x768xf32>
    %c0_38 = arith.constant 0 : index
    %c0_39 = arith.constant 0 : index
    %52 = vector.load %arg16[%c0_38, %c0_39] : memref<64x768xf32, #tpu.memory_space<vmem>>, vector<8x384xf32>
    %c56_40 = arith.constant 56 : index
    %c384 = arith.constant 384 : index
    %53 = vector.load %arg16[%c56_40, %c384] : memref<64x768xf32, #tpu.memory_space<vmem>>, vector<8x384xf32>
    %54 = vector.extract_strided_slice %52 {offsets = [0, 0], sizes = [8, 128], strides = [1, 1]} : vector<8x384xf32> to vector<8x128xf32>
    %55 = vector.extract_strided_slice %51 {offsets = [0, 0], sizes = [8, 128], strides = [1, 1]} : vector<8x768xf32> to vector<8x128xf32>
    %56 = arith.addf %54, %55 : vector<8x128xf32>
    %cst_41 = arith.constant 5.000000e-01 : f32
    %57 = vector.broadcast %cst_41 : f32 to vector<8x128xf32>
    %58 = arith.mulf %57, %56 : vector<8x128xf32>
    %59 = math.tanh %58 : vector<8x128xf32>
    %cst_42 = arith.constant 1.000000e+00 : f32
    %60 = vector.broadcast %cst_42 : f32 to vector<8x128xf32>
    %61 = arith.addf %59, %60 : vector<8x128xf32>
    %cst_43 = arith.constant 5.000000e-01 : f32
    %62 = vector.broadcast %cst_43 : f32 to vector<8x128xf32>
    %63 = arith.mulf %62, %61 : vector<8x128xf32>
    %64 = vector.extract_strided_slice %52 {offsets = [0, 128], sizes = [8, 128], strides = [1, 1]} : vector<8x384xf32> to vector<8x128xf32>
    %65 = vector.extract_strided_slice %51 {offsets = [0, 128], sizes = [8, 128], strides = [1, 1]} : vector<8x768xf32> to vector<8x128xf32>
    %66 = arith.addf %64, %65 : vector<8x128xf32>
    %cst_44 = arith.constant 5.000000e-01 : f32
    %67 = vector.broadcast %cst_44 : f32 to vector<8x128xf32>
    %68 = arith.mulf %67, %66 : vector<8x128xf32>
    %69 = math.tanh %68 : vector<8x128xf32>
    %cst_45 = arith.constant 1.000000e+00 : f32
    %70 = vector.broadcast %cst_45 : f32 to vector<8x128xf32>
    %71 = arith.addf %69, %70 : vector<8x128xf32>
    %cst_46 = arith.constant 5.000000e-01 : f32
    %72 = vector.broadcast %cst_46 : f32 to vector<8x128xf32>
    %73 = arith.mulf %72, %71 : vector<8x128xf32>
    %74 = vector.extract_strided_slice %52 {offsets = [0, 256], sizes = [8, 128], strides = [1, 1]} : vector<8x384xf32> to vector<8x128xf32>
    %75 = vector.extract_strided_slice %51 {offsets = [0, 256], sizes = [8, 128], strides = [1, 1]} : vector<8x768xf32> to vector<8x128xf32>
    %76 = arith.mulf %63, %75 : vector<8x128xf32>
    %77 = arith.addf %74, %76 : vector<8x128xf32>
    %78 = math.tanh %77 : vector<8x128xf32>
    %cst_47 = arith.constant 1.000000e+00 : f32
    %79 = vector.broadcast %cst_47 : f32 to vector<8x128xf32>
    %80 = arith.subf %79, %73 : vector<8x128xf32>
    %81 = arith.mulf %80, %78 : vector<8x128xf32>
    %82 = arith.mulf %73, %45 : vector<8x128xf32>
    %83 = arith.addf %81, %82 : vector<8x128xf32>
    %84 = vector.extract_strided_slice %53 {offsets = [0, 0], sizes = [8, 128], strides = [1, 1]} : vector<8x384xf32> to vector<8x128xf32>
    %85 = vector.extract_strided_slice %51 {offsets = [0, 384], sizes = [8, 128], strides = [1, 1]} : vector<8x768xf32> to vector<8x128xf32>
    %86 = arith.addf %84, %85 : vector<8x128xf32>
    %cst_48 = arith.constant 5.000000e-01 : f32
    %87 = vector.broadcast %cst_48 : f32 to vector<8x128xf32>
    %88 = arith.mulf %87, %86 : vector<8x128xf32>
    %89 = math.tanh %88 : vector<8x128xf32>
    %cst_49 = arith.constant 1.000000e+00 : f32
    %90 = vector.broadcast %cst_49 : f32 to vector<8x128xf32>
    %91 = arith.addf %89, %90 : vector<8x128xf32>
    %cst_50 = arith.constant 5.000000e-01 : f32
    %92 = vector.broadcast %cst_50 : f32 to vector<8x128xf32>
    %93 = arith.mulf %92, %91 : vector<8x128xf32>
    %94 = vector.extract_strided_slice %53 {offsets = [0, 128], sizes = [8, 128], strides = [1, 1]} : vector<8x384xf32> to vector<8x128xf32>
    %95 = vector.extract_strided_slice %51 {offsets = [0, 512], sizes = [8, 128], strides = [1, 1]} : vector<8x768xf32> to vector<8x128xf32>
    %96 = arith.addf %94, %95 : vector<8x128xf32>
    %cst_51 = arith.constant 5.000000e-01 : f32
    %97 = vector.broadcast %cst_51 : f32 to vector<8x128xf32>
    %98 = arith.mulf %97, %96 : vector<8x128xf32>
    %99 = math.tanh %98 : vector<8x128xf32>
    %cst_52 = arith.constant 1.000000e+00 : f32
    %100 = vector.broadcast %cst_52 : f32 to vector<8x128xf32>
    %101 = arith.addf %99, %100 : vector<8x128xf32>
    %cst_53 = arith.constant 5.000000e-01 : f32
    %102 = vector.broadcast %cst_53 : f32 to vector<8x128xf32>
    %103 = arith.mulf %102, %101 : vector<8x128xf32>
    %104 = vector.extract_strided_slice %53 {offsets = [0, 256], sizes = [8, 128], strides = [1, 1]} : vector<8x384xf32> to vector<8x128xf32>
    %105 = vector.extract_strided_slice %51 {offsets = [0, 640], sizes = [8, 128], strides = [1, 1]} : vector<8x768xf32> to vector<8x128xf32>
    %106 = arith.mulf %93, %105 : vector<8x128xf32>
    %107 = arith.addf %104, %106 : vector<8x128xf32>
    %108 = math.tanh %107 : vector<8x128xf32>
    %cst_54 = arith.constant 1.000000e+00 : f32
    %109 = vector.broadcast %cst_54 : f32 to vector<8x128xf32>
    %110 = arith.subf %109, %103 : vector<8x128xf32>
    %111 = arith.mulf %110, %108 : vector<8x128xf32>
    %112 = arith.mulf %103, %46 : vector<8x128xf32>
    %113 = arith.addf %111, %112 : vector<8x128xf32>
    %c0_55 = arith.constant 0 : index
    %c0_56 = arith.constant 0 : index
    %114 = vector.load %arg17[%c0_55, %c0_56] : memref<64x256xf32, #tpu.memory_space<vmem>>, vector<8x128xf32>
    tpu.vector_store %arg17[%c0_55, %c0_56], %83 {strides = array<i32>} : memref<64x256xf32, #tpu.memory_space<vmem>>, vector<8x128xf32>,
    %c56_57 = arith.constant 56 : index
    %c128 = arith.constant 128 : index
    %115 = vector.load %arg17[%c56_57, %c128] : memref<64x256xf32, #tpu.memory_space<vmem>>, vector<8x128xf32>
    tpu.vector_store %arg17[%c56_57, %c128], %113 {strides = array<i32>} : memref<64x256xf32, #tpu.memory_space<vmem>>, vector<8x128xf32>,
    %116 = tpu.concatenate %83, %113 in 1 : vector<8x128xf32>, vector<8x128xf32> -> vector<8x256xf32>
    %117 = arith.truncf %116 : vector<8x256xf32> to vector<8x256xbf16>
    %cst_58 = arith.constant dense<0.000000e+00> : vector<8x768xf32>
    %118 = tpu.matmul %117, %43, %cst_58 {dimension_numbers = #tpu.dot_dimension_numbers<[1], [0], [0], [1], [0, 0, 1, 1], [], []>} : vector<8x256xbf16>, vector<256x768xbf16>, vector<8x768xf32> -> vector<8x768xf32>
    %119 = vector.broadcast %44 : vector<1x768xf32> to vector<8x768xf32>
    %120 = arith.addf %118, %119 : vector<8x768xf32>
    %c8_59 = arith.constant 8 : index
    %c0_60 = arith.constant 0 : index
    %121 = vector.load %arg16[%c8_59, %c0_60] : memref<64x768xf32, #tpu.memory_space<vmem>>, vector<8x384xf32>
    %c48_61 = arith.constant 48 : index
    %c384_62 = arith.constant 384 : index
    %122 = vector.load %arg16[%c48_61, %c384_62] : memref<64x768xf32, #tpu.memory_space<vmem>>, vector<8x384xf32>
    %123 = vector.extract_strided_slice %121 {offsets = [0, 0], sizes = [8, 128], strides = [1, 1]} : vector<8x384xf32> to vector<8x128xf32>
    %124 = vector.extract_strided_slice %120 {offsets = [0, 0], sizes = [8, 128], strides = [1, 1]} : vector<8x768xf32> to vector<8x128xf32>
    %125 = arith.addf %123, %124 : vector<8x128xf32>
    %cst_63 = arith.constant 5.000000e-01 : f32
    %126 = vector.broadcast %cst_63 : f32 to vector<8x128xf32>
    %127 = arith.mulf %126, %125 : vector<8x128xf32>
    %128 = math.tanh %127 : vector<8x128xf32>
    %cst_64 = arith.constant 1.000000e+00 : f32
    %129 = vector.broadcast %cst_64 : f32 to vector<8x128xf32>
    %130 = arith.addf %128, %129 : vector<8x128xf32>
    %cst_65 = arith.constant 5.000000e-01 : f32
    %131 = vector.broadcast %cst_65 : f32 to vector<8x128xf32>
    %132 = arith.mulf %131, %130 : vector<8x128xf32>
    %133 = vector.extract_strided_slice %121 {offsets = [0, 128], sizes = [8, 128], strides = [1, 1]} : vector<8x384xf32> to vector<8x128xf32>
    %134 = vector.extract_strided_slice %120 {offsets = [0, 128], sizes = [8, 128], strides = [1, 1]} : vector<8x768xf32> to vector<8x128xf32>
    %135 = arith.addf %133, %134 : vector<8x128xf32>
    %cst_66 = arith.constant 5.000000e-01 : f32
    %136 = vector.broadcast %cst_66 : f32 to vector<8x128xf32>
    %137 = arith.mulf %136, %135 : vector<8x128xf32>
    %138 = math.tanh %137 : vector<8x128xf32>
    %cst_67 = arith.constant 1.000000e+00 : f32
    %139 = vector.broadcast %cst_67 : f32 to vector<8x128xf32>
    %140 = arith.addf %138, %139 : vector<8x128xf32>
    %cst_68 = arith.constant 5.000000e-01 : f32
    %141 = vector.broadcast %cst_68 : f32 to vector<8x128xf32>
    %142 = arith.mulf %141, %140 : vector<8x128xf32>
    %143 = vector.extract_strided_slice %121 {offsets = [0, 256], sizes = [8, 128], strides = [1, 1]} : vector<8x384xf32> to vector<8x128xf32>
    %144 = vector.extract_strided_slice %120 {offsets = [0, 256], sizes = [8, 128], strides = [1, 1]} : vector<8x768xf32> to vector<8x128xf32>
    %145 = arith.mulf %132, %144 : vector<8x128xf32>
    %146 = arith.addf %143, %145 : vector<8x128xf32>
    %147 = math.tanh %146 : vector<8x128xf32>
    %cst_69 = arith.constant 1.000000e+00 : f32
    %148 = vector.broadcast %cst_69 : f32 to vector<8x128xf32>
    %149 = arith.subf %148, %142 : vector<8x128xf32>
    %150 = arith.mulf %149, %147 : vector<8x128xf32>
    %151 = arith.mulf %142, %83 : vector<8x128xf32>
    %152 = arith.addf %150, %151 : vector<8x128xf32>
    %153 = vector.extract_strided_slice %122 {offsets = [0, 0], sizes = [8, 128], strides = [1, 1]} : vector<8x384xf32> to vector<8x128xf32>
    %154 = vector.extract_strided_slice %120 {offsets = [0, 384], sizes = [8, 128], strides = [1, 1]} : vector<8x768xf32> to vector<8x128xf32>
    %155 = arith.addf %153, %154 : vector<8x128xf32>
    %cst_70 = arith.constant 5.000000e-01 : f32
    %156 = vector.broadcast %cst_70 : f32 to vector<8x128xf32>
    %157 = arith.mulf %156, %155 : vector<8x128xf32>
    %158 = math.tanh %157 : vector<8x128xf32>
    %cst_71 = arith.constant 1.000000e+00 : f32
    %159 = vector.broadcast %cst_71 : f32 to vector<8x128xf32>
    %160 = arith.addf %158, %159 : vector<8x128xf32>
    %cst_72 = arith.constant 5.000000e-01 : f32
    %161 = vector.broadcast %cst_72 : f32 to vector<8x128xf32>
    %162 = arith.mulf %161, %160 : vector<8x128xf32>
    %163 = vector.extract_strided_slice %122 {offsets = [0, 128], sizes = [8, 128], strides = [1, 1]} : vector<8x384xf32> to vector<8x128xf32>
    %164 = vector.extract_strided_slice %120 {offsets = [0, 512], sizes = [8, 128], strides = [1, 1]} : vector<8x768xf32> to vector<8x128xf32>
    %165 = arith.addf %163, %164 : vector<8x128xf32>
    %cst_73 = arith.constant 5.000000e-01 : f32
    %166 = vector.broadcast %cst_73 : f32 to vector<8x128xf32>
    %167 = arith.mulf %166, %165 : vector<8x128xf32>
    %168 = math.tanh %167 : vector<8x128xf32>
    %cst_74 = arith.constant 1.000000e+00 : f32
    %169 = vector.broadcast %cst_74 : f32 to vector<8x128xf32>
    %170 = arith.addf %168, %169 : vector<8x128xf32>
    %cst_75 = arith.constant 5.000000e-01 : f32
    %171 = vector.broadcast %cst_75 : f32 to vector<8x128xf32>
    %172 = arith.mulf %171, %170 : vector<8x128xf32>
    %173 = vector.extract_strided_slice %122 {offsets = [0, 256], sizes = [8, 128], strides = [1, 1]} : vector<8x384xf32> to vector<8x128xf32>
    %174 = vector.extract_strided_slice %120 {offsets = [0, 640], sizes = [8, 128], strides = [1, 1]} : vector<8x768xf32> to vector<8x128xf32>
    %175 = arith.mulf %162, %174 : vector<8x128xf32>
    %176 = arith.addf %173, %175 : vector<8x128xf32>
    %177 = math.tanh %176 : vector<8x128xf32>
    %cst_76 = arith.constant 1.000000e+00 : f32
    %178 = vector.broadcast %cst_76 : f32 to vector<8x128xf32>
    %179 = arith.subf %178, %172 : vector<8x128xf32>
    %180 = arith.mulf %179, %177 : vector<8x128xf32>
    %181 = arith.mulf %172, %113 : vector<8x128xf32>
    %182 = arith.addf %180, %181 : vector<8x128xf32>
    %c8_77 = arith.constant 8 : index
    %c0_78 = arith.constant 0 : index
    %183 = vector.load %arg17[%c8_77, %c0_78] : memref<64x256xf32, #tpu.memory_space<vmem>>, vector<8x128xf32>
    tpu.vector_store %arg17[%c8_77, %c0_78], %152 {strides = array<i32>} : memref<64x256xf32, #tpu.memory_space<vmem>>, vector<8x128xf32>,
    %c48_79 = arith.constant 48 : index
    %c128_80 = arith.constant 128 : index
    %184 = vector.load %arg17[%c48_79, %c128_80] : memref<64x256xf32, #tpu.memory_space<vmem>>, vector<8x128xf32>
    tpu.vector_store %arg17[%c48_79, %c128_80], %182 {strides = array<i32>} : memref<64x256xf32, #tpu.memory_space<vmem>>, vector<8x128xf32>,
    %185 = tpu.concatenate %152, %182 in 1 : vector<8x128xf32>, vector<8x128xf32> -> vector<8x256xf32>
    %186 = arith.truncf %185 : vector<8x256xf32> to vector<8x256xbf16>
    %cst_81 = arith.constant dense<0.000000e+00> : vector<8x768xf32>
    %187 = tpu.matmul %186, %43, %cst_81 {dimension_numbers = #tpu.dot_dimension_numbers<[1], [0], [0], [1], [0, 0, 1, 1], [], []>} : vector<8x256xbf16>, vector<256x768xbf16>, vector<8x768xf32> -> vector<8x768xf32>
    %188 = vector.broadcast %44 : vector<1x768xf32> to vector<8x768xf32>
    %189 = arith.addf %187, %188 : vector<8x768xf32>
    %c16_82 = arith.constant 16 : index
    %c0_83 = arith.constant 0 : index
    %190 = vector.load %arg16[%c16_82, %c0_83] : memref<64x768xf32, #tpu.memory_space<vmem>>, vector<8x384xf32>
    %c40_84 = arith.constant 40 : index
    %c384_85 = arith.constant 384 : index
    %191 = vector.load %arg16[%c40_84, %c384_85] : memref<64x768xf32, #tpu.memory_space<vmem>>, vector<8x384xf32>
    %192 = vector.extract_strided_slice %190 {offsets = [0, 0], sizes = [8, 128], strides = [1, 1]} : vector<8x384xf32> to vector<8x128xf32>
    %193 = vector.extract_strided_slice %189 {offsets = [0, 0], sizes = [8, 128], strides = [1, 1]} : vector<8x768xf32> to vector<8x128xf32>
    %194 = arith.addf %192, %193 : vector<8x128xf32>
    %cst_86 = arith.constant 5.000000e-01 : f32
    %195 = vector.broadcast %cst_86 : f32 to vector<8x128xf32>
    %196 = arith.mulf %195, %194 : vector<8x128xf32>
    %197 = math.tanh %196 : vector<8x128xf32>
    %cst_87 = arith.constant 1.000000e+00 : f32
    %198 = vector.broadcast %cst_87 : f32 to vector<8x128xf32>
    %199 = arith.addf %197, %198 : vector<8x128xf32>
    %cst_88 = arith.constant 5.000000e-01 : f32
    %200 = vector.broadcast %cst_88 : f32 to vector<8x128xf32>
    %201 = arith.mulf %200, %199 : vector<8x128xf32>
    %202 = vector.extract_strided_slice %190 {offsets = [0, 128], sizes = [8, 128], strides = [1, 1]} : vector<8x384xf32> to vector<8x128xf32>
    %203 = vector.extract_strided_slice %189 {offsets = [0, 128], sizes = [8, 128], strides = [1, 1]} : vector<8x768xf32> to vector<8x128xf32>
    %204 = arith.addf %202, %203 : vector<8x128xf32>
    %cst_89 = arith.constant 5.000000e-01 : f32
    %205 = vector.broadcast %cst_89 : f32 to vector<8x128xf32>
    %206 = arith.mulf %205, %204 : vector<8x128xf32>
    %207 = math.tanh %206 : vector<8x128xf32>
    %cst_90 = arith.constant 1.000000e+00 : f32
    %208 = vector.broadcast %cst_90 : f32 to vector<8x128xf32>
    %209 = arith.addf %207, %208 : vector<8x128xf32>
    %cst_91 = arith.constant 5.000000e-01 : f32
    %210 = vector.broadcast %cst_91 : f32 to vector<8x128xf32>
    %211 = arith.mulf %210, %209 : vector<8x128xf32>
    %212 = vector.extract_strided_slice %190 {offsets = [0, 256], sizes = [8, 128], strides = [1, 1]} : vector<8x384xf32> to vector<8x128xf32>
    %213 = vector.extract_strided_slice %189 {offsets = [0, 256], sizes = [8, 128], strides = [1, 1]} : vector<8x768xf32> to vector<8x128xf32>
    %214 = arith.mulf %201, %213 : vector<8x128xf32>
    %215 = arith.addf %212, %214 : vector<8x128xf32>
    %216 = math.tanh %215 : vector<8x128xf32>
    %cst_92 = arith.constant 1.000000e+00 : f32
    %217 = vector.broadcast %cst_92 : f32 to vector<8x128xf32>
    %218 = arith.subf %217, %211 : vector<8x128xf32>
    %219 = arith.mulf %218, %216 : vector<8x128xf32>
    %220 = arith.mulf %211, %152 : vector<8x128xf32>
    %221 = arith.addf %219, %220 : vector<8x128xf32>
    %222 = vector.extract_strided_slice %191 {offsets = [0, 0], sizes = [8, 128], strides = [1, 1]} : vector<8x384xf32> to vector<8x128xf32>
    %223 = vector.extract_strided_slice %189 {offsets = [0, 384], sizes = [8, 128], strides = [1, 1]} : vector<8x768xf32> to vector<8x128xf32>
    %224 = arith.addf %222, %223 : vector<8x128xf32>
    %cst_93 = arith.constant 5.000000e-01 : f32
    %225 = vector.broadcast %cst_93 : f32 to vector<8x128xf32>
    %226 = arith.mulf %225, %224 : vector<8x128xf32>
    %227 = math.tanh %226 : vector<8x128xf32>
    %cst_94 = arith.constant 1.000000e+00 : f32
    %228 = vector.broadcast %cst_94 : f32 to vector<8x128xf32>
    %229 = arith.addf %227, %228 : vector<8x128xf32>
    %cst_95 = arith.constant 5.000000e-01 : f32
    %230 = vector.broadcast %cst_95 : f32 to vector<8x128xf32>
    %231 = arith.mulf %230, %229 : vector<8x128xf32>
    %232 = vector.extract_strided_slice %191 {offsets = [0, 128], sizes = [8, 128], strides = [1, 1]} : vector<8x384xf32> to vector<8x128xf32>
    %233 = vector.extract_strided_slice %189 {offsets = [0, 512], sizes = [8, 128], strides = [1, 1]} : vector<8x768xf32> to vector<8x128xf32>
    %234 = arith.addf %232, %233 : vector<8x128xf32>
    %cst_96 = arith.constant 5.000000e-01 : f32
    %235 = vector.broadcast %cst_96 : f32 to vector<8x128xf32>
    %236 = arith.mulf %235, %234 : vector<8x128xf32>
    %237 = math.tanh %236 : vector<8x128xf32>
    %cst_97 = arith.constant 1.000000e+00 : f32
    %238 = vector.broadcast %cst_97 : f32 to vector<8x128xf32>
    %239 = arith.addf %237, %238 : vector<8x128xf32>
    %cst_98 = arith.constant 5.000000e-01 : f32
    %240 = vector.broadcast %cst_98 : f32 to vector<8x128xf32>
    %241 = arith.mulf %240, %239 : vector<8x128xf32>
    %242 = vector.extract_strided_slice %191 {offsets = [0, 256], sizes = [8, 128], strides = [1, 1]} : vector<8x384xf32> to vector<8x128xf32>
    %243 = vector.extract_strided_slice %189 {offsets = [0, 640], sizes = [8, 128], strides = [1, 1]} : vector<8x768xf32> to vector<8x128xf32>
    %244 = arith.mulf %231, %243 : vector<8x128xf32>
    %245 = arith.addf %242, %244 : vector<8x128xf32>
    %246 = math.tanh %245 : vector<8x128xf32>
    %cst_99 = arith.constant 1.000000e+00 : f32
    %247 = vector.broadcast %cst_99 : f32 to vector<8x128xf32>
    %248 = arith.subf %247, %241 : vector<8x128xf32>
    %249 = arith.mulf %248, %246 : vector<8x128xf32>
    %250 = arith.mulf %241, %182 : vector<8x128xf32>
    %251 = arith.addf %249, %250 : vector<8x128xf32>
    %c16_100 = arith.constant 16 : index
    %c0_101 = arith.constant 0 : index
    %252 = vector.load %arg17[%c16_100, %c0_101] : memref<64x256xf32, #tpu.memory_space<vmem>>, vector<8x128xf32>
    tpu.vector_store %arg17[%c16_100, %c0_101], %221 {strides = array<i32>} : memref<64x256xf32, #tpu.memory_space<vmem>>, vector<8x128xf32>,
    %c40_102 = arith.constant 40 : index
    %c128_103 = arith.constant 128 : index
    %253 = vector.load %arg17[%c40_102, %c128_103] : memref<64x256xf32, #tpu.memory_space<vmem>>, vector<8x128xf32>
    tpu.vector_store %arg17[%c40_102, %c128_103], %251 {strides = array<i32>} : memref<64x256xf32, #tpu.memory_space<vmem>>, vector<8x128xf32>,
    %254 = tpu.concatenate %221, %251 in 1 : vector<8x128xf32>, vector<8x128xf32> -> vector<8x256xf32>
    %255 = arith.truncf %254 : vector<8x256xf32> to vector<8x256xbf16>
    %cst_104 = arith.constant dense<0.000000e+00> : vector<8x768xf32>
    %256 = tpu.matmul %255, %43, %cst_104 {dimension_numbers = #tpu.dot_dimension_numbers<[1], [0], [0], [1], [0, 0, 1, 1], [], []>} : vector<8x256xbf16>, vector<256x768xbf16>, vector<8x768xf32> -> vector<8x768xf32>
    %257 = vector.broadcast %44 : vector<1x768xf32> to vector<8x768xf32>
    %258 = arith.addf %256, %257 : vector<8x768xf32>
    %c24_105 = arith.constant 24 : index
    %c0_106 = arith.constant 0 : index
    %259 = vector.load %arg16[%c24_105, %c0_106] : memref<64x768xf32, #tpu.memory_space<vmem>>, vector<8x384xf32>
    %c32_107 = arith.constant 32 : index
    %c384_108 = arith.constant 384 : index
    %260 = vector.load %arg16[%c32_107, %c384_108] : memref<64x768xf32, #tpu.memory_space<vmem>>, vector<8x384xf32>
    %261 = vector.extract_strided_slice %259 {offsets = [0, 0], sizes = [8, 128], strides = [1, 1]} : vector<8x384xf32> to vector<8x128xf32>
    %262 = vector.extract_strided_slice %258 {offsets = [0, 0], sizes = [8, 128], strides = [1, 1]} : vector<8x768xf32> to vector<8x128xf32>
    %263 = arith.addf %261, %262 : vector<8x128xf32>
    %cst_109 = arith.constant 5.000000e-01 : f32
    %264 = vector.broadcast %cst_109 : f32 to vector<8x128xf32>
    %265 = arith.mulf %264, %263 : vector<8x128xf32>
    %266 = math.tanh %265 : vector<8x128xf32>
    %cst_110 = arith.constant 1.000000e+00 : f32
    %267 = vector.broadcast %cst_110 : f32 to vector<8x128xf32>
    %268 = arith.addf %266, %267 : vector<8x128xf32>
    %cst_111 = arith.constant 5.000000e-01 : f32
    %269 = vector.broadcast %cst_111 : f32 to vector<8x128xf32>
    %270 = arith.mulf %269, %268 : vector<8x128xf32>
    %271 = vector.extract_strided_slice %259 {offsets = [0, 128], sizes = [8, 128], strides = [1, 1]} : vector<8x384xf32> to vector<8x128xf32>
    %272 = vector.extract_strided_slice %258 {offsets = [0, 128], sizes = [8, 128], strides = [1, 1]} : vector<8x768xf32> to vector<8x128xf32>
    %273 = arith.addf %271, %272 : vector<8x128xf32>
    %cst_112 = arith.constant 5.000000e-01 : f32
    %274 = vector.broadcast %cst_112 : f32 to vector<8x128xf32>
    %275 = arith.mulf %274, %273 : vector<8x128xf32>
    %276 = math.tanh %275 : vector<8x128xf32>
    %cst_113 = arith.constant 1.000000e+00 : f32
    %277 = vector.broadcast %cst_113 : f32 to vector<8x128xf32>
    %278 = arith.addf %276, %277 : vector<8x128xf32>
    %cst_114 = arith.constant 5.000000e-01 : f32
    %279 = vector.broadcast %cst_114 : f32 to vector<8x128xf32>
    %280 = arith.mulf %279, %278 : vector<8x128xf32>
    %281 = vector.extract_strided_slice %259 {offsets = [0, 256], sizes = [8, 128], strides = [1, 1]} : vector<8x384xf32> to vector<8x128xf32>
    %282 = vector.extract_strided_slice %258 {offsets = [0, 256], sizes = [8, 128], strides = [1, 1]} : vector<8x768xf32> to vector<8x128xf32>
    %283 = arith.mulf %270, %282 : vector<8x128xf32>
    %284 = arith.addf %281, %283 : vector<8x128xf32>
    %285 = math.tanh %284 : vector<8x128xf32>
    %cst_115 = arith.constant 1.000000e+00 : f32
    %286 = vector.broadcast %cst_115 : f32 to vector<8x128xf32>
    %287 = arith.subf %286, %280 : vector<8x128xf32>
    %288 = arith.mulf %287, %285 : vector<8x128xf32>
    %289 = arith.mulf %280, %221 : vector<8x128xf32>
    %290 = arith.addf %288, %289 : vector<8x128xf32>
    %291 = vector.extract_strided_slice %260 {offsets = [0, 0], sizes = [8, 128], strides = [1, 1]} : vector<8x384xf32> to vector<8x128xf32>
    %292 = vector.extract_strided_slice %258 {offsets = [0, 384], sizes = [8, 128], strides = [1, 1]} : vector<8x768xf32> to vector<8x128xf32>
    %293 = arith.addf %291, %292 : vector<8x128xf32>
    %cst_116 = arith.constant 5.000000e-01 : f32
    %294 = vector.broadcast %cst_116 : f32 to vector<8x128xf32>
    %295 = arith.mulf %294, %293 : vector<8x128xf32>
    %296 = math.tanh %295 : vector<8x128xf32>
    %cst_117 = arith.constant 1.000000e+00 : f32
    %297 = vector.broadcast %cst_117 : f32 to vector<8x128xf32>
    %298 = arith.addf %296, %297 : vector<8x128xf32>
    %cst_118 = arith.constant 5.000000e-01 : f32
    %299 = vector.broadcast %cst_118 : f32 to vector<8x128xf32>
    %300 = arith.mulf %299, %298 : vector<8x128xf32>
    %301 = vector.extract_strided_slice %260 {offsets = [0, 128], sizes = [8, 128], strides = [1, 1]} : vector<8x384xf32> to vector<8x128xf32>
    %302 = vector.extract_strided_slice %258 {offsets = [0, 512], sizes = [8, 128], strides = [1, 1]} : vector<8x768xf32> to vector<8x128xf32>
    %303 = arith.addf %301, %302 : vector<8x128xf32>
    %cst_119 = arith.constant 5.000000e-01 : f32
    %304 = vector.broadcast %cst_119 : f32 to vector<8x128xf32>
    %305 = arith.mulf %304, %303 : vector<8x128xf32>
    %306 = math.tanh %305 : vector<8x128xf32>
    %cst_120 = arith.constant 1.000000e+00 : f32
    %307 = vector.broadcast %cst_120 : f32 to vector<8x128xf32>
    %308 = arith.addf %306, %307 : vector<8x128xf32>
    %cst_121 = arith.constant 5.000000e-01 : f32
    %309 = vector.broadcast %cst_121 : f32 to vector<8x128xf32>
    %310 = arith.mulf %309, %308 : vector<8x128xf32>
    %311 = vector.extract_strided_slice %260 {offsets = [0, 256], sizes = [8, 128], strides = [1, 1]} : vector<8x384xf32> to vector<8x128xf32>
    %312 = vector.extract_strided_slice %258 {offsets = [0, 640], sizes = [8, 128], strides = [1, 1]} : vector<8x768xf32> to vector<8x128xf32>
    %313 = arith.mulf %300, %312 : vector<8x128xf32>
    %314 = arith.addf %311, %313 : vector<8x128xf32>
    %315 = math.tanh %314 : vector<8x128xf32>
    %cst_122 = arith.constant 1.000000e+00 : f32
    %316 = vector.broadcast %cst_122 : f32 to vector<8x128xf32>
    %317 = arith.subf %316, %310 : vector<8x128xf32>
    %318 = arith.mulf %317, %315 : vector<8x128xf32>
    %319 = arith.mulf %310, %251 : vector<8x128xf32>
    %320 = arith.addf %318, %319 : vector<8x128xf32>
    %c24_123 = arith.constant 24 : index
    %c0_124 = arith.constant 0 : index
    %321 = vector.load %arg17[%c24_123, %c0_124] : memref<64x256xf32, #tpu.memory_space<vmem>>, vector<8x128xf32>
    tpu.vector_store %arg17[%c24_123, %c0_124], %290 {strides = array<i32>} : memref<64x256xf32, #tpu.memory_space<vmem>>, vector<8x128xf32>,
    %c32_125 = arith.constant 32 : index
    %c128_126 = arith.constant 128 : index
    %322 = vector.load %arg17[%c32_125, %c128_126] : memref<64x256xf32, #tpu.memory_space<vmem>>, vector<8x128xf32>
    tpu.vector_store %arg17[%c32_125, %c128_126], %320 {strides = array<i32>} : memref<64x256xf32, #tpu.memory_space<vmem>>, vector<8x128xf32>,
    %323 = tpu.concatenate %290, %320 in 1 : vector<8x128xf32>, vector<8x128xf32> -> vector<8x256xf32>
    %324 = arith.truncf %323 : vector<8x256xf32> to vector<8x256xbf16>
    %cst_127 = arith.constant dense<0.000000e+00> : vector<8x768xf32>
    %325 = tpu.matmul %324, %43, %cst_127 {dimension_numbers = #tpu.dot_dimension_numbers<[1], [0], [0], [1], [0, 0, 1, 1], [], []>} : vector<8x256xbf16>, vector<256x768xbf16>, vector<8x768xf32> -> vector<8x768xf32>
    %326 = vector.broadcast %44 : vector<1x768xf32> to vector<8x768xf32>
    %327 = arith.addf %325, %326 : vector<8x768xf32>
    %c32_128 = arith.constant 32 : index
    %c0_129 = arith.constant 0 : index
    %328 = vector.load %arg16[%c32_128, %c0_129] : memref<64x768xf32, #tpu.memory_space<vmem>>, vector<8x384xf32>
    %c24_130 = arith.constant 24 : index
    %c384_131 = arith.constant 384 : index
    %329 = vector.load %arg16[%c24_130, %c384_131] : memref<64x768xf32, #tpu.memory_space<vmem>>, vector<8x384xf32>
    %330 = vector.extract_strided_slice %328 {offsets = [0, 0], sizes = [8, 128], strides = [1, 1]} : vector<8x384xf32> to vector<8x128xf32>
    %331 = vector.extract_strided_slice %327 {offsets = [0, 0], sizes = [8, 128], strides = [1, 1]} : vector<8x768xf32> to vector<8x128xf32>
    %332 = arith.addf %330, %331 : vector<8x128xf32>
    %cst_132 = arith.constant 5.000000e-01 : f32
    %333 = vector.broadcast %cst_132 : f32 to vector<8x128xf32>
    %334 = arith.mulf %333, %332 : vector<8x128xf32>
    %335 = math.tanh %334 : vector<8x128xf32>
    %cst_133 = arith.constant 1.000000e+00 : f32
    %336 = vector.broadcast %cst_133 : f32 to vector<8x128xf32>
    %337 = arith.addf %335, %336 : vector<8x128xf32>
    %cst_134 = arith.constant 5.000000e-01 : f32
    %338 = vector.broadcast %cst_134 : f32 to vector<8x128xf32>
    %339 = arith.mulf %338, %337 : vector<8x128xf32>
    %340 = vector.extract_strided_slice %328 {offsets = [0, 128], sizes = [8, 128], strides = [1, 1]} : vector<8x384xf32> to vector<8x128xf32>
    %341 = vector.extract_strided_slice %327 {offsets = [0, 128], sizes = [8, 128], strides = [1, 1]} : vector<8x768xf32> to vector<8x128xf32>
    %342 = arith.addf %340, %341 : vector<8x128xf32>
    %cst_135 = arith.constant 5.000000e-01 : f32
    %343 = vector.broadcast %cst_135 : f32 to vector<8x128xf32>
    %344 = arith.mulf %343, %342 : vector<8x128xf32>
    %345 = math.tanh %344 : vector<8x128xf32>
    %cst_136 = arith.constant 1.000000e+00 : f32
    %346 = vector.broadcast %cst_136 : f32 to vector<8x128xf32>
    %347 = arith.addf %345, %346 : vector<8x128xf32>
    %cst_137 = arith.constant 5.000000e-01 : f32
    %348 = vector.broadcast %cst_137 : f32 to vector<8x128xf32>
    %349 = arith.mulf %348, %347 : vector<8x128xf32>
    %350 = vector.extract_strided_slice %328 {offsets = [0, 256], sizes = [8, 128], strides = [1, 1]} : vector<8x384xf32> to vector<8x128xf32>
    %351 = vector.extract_strided_slice %327 {offsets = [0, 256], sizes = [8, 128], strides = [1, 1]} : vector<8x768xf32> to vector<8x128xf32>
    %352 = arith.mulf %339, %351 : vector<8x128xf32>
    %353 = arith.addf %350, %352 : vector<8x128xf32>
    %354 = math.tanh %353 : vector<8x128xf32>
    %cst_138 = arith.constant 1.000000e+00 : f32
    %355 = vector.broadcast %cst_138 : f32 to vector<8x128xf32>
    %356 = arith.subf %355, %349 : vector<8x128xf32>
    %357 = arith.mulf %356, %354 : vector<8x128xf32>
    %358 = arith.mulf %349, %290 : vector<8x128xf32>
    %359 = arith.addf %357, %358 : vector<8x128xf32>
    %360 = vector.extract_strided_slice %329 {offsets = [0, 0], sizes = [8, 128], strides = [1, 1]} : vector<8x384xf32> to vector<8x128xf32>
    %361 = vector.extract_strided_slice %327 {offsets = [0, 384], sizes = [8, 128], strides = [1, 1]} : vector<8x768xf32> to vector<8x128xf32>
    %362 = arith.addf %360, %361 : vector<8x128xf32>
    %cst_139 = arith.constant 5.000000e-01 : f32
    %363 = vector.broadcast %cst_139 : f32 to vector<8x128xf32>
    %364 = arith.mulf %363, %362 : vector<8x128xf32>
    %365 = math.tanh %364 : vector<8x128xf32>
    %cst_140 = arith.constant 1.000000e+00 : f32
    %366 = vector.broadcast %cst_140 : f32 to vector<8x128xf32>
    %367 = arith.addf %365, %366 : vector<8x128xf32>
    %cst_141 = arith.constant 5.000000e-01 : f32
    %368 = vector.broadcast %cst_141 : f32 to vector<8x128xf32>
    %369 = arith.mulf %368, %367 : vector<8x128xf32>
    %370 = vector.extract_strided_slice %329 {offsets = [0, 128], sizes = [8, 128], strides = [1, 1]} : vector<8x384xf32> to vector<8x128xf32>
    %371 = vector.extract_strided_slice %327 {offsets = [0, 512], sizes = [8, 128], strides = [1, 1]} : vector<8x768xf32> to vector<8x128xf32>
    %372 = arith.addf %370, %371 : vector<8x128xf32>
    %cst_142 = arith.constant 5.000000e-01 : f32
    %373 = vector.broadcast %cst_142 : f32 to vector<8x128xf32>
    %374 = arith.mulf %373, %372 : vector<8x128xf32>
    %375 = math.tanh %374 : vector<8x128xf32>
    %cst_143 = arith.constant 1.000000e+00 : f32
    %376 = vector.broadcast %cst_143 : f32 to vector<8x128xf32>
    %377 = arith.addf %375, %376 : vector<8x128xf32>
    %cst_144 = arith.constant 5.000000e-01 : f32
    %378 = vector.broadcast %cst_144 : f32 to vector<8x128xf32>
    %379 = arith.mulf %378, %377 : vector<8x128xf32>
    %380 = vector.extract_strided_slice %329 {offsets = [0, 256], sizes = [8, 128], strides = [1, 1]} : vector<8x384xf32> to vector<8x128xf32>
    %381 = vector.extract_strided_slice %327 {offsets = [0, 640], sizes = [8, 128], strides = [1, 1]} : vector<8x768xf32> to vector<8x128xf32>
    %382 = arith.mulf %369, %381 : vector<8x128xf32>
    %383 = arith.addf %380, %382 : vector<8x128xf32>
    %384 = math.tanh %383 : vector<8x128xf32>
    %cst_145 = arith.constant 1.000000e+00 : f32
    %385 = vector.broadcast %cst_145 : f32 to vector<8x128xf32>
    %386 = arith.subf %385, %379 : vector<8x128xf32>
    %387 = arith.mulf %386, %384 : vector<8x128xf32>
    %388 = arith.mulf %379, %320 : vector<8x128xf32>
    %389 = arith.addf %387, %388 : vector<8x128xf32>
    %c32_146 = arith.constant 32 : index
    %c0_147 = arith.constant 0 : index
    %390 = vector.load %arg17[%c32_146, %c0_147] : memref<64x256xf32, #tpu.memory_space<vmem>>, vector<8x128xf32>
    tpu.vector_store %arg17[%c32_146, %c0_147], %359 {strides = array<i32>} : memref<64x256xf32, #tpu.memory_space<vmem>>, vector<8x128xf32>,
    %c24_148 = arith.constant 24 : index
    %c128_149 = arith.constant 128 : index
    %391 = vector.load %arg17[%c24_148, %c128_149] : memref<64x256xf32, #tpu.memory_space<vmem>>, vector<8x128xf32>
    tpu.vector_store %arg17[%c24_148, %c128_149], %389 {strides = array<i32>} : memref<64x256xf32, #tpu.memory_space<vmem>>, vector<8x128xf32>,
    %392 = tpu.concatenate %359, %389 in 1 : vector<8x128xf32>, vector<8x128xf32> -> vector<8x256xf32>
    %393 = arith.truncf %392 : vector<8x256xf32> to vector<8x256xbf16>
    %cst_150 = arith.constant dense<0.000000e+00> : vector<8x768xf32>
    %394 = tpu.matmul %393, %43, %cst_150 {dimension_numbers = #tpu.dot_dimension_numbers<[1], [0], [0], [1], [0, 0, 1, 1], [], []>} : vector<8x256xbf16>, vector<256x768xbf16>, vector<8x768xf32> -> vector<8x768xf32>
    %395 = vector.broadcast %44 : vector<1x768xf32> to vector<8x768xf32>
    %396 = arith.addf %394, %395 : vector<8x768xf32>
    %c40_151 = arith.constant 40 : index
    %c0_152 = arith.constant 0 : index
    %397 = vector.load %arg16[%c40_151, %c0_152] : memref<64x768xf32, #tpu.memory_space<vmem>>, vector<8x384xf32>
    %c16_153 = arith.constant 16 : index
    %c384_154 = arith.constant 384 : index
    %398 = vector.load %arg16[%c16_153, %c384_154] : memref<64x768xf32, #tpu.memory_space<vmem>>, vector<8x384xf32>
    %399 = vector.extract_strided_slice %397 {offsets = [0, 0], sizes = [8, 128], strides = [1, 1]} : vector<8x384xf32> to vector<8x128xf32>
    %400 = vector.extract_strided_slice %396 {offsets = [0, 0], sizes = [8, 128], strides = [1, 1]} : vector<8x768xf32> to vector<8x128xf32>
    %401 = arith.addf %399, %400 : vector<8x128xf32>
    %cst_155 = arith.constant 5.000000e-01 : f32
    %402 = vector.broadcast %cst_155 : f32 to vector<8x128xf32>
    %403 = arith.mulf %402, %401 : vector<8x128xf32>
    %404 = math.tanh %403 : vector<8x128xf32>
    %cst_156 = arith.constant 1.000000e+00 : f32
    %405 = vector.broadcast %cst_156 : f32 to vector<8x128xf32>
    %406 = arith.addf %404, %405 : vector<8x128xf32>
    %cst_157 = arith.constant 5.000000e-01 : f32
    %407 = vector.broadcast %cst_157 : f32 to vector<8x128xf32>
    %408 = arith.mulf %407, %406 : vector<8x128xf32>
    %409 = vector.extract_strided_slice %397 {offsets = [0, 128], sizes = [8, 128], strides = [1, 1]} : vector<8x384xf32> to vector<8x128xf32>
    %410 = vector.extract_strided_slice %396 {offsets = [0, 128], sizes = [8, 128], strides = [1, 1]} : vector<8x768xf32> to vector<8x128xf32>
    %411 = arith.addf %409, %410 : vector<8x128xf32>
    %cst_158 = arith.constant 5.000000e-01 : f32
    %412 = vector.broadcast %cst_158 : f32 to vector<8x128xf32>
    %413 = arith.mulf %412, %411 : vector<8x128xf32>
    %414 = math.tanh %413 : vector<8x128xf32>
    %cst_159 = arith.constant 1.000000e+00 : f32
    %415 = vector.broadcast %cst_159 : f32 to vector<8x128xf32>
    %416 = arith.addf %414, %415 : vector<8x128xf32>
    %cst_160 = arith.constant 5.000000e-01 : f32
    %417 = vector.broadcast %cst_160 : f32 to vector<8x128xf32>
    %418 = arith.mulf %417, %416 : vector<8x128xf32>
    %419 = vector.extract_strided_slice %397 {offsets = [0, 256], sizes = [8, 128], strides = [1, 1]} : vector<8x384xf32> to vector<8x128xf32>
    %420 = vector.extract_strided_slice %396 {offsets = [0, 256], sizes = [8, 128], strides = [1, 1]} : vector<8x768xf32> to vector<8x128xf32>
    %421 = arith.mulf %408, %420 : vector<8x128xf32>
    %422 = arith.addf %419, %421 : vector<8x128xf32>
    %423 = math.tanh %422 : vector<8x128xf32>
    %cst_161 = arith.constant 1.000000e+00 : f32
    %424 = vector.broadcast %cst_161 : f32 to vector<8x128xf32>
    %425 = arith.subf %424, %418 : vector<8x128xf32>
    %426 = arith.mulf %425, %423 : vector<8x128xf32>
    %427 = arith.mulf %418, %359 : vector<8x128xf32>
    %428 = arith.addf %426, %427 : vector<8x128xf32>
    %429 = vector.extract_strided_slice %398 {offsets = [0, 0], sizes = [8, 128], strides = [1, 1]} : vector<8x384xf32> to vector<8x128xf32>
    %430 = vector.extract_strided_slice %396 {offsets = [0, 384], sizes = [8, 128], strides = [1, 1]} : vector<8x768xf32> to vector<8x128xf32>
    %431 = arith.addf %429, %430 : vector<8x128xf32>
    %cst_162 = arith.constant 5.000000e-01 : f32
    %432 = vector.broadcast %cst_162 : f32 to vector<8x128xf32>
    %433 = arith.mulf %432, %431 : vector<8x128xf32>
    %434 = math.tanh %433 : vector<8x128xf32>
    %cst_163 = arith.constant 1.000000e+00 : f32
    %435 = vector.broadcast %cst_163 : f32 to vector<8x128xf32>
    %436 = arith.addf %434, %435 : vector<8x128xf32>
    %cst_164 = arith.constant 5.000000e-01 : f32
    %437 = vector.broadcast %cst_164 : f32 to vector<8x128xf32>
    %438 = arith.mulf %437, %436 : vector<8x128xf32>
    %439 = vector.extract_strided_slice %398 {offsets = [0, 128], sizes = [8, 128], strides = [1, 1]} : vector<8x384xf32> to vector<8x128xf32>
    %440 = vector.extract_strided_slice %396 {offsets = [0, 512], sizes = [8, 128], strides = [1, 1]} : vector<8x768xf32> to vector<8x128xf32>
    %441 = arith.addf %439, %440 : vector<8x128xf32>
    %cst_165 = arith.constant 5.000000e-01 : f32
    %442 = vector.broadcast %cst_165 : f32 to vector<8x128xf32>
    %443 = arith.mulf %442, %441 : vector<8x128xf32>
    %444 = math.tanh %443 : vector<8x128xf32>
    %cst_166 = arith.constant 1.000000e+00 : f32
    %445 = vector.broadcast %cst_166 : f32 to vector<8x128xf32>
    %446 = arith.addf %444, %445 : vector<8x128xf32>
    %cst_167 = arith.constant 5.000000e-01 : f32
    %447 = vector.broadcast %cst_167 : f32 to vector<8x128xf32>
    %448 = arith.mulf %447, %446 : vector<8x128xf32>
    %449 = vector.extract_strided_slice %398 {offsets = [0, 256], sizes = [8, 128], strides = [1, 1]} : vector<8x384xf32> to vector<8x128xf32>
    %450 = vector.extract_strided_slice %396 {offsets = [0, 640], sizes = [8, 128], strides = [1, 1]} : vector<8x768xf32> to vector<8x128xf32>
    %451 = arith.mulf %438, %450 : vector<8x128xf32>
    %452 = arith.addf %449, %451 : vector<8x128xf32>
    %453 = math.tanh %452 : vector<8x128xf32>
    %cst_168 = arith.constant 1.000000e+00 : f32
    %454 = vector.broadcast %cst_168 : f32 to vector<8x128xf32>
    %455 = arith.subf %454, %448 : vector<8x128xf32>
    %456 = arith.mulf %455, %453 : vector<8x128xf32>
    %457 = arith.mulf %448, %389 : vector<8x128xf32>
    %458 = arith.addf %456, %457 : vector<8x128xf32>
    %c40_169 = arith.constant 40 : index
    %c0_170 = arith.constant 0 : index
    %459 = vector.load %arg17[%c40_169, %c0_170] : memref<64x256xf32, #tpu.memory_space<vmem>>, vector<8x128xf32>
    tpu.vector_store %arg17[%c40_169, %c0_170], %428 {strides = array<i32>} : memref<64x256xf32, #tpu.memory_space<vmem>>, vector<8x128xf32>,
    %c16_171 = arith.constant 16 : index
    %c128_172 = arith.constant 128 : index
    %460 = vector.load %arg17[%c16_171, %c128_172] : memref<64x256xf32, #tpu.memory_space<vmem>>, vector<8x128xf32>
    tpu.vector_store %arg17[%c16_171, %c128_172], %458 {strides = array<i32>} : memref<64x256xf32, #tpu.memory_space<vmem>>, vector<8x128xf32>,
    %461 = tpu.concatenate %428, %458 in 1 : vector<8x128xf32>, vector<8x128xf32> -> vector<8x256xf32>
    %462 = arith.truncf %461 : vector<8x256xf32> to vector<8x256xbf16>
    %cst_173 = arith.constant dense<0.000000e+00> : vector<8x768xf32>
    %463 = tpu.matmul %462, %43, %cst_173 {dimension_numbers = #tpu.dot_dimension_numbers<[1], [0], [0], [1], [0, 0, 1, 1], [], []>} : vector<8x256xbf16>, vector<256x768xbf16>, vector<8x768xf32> -> vector<8x768xf32>
    %464 = vector.broadcast %44 : vector<1x768xf32> to vector<8x768xf32>
    %465 = arith.addf %463, %464 : vector<8x768xf32>
    %c48_174 = arith.constant 48 : index
    %c0_175 = arith.constant 0 : index
    %466 = vector.load %arg16[%c48_174, %c0_175] : memref<64x768xf32, #tpu.memory_space<vmem>>, vector<8x384xf32>
    %c8_176 = arith.constant 8 : index
    %c384_177 = arith.constant 384 : index
    %467 = vector.load %arg16[%c8_176, %c384_177] : memref<64x768xf32, #tpu.memory_space<vmem>>, vector<8x384xf32>
    %468 = vector.extract_strided_slice %466 {offsets = [0, 0], sizes = [8, 128], strides = [1, 1]} : vector<8x384xf32> to vector<8x128xf32>
    %469 = vector.extract_strided_slice %465 {offsets = [0, 0], sizes = [8, 128], strides = [1, 1]} : vector<8x768xf32> to vector<8x128xf32>
    %470 = arith.addf %468, %469 : vector<8x128xf32>
    %cst_178 = arith.constant 5.000000e-01 : f32
    %471 = vector.broadcast %cst_178 : f32 to vector<8x128xf32>
    %472 = arith.mulf %471, %470 : vector<8x128xf32>
    %473 = math.tanh %472 : vector<8x128xf32>
    %cst_179 = arith.constant 1.000000e+00 : f32
    %474 = vector.broadcast %cst_179 : f32 to vector<8x128xf32>
    %475 = arith.addf %473, %474 : vector<8x128xf32>
    %cst_180 = arith.constant 5.000000e-01 : f32
    %476 = vector.broadcast %cst_180 : f32 to vector<8x128xf32>
    %477 = arith.mulf %476, %475 : vector<8x128xf32>
    %478 = vector.extract_strided_slice %466 {offsets = [0, 128], sizes = [8, 128], strides = [1, 1]} : vector<8x384xf32> to vector<8x128xf32>
    %479 = vector.extract_strided_slice %465 {offsets = [0, 128], sizes = [8, 128], strides = [1, 1]} : vector<8x768xf32> to vector<8x128xf32>
    %480 = arith.addf %478, %479 : vector<8x128xf32>
    %cst_181 = arith.constant 5.000000e-01 : f32
    %481 = vector.broadcast %cst_181 : f32 to vector<8x128xf32>
    %482 = arith.mulf %481, %480 : vector<8x128xf32>
    %483 = math.tanh %482 : vector<8x128xf32>
    %cst_182 = arith.constant 1.000000e+00 : f32
    %484 = vector.broadcast %cst_182 : f32 to vector<8x128xf32>
    %485 = arith.addf %483, %484 : vector<8x128xf32>
    %cst_183 = arith.constant 5.000000e-01 : f32
    %486 = vector.broadcast %cst_183 : f32 to vector<8x128xf32>
    %487 = arith.mulf %486, %485 : vector<8x128xf32>
    %488 = vector.extract_strided_slice %466 {offsets = [0, 256], sizes = [8, 128], strides = [1, 1]} : vector<8x384xf32> to vector<8x128xf32>
    %489 = vector.extract_strided_slice %465 {offsets = [0, 256], sizes = [8, 128], strides = [1, 1]} : vector<8x768xf32> to vector<8x128xf32>
    %490 = arith.mulf %477, %489 : vector<8x128xf32>
    %491 = arith.addf %488, %490 : vector<8x128xf32>
    %492 = math.tanh %491 : vector<8x128xf32>
    %cst_184 = arith.constant 1.000000e+00 : f32
    %493 = vector.broadcast %cst_184 : f32 to vector<8x128xf32>
    %494 = arith.subf %493, %487 : vector<8x128xf32>
    %495 = arith.mulf %494, %492 : vector<8x128xf32>
    %496 = arith.mulf %487, %428 : vector<8x128xf32>
    %497 = arith.addf %495, %496 : vector<8x128xf32>
    %498 = vector.extract_strided_slice %467 {offsets = [0, 0], sizes = [8, 128], strides = [1, 1]} : vector<8x384xf32> to vector<8x128xf32>
    %499 = vector.extract_strided_slice %465 {offsets = [0, 384], sizes = [8, 128], strides = [1, 1]} : vector<8x768xf32> to vector<8x128xf32>
    %500 = arith.addf %498, %499 : vector<8x128xf32>
    %cst_185 = arith.constant 5.000000e-01 : f32
    %501 = vector.broadcast %cst_185 : f32 to vector<8x128xf32>
    %502 = arith.mulf %501, %500 : vector<8x128xf32>
    %503 = math.tanh %502 : vector<8x128xf32>
    %cst_186 = arith.constant 1.000000e+00 : f32
    %504 = vector.broadcast %cst_186 : f32 to vector<8x128xf32>
    %505 = arith.addf %503, %504 : vector<8x128xf32>
    %cst_187 = arith.constant 5.000000e-01 : f32
    %506 = vector.broadcast %cst_187 : f32 to vector<8x128xf32>
    %507 = arith.mulf %506, %505 : vector<8x128xf32>
    %508 = vector.extract_strided_slice %467 {offsets = [0, 128], sizes = [8, 128], strides = [1, 1]} : vector<8x384xf32> to vector<8x128xf32>
    %509 = vector.extract_strided_slice %465 {offsets = [0, 512], sizes = [8, 128], strides = [1, 1]} : vector<8x768xf32> to vector<8x128xf32>
    %510 = arith.addf %508, %509 : vector<8x128xf32>
    %cst_188 = arith.constant 5.000000e-01 : f32
    %511 = vector.broadcast %cst_188 : f32 to vector<8x128xf32>
    %512 = arith.mulf %511, %510 : vector<8x128xf32>
    %513 = math.tanh %512 : vector<8x128xf32>
    %cst_189 = arith.constant 1.000000e+00 : f32
    %514 = vector.broadcast %cst_189 : f32 to vector<8x128xf32>
    %515 = arith.addf %513, %514 : vector<8x128xf32>
    %cst_190 = arith.constant 5.000000e-01 : f32
    %516 = vector.broadcast %cst_190 : f32 to vector<8x128xf32>
    %517 = arith.mulf %516, %515 : vector<8x128xf32>
    %518 = vector.extract_strided_slice %467 {offsets = [0, 256], sizes = [8, 128], strides = [1, 1]} : vector<8x384xf32> to vector<8x128xf32>
    %519 = vector.extract_strided_slice %465 {offsets = [0, 640], sizes = [8, 128], strides = [1, 1]} : vector<8x768xf32> to vector<8x128xf32>
    %520 = arith.mulf %507, %519 : vector<8x128xf32>
    %521 = arith.addf %518, %520 : vector<8x128xf32>
    %522 = math.tanh %521 : vector<8x128xf32>
    %cst_191 = arith.constant 1.000000e+00 : f32
    %523 = vector.broadcast %cst_191 : f32 to vector<8x128xf32>
    %524 = arith.subf %523, %517 : vector<8x128xf32>
    %525 = arith.mulf %524, %522 : vector<8x128xf32>
    %526 = arith.mulf %517, %458 : vector<8x128xf32>
    %527 = arith.addf %525, %526 : vector<8x128xf32>
    %c48_192 = arith.constant 48 : index
    %c0_193 = arith.constant 0 : index
    %528 = vector.load %arg17[%c48_192, %c0_193] : memref<64x256xf32, #tpu.memory_space<vmem>>, vector<8x128xf32>
    tpu.vector_store %arg17[%c48_192, %c0_193], %497 {strides = array<i32>} : memref<64x256xf32, #tpu.memory_space<vmem>>, vector<8x128xf32>,
    %c8_194 = arith.constant 8 : index
    %c128_195 = arith.constant 128 : index
    %529 = vector.load %arg17[%c8_194, %c128_195] : memref<64x256xf32, #tpu.memory_space<vmem>>, vector<8x128xf32>
    tpu.vector_store %arg17[%c8_194, %c128_195], %527 {strides = array<i32>} : memref<64x256xf32, #tpu.memory_space<vmem>>, vector<8x128xf32>,
    %530 = tpu.concatenate %497, %527 in 1 : vector<8x128xf32>, vector<8x128xf32> -> vector<8x256xf32>
    %531 = arith.truncf %530 : vector<8x256xf32> to vector<8x256xbf16>
    %cst_196 = arith.constant dense<0.000000e+00> : vector<8x768xf32>
    %532 = tpu.matmul %531, %43, %cst_196 {dimension_numbers = #tpu.dot_dimension_numbers<[1], [0], [0], [1], [0, 0, 1, 1], [], []>} : vector<8x256xbf16>, vector<256x768xbf16>, vector<8x768xf32> -> vector<8x768xf32>
    %533 = vector.broadcast %44 : vector<1x768xf32> to vector<8x768xf32>
    %534 = arith.addf %532, %533 : vector<8x768xf32>
    %c56_197 = arith.constant 56 : index
    %c0_198 = arith.constant 0 : index
    %535 = vector.load %arg16[%c56_197, %c0_198] : memref<64x768xf32, #tpu.memory_space<vmem>>, vector<8x384xf32>
    %c0_199 = arith.constant 0 : index
    %c384_200 = arith.constant 384 : index
    %536 = vector.load %arg16[%c0_199, %c384_200] : memref<64x768xf32, #tpu.memory_space<vmem>>, vector<8x384xf32>
    %537 = vector.extract_strided_slice %535 {offsets = [0, 0], sizes = [8, 128], strides = [1, 1]} : vector<8x384xf32> to vector<8x128xf32>
    %538 = vector.extract_strided_slice %534 {offsets = [0, 0], sizes = [8, 128], strides = [1, 1]} : vector<8x768xf32> to vector<8x128xf32>
    %539 = arith.addf %537, %538 : vector<8x128xf32>
    %cst_201 = arith.constant 5.000000e-01 : f32
    %540 = vector.broadcast %cst_201 : f32 to vector<8x128xf32>
    %541 = arith.mulf %540, %539 : vector<8x128xf32>
    %542 = math.tanh %541 : vector<8x128xf32>
    %cst_202 = arith.constant 1.000000e+00 : f32
    %543 = vector.broadcast %cst_202 : f32 to vector<8x128xf32>
    %544 = arith.addf %542, %543 : vector<8x128xf32>
    %cst_203 = arith.constant 5.000000e-01 : f32
    %545 = vector.broadcast %cst_203 : f32 to vector<8x128xf32>
    %546 = arith.mulf %545, %544 : vector<8x128xf32>
    %547 = vector.extract_strided_slice %535 {offsets = [0, 128], sizes = [8, 128], strides = [1, 1]} : vector<8x384xf32> to vector<8x128xf32>
    %548 = vector.extract_strided_slice %534 {offsets = [0, 128], sizes = [8, 128], strides = [1, 1]} : vector<8x768xf32> to vector<8x128xf32>
    %549 = arith.addf %547, %548 : vector<8x128xf32>
    %cst_204 = arith.constant 5.000000e-01 : f32
    %550 = vector.broadcast %cst_204 : f32 to vector<8x128xf32>
    %551 = arith.mulf %550, %549 : vector<8x128xf32>
    %552 = math.tanh %551 : vector<8x128xf32>
    %cst_205 = arith.constant 1.000000e+00 : f32
    %553 = vector.broadcast %cst_205 : f32 to vector<8x128xf32>
    %554 = arith.addf %552, %553 : vector<8x128xf32>
    %cst_206 = arith.constant 5.000000e-01 : f32
    %555 = vector.broadcast %cst_206 : f32 to vector<8x128xf32>
    %556 = arith.mulf %555, %554 : vector<8x128xf32>
    %557 = vector.extract_strided_slice %535 {offsets = [0, 256], sizes = [8, 128], strides = [1, 1]} : vector<8x384xf32> to vector<8x128xf32>
    %558 = vector.extract_strided_slice %534 {offsets = [0, 256], sizes = [8, 128], strides = [1, 1]} : vector<8x768xf32> to vector<8x128xf32>
    %559 = arith.mulf %546, %558 : vector<8x128xf32>
    %560 = arith.addf %557, %559 : vector<8x128xf32>
    %561 = math.tanh %560 : vector<8x128xf32>
    %cst_207 = arith.constant 1.000000e+00 : f32
    %562 = vector.broadcast %cst_207 : f32 to vector<8x128xf32>
    %563 = arith.subf %562, %556 : vector<8x128xf32>
    %564 = arith.mulf %563, %561 : vector<8x128xf32>
    %565 = arith.mulf %556, %497 : vector<8x128xf32>
    %566 = arith.addf %564, %565 : vector<8x128xf32>
    %567 = vector.extract_strided_slice %536 {offsets = [0, 0], sizes = [8, 128], strides = [1, 1]} : vector<8x384xf32> to vector<8x128xf32>
    %568 = vector.extract_strided_slice %534 {offsets = [0, 384], sizes = [8, 128], strides = [1, 1]} : vector<8x768xf32> to vector<8x128xf32>
    %569 = arith.addf %567, %568 : vector<8x128xf32>
    %cst_208 = arith.constant 5.000000e-01 : f32
    %570 = vector.broadcast %cst_208 : f32 to vector<8x128xf32>
    %571 = arith.mulf %570, %569 : vector<8x128xf32>
    %572 = math.tanh %571 : vector<8x128xf32>
    %cst_209 = arith.constant 1.000000e+00 : f32
    %573 = vector.broadcast %cst_209 : f32 to vector<8x128xf32>
    %574 = arith.addf %572, %573 : vector<8x128xf32>
    %cst_210 = arith.constant 5.000000e-01 : f32
    %575 = vector.broadcast %cst_210 : f32 to vector<8x128xf32>
    %576 = arith.mulf %575, %574 : vector<8x128xf32>
    %577 = vector.extract_strided_slice %536 {offsets = [0, 128], sizes = [8, 128], strides = [1, 1]} : vector<8x384xf32> to vector<8x128xf32>
    %578 = vector.extract_strided_slice %534 {offsets = [0, 512], sizes = [8, 128], strides = [1, 1]} : vector<8x768xf32> to vector<8x128xf32>
    %579 = arith.addf %577, %578 : vector<8x128xf32>
    %cst_211 = arith.constant 5.000000e-01 : f32
    %580 = vector.broadcast %cst_211 : f32 to vector<8x128xf32>
    %581 = arith.mulf %580, %579 : vector<8x128xf32>
    %582 = math.tanh %581 : vector<8x128xf32>
    %cst_212 = arith.constant 1.000000e+00 : f32
    %583 = vector.broadcast %cst_212 : f32 to vector<8x128xf32>
    %584 = arith.addf %582, %583 : vector<8x128xf32>
    %cst_213 = arith.constant 5.000000e-01 : f32
    %585 = vector.broadcast %cst_213 : f32 to vector<8x128xf32>
    %586 = arith.mulf %585, %584 : vector<8x128xf32>
    %587 = vector.extract_strided_slice %536 {offsets = [0, 256], sizes = [8, 128], strides = [1, 1]} : vector<8x384xf32> to vector<8x128xf32>
    %588 = vector.extract_strided_slice %534 {offsets = [0, 640], sizes = [8, 128], strides = [1, 1]} : vector<8x768xf32> to vector<8x128xf32>
    %589 = arith.mulf %576, %588 : vector<8x128xf32>
    %590 = arith.addf %587, %589 : vector<8x128xf32>
    %591 = math.tanh %590 : vector<8x128xf32>
    %cst_214 = arith.constant 1.000000e+00 : f32
    %592 = vector.broadcast %cst_214 : f32 to vector<8x128xf32>
    %593 = arith.subf %592, %586 : vector<8x128xf32>
    %594 = arith.mulf %593, %591 : vector<8x128xf32>
    %595 = arith.mulf %586, %527 : vector<8x128xf32>
    %596 = arith.addf %594, %595 : vector<8x128xf32>
    %c56_215 = arith.constant 56 : index
    %c0_216 = arith.constant 0 : index
    %597 = vector.load %arg17[%c56_215, %c0_216] : memref<64x256xf32, #tpu.memory_space<vmem>>, vector<8x128xf32>
    tpu.vector_store %arg17[%c56_215, %c0_216], %566 {strides = array<i32>} : memref<64x256xf32, #tpu.memory_space<vmem>>, vector<8x128xf32>,
    %c0_217 = arith.constant 0 : index
    %c128_218 = arith.constant 128 : index
    %598 = vector.load %arg17[%c0_217, %c128_218] : memref<64x256xf32, #tpu.memory_space<vmem>>, vector<8x128xf32>
    tpu.vector_store %arg17[%c0_217, %c128_218], %596 {strides = array<i32>} : memref<64x256xf32, #tpu.memory_space<vmem>>, vector<8x128xf32>,
    %c0_219 = arith.constant 0 : index
    %c0_220 = arith.constant 0 : index
    %599 = vector.load %arg17[%c0_219, %c0_220] : memref<64x256xf32, #tpu.memory_space<vmem>>, vector<64x256xf32>
    %c0_221 = arith.constant 0 : index
    %c0_222 = arith.constant 0 : index
    %600 = vector.load %arg7[%c0_221, %c0_222] : memref<256x768xf32, #tpu.memory_space<vmem>>, vector<256x768xf32>
    %cst_223 = arith.constant dense<0.000000e+00> : vector<64x768xf32>
    %601 = tpu.matmul %599, %600, %cst_223 {dimension_numbers = #tpu.dot_dimension_numbers<[1], [0], [0], [1], [0, 0, 1, 1], [], []>} : vector<64x256xf32>, vector<256x768xf32>, vector<64x768xf32> -> vector<64x768xf32>
    %c0_224 = arith.constant 0 : index
    %c0_225 = arith.constant 0 : index
    %602 = vector.load %arg8[%c0_224, %c0_225] : memref<1x768xf32, #tpu.memory_space<vmem>>, vector<1x768xf32>
    %603 = vector.broadcast %602 : vector<1x768xf32> to vector<64x768xf32>
    %604 = arith.addf %601, %603 : vector<64x768xf32>
    %c0_226 = arith.constant 0 : index
    %c0_227 = arith.constant 0 : index
    %605 = vector.load %arg16[%c0_226, %c0_227] : memref<64x768xf32, #tpu.memory_space<vmem>>, vector<64x768xf32>
    tpu.vector_store %arg16[%c0_226, %c0_227], %604 {strides = array<i32>} : memref<64x768xf32, #tpu.memory_space<vmem>>, vector<64x768xf32>,
    %c0_228 = arith.constant 0 : index
    %c0_229 = arith.constant 0 : index
    %606 = vector.load %arg9[%c0_228, %c0_229] : memref<256x768xbf16, #tpu.memory_space<vmem>>, vector<256x768xbf16>
    %c0_230 = arith.constant 0 : index
    %c0_231 = arith.constant 0 : index
    %607 = vector.load %arg10[%c0_230, %c0_231] : memref<1x768xf32, #tpu.memory_space<vmem>>, vector<1x768xf32>
    %cst_232 = arith.constant 0.000000e+00 : f32
    %608 = vector.broadcast %cst_232 : f32 to vector<8x128xf32>
    %cst_233 = arith.constant 0.000000e+00 : f32
    %609 = vector.broadcast %cst_233 : f32 to vector<8x128xf32>
    %610 = tpu.concatenate %608, %609 in 1 : vector<8x128xf32>, vector<8x128xf32> -> vector<8x256xf32>
    %611 = arith.truncf %610 : vector<8x256xf32> to vector<8x256xbf16>
    %cst_234 = arith.constant dense<0.000000e+00> : vector<8x768xf32>
    %612 = tpu.matmul %611, %606, %cst_234 {dimension_numbers = #tpu.dot_dimension_numbers<[1], [0], [0], [1], [0, 0, 1, 1], [], []>} : vector<8x256xbf16>, vector<256x768xbf16>, vector<8x768xf32> -> vector<8x768xf32>
    %613 = vector.broadcast %607 : vector<1x768xf32> to vector<8x768xf32>
    %614 = arith.addf %612, %613 : vector<8x768xf32>
    %c0_235 = arith.constant 0 : index
    %c0_236 = arith.constant 0 : index
    %615 = vector.load %arg16[%c0_235, %c0_236] : memref<64x768xf32, #tpu.memory_space<vmem>>, vector<8x384xf32>
    %c56_237 = arith.constant 56 : index
    %c384_238 = arith.constant 384 : index
    %616 = vector.load %arg16[%c56_237, %c384_238] : memref<64x768xf32, #tpu.memory_space<vmem>>, vector<8x384xf32>
    %617 = vector.extract_strided_slice %615 {offsets = [0, 0], sizes = [8, 128], strides = [1, 1]} : vector<8x384xf32> to vector<8x128xf32>
    %618 = vector.extract_strided_slice %614 {offsets = [0, 0], sizes = [8, 128], strides = [1, 1]} : vector<8x768xf32> to vector<8x128xf32>
    %619 = arith.addf %617, %618 : vector<8x128xf32>
    %cst_239 = arith.constant 5.000000e-01 : f32
    %620 = vector.broadcast %cst_239 : f32 to vector<8x128xf32>
    %621 = arith.mulf %620, %619 : vector<8x128xf32>
    %622 = math.tanh %621 : vector<8x128xf32>
    %cst_240 = arith.constant 1.000000e+00 : f32
    %623 = vector.broadcast %cst_240 : f32 to vector<8x128xf32>
    %624 = arith.addf %622, %623 : vector<8x128xf32>
    %cst_241 = arith.constant 5.000000e-01 : f32
    %625 = vector.broadcast %cst_241 : f32 to vector<8x128xf32>
    %626 = arith.mulf %625, %624 : vector<8x128xf32>
    %627 = vector.extract_strided_slice %615 {offsets = [0, 128], sizes = [8, 128], strides = [1, 1]} : vector<8x384xf32> to vector<8x128xf32>
    %628 = vector.extract_strided_slice %614 {offsets = [0, 128], sizes = [8, 128], strides = [1, 1]} : vector<8x768xf32> to vector<8x128xf32>
    %629 = arith.addf %627, %628 : vector<8x128xf32>
    %cst_242 = arith.constant 5.000000e-01 : f32
    %630 = vector.broadcast %cst_242 : f32 to vector<8x128xf32>
    %631 = arith.mulf %630, %629 : vector<8x128xf32>
    %632 = math.tanh %631 : vector<8x128xf32>
    %cst_243 = arith.constant 1.000000e+00 : f32
    %633 = vector.broadcast %cst_243 : f32 to vector<8x128xf32>
    %634 = arith.addf %632, %633 : vector<8x128xf32>
    %cst_244 = arith.constant 5.000000e-01 : f32
    %635 = vector.broadcast %cst_244 : f32 to vector<8x128xf32>
    %636 = arith.mulf %635, %634 : vector<8x128xf32>
    %637 = vector.extract_strided_slice %615 {offsets = [0, 256], sizes = [8, 128], strides = [1, 1]} : vector<8x384xf32> to vector<8x128xf32>
    %638 = vector.extract_strided_slice %614 {offsets = [0, 256], sizes = [8, 128], strides = [1, 1]} : vector<8x768xf32> to vector<8x128xf32>
    %639 = arith.mulf %626, %638 : vector<8x128xf32>
    %640 = arith.addf %637, %639 : vector<8x128xf32>
    %641 = math.tanh %640 : vector<8x128xf32>
    %cst_245 = arith.constant 1.000000e+00 : f32
    %642 = vector.broadcast %cst_245 : f32 to vector<8x128xf32>
    %643 = arith.subf %642, %636 : vector<8x128xf32>
    %644 = arith.mulf %643, %641 : vector<8x128xf32>
    %645 = arith.mulf %636, %608 : vector<8x128xf32>
    %646 = arith.addf %644, %645 : vector<8x128xf32>
    %647 = vector.extract_strided_slice %616 {offsets = [0, 0], sizes = [8, 128], strides = [1, 1]} : vector<8x384xf32> to vector<8x128xf32>
    %648 = vector.extract_strided_slice %614 {offsets = [0, 384], sizes = [8, 128], strides = [1, 1]} : vector<8x768xf32> to vector<8x128xf32>
    %649 = arith.addf %647, %648 : vector<8x128xf32>
    %cst_246 = arith.constant 5.000000e-01 : f32
    %650 = vector.broadcast %cst_246 : f32 to vector<8x128xf32>
    %651 = arith.mulf %650, %649 : vector<8x128xf32>
    %652 = math.tanh %651 : vector<8x128xf32>
    %cst_247 = arith.constant 1.000000e+00 : f32
    %653 = vector.broadcast %cst_247 : f32 to vector<8x128xf32>
    %654 = arith.addf %652, %653 : vector<8x128xf32>
    %cst_248 = arith.constant 5.000000e-01 : f32
    %655 = vector.broadcast %cst_248 : f32 to vector<8x128xf32>
    %656 = arith.mulf %655, %654 : vector<8x128xf32>
    %657 = vector.extract_strided_slice %616 {offsets = [0, 128], sizes = [8, 128], strides = [1, 1]} : vector<8x384xf32> to vector<8x128xf32>
    %658 = vector.extract_strided_slice %614 {offsets = [0, 512], sizes = [8, 128], strides = [1, 1]} : vector<8x768xf32> to vector<8x128xf32>
    %659 = arith.addf %657, %658 : vector<8x128xf32>
    %cst_249 = arith.constant 5.000000e-01 : f32
    %660 = vector.broadcast %cst_249 : f32 to vector<8x128xf32>
    %661 = arith.mulf %660, %659 : vector<8x128xf32>
    %662 = math.tanh %661 : vector<8x128xf32>
    %cst_250 = arith.constant 1.000000e+00 : f32
    %663 = vector.broadcast %cst_250 : f32 to vector<8x128xf32>
    %664 = arith.addf %662, %663 : vector<8x128xf32>
    %cst_251 = arith.constant 5.000000e-01 : f32
    %665 = vector.broadcast %cst_251 : f32 to vector<8x128xf32>
    %666 = arith.mulf %665, %664 : vector<8x128xf32>
    %667 = vector.extract_strided_slice %616 {offsets = [0, 256], sizes = [8, 128], strides = [1, 1]} : vector<8x384xf32> to vector<8x128xf32>
    %668 = vector.extract_strided_slice %614 {offsets = [0, 640], sizes = [8, 128], strides = [1, 1]} : vector<8x768xf32> to vector<8x128xf32>
    %669 = arith.mulf %656, %668 : vector<8x128xf32>
    %670 = arith.addf %667, %669 : vector<8x128xf32>
    %671 = math.tanh %670 : vector<8x128xf32>
    %cst_252 = arith.constant 1.000000e+00 : f32
    %672 = vector.broadcast %cst_252 : f32 to vector<8x128xf32>
    %673 = arith.subf %672, %666 : vector<8x128xf32>
    %674 = arith.mulf %673, %671 : vector<8x128xf32>
    %675 = arith.mulf %666, %609 : vector<8x128xf32>
    %676 = arith.addf %674, %675 : vector<8x128xf32>
    %c0_253 = arith.constant 0 : index
    %c0_254 = arith.constant 0 : index
    %677 = vector.load %arg17[%c0_253, %c0_254] : memref<64x256xf32, #tpu.memory_space<vmem>>, vector<8x128xf32>
    tpu.vector_store %arg17[%c0_253, %c0_254], %646 {strides = array<i32>} : memref<64x256xf32, #tpu.memory_space<vmem>>, vector<8x128xf32>,
    %c56_255 = arith.constant 56 : index
    %c128_256 = arith.constant 128 : index
    %678 = vector.load %arg17[%c56_255, %c128_256] : memref<64x256xf32, #tpu.memory_space<vmem>>, vector<8x128xf32>
    tpu.vector_store %arg17[%c56_255, %c128_256], %676 {strides = array<i32>} : memref<64x256xf32, #tpu.memory_space<vmem>>, vector<8x128xf32>,
    %679 = tpu.concatenate %646, %676 in 1 : vector<8x128xf32>, vector<8x128xf32> -> vector<8x256xf32>
    %680 = arith.truncf %679 : vector<8x256xf32> to vector<8x256xbf16>
    %cst_257 = arith.constant dense<0.000000e+00> : vector<8x768xf32>
    %681 = tpu.matmul %680, %606, %cst_257 {dimension_numbers = #tpu.dot_dimension_numbers<[1], [0], [0], [1], [0, 0, 1, 1], [], []>} : vector<8x256xbf16>, vector<256x768xbf16>, vector<8x768xf32> -> vector<8x768xf32>
    %682 = vector.broadcast %607 : vector<1x768xf32> to vector<8x768xf32>
    %683 = arith.addf %681, %682 : vector<8x768xf32>
    %c8_258 = arith.constant 8 : index
    %c0_259 = arith.constant 0 : index
    %684 = vector.load %arg16[%c8_258, %c0_259] : memref<64x768xf32, #tpu.memory_space<vmem>>, vector<8x384xf32>
    %c48_260 = arith.constant 48 : index
    %c384_261 = arith.constant 384 : index
    %685 = vector.load %arg16[%c48_260, %c384_261] : memref<64x768xf32, #tpu.memory_space<vmem>>, vector<8x384xf32>
    %686 = vector.extract_strided_slice %684 {offsets = [0, 0], sizes = [8, 128], strides = [1, 1]} : vector<8x384xf32> to vector<8x128xf32>
    %687 = vector.extract_strided_slice %683 {offsets = [0, 0], sizes = [8, 128], strides = [1, 1]} : vector<8x768xf32> to vector<8x128xf32>
    %688 = arith.addf %686, %687 : vector<8x128xf32>
    %cst_262 = arith.constant 5.000000e-01 : f32
    %689 = vector.broadcast %cst_262 : f32 to vector<8x128xf32>
    %690 = arith.mulf %689, %688 : vector<8x128xf32>
    %691 = math.tanh %690 : vector<8x128xf32>
    %cst_263 = arith.constant 1.000000e+00 : f32
    %692 = vector.broadcast %cst_263 : f32 to vector<8x128xf32>
    %693 = arith.addf %691, %692 : vector<8x128xf32>
    %cst_264 = arith.constant 5.000000e-01 : f32
    %694 = vector.broadcast %cst_264 : f32 to vector<8x128xf32>
    %695 = arith.mulf %694, %693 : vector<8x128xf32>
    %696 = vector.extract_strided_slice %684 {offsets = [0, 128], sizes = [8, 128], strides = [1, 1]} : vector<8x384xf32> to vector<8x128xf32>
    %697 = vector.extract_strided_slice %683 {offsets = [0, 128], sizes = [8, 128], strides = [1, 1]} : vector<8x768xf32> to vector<8x128xf32>
    %698 = arith.addf %696, %697 : vector<8x128xf32>
    %cst_265 = arith.constant 5.000000e-01 : f32
    %699 = vector.broadcast %cst_265 : f32 to vector<8x128xf32>
    %700 = arith.mulf %699, %698 : vector<8x128xf32>
    %701 = math.tanh %700 : vector<8x128xf32>
    %cst_266 = arith.constant 1.000000e+00 : f32
    %702 = vector.broadcast %cst_266 : f32 to vector<8x128xf32>
    %703 = arith.addf %701, %702 : vector<8x128xf32>
    %cst_267 = arith.constant 5.000000e-01 : f32
    %704 = vector.broadcast %cst_267 : f32 to vector<8x128xf32>
    %705 = arith.mulf %704, %703 : vector<8x128xf32>
    %706 = vector.extract_strided_slice %684 {offsets = [0, 256], sizes = [8, 128], strides = [1, 1]} : vector<8x384xf32> to vector<8x128xf32>
    %707 = vector.extract_strided_slice %683 {offsets = [0, 256], sizes = [8, 128], strides = [1, 1]} : vector<8x768xf32> to vector<8x128xf32>
    %708 = arith.mulf %695, %707 : vector<8x128xf32>
    %709 = arith.addf %706, %708 : vector<8x128xf32>
    %710 = math.tanh %709 : vector<8x128xf32>
    %cst_268 = arith.constant 1.000000e+00 : f32
    %711 = vector.broadcast %cst_268 : f32 to vector<8x128xf32>
    %712 = arith.subf %711, %705 : vector<8x128xf32>
    %713 = arith.mulf %712, %710 : vector<8x128xf32>
    %714 = arith.mulf %705, %646 : vector<8x128xf32>
    %715 = arith.addf %713, %714 : vector<8x128xf32>
    %716 = vector.extract_strided_slice %685 {offsets = [0, 0], sizes = [8, 128], strides = [1, 1]} : vector<8x384xf32> to vector<8x128xf32>
    %717 = vector.extract_strided_slice %683 {offsets = [0, 384], sizes = [8, 128], strides = [1, 1]} : vector<8x768xf32> to vector<8x128xf32>
    %718 = arith.addf %716, %717 : vector<8x128xf32>
    %cst_269 = arith.constant 5.000000e-01 : f32
    %719 = vector.broadcast %cst_269 : f32 to vector<8x128xf32>
    %720 = arith.mulf %719, %718 : vector<8x128xf32>
    %721 = math.tanh %720 : vector<8x128xf32>
    %cst_270 = arith.constant 1.000000e+00 : f32
    %722 = vector.broadcast %cst_270 : f32 to vector<8x128xf32>
    %723 = arith.addf %721, %722 : vector<8x128xf32>
    %cst_271 = arith.constant 5.000000e-01 : f32
    %724 = vector.broadcast %cst_271 : f32 to vector<8x128xf32>
    %725 = arith.mulf %724, %723 : vector<8x128xf32>
    %726 = vector.extract_strided_slice %685 {offsets = [0, 128], sizes = [8, 128], strides = [1, 1]} : vector<8x384xf32> to vector<8x128xf32>
    %727 = vector.extract_strided_slice %683 {offsets = [0, 512], sizes = [8, 128], strides = [1, 1]} : vector<8x768xf32> to vector<8x128xf32>
    %728 = arith.addf %726, %727 : vector<8x128xf32>
    %cst_272 = arith.constant 5.000000e-01 : f32
    %729 = vector.broadcast %cst_272 : f32 to vector<8x128xf32>
    %730 = arith.mulf %729, %728 : vector<8x128xf32>
    %731 = math.tanh %730 : vector<8x128xf32>
    %cst_273 = arith.constant 1.000000e+00 : f32
    %732 = vector.broadcast %cst_273 : f32 to vector<8x128xf32>
    %733 = arith.addf %731, %732 : vector<8x128xf32>
    %cst_274 = arith.constant 5.000000e-01 : f32
    %734 = vector.broadcast %cst_274 : f32 to vector<8x128xf32>
    %735 = arith.mulf %734, %733 : vector<8x128xf32>
    %736 = vector.extract_strided_slice %685 {offsets = [0, 256], sizes = [8, 128], strides = [1, 1]} : vector<8x384xf32> to vector<8x128xf32>
    %737 = vector.extract_strided_slice %683 {offsets = [0, 640], sizes = [8, 128], strides = [1, 1]} : vector<8x768xf32> to vector<8x128xf32>
    %738 = arith.mulf %725, %737 : vector<8x128xf32>
    %739 = arith.addf %736, %738 : vector<8x128xf32>
    %740 = math.tanh %739 : vector<8x128xf32>
    %cst_275 = arith.constant 1.000000e+00 : f32
    %741 = vector.broadcast %cst_275 : f32 to vector<8x128xf32>
    %742 = arith.subf %741, %735 : vector<8x128xf32>
    %743 = arith.mulf %742, %740 : vector<8x128xf32>
    %744 = arith.mulf %735, %676 : vector<8x128xf32>
    %745 = arith.addf %743, %744 : vector<8x128xf32>
    %c8_276 = arith.constant 8 : index
    %c0_277 = arith.constant 0 : index
    %746 = vector.load %arg17[%c8_276, %c0_277] : memref<64x256xf32, #tpu.memory_space<vmem>>, vector<8x128xf32>
    tpu.vector_store %arg17[%c8_276, %c0_277], %715 {strides = array<i32>} : memref<64x256xf32, #tpu.memory_space<vmem>>, vector<8x128xf32>,
    %c48_278 = arith.constant 48 : index
    %c128_279 = arith.constant 128 : index
    %747 = vector.load %arg17[%c48_278, %c128_279] : memref<64x256xf32, #tpu.memory_space<vmem>>, vector<8x128xf32>
    tpu.vector_store %arg17[%c48_278, %c128_279], %745 {strides = array<i32>} : memref<64x256xf32, #tpu.memory_space<vmem>>, vector<8x128xf32>,
    %748 = tpu.concatenate %715, %745 in 1 : vector<8x128xf32>, vector<8x128xf32> -> vector<8x256xf32>
    %749 = arith.truncf %748 : vector<8x256xf32> to vector<8x256xbf16>
    %cst_280 = arith.constant dense<0.000000e+00> : vector<8x768xf32>
    %750 = tpu.matmul %749, %606, %cst_280 {dimension_numbers = #tpu.dot_dimension_numbers<[1], [0], [0], [1], [0, 0, 1, 1], [], []>} : vector<8x256xbf16>, vector<256x768xbf16>, vector<8x768xf32> -> vector<8x768xf32>
    %751 = vector.broadcast %607 : vector<1x768xf32> to vector<8x768xf32>
    %752 = arith.addf %750, %751 : vector<8x768xf32>
    %c16_281 = arith.constant 16 : index
    %c0_282 = arith.constant 0 : index
    %753 = vector.load %arg16[%c16_281, %c0_282] : memref<64x768xf32, #tpu.memory_space<vmem>>, vector<8x384xf32>
    %c40_283 = arith.constant 40 : index
    %c384_284 = arith.constant 384 : index
    %754 = vector.load %arg16[%c40_283, %c384_284] : memref<64x768xf32, #tpu.memory_space<vmem>>, vector<8x384xf32>
    %755 = vector.extract_strided_slice %753 {offsets = [0, 0], sizes = [8, 128], strides = [1, 1]} : vector<8x384xf32> to vector<8x128xf32>
    %756 = vector.extract_strided_slice %752 {offsets = [0, 0], sizes = [8, 128], strides = [1, 1]} : vector<8x768xf32> to vector<8x128xf32>
    %757 = arith.addf %755, %756 : vector<8x128xf32>
    %cst_285 = arith.constant 5.000000e-01 : f32
    %758 = vector.broadcast %cst_285 : f32 to vector<8x128xf32>
    %759 = arith.mulf %758, %757 : vector<8x128xf32>
    %760 = math.tanh %759 : vector<8x128xf32>
    %cst_286 = arith.constant 1.000000e+00 : f32
    %761 = vector.broadcast %cst_286 : f32 to vector<8x128xf32>
    %762 = arith.addf %760, %761 : vector<8x128xf32>
    %cst_287 = arith.constant 5.000000e-01 : f32
    %763 = vector.broadcast %cst_287 : f32 to vector<8x128xf32>
    %764 = arith.mulf %763, %762 : vector<8x128xf32>
    %765 = vector.extract_strided_slice %753 {offsets = [0, 128], sizes = [8, 128], strides = [1, 1]} : vector<8x384xf32> to vector<8x128xf32>
    %766 = vector.extract_strided_slice %752 {offsets = [0, 128], sizes = [8, 128], strides = [1, 1]} : vector<8x768xf32> to vector<8x128xf32>
    %767 = arith.addf %765, %766 : vector<8x128xf32>
    %cst_288 = arith.constant 5.000000e-01 : f32
    %768 = vector.broadcast %cst_288 : f32 to vector<8x128xf32>
    %769 = arith.mulf %768, %767 : vector<8x128xf32>
    %770 = math.tanh %769 : vector<8x128xf32>
    %cst_289 = arith.constant 1.000000e+00 : f32
    %771 = vector.broadcast %cst_289 : f32 to vector<8x128xf32>
    %772 = arith.addf %770, %771 : vector<8x128xf32>
    %cst_290 = arith.constant 5.000000e-01 : f32
    %773 = vector.broadcast %cst_290 : f32 to vector<8x128xf32>
    %774 = arith.mulf %773, %772 : vector<8x128xf32>
    %775 = vector.extract_strided_slice %753 {offsets = [0, 256], sizes = [8, 128], strides = [1, 1]} : vector<8x384xf32> to vector<8x128xf32>
    %776 = vector.extract_strided_slice %752 {offsets = [0, 256], sizes = [8, 128], strides = [1, 1]} : vector<8x768xf32> to vector<8x128xf32>
    %777 = arith.mulf %764, %776 : vector<8x128xf32>
    %778 = arith.addf %775, %777 : vector<8x128xf32>
    %779 = math.tanh %778 : vector<8x128xf32>
    %cst_291 = arith.constant 1.000000e+00 : f32
    %780 = vector.broadcast %cst_291 : f32 to vector<8x128xf32>
    %781 = arith.subf %780, %774 : vector<8x128xf32>
    %782 = arith.mulf %781, %779 : vector<8x128xf32>
    %783 = arith.mulf %774, %715 : vector<8x128xf32>
    %784 = arith.addf %782, %783 : vector<8x128xf32>
    %785 = vector.extract_strided_slice %754 {offsets = [0, 0], sizes = [8, 128], strides = [1, 1]} : vector<8x384xf32> to vector<8x128xf32>
    %786 = vector.extract_strided_slice %752 {offsets = [0, 384], sizes = [8, 128], strides = [1, 1]} : vector<8x768xf32> to vector<8x128xf32>
    %787 = arith.addf %785, %786 : vector<8x128xf32>
    %cst_292 = arith.constant 5.000000e-01 : f32
    %788 = vector.broadcast %cst_292 : f32 to vector<8x128xf32>
    %789 = arith.mulf %788, %787 : vector<8x128xf32>
    %790 = math.tanh %789 : vector<8x128xf32>
    %cst_293 = arith.constant 1.000000e+00 : f32
    %791 = vector.broadcast %cst_293 : f32 to vector<8x128xf32>
    %792 = arith.addf %790, %791 : vector<8x128xf32>
    %cst_294 = arith.constant 5.000000e-01 : f32
    %793 = vector.broadcast %cst_294 : f32 to vector<8x128xf32>
    %794 = arith.mulf %793, %792 : vector<8x128xf32>
    %795 = vector.extract_strided_slice %754 {offsets = [0, 128], sizes = [8, 128], strides = [1, 1]} : vector<8x384xf32> to vector<8x128xf32>
    %796 = vector.extract_strided_slice %752 {offsets = [0, 512], sizes = [8, 128], strides = [1, 1]} : vector<8x768xf32> to vector<8x128xf32>
    %797 = arith.addf %795, %796 : vector<8x128xf32>
    %cst_295 = arith.constant 5.000000e-01 : f32
    %798 = vector.broadcast %cst_295 : f32 to vector<8x128xf32>
    %799 = arith.mulf %798, %797 : vector<8x128xf32>
    %800 = math.tanh %799 : vector<8x128xf32>
    %cst_296 = arith.constant 1.000000e+00 : f32
    %801 = vector.broadcast %cst_296 : f32 to vector<8x128xf32>
    %802 = arith.addf %800, %801 : vector<8x128xf32>
    %cst_297 = arith.constant 5.000000e-01 : f32
    %803 = vector.broadcast %cst_297 : f32 to vector<8x128xf32>
    %804 = arith.mulf %803, %802 : vector<8x128xf32>
    %805 = vector.extract_strided_slice %754 {offsets = [0, 256], sizes = [8, 128], strides = [1, 1]} : vector<8x384xf32> to vector<8x128xf32>
    %806 = vector.extract_strided_slice %752 {offsets = [0, 640], sizes = [8, 128], strides = [1, 1]} : vector<8x768xf32> to vector<8x128xf32>
    %807 = arith.mulf %794, %806 : vector<8x128xf32>
    %808 = arith.addf %805, %807 : vector<8x128xf32>
    %809 = math.tanh %808 : vector<8x128xf32>
    %cst_298 = arith.constant 1.000000e+00 : f32
    %810 = vector.broadcast %cst_298 : f32 to vector<8x128xf32>
    %811 = arith.subf %810, %804 : vector<8x128xf32>
    %812 = arith.mulf %811, %809 : vector<8x128xf32>
    %813 = arith.mulf %804, %745 : vector<8x128xf32>
    %814 = arith.addf %812, %813 : vector<8x128xf32>
    %c16_299 = arith.constant 16 : index
    %c0_300 = arith.constant 0 : index
    %815 = vector.load %arg17[%c16_299, %c0_300] : memref<64x256xf32, #tpu.memory_space<vmem>>, vector<8x128xf32>
    tpu.vector_store %arg17[%c16_299, %c0_300], %784 {strides = array<i32>} : memref<64x256xf32, #tpu.memory_space<vmem>>, vector<8x128xf32>,
    %c40_301 = arith.constant 40 : index
    %c128_302 = arith.constant 128 : index
    %816 = vector.load %arg17[%c40_301, %c128_302] : memref<64x256xf32, #tpu.memory_space<vmem>>, vector<8x128xf32>
    tpu.vector_store %arg17[%c40_301, %c128_302], %814 {strides = array<i32>} : memref<64x256xf32, #tpu.memory_space<vmem>>, vector<8x128xf32>,
    %817 = tpu.concatenate %784, %814 in 1 : vector<8x128xf32>, vector<8x128xf32> -> vector<8x256xf32>
    %818 = arith.truncf %817 : vector<8x256xf32> to vector<8x256xbf16>
    %cst_303 = arith.constant dense<0.000000e+00> : vector<8x768xf32>
    %819 = tpu.matmul %818, %606, %cst_303 {dimension_numbers = #tpu.dot_dimension_numbers<[1], [0], [0], [1], [0, 0, 1, 1], [], []>} : vector<8x256xbf16>, vector<256x768xbf16>, vector<8x768xf32> -> vector<8x768xf32>
    %820 = vector.broadcast %607 : vector<1x768xf32> to vector<8x768xf32>
    %821 = arith.addf %819, %820 : vector<8x768xf32>
    %c24_304 = arith.constant 24 : index
    %c0_305 = arith.constant 0 : index
    %822 = vector.load %arg16[%c24_304, %c0_305] : memref<64x768xf32, #tpu.memory_space<vmem>>, vector<8x384xf32>
    %c32_306 = arith.constant 32 : index
    %c384_307 = arith.constant 384 : index
    %823 = vector.load %arg16[%c32_306, %c384_307] : memref<64x768xf32, #tpu.memory_space<vmem>>, vector<8x384xf32>
    %824 = vector.extract_strided_slice %822 {offsets = [0, 0], sizes = [8, 128], strides = [1, 1]} : vector<8x384xf32> to vector<8x128xf32>
    %825 = vector.extract_strided_slice %821 {offsets = [0, 0], sizes = [8, 128], strides = [1, 1]} : vector<8x768xf32> to vector<8x128xf32>
    %826 = arith.addf %824, %825 : vector<8x128xf32>
    %cst_308 = arith.constant 5.000000e-01 : f32
    %827 = vector.broadcast %cst_308 : f32 to vector<8x128xf32>
    %828 = arith.mulf %827, %826 : vector<8x128xf32>
    %829 = math.tanh %828 : vector<8x128xf32>
    %cst_309 = arith.constant 1.000000e+00 : f32
    %830 = vector.broadcast %cst_309 : f32 to vector<8x128xf32>
    %831 = arith.addf %829, %830 : vector<8x128xf32>
    %cst_310 = arith.constant 5.000000e-01 : f32
    %832 = vector.broadcast %cst_310 : f32 to vector<8x128xf32>
    %833 = arith.mulf %832, %831 : vector<8x128xf32>
    %834 = vector.extract_strided_slice %822 {offsets = [0, 128], sizes = [8, 128], strides = [1, 1]} : vector<8x384xf32> to vector<8x128xf32>
    %835 = vector.extract_strided_slice %821 {offsets = [0, 128], sizes = [8, 128], strides = [1, 1]} : vector<8x768xf32> to vector<8x128xf32>
    %836 = arith.addf %834, %835 : vector<8x128xf32>
    %cst_311 = arith.constant 5.000000e-01 : f32
    %837 = vector.broadcast %cst_311 : f32 to vector<8x128xf32>
    %838 = arith.mulf %837, %836 : vector<8x128xf32>
    %839 = math.tanh %838 : vector<8x128xf32>
    %cst_312 = arith.constant 1.000000e+00 : f32
    %840 = vector.broadcast %cst_312 : f32 to vector<8x128xf32>
    %841 = arith.addf %839, %840 : vector<8x128xf32>
    %cst_313 = arith.constant 5.000000e-01 : f32
    %842 = vector.broadcast %cst_313 : f32 to vector<8x128xf32>
    %843 = arith.mulf %842, %841 : vector<8x128xf32>
    %844 = vector.extract_strided_slice %822 {offsets = [0, 256], sizes = [8, 128], strides = [1, 1]} : vector<8x384xf32> to vector<8x128xf32>
    %845 = vector.extract_strided_slice %821 {offsets = [0, 256], sizes = [8, 128], strides = [1, 1]} : vector<8x768xf32> to vector<8x128xf32>
    %846 = arith.mulf %833, %845 : vector<8x128xf32>
    %847 = arith.addf %844, %846 : vector<8x128xf32>
    %848 = math.tanh %847 : vector<8x128xf32>
    %cst_314 = arith.constant 1.000000e+00 : f32
    %849 = vector.broadcast %cst_314 : f32 to vector<8x128xf32>
    %850 = arith.subf %849, %843 : vector<8x128xf32>
    %851 = arith.mulf %850, %848 : vector<8x128xf32>
    %852 = arith.mulf %843, %784 : vector<8x128xf32>
    %853 = arith.addf %851, %852 : vector<8x128xf32>
    %854 = vector.extract_strided_slice %823 {offsets = [0, 0], sizes = [8, 128], strides = [1, 1]} : vector<8x384xf32> to vector<8x128xf32>
    %855 = vector.extract_strided_slice %821 {offsets = [0, 384], sizes = [8, 128], strides = [1, 1]} : vector<8x768xf32> to vector<8x128xf32>
    %856 = arith.addf %854, %855 : vector<8x128xf32>
    %cst_315 = arith.constant 5.000000e-01 : f32
    %857 = vector.broadcast %cst_315 : f32 to vector<8x128xf32>
    %858 = arith.mulf %857, %856 : vector<8x128xf32>
    %859 = math.tanh %858 : vector<8x128xf32>
    %cst_316 = arith.constant 1.000000e+00 : f32
    %860 = vector.broadcast %cst_316 : f32 to vector<8x128xf32>
    %861 = arith.addf %859, %860 : vector<8x128xf32>
    %cst_317 = arith.constant 5.000000e-01 : f32
    %862 = vector.broadcast %cst_317 : f32 to vector<8x128xf32>
    %863 = arith.mulf %862, %861 : vector<8x128xf32>
    %864 = vector.extract_strided_slice %823 {offsets = [0, 128], sizes = [8, 128], strides = [1, 1]} : vector<8x384xf32> to vector<8x128xf32>
    %865 = vector.extract_strided_slice %821 {offsets = [0, 512], sizes = [8, 128], strides = [1, 1]} : vector<8x768xf32> to vector<8x128xf32>
    %866 = arith.addf %864, %865 : vector<8x128xf32>
    %cst_318 = arith.constant 5.000000e-01 : f32
    %867 = vector.broadcast %cst_318 : f32 to vector<8x128xf32>
    %868 = arith.mulf %867, %866 : vector<8x128xf32>
    %869 = math.tanh %868 : vector<8x128xf32>
    %cst_319 = arith.constant 1.000000e+00 : f32
    %870 = vector.broadcast %cst_319 : f32 to vector<8x128xf32>
    %871 = arith.addf %869, %870 : vector<8x128xf32>
    %cst_320 = arith.constant 5.000000e-01 : f32
    %872 = vector.broadcast %cst_320 : f32 to vector<8x128xf32>
    %873 = arith.mulf %872, %871 : vector<8x128xf32>
    %874 = vector.extract_strided_slice %823 {offsets = [0, 256], sizes = [8, 128], strides = [1, 1]} : vector<8x384xf32> to vector<8x128xf32>
    %875 = vector.extract_strided_slice %821 {offsets = [0, 640], sizes = [8, 128], strides = [1, 1]} : vector<8x768xf32> to vector<8x128xf32>
    %876 = arith.mulf %863, %875 : vector<8x128xf32>
    %877 = arith.addf %874, %876 : vector<8x128xf32>
    %878 = math.tanh %877 : vector<8x128xf32>
    %cst_321 = arith.constant 1.000000e+00 : f32
    %879 = vector.broadcast %cst_321 : f32 to vector<8x128xf32>
    %880 = arith.subf %879, %873 : vector<8x128xf32>
    %881 = arith.mulf %880, %878 : vector<8x128xf32>
    %882 = arith.mulf %873, %814 : vector<8x128xf32>
    %883 = arith.addf %881, %882 : vector<8x128xf32>
    %c24_322 = arith.constant 24 : index
    %c0_323 = arith.constant 0 : index
    %884 = vector.load %arg17[%c24_322, %c0_323] : memref<64x256xf32, #tpu.memory_space<vmem>>, vector<8x128xf32>
    tpu.vector_store %arg17[%c24_322, %c0_323], %853 {strides = array<i32>} : memref<64x256xf32, #tpu.memory_space<vmem>>, vector<8x128xf32>,
    %c32_324 = arith.constant 32 : index
    %c128_325 = arith.constant 128 : index
    %885 = vector.load %arg17[%c32_324, %c128_325] : memref<64x256xf32, #tpu.memory_space<vmem>>, vector<8x128xf32>
    tpu.vector_store %arg17[%c32_324, %c128_325], %883 {strides = array<i32>} : memref<64x256xf32, #tpu.memory_space<vmem>>, vector<8x128xf32>,
    %886 = tpu.concatenate %853, %883 in 1 : vector<8x128xf32>, vector<8x128xf32> -> vector<8x256xf32>
    %887 = arith.truncf %886 : vector<8x256xf32> to vector<8x256xbf16>
    %cst_326 = arith.constant dense<0.000000e+00> : vector<8x768xf32>
    %888 = tpu.matmul %887, %606, %cst_326 {dimension_numbers = #tpu.dot_dimension_numbers<[1], [0], [0], [1], [0, 0, 1, 1], [], []>} : vector<8x256xbf16>, vector<256x768xbf16>, vector<8x768xf32> -> vector<8x768xf32>
    %889 = vector.broadcast %607 : vector<1x768xf32> to vector<8x768xf32>
    %890 = arith.addf %888, %889 : vector<8x768xf32>
    %c32_327 = arith.constant 32 : index
    %c0_328 = arith.constant 0 : index
    %891 = vector.load %arg16[%c32_327, %c0_328] : memref<64x768xf32, #tpu.memory_space<vmem>>, vector<8x384xf32>
    %c24_329 = arith.constant 24 : index
    %c384_330 = arith.constant 384 : index
    %892 = vector.load %arg16[%c24_329, %c384_330] : memref<64x768xf32, #tpu.memory_space<vmem>>, vector<8x384xf32>
    %893 = vector.extract_strided_slice %891 {offsets = [0, 0], sizes = [8, 128], strides = [1, 1]} : vector<8x384xf32> to vector<8x128xf32>
    %894 = vector.extract_strided_slice %890 {offsets = [0, 0], sizes = [8, 128], strides = [1, 1]} : vector<8x768xf32> to vector<8x128xf32>
    %895 = arith.addf %893, %894 : vector<8x128xf32>
    %cst_331 = arith.constant 5.000000e-01 : f32
    %896 = vector.broadcast %cst_331 : f32 to vector<8x128xf32>
    %897 = arith.mulf %896, %895 : vector<8x128xf32>
    %898 = math.tanh %897 : vector<8x128xf32>
    %cst_332 = arith.constant 1.000000e+00 : f32
    %899 = vector.broadcast %cst_332 : f32 to vector<8x128xf32>
    %900 = arith.addf %898, %899 : vector<8x128xf32>
    %cst_333 = arith.constant 5.000000e-01 : f32
    %901 = vector.broadcast %cst_333 : f32 to vector<8x128xf32>
    %902 = arith.mulf %901, %900 : vector<8x128xf32>
    %903 = vector.extract_strided_slice %891 {offsets = [0, 128], sizes = [8, 128], strides = [1, 1]} : vector<8x384xf32> to vector<8x128xf32>
    %904 = vector.extract_strided_slice %890 {offsets = [0, 128], sizes = [8, 128], strides = [1, 1]} : vector<8x768xf32> to vector<8x128xf32>
    %905 = arith.addf %903, %904 : vector<8x128xf32>
    %cst_334 = arith.constant 5.000000e-01 : f32
    %906 = vector.broadcast %cst_334 : f32 to vector<8x128xf32>
    %907 = arith.mulf %906, %905 : vector<8x128xf32>
    %908 = math.tanh %907 : vector<8x128xf32>
    %cst_335 = arith.constant 1.000000e+00 : f32
    %909 = vector.broadcast %cst_335 : f32 to vector<8x128xf32>
    %910 = arith.addf %908, %909 : vector<8x128xf32>
    %cst_336 = arith.constant 5.000000e-01 : f32
    %911 = vector.broadcast %cst_336 : f32 to vector<8x128xf32>
    %912 = arith.mulf %911, %910 : vector<8x128xf32>
    %913 = vector.extract_strided_slice %891 {offsets = [0, 256], sizes = [8, 128], strides = [1, 1]} : vector<8x384xf32> to vector<8x128xf32>
    %914 = vector.extract_strided_slice %890 {offsets = [0, 256], sizes = [8, 128], strides = [1, 1]} : vector<8x768xf32> to vector<8x128xf32>
    %915 = arith.mulf %902, %914 : vector<8x128xf32>
    %916 = arith.addf %913, %915 : vector<8x128xf32>
    %917 = math.tanh %916 : vector<8x128xf32>
    %cst_337 = arith.constant 1.000000e+00 : f32
    %918 = vector.broadcast %cst_337 : f32 to vector<8x128xf32>
    %919 = arith.subf %918, %912 : vector<8x128xf32>
    %920 = arith.mulf %919, %917 : vector<8x128xf32>
    %921 = arith.mulf %912, %853 : vector<8x128xf32>
    %922 = arith.addf %920, %921 : vector<8x128xf32>
    %923 = vector.extract_strided_slice %892 {offsets = [0, 0], sizes = [8, 128], strides = [1, 1]} : vector<8x384xf32> to vector<8x128xf32>
    %924 = vector.extract_strided_slice %890 {offsets = [0, 384], sizes = [8, 128], strides = [1, 1]} : vector<8x768xf32> to vector<8x128xf32>
    %925 = arith.addf %923, %924 : vector<8x128xf32>
    %cst_338 = arith.constant 5.000000e-01 : f32
    %926 = vector.broadcast %cst_338 : f32 to vector<8x128xf32>
    %927 = arith.mulf %926, %925 : vector<8x128xf32>
    %928 = math.tanh %927 : vector<8x128xf32>
    %cst_339 = arith.constant 1.000000e+00 : f32
    %929 = vector.broadcast %cst_339 : f32 to vector<8x128xf32>
    %930 = arith.addf %928, %929 : vector<8x128xf32>
    %cst_340 = arith.constant 5.000000e-01 : f32
    %931 = vector.broadcast %cst_340 : f32 to vector<8x128xf32>
    %932 = arith.mulf %931, %930 : vector<8x128xf32>
    %933 = vector.extract_strided_slice %892 {offsets = [0, 128], sizes = [8, 128], strides = [1, 1]} : vector<8x384xf32> to vector<8x128xf32>
    %934 = vector.extract_strided_slice %890 {offsets = [0, 512], sizes = [8, 128], strides = [1, 1]} : vector<8x768xf32> to vector<8x128xf32>
    %935 = arith.addf %933, %934 : vector<8x128xf32>
    %cst_341 = arith.constant 5.000000e-01 : f32
    %936 = vector.broadcast %cst_341 : f32 to vector<8x128xf32>
    %937 = arith.mulf %936, %935 : vector<8x128xf32>
    %938 = math.tanh %937 : vector<8x128xf32>
    %cst_342 = arith.constant 1.000000e+00 : f32
    %939 = vector.broadcast %cst_342 : f32 to vector<8x128xf32>
    %940 = arith.addf %938, %939 : vector<8x128xf32>
    %cst_343 = arith.constant 5.000000e-01 : f32
    %941 = vector.broadcast %cst_343 : f32 to vector<8x128xf32>
    %942 = arith.mulf %941, %940 : vector<8x128xf32>
    %943 = vector.extract_strided_slice %892 {offsets = [0, 256], sizes = [8, 128], strides = [1, 1]} : vector<8x384xf32> to vector<8x128xf32>
    %944 = vector.extract_strided_slice %890 {offsets = [0, 640], sizes = [8, 128], strides = [1, 1]} : vector<8x768xf32> to vector<8x128xf32>
    %945 = arith.mulf %932, %944 : vector<8x128xf32>
    %946 = arith.addf %943, %945 : vector<8x128xf32>
    %947 = math.tanh %946 : vector<8x128xf32>
    %cst_344 = arith.constant 1.000000e+00 : f32
    %948 = vector.broadcast %cst_344 : f32 to vector<8x128xf32>
    %949 = arith.subf %948, %942 : vector<8x128xf32>
    %950 = arith.mulf %949, %947 : vector<8x128xf32>
    %951 = arith.mulf %942, %883 : vector<8x128xf32>
    %952 = arith.addf %950, %951 : vector<8x128xf32>
    %c32_345 = arith.constant 32 : index
    %c0_346 = arith.constant 0 : index
    %953 = vector.load %arg17[%c32_345, %c0_346] : memref<64x256xf32, #tpu.memory_space<vmem>>, vector<8x128xf32>
    tpu.vector_store %arg17[%c32_345, %c0_346], %922 {strides = array<i32>} : memref<64x256xf32, #tpu.memory_space<vmem>>, vector<8x128xf32>,
    %c24_347 = arith.constant 24 : index
    %c128_348 = arith.constant 128 : index
    %954 = vector.load %arg17[%c24_347, %c128_348] : memref<64x256xf32, #tpu.memory_space<vmem>>, vector<8x128xf32>
    tpu.vector_store %arg17[%c24_347, %c128_348], %952 {strides = array<i32>} : memref<64x256xf32, #tpu.memory_space<vmem>>, vector<8x128xf32>,
    %955 = tpu.concatenate %922, %952 in 1 : vector<8x128xf32>, vector<8x128xf32> -> vector<8x256xf32>
    %956 = arith.truncf %955 : vector<8x256xf32> to vector<8x256xbf16>
    %cst_349 = arith.constant dense<0.000000e+00> : vector<8x768xf32>
    %957 = tpu.matmul %956, %606, %cst_349 {dimension_numbers = #tpu.dot_dimension_numbers<[1], [0], [0], [1], [0, 0, 1, 1], [], []>} : vector<8x256xbf16>, vector<256x768xbf16>, vector<8x768xf32> -> vector<8x768xf32>
    %958 = vector.broadcast %607 : vector<1x768xf32> to vector<8x768xf32>
    %959 = arith.addf %957, %958 : vector<8x768xf32>
    %c40_350 = arith.constant 40 : index
    %c0_351 = arith.constant 0 : index
    %960 = vector.load %arg16[%c40_350, %c0_351] : memref<64x768xf32, #tpu.memory_space<vmem>>, vector<8x384xf32>
    %c16_352 = arith.constant 16 : index
    %c384_353 = arith.constant 384 : index
    %961 = vector.load %arg16[%c16_352, %c384_353] : memref<64x768xf32, #tpu.memory_space<vmem>>, vector<8x384xf32>
    %962 = vector.extract_strided_slice %960 {offsets = [0, 0], sizes = [8, 128], strides = [1, 1]} : vector<8x384xf32> to vector<8x128xf32>
    %963 = vector.extract_strided_slice %959 {offsets = [0, 0], sizes = [8, 128], strides = [1, 1]} : vector<8x768xf32> to vector<8x128xf32>
    %964 = arith.addf %962, %963 : vector<8x128xf32>
    %cst_354 = arith.constant 5.000000e-01 : f32
    %965 = vector.broadcast %cst_354 : f32 to vector<8x128xf32>
    %966 = arith.mulf %965, %964 : vector<8x128xf32>
    %967 = math.tanh %966 : vector<8x128xf32>
    %cst_355 = arith.constant 1.000000e+00 : f32
    %968 = vector.broadcast %cst_355 : f32 to vector<8x128xf32>
    %969 = arith.addf %967, %968 : vector<8x128xf32>
    %cst_356 = arith.constant 5.000000e-01 : f32
    %970 = vector.broadcast %cst_356 : f32 to vector<8x128xf32>
    %971 = arith.mulf %970, %969 : vector<8x128xf32>
    %972 = vector.extract_strided_slice %960 {offsets = [0, 128], sizes = [8, 128], strides = [1, 1]} : vector<8x384xf32> to vector<8x128xf32>
    %973 = vector.extract_strided_slice %959 {offsets = [0, 128], sizes = [8, 128], strides = [1, 1]} : vector<8x768xf32> to vector<8x128xf32>
    %974 = arith.addf %972, %973 : vector<8x128xf32>
    %cst_357 = arith.constant 5.000000e-01 : f32
    %975 = vector.broadcast %cst_357 : f32 to vector<8x128xf32>
    %976 = arith.mulf %975, %974 : vector<8x128xf32>
    %977 = math.tanh %976 : vector<8x128xf32>
    %cst_358 = arith.constant 1.000000e+00 : f32
    %978 = vector.broadcast %cst_358 : f32 to vector<8x128xf32>
    %979 = arith.addf %977, %978 : vector<8x128xf32>
    %cst_359 = arith.constant 5.000000e-01 : f32
    %980 = vector.broadcast %cst_359 : f32 to vector<8x128xf32>
    %981 = arith.mulf %980, %979 : vector<8x128xf32>
    %982 = vector.extract_strided_slice %960 {offsets = [0, 256], sizes = [8, 128], strides = [1, 1]} : vector<8x384xf32> to vector<8x128xf32>
    %983 = vector.extract_strided_slice %959 {offsets = [0, 256], sizes = [8, 128], strides = [1, 1]} : vector<8x768xf32> to vector<8x128xf32>
    %984 = arith.mulf %971, %983 : vector<8x128xf32>
    %985 = arith.addf %982, %984 : vector<8x128xf32>
    %986 = math.tanh %985 : vector<8x128xf32>
    %cst_360 = arith.constant 1.000000e+00 : f32
    %987 = vector.broadcast %cst_360 : f32 to vector<8x128xf32>
    %988 = arith.subf %987, %981 : vector<8x128xf32>
    %989 = arith.mulf %988, %986 : vector<8x128xf32>
    %990 = arith.mulf %981, %922 : vector<8x128xf32>
    %991 = arith.addf %989, %990 : vector<8x128xf32>
    %992 = vector.extract_strided_slice %961 {offsets = [0, 0], sizes = [8, 128], strides = [1, 1]} : vector<8x384xf32> to vector<8x128xf32>
    %993 = vector.extract_strided_slice %959 {offsets = [0, 384], sizes = [8, 128], strides = [1, 1]} : vector<8x768xf32> to vector<8x128xf32>
    %994 = arith.addf %992, %993 : vector<8x128xf32>
    %cst_361 = arith.constant 5.000000e-01 : f32
    %995 = vector.broadcast %cst_361 : f32 to vector<8x128xf32>
    %996 = arith.mulf %995, %994 : vector<8x128xf32>
    %997 = math.tanh %996 : vector<8x128xf32>
    %cst_362 = arith.constant 1.000000e+00 : f32
    %998 = vector.broadcast %cst_362 : f32 to vector<8x128xf32>
    %999 = arith.addf %997, %998 : vector<8x128xf32>
    %cst_363 = arith.constant 5.000000e-01 : f32
    %1000 = vector.broadcast %cst_363 : f32 to vector<8x128xf32>
    %1001 = arith.mulf %1000, %999 : vector<8x128xf32>
    %1002 = vector.extract_strided_slice %961 {offsets = [0, 128], sizes = [8, 128], strides = [1, 1]} : vector<8x384xf32> to vector<8x128xf32>
    %1003 = vector.extract_strided_slice %959 {offsets = [0, 512], sizes = [8, 128], strides = [1, 1]} : vector<8x768xf32> to vector<8x128xf32>
    %1004 = arith.addf %1002, %1003 : vector<8x128xf32>
    %cst_364 = arith.constant 5.000000e-01 : f32
    %1005 = vector.broadcast %cst_364 : f32 to vector<8x128xf32>
    %1006 = arith.mulf %1005, %1004 : vector<8x128xf32>
    %1007 = math.tanh %1006 : vector<8x128xf32>
    %cst_365 = arith.constant 1.000000e+00 : f32
    %1008 = vector.broadcast %cst_365 : f32 to vector<8x128xf32>
    %1009 = arith.addf %1007, %1008 : vector<8x128xf32>
    %cst_366 = arith.constant 5.000000e-01 : f32
    %1010 = vector.broadcast %cst_366 : f32 to vector<8x128xf32>
    %1011 = arith.mulf %1010, %1009 : vector<8x128xf32>
    %1012 = vector.extract_strided_slice %961 {offsets = [0, 256], sizes = [8, 128], strides = [1, 1]} : vector<8x384xf32> to vector<8x128xf32>
    %1013 = vector.extract_strided_slice %959 {offsets = [0, 640], sizes = [8, 128], strides = [1, 1]} : vector<8x768xf32> to vector<8x128xf32>
    %1014 = arith.mulf %1001, %1013 : vector<8x128xf32>
    %1015 = arith.addf %1012, %1014 : vector<8x128xf32>
    %1016 = math.tanh %1015 : vector<8x128xf32>
    %cst_367 = arith.constant 1.000000e+00 : f32
    %1017 = vector.broadcast %cst_367 : f32 to vector<8x128xf32>
    %1018 = arith.subf %1017, %1011 : vector<8x128xf32>
    %1019 = arith.mulf %1018, %1016 : vector<8x128xf32>
    %1020 = arith.mulf %1011, %952 : vector<8x128xf32>
    %1021 = arith.addf %1019, %1020 : vector<8x128xf32>
    %c40_368 = arith.constant 40 : index
    %c0_369 = arith.constant 0 : index
    %1022 = vector.load %arg17[%c40_368, %c0_369] : memref<64x256xf32, #tpu.memory_space<vmem>>, vector<8x128xf32>
    tpu.vector_store %arg17[%c40_368, %c0_369], %991 {strides = array<i32>} : memref<64x256xf32, #tpu.memory_space<vmem>>, vector<8x128xf32>,
    %c16_370 = arith.constant 16 : index
    %c128_371 = arith.constant 128 : index
    %1023 = vector.load %arg17[%c16_370, %c128_371] : memref<64x256xf32, #tpu.memory_space<vmem>>, vector<8x128xf32>
    tpu.vector_store %arg17[%c16_370, %c128_371], %1021 {strides = array<i32>} : memref<64x256xf32, #tpu.memory_space<vmem>>, vector<8x128xf32>,
    %1024 = tpu.concatenate %991, %1021 in 1 : vector<8x128xf32>, vector<8x128xf32> -> vector<8x256xf32>
    %1025 = arith.truncf %1024 : vector<8x256xf32> to vector<8x256xbf16>
    %cst_372 = arith.constant dense<0.000000e+00> : vector<8x768xf32>
    %1026 = tpu.matmul %1025, %606, %cst_372 {dimension_numbers = #tpu.dot_dimension_numbers<[1], [0], [0], [1], [0, 0, 1, 1], [], []>} : vector<8x256xbf16>, vector<256x768xbf16>, vector<8x768xf32> -> vector<8x768xf32>
    %1027 = vector.broadcast %607 : vector<1x768xf32> to vector<8x768xf32>
    %1028 = arith.addf %1026, %1027 : vector<8x768xf32>
    %c48_373 = arith.constant 48 : index
    %c0_374 = arith.constant 0 : index
    %1029 = vector.load %arg16[%c48_373, %c0_374] : memref<64x768xf32, #tpu.memory_space<vmem>>, vector<8x384xf32>
    %c8_375 = arith.constant 8 : index
    %c384_376 = arith.constant 384 : index
    %1030 = vector.load %arg16[%c8_375, %c384_376] : memref<64x768xf32, #tpu.memory_space<vmem>>, vector<8x384xf32>
    %1031 = vector.extract_strided_slice %1029 {offsets = [0, 0], sizes = [8, 128], strides = [1, 1]} : vector<8x384xf32> to vector<8x128xf32>
    %1032 = vector.extract_strided_slice %1028 {offsets = [0, 0], sizes = [8, 128], strides = [1, 1]} : vector<8x768xf32> to vector<8x128xf32>
    %1033 = arith.addf %1031, %1032 : vector<8x128xf32>
    %cst_377 = arith.constant 5.000000e-01 : f32
    %1034 = vector.broadcast %cst_377 : f32 to vector<8x128xf32>
    %1035 = arith.mulf %1034, %1033 : vector<8x128xf32>
    %1036 = math.tanh %1035 : vector<8x128xf32>
    %cst_378 = arith.constant 1.000000e+00 : f32
    %1037 = vector.broadcast %cst_378 : f32 to vector<8x128xf32>
    %1038 = arith.addf %1036, %1037 : vector<8x128xf32>
    %cst_379 = arith.constant 5.000000e-01 : f32
    %1039 = vector.broadcast %cst_379 : f32 to vector<8x128xf32>
    %1040 = arith.mulf %1039, %1038 : vector<8x128xf32>
    %1041 = vector.extract_strided_slice %1029 {offsets = [0, 128], sizes = [8, 128], strides = [1, 1]} : vector<8x384xf32> to vector<8x128xf32>
    %1042 = vector.extract_strided_slice %1028 {offsets = [0, 128], sizes = [8, 128], strides = [1, 1]} : vector<8x768xf32> to vector<8x128xf32>
    %1043 = arith.addf %1041, %1042 : vector<8x128xf32>
    %cst_380 = arith.constant 5.000000e-01 : f32
    %1044 = vector.broadcast %cst_380 : f32 to vector<8x128xf32>
    %1045 = arith.mulf %1044, %1043 : vector<8x128xf32>
    %1046 = math.tanh %1045 : vector<8x128xf32>
    %cst_381 = arith.constant 1.000000e+00 : f32
    %1047 = vector.broadcast %cst_381 : f32 to vector<8x128xf32>
    %1048 = arith.addf %1046, %1047 : vector<8x128xf32>
    %cst_382 = arith.constant 5.000000e-01 : f32
    %1049 = vector.broadcast %cst_382 : f32 to vector<8x128xf32>
    %1050 = arith.mulf %1049, %1048 : vector<8x128xf32>
    %1051 = vector.extract_strided_slice %1029 {offsets = [0, 256], sizes = [8, 128], strides = [1, 1]} : vector<8x384xf32> to vector<8x128xf32>
    %1052 = vector.extract_strided_slice %1028 {offsets = [0, 256], sizes = [8, 128], strides = [1, 1]} : vector<8x768xf32> to vector<8x128xf32>
    %1053 = arith.mulf %1040, %1052 : vector<8x128xf32>
    %1054 = arith.addf %1051, %1053 : vector<8x128xf32>
    %1055 = math.tanh %1054 : vector<8x128xf32>
    %cst_383 = arith.constant 1.000000e+00 : f32
    %1056 = vector.broadcast %cst_383 : f32 to vector<8x128xf32>
    %1057 = arith.subf %1056, %1050 : vector<8x128xf32>
    %1058 = arith.mulf %1057, %1055 : vector<8x128xf32>
    %1059 = arith.mulf %1050, %991 : vector<8x128xf32>
    %1060 = arith.addf %1058, %1059 : vector<8x128xf32>
    %1061 = vector.extract_strided_slice %1030 {offsets = [0, 0], sizes = [8, 128], strides = [1, 1]} : vector<8x384xf32> to vector<8x128xf32>
    %1062 = vector.extract_strided_slice %1028 {offsets = [0, 384], sizes = [8, 128], strides = [1, 1]} : vector<8x768xf32> to vector<8x128xf32>
    %1063 = arith.addf %1061, %1062 : vector<8x128xf32>
    %cst_384 = arith.constant 5.000000e-01 : f32
    %1064 = vector.broadcast %cst_384 : f32 to vector<8x128xf32>
    %1065 = arith.mulf %1064, %1063 : vector<8x128xf32>
    %1066 = math.tanh %1065 : vector<8x128xf32>
    %cst_385 = arith.constant 1.000000e+00 : f32
    %1067 = vector.broadcast %cst_385 : f32 to vector<8x128xf32>
    %1068 = arith.addf %1066, %1067 : vector<8x128xf32>
    %cst_386 = arith.constant 5.000000e-01 : f32
    %1069 = vector.broadcast %cst_386 : f32 to vector<8x128xf32>
    %1070 = arith.mulf %1069, %1068 : vector<8x128xf32>
    %1071 = vector.extract_strided_slice %1030 {offsets = [0, 128], sizes = [8, 128], strides = [1, 1]} : vector<8x384xf32> to vector<8x128xf32>
    %1072 = vector.extract_strided_slice %1028 {offsets = [0, 512], sizes = [8, 128], strides = [1, 1]} : vector<8x768xf32> to vector<8x128xf32>
    %1073 = arith.addf %1071, %1072 : vector<8x128xf32>
    %cst_387 = arith.constant 5.000000e-01 : f32
    %1074 = vector.broadcast %cst_387 : f32 to vector<8x128xf32>
    %1075 = arith.mulf %1074, %1073 : vector<8x128xf32>
    %1076 = math.tanh %1075 : vector<8x128xf32>
    %cst_388 = arith.constant 1.000000e+00 : f32
    %1077 = vector.broadcast %cst_388 : f32 to vector<8x128xf32>
    %1078 = arith.addf %1076, %1077 : vector<8x128xf32>
    %cst_389 = arith.constant 5.000000e-01 : f32
    %1079 = vector.broadcast %cst_389 : f32 to vector<8x128xf32>
    %1080 = arith.mulf %1079, %1078 : vector<8x128xf32>
    %1081 = vector.extract_strided_slice %1030 {offsets = [0, 256], sizes = [8, 128], strides = [1, 1]} : vector<8x384xf32> to vector<8x128xf32>
    %1082 = vector.extract_strided_slice %1028 {offsets = [0, 640], sizes = [8, 128], strides = [1, 1]} : vector<8x768xf32> to vector<8x128xf32>
    %1083 = arith.mulf %1070, %1082 : vector<8x128xf32>
    %1084 = arith.addf %1081, %1083 : vector<8x128xf32>
    %1085 = math.tanh %1084 : vector<8x128xf32>
    %cst_390 = arith.constant 1.000000e+00 : f32
    %1086 = vector.broadcast %cst_390 : f32 to vector<8x128xf32>
    %1087 = arith.subf %1086, %1080 : vector<8x128xf32>
    %1088 = arith.mulf %1087, %1085 : vector<8x128xf32>
    %1089 = arith.mulf %1080, %1021 : vector<8x128xf32>
    %1090 = arith.addf %1088, %1089 : vector<8x128xf32>
    %c48_391 = arith.constant 48 : index
    %c0_392 = arith.constant 0 : index
    %1091 = vector.load %arg17[%c48_391, %c0_392] : memref<64x256xf32, #tpu.memory_space<vmem>>, vector<8x128xf32>
    tpu.vector_store %arg17[%c48_391, %c0_392], %1060 {strides = array<i32>} : memref<64x256xf32, #tpu.memory_space<vmem>>, vector<8x128xf32>,
    %c8_393 = arith.constant 8 : index
    %c128_394 = arith.constant 128 : index
    %1092 = vector.load %arg17[%c8_393, %c128_394] : memref<64x256xf32, #tpu.memory_space<vmem>>, vector<8x128xf32>
    tpu.vector_store %arg17[%c8_393, %c128_394], %1090 {strides = array<i32>} : memref<64x256xf32, #tpu.memory_space<vmem>>, vector<8x128xf32>,
    %1093 = tpu.concatenate %1060, %1090 in 1 : vector<8x128xf32>, vector<8x128xf32> -> vector<8x256xf32>
    %1094 = arith.truncf %1093 : vector<8x256xf32> to vector<8x256xbf16>
    %cst_395 = arith.constant dense<0.000000e+00> : vector<8x768xf32>
    %1095 = tpu.matmul %1094, %606, %cst_395 {dimension_numbers = #tpu.dot_dimension_numbers<[1], [0], [0], [1], [0, 0, 1, 1], [], []>} : vector<8x256xbf16>, vector<256x768xbf16>, vector<8x768xf32> -> vector<8x768xf32>
    %1096 = vector.broadcast %607 : vector<1x768xf32> to vector<8x768xf32>
    %1097 = arith.addf %1095, %1096 : vector<8x768xf32>
    %c56_396 = arith.constant 56 : index
    %c0_397 = arith.constant 0 : index
    %1098 = vector.load %arg16[%c56_396, %c0_397] : memref<64x768xf32, #tpu.memory_space<vmem>>, vector<8x384xf32>
    %c0_398 = arith.constant 0 : index
    %c384_399 = arith.constant 384 : index
    %1099 = vector.load %arg16[%c0_398, %c384_399] : memref<64x768xf32, #tpu.memory_space<vmem>>, vector<8x384xf32>
    %1100 = vector.extract_strided_slice %1098 {offsets = [0, 0], sizes = [8, 128], strides = [1, 1]} : vector<8x384xf32> to vector<8x128xf32>
    %1101 = vector.extract_strided_slice %1097 {offsets = [0, 0], sizes = [8, 128], strides = [1, 1]} : vector<8x768xf32> to vector<8x128xf32>
    %1102 = arith.addf %1100, %1101 : vector<8x128xf32>
    %cst_400 = arith.constant 5.000000e-01 : f32
    %1103 = vector.broadcast %cst_400 : f32 to vector<8x128xf32>
    %1104 = arith.mulf %1103, %1102 : vector<8x128xf32>
    %1105 = math.tanh %1104 : vector<8x128xf32>
    %cst_401 = arith.constant 1.000000e+00 : f32
    %1106 = vector.broadcast %cst_401 : f32 to vector<8x128xf32>
    %1107 = arith.addf %1105, %1106 : vector<8x128xf32>
    %cst_402 = arith.constant 5.000000e-01 : f32
    %1108 = vector.broadcast %cst_402 : f32 to vector<8x128xf32>
    %1109 = arith.mulf %1108, %1107 : vector<8x128xf32>
    %1110 = vector.extract_strided_slice %1098 {offsets = [0, 128], sizes = [8, 128], strides = [1, 1]} : vector<8x384xf32> to vector<8x128xf32>
    %1111 = vector.extract_strided_slice %1097 {offsets = [0, 128], sizes = [8, 128], strides = [1, 1]} : vector<8x768xf32> to vector<8x128xf32>
    %1112 = arith.addf %1110, %1111 : vector<8x128xf32>
    %cst_403 = arith.constant 5.000000e-01 : f32
    %1113 = vector.broadcast %cst_403 : f32 to vector<8x128xf32>
    %1114 = arith.mulf %1113, %1112 : vector<8x128xf32>
    %1115 = math.tanh %1114 : vector<8x128xf32>
    %cst_404 = arith.constant 1.000000e+00 : f32
    %1116 = vector.broadcast %cst_404 : f32 to vector<8x128xf32>
    %1117 = arith.addf %1115, %1116 : vector<8x128xf32>
    %cst_405 = arith.constant 5.000000e-01 : f32
    %1118 = vector.broadcast %cst_405 : f32 to vector<8x128xf32>
    %1119 = arith.mulf %1118, %1117 : vector<8x128xf32>
    %1120 = vector.extract_strided_slice %1098 {offsets = [0, 256], sizes = [8, 128], strides = [1, 1]} : vector<8x384xf32> to vector<8x128xf32>
    %1121 = vector.extract_strided_slice %1097 {offsets = [0, 256], sizes = [8, 128], strides = [1, 1]} : vector<8x768xf32> to vector<8x128xf32>
    %1122 = arith.mulf %1109, %1121 : vector<8x128xf32>
    %1123 = arith.addf %1120, %1122 : vector<8x128xf32>
    %1124 = math.tanh %1123 : vector<8x128xf32>
    %cst_406 = arith.constant 1.000000e+00 : f32
    %1125 = vector.broadcast %cst_406 : f32 to vector<8x128xf32>
    %1126 = arith.subf %1125, %1119 : vector<8x128xf32>
    %1127 = arith.mulf %1126, %1124 : vector<8x128xf32>
    %1128 = arith.mulf %1119, %1060 : vector<8x128xf32>
    %1129 = arith.addf %1127, %1128 : vector<8x128xf32>
    %1130 = vector.extract_strided_slice %1099 {offsets = [0, 0], sizes = [8, 128], strides = [1, 1]} : vector<8x384xf32> to vector<8x128xf32>
    %1131 = vector.extract_strided_slice %1097 {offsets = [0, 384], sizes = [8, 128], strides = [1, 1]} : vector<8x768xf32> to vector<8x128xf32>
    %1132 = arith.addf %1130, %1131 : vector<8x128xf32>
    %cst_407 = arith.constant 5.000000e-01 : f32
    %1133 = vector.broadcast %cst_407 : f32 to vector<8x128xf32>
    %1134 = arith.mulf %1133, %1132 : vector<8x128xf32>
    %1135 = math.tanh %1134 : vector<8x128xf32>
    %cst_408 = arith.constant 1.000000e+00 : f32
    %1136 = vector.broadcast %cst_408 : f32 to vector<8x128xf32>
    %1137 = arith.addf %1135, %1136 : vector<8x128xf32>
    %cst_409 = arith.constant 5.000000e-01 : f32
    %1138 = vector.broadcast %cst_409 : f32 to vector<8x128xf32>
    %1139 = arith.mulf %1138, %1137 : vector<8x128xf32>
    %1140 = vector.extract_strided_slice %1099 {offsets = [0, 128], sizes = [8, 128], strides = [1, 1]} : vector<8x384xf32> to vector<8x128xf32>
    %1141 = vector.extract_strided_slice %1097 {offsets = [0, 512], sizes = [8, 128], strides = [1, 1]} : vector<8x768xf32> to vector<8x128xf32>
    %1142 = arith.addf %1140, %1141 : vector<8x128xf32>
    %cst_410 = arith.constant 5.000000e-01 : f32
    %1143 = vector.broadcast %cst_410 : f32 to vector<8x128xf32>
    %1144 = arith.mulf %1143, %1142 : vector<8x128xf32>
    %1145 = math.tanh %1144 : vector<8x128xf32>
    %cst_411 = arith.constant 1.000000e+00 : f32
    %1146 = vector.broadcast %cst_411 : f32 to vector<8x128xf32>
    %1147 = arith.addf %1145, %1146 : vector<8x128xf32>
    %cst_412 = arith.constant 5.000000e-01 : f32
    %1148 = vector.broadcast %cst_412 : f32 to vector<8x128xf32>
    %1149 = arith.mulf %1148, %1147 : vector<8x128xf32>
    %1150 = vector.extract_strided_slice %1099 {offsets = [0, 256], sizes = [8, 128], strides = [1, 1]} : vector<8x384xf32> to vector<8x128xf32>
    %1151 = vector.extract_strided_slice %1097 {offsets = [0, 640], sizes = [8, 128], strides = [1, 1]} : vector<8x768xf32> to vector<8x128xf32>
    %1152 = arith.mulf %1139, %1151 : vector<8x128xf32>
    %1153 = arith.addf %1150, %1152 : vector<8x128xf32>
    %1154 = math.tanh %1153 : vector<8x128xf32>
    %cst_413 = arith.constant 1.000000e+00 : f32
    %1155 = vector.broadcast %cst_413 : f32 to vector<8x128xf32>
    %1156 = arith.subf %1155, %1149 : vector<8x128xf32>
    %1157 = arith.mulf %1156, %1154 : vector<8x128xf32>
    %1158 = arith.mulf %1149, %1090 : vector<8x128xf32>
    %1159 = arith.addf %1157, %1158 : vector<8x128xf32>
    %c56_414 = arith.constant 56 : index
    %c0_415 = arith.constant 0 : index
    %1160 = vector.load %arg17[%c56_414, %c0_415] : memref<64x256xf32, #tpu.memory_space<vmem>>, vector<8x128xf32>
    tpu.vector_store %arg17[%c56_414, %c0_415], %1129 {strides = array<i32>} : memref<64x256xf32, #tpu.memory_space<vmem>>, vector<8x128xf32>,
    %c0_416 = arith.constant 0 : index
    %c128_417 = arith.constant 128 : index
    %1161 = vector.load %arg17[%c0_416, %c128_417] : memref<64x256xf32, #tpu.memory_space<vmem>>, vector<8x128xf32>
    tpu.vector_store %arg17[%c0_416, %c128_417], %1159 {strides = array<i32>} : memref<64x256xf32, #tpu.memory_space<vmem>>, vector<8x128xf32>,
    %c0_418 = arith.constant 0 : index
    %c0_419 = arith.constant 0 : index
    %1162 = vector.load %arg17[%c0_418, %c0_419] : memref<64x256xf32, #tpu.memory_space<vmem>>, vector<64x256xf32>
    %c0_420 = arith.constant 0 : index
    %c0_421 = arith.constant 0 : index
    %1163 = vector.load %arg11[%c0_420, %c0_421] : memref<1x256xf32, #tpu.memory_space<vmem>>, vector<1x256xf32>
    %1164 = vector.broadcast %1163 : vector<1x256xf32> to vector<64x256xf32>
    %1165 = arith.mulf %1162, %1164 : vector<64x256xf32>
    %cst_422 = arith.constant dense<0.000000e+00> : vector<64xf32>
    %1166 = vector.multi_reduction <add>, %1165, %cst_422 [1] : vector<64x256xf32> to vector<64xf32>
    %1167 = vector.shape_cast %1166 : vector<64xf32> to vector<64x1xf32>
    %c0_423 = arith.constant 0 : index
    %c0_424 = arith.constant 0 : index
    %1168 = vector.load %arg12[%c0_423, %c0_424] : memref<1x1xf32, #tpu.memory_space<vmem>>, vector<1x1xf32>
    %1169 = vector.broadcast %1168 : vector<1x1xf32> to vector<64x1xf32>
    %1170 = arith.addf %1167, %1169 : vector<64x1xf32>
    %1171 = vector.extract_strided_slice %1170 {offsets = [0, 0], sizes = [8, 1], strides = [1, 1]} : vector<64x1xf32> to vector<8x1xf32>
    %1172 = vector.extract_strided_slice %1170 {offsets = [8, 0], sizes = [8, 1], strides = [1, 1]} : vector<64x1xf32> to vector<8x1xf32>
    %1173 = vector.extract_strided_slice %1170 {offsets = [16, 0], sizes = [8, 1], strides = [1, 1]} : vector<64x1xf32> to vector<8x1xf32>
    %1174 = vector.extract_strided_slice %1170 {offsets = [24, 0], sizes = [8, 1], strides = [1, 1]} : vector<64x1xf32> to vector<8x1xf32>
    %1175 = vector.extract_strided_slice %1170 {offsets = [32, 0], sizes = [8, 1], strides = [1, 1]} : vector<64x1xf32> to vector<8x1xf32>
    %1176 = vector.extract_strided_slice %1170 {offsets = [40, 0], sizes = [8, 1], strides = [1, 1]} : vector<64x1xf32> to vector<8x1xf32>
    %1177 = vector.extract_strided_slice %1170 {offsets = [48, 0], sizes = [8, 1], strides = [1, 1]} : vector<64x1xf32> to vector<8x1xf32>
    %1178 = vector.extract_strided_slice %1170 {offsets = [56, 0], sizes = [8, 1], strides = [1, 1]} : vector<64x1xf32> to vector<8x1xf32>
    %1179 = tpu.concatenate %1171, %1172, %1173, %1174, %1175, %1176, %1177, %1178 in 1 : vector<8x1xf32>, vector<8x1xf32>, vector<8x1xf32>, vector<8x1xf32>, vector<8x1xf32>, vector<8x1xf32>, vector<8x1xf32>, vector<8x1xf32> -> vector<8x8xf32>
    %1180 = vector.extract_strided_slice %1179 {offsets = [0, 0], sizes = [2, 8], strides = [1, 1]} : vector<8x8xf32> to vector<2x8xf32>
    %c0_425 = arith.constant 0 : index
    %c0_426 = arith.constant 0 : index
    %1181 = vector.load %arg13[%c0_425, %c0_426] : memref<2x8xf32, #tpu.memory_space<vmem>>, vector<2x8xf32>
    tpu.vector_store %arg13[%c0_425, %c0_426], %1180 {strides = array<i32>} : memref<2x8xf32, #tpu.memory_space<vmem>>, vector<2x8xf32>,
    %1182 = vector.extract_strided_slice %1179 {offsets = [0, 0], sizes = [2, 8], strides = [1, 1]} : vector<8x8xf32> to vector<2x8xf32>
    %cst_427 = arith.constant 5.000000e-01 : f32
    %1183 = vector.broadcast %cst_427 : f32 to vector<2x8xf32>
    %1184 = arith.mulf %1183, %1182 : vector<2x8xf32>
    %1185 = math.tanh %1184 : vector<2x8xf32>
    %cst_428 = arith.constant 1.000000e+00 : f32
    %1186 = vector.broadcast %cst_428 : f32 to vector<2x8xf32>
    %1187 = arith.addf %1185, %1186 : vector<2x8xf32>
    %cst_429 = arith.constant 5.000000e-01 : f32
    %1188 = vector.broadcast %cst_429 : f32 to vector<2x8xf32>
    %1189 = arith.mulf %1188, %1187 : vector<2x8xf32>
    %c0_430 = arith.constant 0 : index
    %c0_431 = arith.constant 0 : index
    %1190 = vector.load %arg14[%c0_430, %c0_431] : memref<2x8xf32, #tpu.memory_space<vmem>>, vector<2x8xf32>
    tpu.vector_store %arg14[%c0_430, %c0_431], %1189 {strides = array<i32>} : memref<2x8xf32, #tpu.memory_space<vmem>>, vector<2x8xf32>,
    return
  }
}

</mosaic_0001>

<llo_original>
// kernel: detection_net_forward.1
$region0: #{detection_net_forward.1}
  #allocation0 [shape = 'u32[]', space=smem, size = 0x4, offset = 0x4, fixed_abs, tag = 'smem constant byte address 0x4 - core index']
  #allocation1 [shape = 'u32[144,128]{1,0:T(1,128)}', space=vmem, size = 0x12000, scoped, tag = 'internal scratch']
  #allocation2 [shape = 'f32[64,128]{1,0:T(8,128)}', space=vmem, size = 0x8000, scoped, tag = 'scratch operand']
  #allocation3 [shape = 'f32[64,768]{1,0:T(8,128)}', space=vmem, size = 0x30000, scoped, tag = 'scratch operand']
  #allocation4 [shape = 'f32[64,256]{1,0:T(8,128)}', space=vmem, size = 0x10000, scoped, tag = 'scratch operand']
  #allocation5 [shape = 'f32[1,1]{1,0:T(1,128)S(1)}', space=vmem, size = 0x200, scoped, tag = 'scoped memory for detection_net_forward.1']
  %s0 = inlined_call_operand.vmem [shape: f32[2,64], index: 0, kind: input, shape index: {}]
  %s1 = inlined_call_operand.hbm [shape: f32[64,1024], index: 1, kind: input, shape index: {}]
  %s2 = inlined_call_operand.hbm [shape: f32[1,1024], index: 2, kind: input, shape index: {}]
  %s3 = inlined_call_operand.hbm [shape: f32[128,768], index: 3, kind: input, shape index: {}]
  %s4 = inlined_call_operand.vmem [shape: f32[1,768], index: 4, kind: input, shape index: {}]
  %s5 = inlined_call_operand.hbm [shape: bf16[256,768], index: 5, kind: input, shape index: {}]
  %s6 = inlined_call_operand.hbm [shape: f32[1,768], index: 6, kind: input, shape index: {}]
  %s7 = inlined_call_operand.hbm [shape: f32[256,768], index: 7, kind: input, shape index: {}]
  %s8 = inlined_call_operand.vmem [shape: f32[1,768], index: 8, kind: input, shape index: {}]
  %s9 = inlined_call_operand.hbm [shape: bf16[256,768], index: 9, kind: input, shape index: {}]
  %s10 = inlined_call_operand.hbm [shape: f32[1,768], index: 10, kind: input, shape index: {}]
  %s11 = inlined_call_operand.vmem [shape: f32[1,256], index: 11, kind: input, shape index: {}]
  %s12 = inlined_call_operand.<no memory space> [shape: f32[1,1], index: 12, kind: input, shape index: {}]
  %s13 = inlined_call_operand.hbm [shape: f32[2,8], index: 13, kind: output, shape index: {0}]
  %s14 = inlined_call_operand.hbm [shape: f32[2,8], index: 14, kind: output, shape index: {1}]
  %15 = xla_tuple %s13, %s14
  %s16 = sld [smem:[#allocation0]]
  $region102: #{detection_net_forward.1} parent=0
    _
  %s18 = ssub.s32 1, %s16
  %s19 = scalar_select 0, %s18, %s16
  %v20 = vstv %s12
  %21 = vst [vmem:[#allocation5] sm:$0x1] %v20
  $region1: #{detection_net_forward.1} parent=0
    #allocation6 [shape = 'u8[262144]{0}', space=vmem, size = 0x40000, scoped, tag = 'input window, operand 1, single buffered']
    #allocation7 [shape = 's32[1]{0}', space=sflag, size = 0x4, scoped, tag = 'scoped memory for detection_net_forward.1']
    #allocation8 [shape = 's32[1]{0}', space=sflag, size = 0x4, scoped, tag = 'scoped memory for detection_net_forward.1']
    #allocation9 [shape = 'u8[4096]{0}', space=vmem, size = 0x1000, scoped, tag = 'input window, operand 2, single buffered']
    #allocation10 [shape = 's32[1]{0}', space=sflag, size = 0x4, scoped, tag = 'scoped memory for detection_net_forward.1']
    #allocation11 [shape = 'u8[393216]{0}', space=vmem, size = 0x60000, scoped, tag = 'input window, operand 3, single buffered']
    #allocation12 [shape = 'u8[393216]{0}', space=vmem, size = 0x60000, scoped, tag = 'input window, operand 5, single buffered']
    #allocation13 [shape = 's32[1]{0}', space=sflag, size = 0x4, scoped, tag = 'scoped memory for detection_net_forward.1']
    #allocation14 [shape = 'u8[3072]{0}', space=vmem, size = 0xc00, scoped, tag = 'input window, operand 6, single buffered']
    #allocation15 [shape = 'u8[786432]{0}', space=vmem, size = 0xc0000, scoped, tag = 'input window, operand 7, single buffered']
    #allocation16 [shape = 's32[1]{0}', space=sflag, size = 0x4, scoped, tag = 'scoped memory for detection_net_forward.1']
    #allocation17 [shape = 'u8[393216]{0}', space=vmem, size = 0x60000, scoped, tag = 'input window, operand 9, single buffered']
    #allocation18 [shape = 'u8[3072]{0}', space=vmem, size = 0xc00, scoped, tag = 'input window, operand 10, single buffered']
    #allocation19 [shape = 's32[1]{0}', space=sflag, size = 0x4, scoped, tag = 'scoped memory for detection_net_forward.1']
    #allocation20 [shape = 'u8[1024]{0}', space=vmem, size = 0x400, scoped, tag = 'output window, operand 0, single buffered']
    #allocation21 [shape = 'u8[1024]{0}', space=vmem, size = 0x400, scoped, tag = 'output window, operand 1, single buffered']
    #allocation22 [shape = 's32[1]{0}', space=sflag, size = 0x4, scoped, tag = 'scoped memory for detection_net_forward.1']
    %22 = vsyncpa [#allocation7], 0
    %23 = vsyncpa [#allocation10], 0
    %24 = vsyncpa [#allocation13], 0
    %25 = vsyncpa [#allocation16], 0
    %26 = vsyncpa [#allocation19], 0
    %27 = vsyncpa [#allocation8], 0
    %28 = vsyncpa [#allocation22], 0
    // Predicated region
    $region2: #{detection_net_forward.1} parent=1 // pred_check
      _
    $region3: #{detection_net_forward.1} parent=1 // pred_check_branch
      %30 = sbr.rel (0) target = $region5
    $region4: #{detection_net_forward.1} parent=1 // pred_region
      _
    $region5: #{detection_net_forward.1} parent=1 // pred_fallthru
      _
    // Predicated region
    $region6: #{detection_net_forward.1} parent=1 // pred_check
      _
    $region7: #{detection_net_forward.1} parent=1 // pred_check_branch
      %32 = sbr.rel (0) target = $region9
    $region8: #{detection_net_forward.1} parent=1 // pred_region
      %s34 = ssub.s32 8192, 8192
      %35 = vsyncadd [#allocation7], %s34
      %s36 = sshll.u32 [#allocation6], 4
      %s37 = int_to_ptr.vmem [resolvable:$true] %s36
      %42 = dma.hbm_to_vmem [thread:$0]  %s1, 8192, %s37, [#allocation7], 1024, 1024, 64
    $region9: #{detection_net_forward.1} parent=1 // pred_fallthru
      _
    // Predicated region
    $region10: #{detection_net_forward.1} parent=1 // pred_check
      _
    $region11: #{detection_net_forward.1} parent=1 // pred_check_branch
      %44 = sbr.rel (0) target = $region13
    $region12: #{detection_net_forward.1} parent=1 // pred_region
      %s46 = ssub.s32 128, 128
      %47 = vsyncadd [#allocation10], %s46
      %s49 = sshll.u32 [#allocation9], 4
      %s50 = int_to_ptr.vmem [resolvable:$true] %s49
      %52 = dma.hbm_to_vmem [thread:$0]  %s2, 128, %s50, [#allocation10]
    $region13: #{detection_net_forward.1} parent=1 // pred_fallthru
      _
    // Predicated region
    $region14: #{detection_net_forward.1} parent=1 // pred_check
      _
    $region15: #{detection_net_forward.1} parent=1 // pred_check_branch
      %54 = sbr.rel (0) target = $region17
    $region16: #{detection_net_forward.1} parent=1 // pred_region
      %s56 = ssub.s32 12288, 12288
      %57 = vsyncadd [#allocation10], %s56
      %s58 = sshll.u32 [#allocation11], 4
      %s59 = int_to_ptr.vmem [resolvable:$true] %s58
      %64 = dma.hbm_to_vmem [thread:$0]  %s3, 12288, %s59, [#allocation10], 768, 768, 48
    $region17: #{detection_net_forward.1} parent=1 // pred_fallthru
      _
    // Predicated region
    $region18: #{detection_net_forward.1} parent=1 // pred_check
      _
    $region19: #{detection_net_forward.1} parent=1 // pred_check_branch
      %66 = sbr.rel (0) target = $region21
    $region20: #{detection_net_forward.1} parent=1 // pred_region
      _
    $region21: #{detection_net_forward.1} parent=1 // pred_fallthru
      _
    // Predicated region
    $region22: #{detection_net_forward.1} parent=1 // pred_check
      _
    $region23: #{detection_net_forward.1} parent=1 // pred_check_branch
      %68 = sbr.rel (0) target = $region25
    $region24: #{detection_net_forward.1} parent=1 // pred_region
      %s70 = ssub.s32 12288, 12288
      %71 = vsyncadd [#allocation13], %s70
      %s72 = sshll.u32 [#allocation12], 4
      %s73 = int_to_ptr.vmem [resolvable:$true] %s72
      %78 = dma.hbm_to_vmem [thread:$0]  %s5, 12288, %s73, [#allocation13], 384, 384, 24
    $region25: #{detection_net_forward.1} parent=1 // pred_fallthru
      _
    // Predicated region
    $region26: #{detection_net_forward.1} parent=1 // pred_check
      _
    $region27: #{detection_net_forward.1} parent=1 // pred_check_branch
      %80 = sbr.rel (0) target = $region29
    $region28: #{detection_net_forward.1} parent=1 // pred_region
      %s82 = ssub.s32 96, 96
      %83 = vsyncadd [#allocation13], %s82
      %s85 = sshll.u32 [#allocation14], 4
      %s86 = int_to_ptr.vmem [resolvable:$true] %s85
      %88 = dma.hbm_to_vmem [thread:$0]  %s6, 96, %s86, [#allocation13]
    $region29: #{detection_net_forward.1} parent=1 // pred_fallthru
      _
    // Predicated region
    $region30: #{detection_net_forward.1} parent=1 // pred_check
      _
    $region31: #{detection_net_forward.1} parent=1 // pred_check_branch
      %90 = sbr.rel (0) target = $region33
    $region32: #{detection_net_forward.1} parent=1 // pred_region
      %s92 = ssub.s32 24576, 24576
      %93 = vsyncadd [#allocation16], %s92
      %s94 = sshll.u32 [#allocation15], 4
      %s95 = int_to_ptr.vmem [resolvable:$true] %s94
      %100 = dma.hbm_to_vmem [thread:$0]  %s7, 24576, %s95, [#allocation16], 768, 768, 48
    $region33: #{detection_net_forward.1} parent=1 // pred_fallthru
      _
    // Predicated region
    $region34: #{detection_net_forward.1} parent=1 // pred_check
      _
    $region35: #{detection_net_forward.1} parent=1 // pred_check_branch
      %102 = sbr.rel (0) target = $region37
    $region36: #{detection_net_forward.1} parent=1 // pred_region
      _
    $region37: #{detection_net_forward.1} parent=1 // pred_fallthru
      _
    // Predicated region
    $region38: #{detection_net_forward.1} parent=1 // pred_check
      _
    $region39: #{detection_net_forward.1} parent=1 // pred_check_branch
      %104 = sbr.rel (0) target = $region41
    $region40: #{detection_net_forward.1} parent=1 // pred_region
      %s106 = ssub.s32 12288, 12288
      %107 = vsyncadd [#allocation16], %s106
      %s108 = sshll.u32 [#allocation17], 4
      %s109 = int_to_ptr.vmem [resolvable:$true] %s108
      %114 = dma.hbm_to_vmem [thread:$0]  %s9, 12288, %s109, [#allocation16], 384, 384, 24
    $region41: #{detection_net_forward.1} parent=1 // pred_fallthru
      _
    // Predicated region
    $region42: #{detection_net_forward.1} parent=1 // pred_check
      _
    $region43: #{detection_net_forward.1} parent=1 // pred_check_branch
      %116 = sbr.rel (0) target = $region45
    $region44: #{detection_net_forward.1} parent=1 // pred_region
      %s118 = ssub.s32 96, 96
      %119 = vsyncadd [#allocation19], %s118
      %s121 = sshll.u32 [#allocation18], 4
      %s122 = int_to_ptr.vmem [resolvable:$true] %s121
      %124 = dma.hbm_to_vmem [thread:$0]  %s10, 96, %s122, [#allocation19]
    $region45: #{detection_net_forward.1} parent=1 // pred_fallthru
      _
    // Predicated region
    $region46: #{detection_net_forward.1} parent=1 // pred_check
      _
    $region47: #{detection_net_forward.1} parent=1 // pred_check_branch
      %126 = sbr.rel (0) target = $region49
    $region48: #{detection_net_forward.1} parent=1 // pred_region
      _
    $region49: #{detection_net_forward.1} parent=1 // pred_fallthru
      _
    // Predicated region
    $region50: #{detection_net_forward.1} parent=1 // pred_check
      _
    $region51: #{detection_net_forward.1} parent=1 // pred_check_branch
      %128 = sbr.rel (0) target = $region53
    $region52: #{detection_net_forward.1} parent=1 // pred_region
      _
    $region53: #{detection_net_forward.1} parent=1 // pred_fallthru
      _
    // Predicated region
    $region54: #{detection_net_forward.1} parent=1 // pred_check
      _
    $region55: #{detection_net_forward.1} parent=1 // pred_check_branch
      %130 = sbr.rel (0) target = $region57
    $region56: #{detection_net_forward.1} parent=1 // pred_region
      %131 = dma.done [#allocation7], 8192
    $region57: #{detection_net_forward.1} parent=1 // pred_fallthru
      _
    // Predicated region
    $region58: #{detection_net_forward.1} parent=1 // pred_check
      _
    $region59: #{detection_net_forward.1} parent=1 // pred_check_branch
      %133 = sbr.rel (0) target = $region61
    $region60: #{detection_net_forward.1} parent=1 // pred_region
      %134 = dma.done [#allocation10], 128
    $region61: #{detection_net_forward.1} parent=1 // pred_fallthru
      _
    // Predicated region
    $region62: #{detection_net_forward.1} parent=1 // pred_check
      _
    $region63: #{detection_net_forward.1} parent=1 // pred_check_branch
      %136 = sbr.rel (0) target = $region65
    $region64: #{detection_net_forward.1} parent=1 // pred_region
      %137 = dma.done [#allocation10], 12288
    $region65: #{detection_net_forward.1} parent=1 // pred_fallthru
      _
    // Predicated region
    $region66: #{detection_net_forward.1} parent=1 // pred_check
      _
    $region67: #{detection_net_forward.1} parent=1 // pred_check_branch
      %139 = sbr.rel (0) target = $region69
    $region68: #{detection_net_forward.1} parent=1 // pred_region
      %140 = dma.done [#allocation13], 12288
    $region69: #{detection_net_forward.1} parent=1 // pred_fallthru
      _
    // Predicated region
    $region70: #{detection_net_forward.1} parent=1 // pred_check
      _
    $region71: #{detection_net_forward.1} parent=1 // pred_check_branch
      %142 = sbr.rel (0) target = $region73
    $region72: #{detection_net_forward.1} parent=1 // pred_region
      %143 = dma.done [#allocation13], 96
    $region73: #{detection_net_forward.1} parent=1 // pred_fallthru
      _
    // Predicated region
    $region74: #{detection_net_forward.1} parent=1 // pred_check
      _
    $region75: #{detection_net_forward.1} parent=1 // pred_check_branch
      %145 = sbr.rel (0) target = $region77
    $region76: #{detection_net_forward.1} parent=1 // pred_region
      %146 = dma.done [#allocation16], 24576
    $region77: #{detection_net_forward.1} parent=1 // pred_fallthru
      _
    // Predicated region
    $region78: #{detection_net_forward.1} parent=1 // pred_check
      _
    $region79: #{detection_net_forward.1} parent=1 // pred_check_branch
      %148 = sbr.rel (0) target = $region81
    $region80: #{detection_net_forward.1} parent=1 // pred_region
      %149 = dma.done [#allocation16], 12288
    $region81: #{detection_net_forward.1} parent=1 // pred_fallthru
      _
    // Predicated region
    $region82: #{detection_net_forward.1} parent=1 // pred_check
      _
    $region83: #{detection_net_forward.1} parent=1 // pred_check_branch
      %151 = sbr.rel (0) target = $region85
    $region84: #{detection_net_forward.1} parent=1 // pred_region
      %152 = dma.done [#allocation19], 96
    $region85: #{detection_net_forward.1} parent=1 // pred_fallthru
      _
    %v153 = vld [vmem:[%s0] sm:$0x3]
    %v154 = vld [vmem:[#allocation6] sm:$0xff]
    %v155 = vld [vmem:[#allocation6 + $0x8] sm:$0xff]
    %v156 = vld [vmem:[#allocation6 + $0x10] sm:$0xff]
    %v157 = vld [vmem:[#allocation6 + $0x18] sm:$0xff]
    %v158 = vld [vmem:[#allocation6 + $0x20] sm:$0xff]
    %v159 = vld [vmem:[#allocation6 + $0x28] sm:$0xff]
    %v160 = vld [vmem:[#allocation6 + $0x30] sm:$0xff]
    %v161 = vld [vmem:[#allocation6 + $0x38] sm:$0xff]
    %v162 = vld [vmem:[#allocation6 + $0x40] sm:$0xff]
    %v163 = vld [vmem:[#allocation6 + $0x48] sm:$0xff]
    %v164 = vld [vmem:[#allocation6 + $0x50] sm:$0xff]
    %v165 = vld [vmem:[#allocation6 + $0x58] sm:$0xff]
    %v166 = vld [vmem:[#allocation6 + $0x60] sm:$0xff]
    %v167 = vld [vmem:[#allocation6 + $0x68] sm:$0xff]
    %v168 = vld [vmem:[#allocation6 + $0x70] sm:$0xff]
    %v169 = vld [vmem:[#allocation6 + $0x78] sm:$0xff]
    %v170 = vld [vmem:[#allocation6 + $0x80] sm:$0xff]
    %v171 = vld [vmem:[#allocation6 + $0x88] sm:$0xff]
    %v172 = vld [vmem:[#allocation6 + $0x90] sm:$0xff]
    %v173 = vld [vmem:[#allocation6 + $0x98] sm:$0xff]
    %v174 = vld [vmem:[#allocation6 + $0xa0] sm:$0xff]
    %v175 = vld [vmem:[#allocation6 + $0xa8] sm:$0xff]
    %v176 = vld [vmem:[#allocation6 + $0xb0] sm:$0xff]
    %v177 = vld [vmem:[#allocation6 + $0xb8] sm:$0xff]
    %v178 = vld [vmem:[#allocation6 + $0xc0] sm:$0xff]
    %v179 = vld [vmem:[#allocation6 + $0xc8] sm:$0xff]
    %v180 = vld [vmem:[#allocation6 + $0xd0] sm:$0xff]
    %v181 = vld [vmem:[#allocation6 + $0xd8] sm:$0xff]
    %v182 = vld [vmem:[#allocation6 + $0xe0] sm:$0xff]
    %v183 = vld [vmem:[#allocation6 + $0xe8] sm:$0xff]
    %v184 = vld [vmem:[#allocation6 + $0xf0] sm:$0xff]
    %v185 = vld [vmem:[#allocation6 + $0xf8] sm:$0xff]
    %v186 = vld [vmem:[#allocation6 + $0x100] sm:$0xff]
    %v187 = vld [vmem:[#allocation6 + $0x108] sm:$0xff]
    %v188 = vld [vmem:[#allocation6 + $0x110] sm:$0xff]
    %v189 = vld [vmem:[#allocation6 + $0x118] sm:$0xff]
    %v190 = vld [vmem:[#allocation6 + $0x120] sm:$0xff]
    %v191 = vld [vmem:[#allocation6 + $0x128] sm:$0xff]
    %v192 = vld [vmem:[#allocation6 + $0x130] sm:$0xff]
    %v193 = vld [vmem:[#allocation6 + $0x138] sm:$0xff]
    %v194 = vld [vmem:[#allocation6 + $0x140] sm:$0xff]
    %v195 = vld [vmem:[#allocation6 + $0x148] sm:$0xff]
    %v196 = vld [vmem:[#allocation6 + $0x150] sm:$0xff]
    %v197 = vld [vmem:[#allocation6 + $0x158] sm:$0xff]
    %v198 = vld [vmem:[#allocation6 + $0x160] sm:$0xff]
    %v199 = vld [vmem:[#allocation6 + $0x168] sm:$0xff]
    %v200 = vld [vmem:[#allocation6 + $0x170] sm:$0xff]
    %v201 = vld [vmem:[#allocation6 + $0x178] sm:$0xff]
    %v202 = vld [vmem:[#allocation6 + $0x180] sm:$0xff]
    %v203 = vld [vmem:[#allocation6 + $0x188] sm:$0xff]
    %v204 = vld [vmem:[#allocation6 + $0x190] sm:$0xff]
    %v205 = vld [vmem:[#allocation6 + $0x198] sm:$0xff]
    %v206 = vld [vmem:[#allocation6 + $0x1a0] sm:$0xff]
    %v207 = vld [vmem:[#allocation6 + $0x1a8] sm:$0xff]
    %v208 = vld [vmem:[#allocation6 + $0x1b0] sm:$0xff]
    %v209 = vld [vmem:[#allocation6 + $0x1b8] sm:$0xff]
    %v210 = vld [vmem:[#allocation6 + $0x1c0] sm:$0xff]
    %v211 = vld [vmem:[#allocation6 + $0x1c8] sm:$0xff]
    %v212 = vld [vmem:[#allocation6 + $0x1d0] sm:$0xff]
    %v213 = vld [vmem:[#allocation6 + $0x1d8] sm:$0xff]
    %v214 = vld [vmem:[#allocation6 + $0x1e0] sm:$0xff]
    %v215 = vld [vmem:[#allocation6 + $0x1e8] sm:$0xff]
    %v216 = vld [vmem:[#allocation6 + $0x1f0] sm:$0xff]
    %v217 = vld [vmem:[#allocation6 + $0x1f8] sm:$0xff]
    %v218 = vld [vmem:[#allocation9] sm:$0xff]
    %v220 = vlaneseq
    %v221 = vshrl.u32 %v220, 7
    %v222 = vsub.s32 0, %v221
    %v223 = vrot.slane %v218, %v222
    %v224 = vlaneseq
    %v225 = vshrl.u32 %v224, 7
    %v226 = vsub.s32 1, %v225
    %v227 = vrot.slane %v218, %v226
    %v228 = vlaneseq
    %v229 = vshrl.u32 %v228, 7
    %v230 = vsub.s32 2, %v229
    %v231 = vrot.slane %v218, %v230
    %v232 = vlaneseq
    %v233 = vshrl.u32 %v232, 7
    %v234 = vsub.s32 3, %v233
    %v235 = vrot.slane %v218, %v234
    %v236 = vlaneseq
    %v237 = vshrl.u32 %v236, 7
    %v238 = vsub.s32 4, %v237
    %v239 = vrot.slane %v218, %v238
    %v240 = vlaneseq
    %v241 = vshrl.u32 %v240, 7
    %v242 = vsub.s32 5, %v241
    %v243 = vrot.slane %v218, %v242
    %v244 = vlaneseq
    %v245 = vshrl.u32 %v244, 7
    %v246 = vsub.s32 6, %v245
    %v247 = vrot.slane %v218, %v246
    %v248 = vlaneseq
    %v249 = vshrl.u32 %v248, 7
    %v250 = vsub.s32 7, %v249
    %v251 = vrot.slane %v218, %v250
    %vm260 = vcmask 523264
    %v262 = vsel %vm260, %v153, 0
    %264 = vmatprep.subr.mxu0 %v155
    %265 = vmatpush1.msra.mxu0 %v154
    %266 = vmatprep.subr.mxu0 %v163
    %267 = vmatpush1.msra.mxu0 %v162
    %268 = vmatprep.subr.mxu0 %v171
    %269 = vmatpush1.msra.mxu0 %v170
    %270 = vmatprep.subr.mxu0 %v179
    %271 = vmatpush1.msra.mxu0 %v178
    %272 = vmatprep.subr.mxu0 %v187
    %273 = vmatpush1.msra.mxu0 %v186
    %274 = vmatprep.subr.mxu0 %v195
    %275 = vmatpush1.msra.mxu0 %v194
    %276 = vmatprep.subr.mxu0 %v203
    %277 = vmatpush1.msra.mxu0 %v202
    %278 = vmatprep.subr.mxu0 %v211
    %279 = vmatpush1.msra.mxu0 %v210
    %280 = vmatprep.subr.mxu0 0.0
    %281 = vmatpush1.msra.mxu0 0.0
    %282 = vmatprep.subr.mxu0 0.0
    %283 = vmatpush1.msra.mxu0 0.0
    %284 = vmatprep.subr.mxu0 0.0
    %285 = vmatpush1.msra.mxu0 0.0
    %286 = vmatprep.subr.mxu0 0.0
    %287 = vmatpush1.msra.mxu0 0.0
    %288 = vmatprep.subr.mxu0 0.0
    %289 = vmatpush1.msra.mxu0 0.0
    %290 = vmatprep.subr.mxu0 0.0
    %291 = vmatpush1.msra.mxu0 0.0
    %292 = vmatprep.subr.mxu0 0.0
    %293 = vmatpush1.msra.mxu0 0.0
    %294 = vmatprep.subr.mxu0 0.0
    %295 = vmatpush1.msra.mxu0 0.0
    %296 = vmatprep.subr.mxu0 0.0
    %297 = vmatpush1.msra.mxu0 0.0
    %298 = vmatprep.subr.mxu0 0.0
    %299 = vmatpush1.msra.mxu0 0.0
    %300 = vmatprep.subr.mxu0 0.0
    %301 = vmatpush1.msra.mxu0 0.0
    %302 = vmatprep.subr.mxu0 0.0
    %303 = vmatpush1.msra.mxu0 0.0
    %304 = vmatprep.subr.mxu0 0.0
    %305 = vmatpush1.msra.mxu0 0.0
    %306 = vmatprep.subr.mxu0 0.0
    %307 = vmatpush1.msra.mxu0 0.0
    %308 = vmatprep.subr.mxu0 0.0
    %309 = vmatpush1.msra.mxu0 0.0
    %310 = vmatprep.subr.mxu0 0.0
    %311 = vmatpush1.msra.mxu0 0.0
    %312 = vmatprep.subr.mxu0 0.0
    %313 = vmatpush1.msra.mxu0 0.0
    %314 = vmatprep.subr.mxu0 0.0
    %315 = vmatpush1.msra.mxu0 0.0
    %316 = vmatprep.subr.mxu0 0.0
    %317 = vmatpush1.msra.mxu0 0.0
    %318 = vmatprep.subr.mxu0 0.0
    %319 = vmatpush1.msra.mxu0 0.0
    %320 = vmatprep.subr.mxu0 0.0
    %321 = vmatpush1.msra.mxu0 0.0
    %322 = vmatprep.subr.mxu0 0.0
    %323 = vmatpush1.msra.mxu0 0.0
    %324 = vmatprep.subr.mxu0 0.0
    %325 = vmatpush1.msra.mxu0 0.0
    %326 = vmatprep.subr.mxu0 0.0
    %327 = vmatpush1.msra.mxu0 0.0
    %328 = vmatprep.mubr.f32.mxu0 0.0
    %329 = vmatmul.mubr.f32.gmra.mrb[0].mxu0 %v262
    %v330 = vpop.f32.mrb[0].mxu0
    %v331 = vadd.f32 %v223, %v330
    %v332 = vpop.f32.mrb[0].mxu0
    %v333 = vadd.f32 %v227, %v332
    %334 = vdwg.mxu0
    %335 = vmatprep.subr.mxu0 %v157
    %336 = vmatpush1.msra.mxu0 %v156
    %337 = vmatprep.subr.mxu0 %v165
    %338 = vmatpush1.msra.mxu0 %v164
    %339 = vmatprep.subr.mxu0 %v173
    %340 = vmatpush1.msra.mxu0 %v172
    %341 = vmatprep.subr.mxu0 %v181
    %342 = vmatpush1.msra.mxu0 %v180
    %343 = vmatprep.subr.mxu0 %v189
    %344 = vmatpush1.msra.mxu0 %v188
    %345 = vmatprep.subr.mxu0 %v197
    %346 = vmatpush1.msra.mxu0 %v196
    %347 = vmatprep.subr.mxu0 %v205
    %348 = vmatpush1.msra.mxu0 %v204
    %349 = vmatprep.subr.mxu0 %v213
    %350 = vmatpush1.msra.mxu0 %v212
    %351 = vmatprep.subr.mxu0 0.0
    %352 = vmatpush1.msra.mxu0 0.0
    %353 = vmatprep.subr.mxu0 0.0
    %354 = vmatpush1.msra.mxu0 0.0
    %355 = vmatprep.subr.mxu0 0.0
    %356 = vmatpush1.msra.mxu0 0.0
    %357 = vmatprep.subr.mxu0 0.0
    %358 = vmatpush1.msra.mxu0 0.0
    %359 = vmatprep.subr.mxu0 0.0
    %360 = vmatpush1.msra.mxu0 0.0
    %361 = vmatprep.subr.mxu0 0.0
    %362 = vmatpush1.msra.mxu0 0.0
    %363 = vmatprep.subr.mxu0 0.0
    %364 = vmatpush1.msra.mxu0 0.0
    %365 = vmatprep.subr.mxu0 0.0
    %366 = vmatpush1.msra.mxu0 0.0
    %367 = vmatprep.subr.mxu0 0.0
    %368 = vmatpush1.msra.mxu0 0.0
    %369 = vmatprep.subr.mxu0 0.0
    %370 = vmatpush1.msra.mxu0 0.0
    %371 = vmatprep.subr.mxu0 0.0
    %372 = vmatpush1.msra.mxu0 0.0
    %373 = vmatprep.subr.mxu0 0.0
    %374 = vmatpush1.msra.mxu0 0.0
    %375 = vmatprep.subr.mxu0 0.0
    %376 = vmatpush1.msra.mxu0 0.0
    %377 = vmatprep.subr.mxu0 0.0
    %378 = vmatpush1.msra.mxu0 0.0
    %379 = vmatprep.subr.mxu0 0.0
    %380 = vmatpush1.msra.mxu0 0.0
    %381 = vmatprep.subr.mxu0 0.0
    %382 = vmatpush1.msra.mxu0 0.0
    %383 = vmatprep.subr.mxu0 0.0
    %384 = vmatpush1.msra.mxu0 0.0
    %385 = vmatprep.subr.mxu0 0.0
    %386 = vmatpush1.msra.mxu0 0.0
    %387 = vmatprep.subr.mxu0 0.0
    %388 = vmatpush1.msra.mxu0 0.0
    %389 = vmatprep.subr.mxu0 0.0
    %390 = vmatpush1.msra.mxu0 0.0
    %391 = vmatprep.subr.mxu0 0.0
    %392 = vmatpush1.msra.mxu0 0.0
    %393 = vmatprep.subr.mxu0 0.0
    %394 = vmatpush1.msra.mxu0 0.0
    %395 = vmatprep.subr.mxu0 0.0
    %396 = vmatpush1.msra.mxu0 0.0
    %397 = vmatprep.subr.mxu0 0.0
    %398 = vmatpush1.msra.mxu0 0.0
    %399 = vmatprep.mubr.f32.mxu0 0.0
    %400 = vmatmul.mubr.f32.gmra.mrb[0].mxu0 %v262
    %v401 = vpop.f32.mrb[0].mxu0
    %v402 = vadd.f32 %v231, %v401
    %v403 = vpop.f32.mrb[0].mxu0
    %v404 = vadd.f32 %v235, %v403
    %405 = vdwg.mxu0
    %406 = vmatprep.subr.mxu0 %v159
    %407 = vmatpush1.msra.mxu0 %v158
    %408 = vmatprep.subr.mxu0 %v167
    %409 = vmatpush1.msra.mxu0 %v166
    %410 = vmatprep.subr.mxu0 %v175
    %411 = vmatpush1.msra.mxu0 %v174
    %412 = vmatprep.subr.mxu0 %v183
    %413 = vmatpush1.msra.mxu0 %v182
    %414 = vmatprep.subr.mxu0 %v191
    %415 = vmatpush1.msra.mxu0 %v190
    %416 = vmatprep.subr.mxu0 %v199
    %417 = vmatpush1.msra.mxu0 %v198
    %418 = vmatprep.subr.mxu0 %v207
    %419 = vmatpush1.msra.mxu0 %v206
    %420 = vmatprep.subr.mxu0 %v215
    %421 = vmatpush1.msra.mxu0 %v214
    %422 = vmatprep.subr.mxu0 0.0
    %423 = vmatpush1.msra.mxu0 0.0
    %424 = vmatprep.subr.mxu0 0.0
    %425 = vmatpush1.msra.mxu0 0.0
    %426 = vmatprep.subr.mxu0 0.0
    %427 = vmatpush1.msra.mxu0 0.0
    %428 = vmatprep.subr.mxu0 0.0
    %429 = vmatpush1.msra.mxu0 0.0
    %430 = vmatprep.subr.mxu0 0.0
    %431 = vmatpush1.msra.mxu0 0.0
    %432 = vmatprep.subr.mxu0 0.0
    %433 = vmatpush1.msra.mxu0 0.0
    %434 = vmatprep.subr.mxu0 0.0
    %435 = vmatpush1.msra.mxu0 0.0
    %436 = vmatprep.subr.mxu0 0.0
    %437 = vmatpush1.msra.mxu0 0.0
    %438 = vmatprep.subr.mxu0 0.0
    %439 = vmatpush1.msra.mxu0 0.0
    %440 = vmatprep.subr.mxu0 0.0
    %441 = vmatpush1.msra.mxu0 0.0
    %442 = vmatprep.subr.mxu0 0.0
    %443 = vmatpush1.msra.mxu0 0.0
    %444 = vmatprep.subr.mxu0 0.0
    %445 = vmatpush1.msra.mxu0 0.0
    %446 = vmatprep.subr.mxu0 0.0
    %447 = vmatpush1.msra.mxu0 0.0
    %448 = vmatprep.subr.mxu0 0.0
    %449 = vmatpush1.msra.mxu0 0.0
    %450 = vmatprep.subr.mxu0 0.0
    %451 = vmatpush1.msra.mxu0 0.0
    %452 = vmatprep.subr.mxu0 0.0
    %453 = vmatpush1.msra.mxu0 0.0
    %454 = vmatprep.subr.mxu0 0.0
    %455 = vmatpush1.msra.mxu0 0.0
    %456 = vmatprep.subr.mxu0 0.0
    %457 = vmatpush1.msra.mxu0 0.0
    %458 = vmatprep.subr.mxu0 0.0
    %459 = vmatpush1.msra.mxu0 0.0
    %460 = vmatprep.subr.mxu0 0.0
    %461 = vmatpush1.msra.mxu0 0.0
    %462 = vmatprep.subr.mxu0 0.0
    %463 = vmatpush1.msra.mxu0 0.0
    %464 = vmatprep.subr.mxu0 0.0
    %465 = vmatpush1.msra.mxu0 0.0
    %466 = vmatprep.subr.mxu0 0.0
    %467 = vmatpush1.msra.mxu0 0.0
    %468 = vmatprep.subr.mxu0 0.0
    %469 = vmatpush1.msra.mxu0 0.0
    %470 = vmatprep.mubr.f32.mxu0 0.0
    %471 = vmatmul.mubr.f32.gmra.mrb[0].mxu0 %v262
    %v472 = vpop.f32.mrb[0].mxu0
    %v473 = vadd.f32 %v239, %v472
    %v474 = vpop.f32.mrb[0].mxu0
    %v475 = vadd.f32 %v243, %v474
    %476 = vdwg.mxu0
    %477 = vmatprep.subr.mxu0 %v161
    %478 = vmatpush1.msra.mxu0 %v160
    %479 = vmatprep.subr.mxu0 %v169
    %480 = vmatpush1.msra.mxu0 %v168
    %481 = vmatprep.subr.mxu0 %v177
    %482 = vmatpush1.msra.mxu0 %v176
    %483 = vmatprep.subr.mxu0 %v185
    %484 = vmatpush1.msra.mxu0 %v184
    %485 = vmatprep.subr.mxu0 %v193
    %486 = vmatpush1.msra.mxu0 %v192
    %487 = vmatprep.subr.mxu0 %v201
    %488 = vmatpush1.msra.mxu0 %v200
    %489 = vmatprep.subr.mxu0 %v209
    %490 = vmatpush1.msra.mxu0 %v208
    %491 = vmatprep.subr.mxu0 %v217
    %492 = vmatpush1.msra.mxu0 %v216
    %493 = vmatprep.subr.mxu0 0.0
    %494 = vmatpush1.msra.mxu0 0.0
    %495 = vmatprep.subr.mxu0 0.0
    %496 = vmatpush1.msra.mxu0 0.0
    %497 = vmatprep.subr.mxu0 0.0
    %498 = vmatpush1.msra.mxu0 0.0
    %499 = vmatprep.subr.mxu0 0.0
    %500 = vmatpush1.msra.mxu0 0.0
    %501 = vmatprep.subr.mxu0 0.0
    %502 = vmatpush1.msra.mxu0 0.0
    %503 = vmatprep.subr.mxu0 0.0
    %504 = vmatpush1.msra.mxu0 0.0
    %505 = vmatprep.subr.mxu0 0.0
    %506 = vmatpush1.msra.mxu0 0.0
    %507 = vmatprep.subr.mxu0 0.0
    %508 = vmatpush1.msra.mxu0 0.0
    %509 = vmatprep.subr.mxu0 0.0
    %510 = vmatpush1.msra.mxu0 0.0
    %511 = vmatprep.subr.mxu0 0.0
    %512 = vmatpush1.msra.mxu0 0.0
    %513 = vmatprep.subr.mxu0 0.0
    %514 = vmatpush1.msra.mxu0 0.0
    %515 = vmatprep.subr.mxu0 0.0
    %516 = vmatpush1.msra.mxu0 0.0
    %517 = vmatprep.subr.mxu0 0.0
    %518 = vmatpush1.msra.mxu0 0.0
    %519 = vmatprep.subr.mxu0 0.0
    %520 = vmatpush1.msra.mxu0 0.0
    %521 = vmatprep.subr.mxu0 0.0
    %522 = vmatpush1.msra.mxu0 0.0
    %523 = vmatprep.subr.mxu0 0.0
    %524 = vmatpush1.msra.mxu0 0.0
    %525 = vmatprep.subr.mxu0 0.0
    %526 = vmatpush1.msra.mxu0 0.0
    %527 = vmatprep.subr.mxu0 0.0
    %528 = vmatpush1.msra.mxu0 0.0
    %529 = vmatprep.subr.mxu0 0.0
    %530 = vmatpush1.msra.mxu0 0.0
    %531 = vmatprep.subr.mxu0 0.0
    %532 = vmatpush1.msra.mxu0 0.0
    %533 = vmatprep.subr.mxu0 0.0
    %534 = vmatpush1.msra.mxu0 0.0
    %535 = vmatprep.subr.mxu0 0.0
    %536 = vmatpush1.msra.mxu0 0.0
    %537 = vmatprep.subr.mxu0 0.0
    %538 = vmatpush1.msra.mxu0 0.0
    %539 = vmatprep.subr.mxu0 0.0
    %540 = vmatpush1.msra.mxu0 0.0
    %541 = vmatprep.mubr.f32.mxu0 0.0
    %542 = vmatmul.mubr.f32.gmra.mrb[0].mxu0 %v262
    %v543 = vpop.f32.mrb[0].mxu0
    %v544 = vadd.f32 %v247, %v543
    %v545 = vpop.f32.mrb[0].mxu0
    %v546 = vadd.f32 %v251, %v545
    %547 = vdwg.mxu0
    %vm548 = vcmp.gt.f32.partialorder %v331, 0.0
    %vm549 = vcmp.gt.f32.partialorder %v333, 0.0
    %vm550 = vcmp.gt.f32.partialorder %v402, 0.0
    %vm551 = vcmp.gt.f32.partialorder %v404, 0.0
    %vm552 = vcmp.gt.f32.partialorder %v473, 0.0
    %vm553 = vcmp.gt.f32.partialorder %v475, 0.0
    %vm554 = vcmp.gt.f32.partialorder %v544, 0.0
    %vm555 = vcmp.gt.f32.partialorder %v546, 0.0
    %v556 = vmin.f32 %v331, 0.0
    %v557 = vmin.f32 %v333, 0.0
    %v558 = vmin.f32 %v402, 0.0
    %v559 = vmin.f32 %v404, 0.0
    %v560 = vmin.f32 %v473, 0.0
    %v561 = vmin.f32 %v475, 0.0
    %v562 = vmin.f32 %v544, 0.0
    %v563 = vmin.f32 %v546, 0.0
    %v564 = vmul.f32 %v556, 1.442695
    %v565 = vpow.pop %v564
    %v566 = vmul.f32 %v557, 1.442695
    %v567 = vpow.pop %v566
    %v568 = vmul.f32 %v558, 1.442695
    %v569 = vpow.pop %v568
    %v570 = vmul.f32 %v559, 1.442695
    %v571 = vpow.pop %v570
    %v572 = vmul.f32 %v560, 1.442695
    %v573 = vpow.pop %v572
    %v574 = vmul.f32 %v561, 1.442695
    %v575 = vpow.pop %v574
    %v576 = vmul.f32 %v562, 1.442695
    %v577 = vpow.pop %v576
    %v578 = vmul.f32 %v563, 1.442695
    %v579 = vpow.pop %v578
    %v580 = vsub.f32 %v565, 1.0
    %v581 = vsub.f32 %v567, 1.0
    %v582 = vsub.f32 %v569, 1.0
    %v583 = vsub.f32 %v571, 1.0
    %v584 = vsub.f32 %v573, 1.0
    %v585 = vsub.f32 %v575, 1.0
    %v586 = vsub.f32 %v577, 1.0
    %v587 = vsub.f32 %v579, 1.0
    %v588 = vmul.f32 %v580, 1.6732632
    %v589 = vmul.f32 %v581, 1.6732632
    %v590 = vmul.f32 %v582, 1.6732632
    %v591 = vmul.f32 %v583, 1.6732632
    %v592 = vmul.f32 %v584, 1.6732632
    %v593 = vmul.f32 %v585, 1.6732632
    %v594 = vmul.f32 %v586, 1.6732632
    %v595 = vmul.f32 %v587, 1.6732632
    %v596 = vsel %vm548, %v331, %v588
    %v597 = vsel %vm549, %v333, %v589
    %v598 = vsel %vm550, %v402, %v590
    %v599 = vsel %vm551, %v404, %v591
    %v600 = vsel %vm552, %v473, %v592
    %v601 = vsel %vm553, %v475, %v593
    %v602 = vsel %vm554, %v544, %v594
    %v603 = vsel %vm555, %v546, %v595
    %v604 = vmul.f32 %v596, 1.050701
    %v605 = vmul.f32 %v597, 1.050701
    %v606 = vmul.f32 %v598, 1.050701
    %v607 = vmul.f32 %v599, 1.050701
    %v608 = vmul.f32 %v600, 1.050701
    %v609 = vmul.f32 %v601, 1.050701
    %v610 = vmul.f32 %v602, 1.050701
    %v611 = vmul.f32 %v603, 1.050701
    %612 = vst [vmem:[#allocation2] sm:$0xff] 0.0
    %613 = vst [vmem:[#allocation2 + $0x8] sm:$0xff] 0.0
    %614 = vst [vmem:[#allocation2 + $0x10] sm:$0xff] 0.0
    %615 = vst [vmem:[#allocation2 + $0x18] sm:$0xff] 0.0
    %616 = vst [vmem:[#allocation2 + $0x20] sm:$0xff] 0.0
    %617 = vst [vmem:[#allocation2 + $0x28] sm:$0xff] 0.0
    %618 = vst [vmem:[#allocation2 + $0x30] sm:$0xff] 0.0
    %619 = vst [vmem:[#allocation2 + $0x38] sm:$0xff] 0.0
    %620 = vst [vmem:[#allocation2] sm:$0x3] %v604
    %621 = vst [vmem:[#allocation2 + $0x8] sm:$0x3] %v605
    %622 = vst [vmem:[#allocation2 + $0x10] sm:$0x3] %v606
    %623 = vst [vmem:[#allocation2 + $0x18] sm:$0x3] %v607
    %624 = vst [vmem:[#allocation2 + $0x20] sm:$0x3] %v608
    %625 = vst [vmem:[#allocation2 + $0x28] sm:$0x3] %v609
    %626 = vst [vmem:[#allocation2 + $0x30] sm:$0x3] %v610
    %627 = vst [vmem:[#allocation2 + $0x38] sm:$0x3] %v611
    %v628 = vld [vmem:[#allocation2] sm:$0xff]
    %v629 = vld [vmem:[#allocation2 + $0x8] sm:$0xff]
    %v630 = vld [vmem:[#allocation2 + $0x10] sm:$0xff]
    %v631 = vld [vmem:[#allocation2 + $0x18] sm:$0xff]
    %v632 = vld [vmem:[#allocation2 + $0x20] sm:$0xff]
    %v633 = vld [vmem:[#allocation2 + $0x28] sm:$0xff]
    %v634 = vld [vmem:[#allocation2 + $0x30] sm:$0xff]
    %v635 = vld [vmem:[#allocation2 + $0x38] sm:$0xff]
    %v636 = vld [vmem:[#allocation11] sm:$0xff]
    %v637 = vld [vmem:[#allocation11 + $0x8] sm:$0xff]
    %v638 = vld [vmem:[#allocation11 + $0x10] sm:$0xff]
    %v639 = vld [vmem:[#allocation11 + $0x18] sm:$0xff]
    %v640 = vld [vmem:[#allocation11 + $0x20] sm:$0xff]
    %v641 = vld [vmem:[#allocation11 + $0x28] sm:$0xff]
    %v642 = vld [vmem:[#allocation11 + $0x30] sm:$0xff]
    %v643 = vld [vmem:[#allocation11 + $0x38] sm:$0xff]
    %v644 = vld [vmem:[#allocation11 + $0x40] sm:$0xff]
    %v645 = vld [vmem:[#allocation11 + $0x48] sm:$0xff]
    %v646 = vld [vmem:[#allocation11 + $0x50] sm:$0xff]
    %v647 = vld [vmem:[#allocation11 + $0x58] sm:$0xff]
    %v648 = vld [vmem:[#allocation11 + $0x60] sm:$0xff]
    %v649 = vld [vmem:[#allocation11 + $0x68] sm:$0xff]
    %v650 = vld [vmem:[#allocation11 + $0x70] sm:$0xff]
    %v651 = vld [vmem:[#allocation11 + $0x78] sm:$0xff]
    %v652 = vld [vmem:[#allocation11 + $0x80] sm:$0xff]
    %v653 = vld [vmem:[#allocation11 + $0x88] sm:$0xff]
    %v654 = vld [vmem:[#allocation11 + $0x90] sm:$0xff]
    %v655 = vld [vmem:[#allocation11 + $0x98] sm:$0xff]
    %v656 = vld [vmem:[#allocation11 + $0xa0] sm:$0xff]
    %v657 = vld [vmem:[#allocation11 + $0xa8] sm:$0xff]
    %v658 = vld [vmem:[#allocation11 + $0xb0] sm:$0xff]
    %v659 = vld [vmem:[#allocation11 + $0xb8] sm:$0xff]
    %v660 = vld [vmem:[#allocation11 + $0xc0] sm:$0xff]
    %v661 = vld [vmem:[#allocation11 + $0xc8] sm:$0xff]
    %v662 = vld [vmem:[#allocation11 + $0xd0] sm:$0xff]
    %v663 = vld [vmem:[#allocation11 + $0xd8] sm:$0xff]
    %v664 = vld [vmem:[#allocation11 + $0xe0] sm:$0xff]
    %v665 = vld [vmem:[#allocation11 + $0xe8] sm:$0xff]
    %v666 = vld [vmem:[#allocation11 + $0xf0] sm:$0xff]
    %v667 = vld [vmem:[#allocation11 + $0xf8] sm:$0xff]
    %v668 = vld [vmem:[#allocation11 + $0x100] sm:$0xff]
    %v669 = vld [vmem:[#allocation11 + $0x108] sm:$0xff]
    %v670 = vld [vmem:[#allocation11 + $0x110] sm:$0xff]
    %v671 = vld [vmem:[#allocation11 + $0x118] sm:$0xff]
    %v672 = vld [vmem:[#allocation11 + $0x120] sm:$0xff]
    %v673 = vld [vmem:[#allocation11 + $0x128] sm:$0xff]
    %v674 = vld [vmem:[#allocation11 + $0x130] sm:$0xff]
    %v675 = vld [vmem:[#allocation11 + $0x138] sm:$0xff]
    %v676 = vld [vmem:[#allocation11 + $0x140] sm:$0xff]
    %v677 = vld [vmem:[#allocation11 + $0x148] sm:$0xff]
    %v678 = vld [vmem:[#allocation11 + $0x150] sm:$0xff]
    %v679 = vld [vmem:[#allocation11 + $0x158] sm:$0xff]
    %v680 = vld [vmem:[#allocation11 + $0x160] sm:$0xff]
    %v681 = vld [vmem:[#allocation11 + $0x168] sm:$0xff]
    %v682 = vld [vmem:[#allocation11 + $0x170] sm:$0xff]
    %v683 = vld [vmem:[#allocation11 + $0x178] sm:$0xff]
    %v684 = vld [vmem:[#allocation11 + $0x180] sm:$0xff]
    %v685 = vld [vmem:[#allocation11 + $0x188] sm:$0xff]
    %v686 = vld [vmem:[#allocation11 + $0x190] sm:$0xff]
    %v687 = vld [vmem:[#allocation11 + $0x198] sm:$0xff]
    %v688 = vld [vmem:[#allocation11 + $0x1a0] sm:$0xff]
    %v689 = vld [vmem:[#allocation11 + $0x1a8] sm:$0xff]
    %v690 = vld [vmem:[#allocation11 + $0x1b0] sm:$0xff]
    %v691 = vld [vmem:[#allocation11 + $0x1b8] sm:$0xff]
    %v692 = vld [vmem:[#allocation11 + $0x1c0] sm:$0xff]
    %v693 = vld [vmem:[#allocation11 + $0x1c8] sm:$0xff]
    %v694 = vld [vmem:[#allocation11 + $0x1d0] sm:$0xff]
    %v695 = vld [vmem:[#allocation11 + $0x1d8] sm:$0xff]
    %v696 = vld [vmem:[#allocation11 + $0x1e0] sm:$0xff]
    %v697 = vld [vmem:[#allocation11 + $0x1e8] sm:$0xff]
    %v698 = vld [vmem:[#allocation11 + $0x1f0] sm:$0xff]
    %v699 = vld [vmem:[#allocation11 + $0x1f8] sm:$0xff]
    %v700 = vld [vmem:[#allocation11 + $0x200] sm:$0xff]
    %v701 = vld [vmem:[#allocation11 + $0x208] sm:$0xff]
    %v702 = vld [vmem:[#allocation11 + $0x210] sm:$0xff]
    %v703 = vld [vmem:[#allocation11 + $0x218] sm:$0xff]
    %v704 = vld [vmem:[#allocation11 + $0x220] sm:$0xff]
    %v705 = vld [vmem:[#allocation11 + $0x228] sm:$0xff]
    %v706 = vld [vmem:[#allocation11 + $0x230] sm:$0xff]
    %v707 = vld [vmem:[#allocation11 + $0x238] sm:$0xff]
    %v708 = vld [vmem:[#allocation11 + $0x240] sm:$0xff]
    %v709 = vld [vmem:[#allocation11 + $0x248] sm:$0xff]
    %v710 = vld [vmem:[#allocation11 + $0x250] sm:$0xff]
    %v711 = vld [vmem:[#allocation11 + $0x258] sm:$0xff]
    %v712 = vld [vmem:[#allocation11 + $0x260] sm:$0xff]
    %v713 = vld [vmem:[#allocation11 + $0x268] sm:$0xff]
    %v714 = vld [vmem:[#allocation11 + $0x270] sm:$0xff]
    %v715 = vld [vmem:[#allocation11 + $0x278] sm:$0xff]
    %v716 = vld [vmem:[#allocation11 + $0x280] sm:$0xff]
    %v717 = vld [vmem:[#allocation11 + $0x288] sm:$0xff]
    %v718 = vld [vmem:[#allocation11 + $0x290] sm:$0xff]
    %v719 = vld [vmem:[#allocation11 + $0x298] sm:$0xff]
    %v720 = vld [vmem:[#allocation11 + $0x2a0] sm:$0xff]
    %v721 = vld [vmem:[#allocation11 + $0x2a8] sm:$0xff]
    %v722 = vld [vmem:[#allocation11 + $0x2b0] sm:$0xff]
    %v723 = vld [vmem:[#allocation11 + $0x2b8] sm:$0xff]
    %v724 = vld [vmem:[#allocation11 + $0x2c0] sm:$0xff]
    %v725 = vld [vmem:[#allocation11 + $0x2c8] sm:$0xff]
    %v726 = vld [vmem:[#allocation11 + $0x2d0] sm:$0xff]
    %v727 = vld [vmem:[#allocation11 + $0x2d8] sm:$0xff]
    %v728 = vld [vmem:[#allocation11 + $0x2e0] sm:$0xff]
    %v729 = vld [vmem:[#allocation11 + $0x2e8] sm:$0xff]
    %v730 = vld [vmem:[#allocation11 + $0x2f0] sm:$0xff]
    %v731 = vld [vmem:[#allocation11 + $0x2f8] sm:$0xff]
    %v732 = vld [vmem:[%s4] sm:$0x3f]
    %v734 = vlaneseq
    %v735 = vshrl.u32 %v734, 7
    %v736 = vsub.s32 0, %v735
    %v737 = vrot.slane %v732, %v736
    %v738 = vlaneseq
    %v739 = vshrl.u32 %v738, 7
    %v740 = vsub.s32 1, %v739
    %v741 = vrot.slane %v732, %v740
    %v742 = vlaneseq
    %v743 = vshrl.u32 %v742, 7
    %v744 = vsub.s32 2, %v743
    %v745 = vrot.slane %v732, %v744
    %v746 = vlaneseq
    %v747 = vshrl.u32 %v746, 7
    %v748 = vsub.s32 3, %v747
    %v749 = vrot.slane %v732, %v748
    %v750 = vlaneseq
    %v751 = vshrl.u32 %v750, 7
    %v752 = vsub.s32 4, %v751
    %v753 = vrot.slane %v732, %v752
    %v754 = vlaneseq
    %v755 = vshrl.u32 %v754, 7
    %v756 = vsub.s32 5, %v755
    %v757 = vrot.slane %v732, %v756
    %764 = vmatprep.subr.mxu0 %v637
    %765 = vmatpush1.msra.mxu0 %v636
    %766 = vmatprep.subr.mxu0 %v643
    %767 = vmatpush1.msra.mxu0 %v642
    %768 = vmatprep.subr.mxu0 %v649
    %769 = vmatpush1.msra.mxu0 %v648
    %770 = vmatprep.subr.mxu0 %v655
    %771 = vmatpush1.msra.mxu0 %v654
    %772 = vmatprep.subr.mxu0 %v661
    %773 = vmatpush1.msra.mxu0 %v660
    %774 = vmatprep.subr.mxu0 %v667
    %775 = vmatpush1.msra.mxu0 %v666
    %776 = vmatprep.subr.mxu0 %v673
    %777 = vmatpush1.msra.mxu0 %v672
    %778 = vmatprep.subr.mxu0 %v679
    %779 = vmatpush1.msra.mxu0 %v678
    %780 = vmatprep.subr.mxu0 %v685
    %781 = vmatpush1.msra.mxu0 %v684
    %782 = vmatprep.subr.mxu0 %v691
    %783 = vmatpush1.msra.mxu0 %v690
    %784 = vmatprep.subr.mxu0 %v697
    %785 = vmatpush1.msra.mxu0 %v696
    %786 = vmatprep.subr.mxu0 %v703
    %787 = vmatpush1.msra.mxu0 %v702
    %788 = vmatprep.subr.mxu0 %v709
    %789 = vmatpush1.msra.mxu0 %v708
    %790 = vmatprep.subr.mxu0 %v715
    %791 = vmatpush1.msra.mxu0 %v714
    %792 = vmatprep.subr.mxu0 %v721
    %793 = vmatpush1.msra.mxu0 %v720
    %794 = vmatprep.subr.mxu0 %v727
    %795 = vmatpush1.msra.mxu0 %v726
    %796 = vmatprep.subr.mxu0 0.0
    %797 = vmatpush1.msra.mxu0 0.0
    %798 = vmatprep.subr.mxu0 0.0
    %799 = vmatpush1.msra.mxu0 0.0
    %800 = vmatprep.subr.mxu0 0.0
    %801 = vmatpush1.msra.mxu0 0.0
    %802 = vmatprep.subr.mxu0 0.0
    %803 = vmatpush1.msra.mxu0 0.0
    %804 = vmatprep.subr.mxu0 0.0
    %805 = vmatpush1.msra.mxu0 0.0
    %806 = vmatprep.subr.mxu0 0.0
    %807 = vmatpush1.msra.mxu0 0.0
    %808 = vmatprep.subr.mxu0 0.0
    %809 = vmatpush1.msra.mxu0 0.0
    %810 = vmatprep.subr.mxu0 0.0
    %811 = vmatpush1.msra.mxu0 0.0
    %812 = vmatprep.subr.mxu0 0.0
    %813 = vmatpush1.msra.mxu0 0.0
    %814 = vmatprep.subr.mxu0 0.0
    %815 = vmatpush1.msra.mxu0 0.0
    %816 = vmatprep.subr.mxu0 0.0
    %817 = vmatpush1.msra.mxu0 0.0
    %818 = vmatprep.subr.mxu0 0.0
    %819 = vmatpush1.msra.mxu0 0.0
    %820 = vmatprep.subr.mxu0 0.0
    %821 = vmatpush1.msra.mxu0 0.0
    %822 = vmatprep.subr.mxu0 0.0
    %823 = vmatpush1.msra.mxu0 0.0
    %824 = vmatprep.subr.mxu0 0.0
    %825 = vmatpush1.msra.mxu0 0.0
    %826 = vmatprep.subr.mxu0 0.0
    %827 = vmatpush1.msra.mxu0 0.0
    %828 = vmatprep.mubr.f32.mxu0 0.0
    %829 = vmatmul.mubr.f32.gmra.mrb[0].mxu0 %v628
    %v830 = vpop.f32.mrb[0].mxu0
    %v831 = vadd.f32 %v737, %v830
    %v832 = vpop.f32.mrb[0].mxu0
    %v833 = vadd.f32 %v741, %v832
    %834 = vmatprep.mubr.f32.mxu0 0.0
    %835 = vmatmul.mubr.f32.gmra.mrb[0].mxu0 %v629
    %v836 = vpop.f32.mrb[0].mxu0
    %v837 = vadd.f32 %v737, %v836
    %v838 = vpop.f32.mrb[0].mxu0
    %v839 = vadd.f32 %v741, %v838
    %840 = vmatprep.mubr.f32.mxu0 0.0
    %841 = vmatmul.mubr.f32.gmra.mrb[0].mxu0 %v630
    %v842 = vpop.f32.mrb[0].mxu0
    %v843 = vadd.f32 %v737, %v842
    %v844 = vpop.f32.mrb[0].mxu0
    %v845 = vadd.f32 %v741, %v844
    %846 = vmatprep.mubr.f32.mxu0 0.0
    %847 = vmatmul.mubr.f32.gmra.mrb[0].mxu0 %v631
    %v848 = vpop.f32.mrb[0].mxu0
    %v849 = vadd.f32 %v737, %v848
    %v850 = vpop.f32.mrb[0].mxu0
    %v851 = vadd.f32 %v741, %v850
    %852 = vmatprep.mubr.f32.mxu0 0.0
    %853 = vmatmul.mubr.f32.gmra.mrb[0].mxu0 %v632
    %v854 = vpop.f32.mrb[0].mxu0
    %v855 = vadd.f32 %v737, %v854
    %v856 = vpop.f32.mrb[0].mxu0
    %v857 = vadd.f32 %v741, %v856
    %858 = vmatprep.mubr.f32.mxu0 0.0
    %859 = vmatmul.mubr.f32.gmra.mrb[0].mxu0 %v633
    %v860 = vpop.f32.mrb[0].mxu0
    %v861 = vadd.f32 %v737, %v860
    %v862 = vpop.f32.mrb[0].mxu0
    %v863 = vadd.f32 %v741, %v862
    %864 = vmatprep.mubr.f32.mxu0 0.0
    %865 = vmatmul.mubr.f32.gmra.mrb[0].mxu0 %v634
    %v866 = vpop.f32.mrb[0].mxu0
    %v867 = vadd.f32 %v737, %v866
    %v868 = vpop.f32.mrb[0].mxu0
    %v869 = vadd.f32 %v741, %v868
    %870 = vmatprep.mubr.f32.mxu0 0.0
    %871 = vmatmul.mubr.f32.gmra.mrb[0].mxu0 %v635
    %v872 = vpop.f32.mrb[0].mxu0
    %v873 = vadd.f32 %v737, %v872
    %v874 = vpop.f32.mrb[0].mxu0
    %v875 = vadd.f32 %v741, %v874
    %876 = vdwg.mxu0
    %877 = vmatprep.subr.mxu0 %v639
    %878 = vmatpush1.msra.mxu0 %v638
    %879 = vmatprep.subr.mxu0 %v645
    %880 = vmatpush1.msra.mxu0 %v644
    %881 = vmatprep.subr.mxu0 %v651
    %882 = vmatpush1.msra.mxu0 %v650
    %883 = vmatprep.subr.mxu0 %v657
    %884 = vmatpush1.msra.mxu0 %v656
    %885 = vmatprep.subr.mxu0 %v663
    %886 = vmatpush1.msra.mxu0 %v662
    %887 = vmatprep.subr.mxu0 %v669
    %888 = vmatpush1.msra.mxu0 %v668
    %889 = vmatprep.subr.mxu0 %v675
    %890 = vmatpush1.msra.mxu0 %v674
    %891 = vmatprep.subr.mxu0 %v681
    %892 = vmatpush1.msra.mxu0 %v680
    %893 = vmatprep.subr.mxu0 %v687
    %894 = vmatpush1.msra.mxu0 %v686
    %895 = vmatprep.subr.mxu0 %v693
    %896 = vmatpush1.msra.mxu0 %v692
    %897 = vmatprep.subr.mxu0 %v699
    %898 = vmatpush1.msra.mxu0 %v698
    %899 = vmatprep.subr.mxu0 %v705
    %900 = vmatpush1.msra.mxu0 %v704
    %901 = vmatprep.subr.mxu0 %v711
    %902 = vmatpush1.msra.mxu0 %v710
    %903 = vmatprep.subr.mxu0 %v717
    %904 = vmatpush1.msra.mxu0 %v716
    %905 = vmatprep.subr.mxu0 %v723
    %906 = vmatpush1.msra.mxu0 %v722
    %907 = vmatprep.subr.mxu0 %v729
    %908 = vmatpush1.msra.mxu0 %v728
    %909 = vmatprep.subr.mxu0 0.0
    %910 = vmatpush1.msra.mxu0 0.0
    %911 = vmatprep.subr.mxu0 0.0
    %912 = vmatpush1.msra.mxu0 0.0
    %913 = vmatprep.subr.mxu0 0.0
    %914 = vmatpush1.msra.mxu0 0.0
    %915 = vmatprep.subr.mxu0 0.0
    %916 = vmatpush1.msra.mxu0 0.0
    %917 = vmatprep.subr.mxu0 0.0
    %918 = vmatpush1.msra.mxu0 0.0
    %919 = vmatprep.subr.mxu0 0.0
    %920 = vmatpush1.msra.mxu0 0.0
    %921 = vmatprep.subr.mxu0 0.0
    %922 = vmatpush1.msra.mxu0 0.0
    %923 = vmatprep.subr.mxu0 0.0
    %924 = vmatpush1.msra.mxu0 0.0
    %925 = vmatprep.subr.mxu0 0.0
    %926 = vmatpush1.msra.mxu0 0.0
    %927 = vmatprep.subr.mxu0 0.0
    %928 = vmatpush1.msra.mxu0 0.0
    %929 = vmatprep.subr.mxu0 0.0
    %930 = vmatpush1.msra.mxu0 0.0
    %931 = vmatprep.subr.mxu0 0.0
    %932 = vmatpush1.msra.mxu0 0.0
    %933 = vmatprep.subr.mxu0 0.0
    %934 = vmatpush1.msra.mxu0 0.0
    %935 = vmatprep.subr.mxu0 0.0
    %936 = vmatpush1.msra.mxu0 0.0
    %937 = vmatprep.subr.mxu0 0.0
    %938 = vmatpush1.msra.mxu0 0.0
    %939 = vmatprep.subr.mxu0 0.0
    %940 = vmatpush1.msra.mxu0 0.0
    %941 = vmatprep.mubr.f32.mxu0 0.0
    %942 = vmatmul.mubr.f32.gmra.mrb[0].mxu0 %v628
    %v943 = vpop.f32.mrb[0].mxu0
    %v944 = vadd.f32 %v745, %v943
    %v945 = vpop.f32.mrb[0].mxu0
    %v946 = vadd.f32 %v749, %v945
    %947 = vmatprep.mubr.f32.mxu0 0.0
    %948 = vmatmul.mubr.f32.gmra.mrb[0].mxu0 %v629
    %v949 = vpop.f32.mrb[0].mxu0
    %v950 = vadd.f32 %v745, %v949
    %v951 = vpop.f32.mrb[0].mxu0
    %v952 = vadd.f32 %v749, %v951
    %953 = vmatprep.mubr.f32.mxu0 0.0
    %954 = vmatmul.mubr.f32.gmra.mrb[0].mxu0 %v630
    %v955 = vpop.f32.mrb[0].mxu0
    %v956 = vadd.f32 %v745, %v955
    %v957 = vpop.f32.mrb[0].mxu0
    %v958 = vadd.f32 %v749, %v957
    %959 = vmatprep.mubr.f32.mxu0 0.0
    %960 = vmatmul.mubr.f32.gmra.mrb[0].mxu0 %v631
    %v961 = vpop.f32.mrb[0].mxu0
    %v962 = vadd.f32 %v745, %v961
    %v963 = vpop.f32.mrb[0].mxu0
    %v964 = vadd.f32 %v749, %v963
    %965 = vmatprep.mubr.f32.mxu0 0.0
    %966 = vmatmul.mubr.f32.gmra.mrb[0].mxu0 %v632
    %v967 = vpop.f32.mrb[0].mxu0
    %v968 = vadd.f32 %v745, %v967
    %v969 = vpop.f32.mrb[0].mxu0
    %v970 = vadd.f32 %v749, %v969
    %971 = vmatprep.mubr.f32.mxu0 0.0
    %972 = vmatmul.mubr.f32.gmra.mrb[0].mxu0 %v633
    %v973 = vpop.f32.mrb[0].mxu0
    %v974 = vadd.f32 %v745, %v973
    %v975 = vpop.f32.mrb[0].mxu0
    %v976 = vadd.f32 %v749, %v975
    %977 = vmatprep.mubr.f32.mxu0 0.0
    %978 = vmatmul.mubr.f32.gmra.mrb[0].mxu0 %v634
    %v979 = vpop.f32.mrb[0].mxu0
    %v980 = vadd.f32 %v745, %v979
    %v981 = vpop.f32.mrb[0].mxu0
    %v982 = vadd.f32 %v749, %v981
    %983 = vmatprep.mubr.f32.mxu0 0.0
    %984 = vmatmul.mubr.f32.gmra.mrb[0].mxu0 %v635
    %v985 = vpop.f32.mrb[0].mxu0
    %v986 = vadd.f32 %v745, %v985
    %v987 = vpop.f32.mrb[0].mxu0
    %v988 = vadd.f32 %v749, %v987
    %989 = vdwg.mxu0
    %990 = vmatprep.subr.mxu0 %v641
    %991 = vmatpush1.msra.mxu0 %v640
    %992 = vmatprep.subr.mxu0 %v647
    %993 = vmatpush1.msra.mxu0 %v646
    %994 = vmatprep.subr.mxu0 %v653
    %995 = vmatpush1.msra.mxu0 %v652
    %996 = vmatprep.subr.mxu0 %v659
    %997 = vmatpush1.msra.mxu0 %v658
    %998 = vmatprep.subr.mxu0 %v665
    %999 = vmatpush1.msra.mxu0 %v664
    %1000 = vmatprep.subr.mxu0 %v671
    %1001 = vmatpush1.msra.mxu0 %v670
    %1002 = vmatprep.subr.mxu0 %v677
    %1003 = vmatpush1.msra.mxu0 %v676
    %1004 = vmatprep.subr.mxu0 %v683
    %1005 = vmatpush1.msra.mxu0 %v682
    %1006 = vmatprep.subr.mxu0 %v689
    %1007 = vmatpush1.msra.mxu0 %v688
    %1008 = vmatprep.subr.mxu0 %v695
    %1009 = vmatpush1.msra.mxu0 %v694
    %1010 = vmatprep.subr.mxu0 %v701
    %1011 = vmatpush1.msra.mxu0 %v700
    %1012 = vmatprep.subr.mxu0 %v707
    %1013 = vmatpush1.msra.mxu0 %v706
    %1014 = vmatprep.subr.mxu0 %v713
    %1015 = vmatpush1.msra.mxu0 %v712
    %1016 = vmatprep.subr.mxu0 %v719
    %1017 = vmatpush1.msra.mxu0 %v718
    %1018 = vmatprep.subr.mxu0 %v725
    %1019 = vmatpush1.msra.mxu0 %v724
    %1020 = vmatprep.subr.mxu0 %v731
    %1021 = vmatpush1.msra.mxu0 %v730
    %1022 = vmatprep.subr.mxu0 0.0
    %1023 = vmatpush1.msra.mxu0 0.0
    %1024 = vmatprep.subr.mxu0 0.0
    %1025 = vmatpush1.msra.mxu0 0.0
    %1026 = vmatprep.subr.mxu0 0.0
    %1027 = vmatpush1.msra.mxu0 0.0
    %1028 = vmatprep.subr.mxu0 0.0
    %1029 = vmatpush1.msra.mxu0 0.0
    %1030 = vmatprep.subr.mxu0 0.0
    %1031 = vmatpush1.msra.mxu0 0.0
    %1032 = vmatprep.subr.mxu0 0.0
    %1033 = vmatpush1.msra.mxu0 0.0
    %1034 = vmatprep.subr.mxu0 0.0
    %1035 = vmatpush1.msra.mxu0 0.0
    %1036 = vmatprep.subr.mxu0 0.0
    %1037 = vmatpush1.msra.mxu0 0.0
    %1038 = vmatprep.subr.mxu0 0.0
    %1039 = vmatpush1.msra.mxu0 0.0
    %1040 = vmatprep.subr.mxu0 0.0
    %1041 = vmatpush1.msra.mxu0 0.0
    %1042 = vmatprep.subr.mxu0 0.0
    %1043 = vmatpush1.msra.mxu0 0.0
    %1044 = vmatprep.subr.mxu0 0.0
    %1045 = vmatpush1.msra.mxu0 0.0
    %1046 = vmatprep.subr.mxu0 0.0
    %1047 = vmatpush1.msra.mxu0 0.0
    %1048 = vmatprep.subr.mxu0 0.0
    %1049 = vmatpush1.msra.mxu0 0.0
    %1050 = vmatprep.subr.mxu0 0.0
    %1051 = vmatpush1.msra.mxu0 0.0
    %1052 = vmatprep.subr.mxu0 0.0
    %1053 = vmatpush1.msra.mxu0 0.0
    %1054 = vmatprep.mubr.f32.mxu0 0.0
    %1055 = vmatmul.mubr.f32.gmra.mrb[0].mxu0 %v628
    %v1056 = vpop.f32.mrb[0].mxu0
    %v1057 = vadd.f32 %v753, %v1056
    %v1058 = vpop.f32.mrb[0].mxu0
    %v1059 = vadd.f32 %v757, %v1058
    %1060 = vmatprep.mubr.f32.mxu0 0.0
    %1061 = vmatmul.mubr.f32.gmra.mrb[0].mxu0 %v629
    %v1062 = vpop.f32.mrb[0].mxu0
    %v1063 = vadd.f32 %v753, %v1062
    %v1064 = vpop.f32.mrb[0].mxu0
    %v1065 = vadd.f32 %v757, %v1064
    %1066 = vmatprep.mubr.f32.mxu0 0.0
    %1067 = vmatmul.mubr.f32.gmra.mrb[0].mxu0 %v630
    %v1068 = vpop.f32.mrb[0].mxu0
    %v1069 = vadd.f32 %v753, %v1068
    %v1070 = vpop.f32.mrb[0].mxu0
    %v1071 = vadd.f32 %v757, %v1070
    %1072 = vmatprep.mubr.f32.mxu0 0.0
    %1073 = vmatmul.mubr.f32.gmra.mrb[0].mxu0 %v631
    %v1074 = vpop.f32.mrb[0].mxu0
    %v1075 = vadd.f32 %v753, %v1074
    %v1076 = vpop.f32.mrb[0].mxu0
    %v1077 = vadd.f32 %v757, %v1076
    %1078 = vmatprep.mubr.f32.mxu0 0.0
    %1079 = vmatmul.mubr.f32.gmra.mrb[0].mxu0 %v632
    %v1080 = vpop.f32.mrb[0].mxu0
    %v1081 = vadd.f32 %v753, %v1080
    %v1082 = vpop.f32.mrb[0].mxu0
    %v1083 = vadd.f32 %v757, %v1082
    %1084 = vmatprep.mubr.f32.mxu0 0.0
    %1085 = vmatmul.mubr.f32.gmra.mrb[0].mxu0 %v633
    %v1086 = vpop.f32.mrb[0].mxu0
    %v1087 = vadd.f32 %v753, %v1086
    %v1088 = vpop.f32.mrb[0].mxu0
    %v1089 = vadd.f32 %v757, %v1088
    %1090 = vmatprep.mubr.f32.mxu0 0.0
    %1091 = vmatmul.mubr.f32.gmra.mrb[0].mxu0 %v634
    %v1092 = vpop.f32.mrb[0].mxu0
    %v1093 = vadd.f32 %v753, %v1092
    %v1094 = vpop.f32.mrb[0].mxu0
    %v1095 = vadd.f32 %v757, %v1094
    %1096 = vmatprep.mubr.f32.mxu0 0.0
    %1097 = vmatmul.mubr.f32.gmra.mrb[0].mxu0 %v635
    %v1098 = vpop.f32.mrb[0].mxu0
    %v1099 = vadd.f32 %v753, %v1098
    %v1100 = vpop.f32.mrb[0].mxu0
    %v1101 = vadd.f32 %v757, %v1100
    %1102 = vdwg.mxu0
    %1103 = vst [vmem:[#allocation3] sm:$0xff] %v831
    %1104 = vst [vmem:[#allocation3 + $0x8] sm:$0xff] %v833
    %1105 = vst [vmem:[#allocation3 + $0x10] sm:$0xff] %v944
    %1106 = vst [vmem:[#allocation3 + $0x18] sm:$0xff] %v946
    %1107 = vst [vmem:[#allocation3 + $0x20] sm:$0xff] %v1057
    %1108 = vst [vmem:[#allocation3 + $0x28] sm:$0xff] %v1059
    %1109 = vst [vmem:[#allocation3 + $0x30] sm:$0xff] %v837
    %1110 = vst [vmem:[#allocation3 + $0x38] sm:$0xff] %v839
    %1111 = vst [vmem:[#allocation3 + $0x40] sm:$0xff] %v950
    %1112 = vst [vmem:[#allocation3 + $0x48] sm:$0xff] %v952
    %1113 = vst [vmem:[#allocation3 + $0x50] sm:$0xff] %v1063
    %1114 = vst [vmem:[#allocation3 + $0x58] sm:$0xff] %v1065
    %1115 = vst [vmem:[#allocation3 + $0x60] sm:$0xff] %v843
    %1116 = vst [vmem:[#allocation3 + $0x68] sm:$0xff] %v845
    %1117 = vst [vmem:[#allocation3 + $0x70] sm:$0xff] %v956
    %1118 = vst [vmem:[#allocation3 + $0x78] sm:$0xff] %v958
    %1119 = vst [vmem:[#allocation3 + $0x80] sm:$0xff] %v1069
    %1120 = vst [vmem:[#allocation3 + $0x88] sm:$0xff] %v1071
    %1121 = vst [vmem:[#allocation3 + $0x90] sm:$0xff] %v849
    %1122 = vst [vmem:[#allocation3 + $0x98] sm:$0xff] %v851
    %1123 = vst [vmem:[#allocation3 + $0xa0] sm:$0xff] %v962
    %1124 = vst [vmem:[#allocation3 + $0xa8] sm:$0xff] %v964
    %1125 = vst [vmem:[#allocation3 + $0xb0] sm:$0xff] %v1075
    %1126 = vst [vmem:[#allocation3 + $0xb8] sm:$0xff] %v1077
    %1127 = vst [vmem:[#allocation3 + $0xc0] sm:$0xff] %v855
    %1128 = vst [vmem:[#allocation3 + $0xc8] sm:$0xff] %v857
    %1129 = vst [vmem:[#allocation3 + $0xd0] sm:$0xff] %v968
    %1130 = vst [vmem:[#allocation3 + $0xd8] sm:$0xff] %v970
    %1131 = vst [vmem:[#allocation3 + $0xe0] sm:$0xff] %v1081
    %1132 = vst [vmem:[#allocation3 + $0xe8] sm:$0xff] %v1083
    %1133 = vst [vmem:[#allocation3 + $0xf0] sm:$0xff] %v861
    %1134 = vst [vmem:[#allocation3 + $0xf8] sm:$0xff] %v863
    %1135 = vst [vmem:[#allocation3 + $0x100] sm:$0xff] %v974
    %1136 = vst [vmem:[#allocation3 + $0x108] sm:$0xff] %v976
    %1137 = vst [vmem:[#allocation3 + $0x110] sm:$0xff] %v1087
    %1138 = vst [vmem:[#allocation3 + $0x118] sm:$0xff] %v1089
    %1139 = vst [vmem:[#allocation3 + $0x120] sm:$0xff] %v867
    %1140 = vst [vmem:[#allocation3 + $0x128] sm:$0xff] %v869
    %1141 = vst [vmem:[#allocation3 + $0x130] sm:$0xff] %v980
    %1142 = vst [vmem:[#allocation3 + $0x138] sm:$0xff] %v982
    %1143 = vst [vmem:[#allocation3 + $0x140] sm:$0xff] %v1093
    %1144 = vst [vmem:[#allocation3 + $0x148] sm:$0xff] %v1095
    %1145 = vst [vmem:[#allocation3 + $0x150] sm:$0xff] %v873
    %1146 = vst [vmem:[#allocation3 + $0x158] sm:$0xff] %v875
    %1147 = vst [vmem:[#allocation3 + $0x160] sm:$0xff] %v986
    %1148 = vst [vmem:[#allocation3 + $0x168] sm:$0xff] %v988
    %1149 = vst [vmem:[#allocation3 + $0x170] sm:$0xff] %v1099
    %1150 = vst [vmem:[#allocation3 + $0x178] sm:$0xff] %v1101
    %v1151 = vld [vmem:[#allocation12] sm:$0xff]
    %v1152 = vld [vmem:[#allocation12 + $0x8] sm:$0xff]
    %v1153 = vld [vmem:[#allocation12 + $0x10] sm:$0xff]
    %v1154 = vld [vmem:[#allocation12 + $0x18] sm:$0xff]
    %v1155 = vld [vmem:[#allocation12 + $0x20] sm:$0xff]
    %v1156 = vld [vmem:[#allocation12 + $0x28] sm:$0xff]
    %v1157 = vld [vmem:[#allocation12 + $0x30] sm:$0xff]
    %v1158 = vld [vmem:[#allocation12 + $0x38] sm:$0xff]
    %v1159 = vld [vmem:[#allocation12 + $0x40] sm:$0xff]
    %v1160 = vld [vmem:[#allocation12 + $0x48] sm:$0xff]
    %v1161 = vld [vmem:[#allocation12 + $0x50] sm:$0xff]
    %v1162 = vld [vmem:[#allocation12 + $0x58] sm:$0xff]
    %v1163 = vld [vmem:[#allocation12 + $0x60] sm:$0xff]
    %v1164 = vld [vmem:[#allocation12 + $0x68] sm:$0xff]
    %v1165 = vld [vmem:[#allocation12 + $0x70] sm:$0xff]
    %v1166 = vld [vmem:[#allocation12 + $0x78] sm:$0xff]
    %v1167 = vld [vmem:[#allocation12 + $0x80] sm:$0xff]
    %v1168 = vld [vmem:[#allocation12 + $0x88] sm:$0xff]
    %v1169 = vld [vmem:[#allocation12 + $0x90] sm:$0xff]
    %v1170 = vld [vmem:[#allocation12 + $0x98] sm:$0xff]
    %v1171 = vld [vmem:[#allocation12 + $0xa0] sm:$0xff]
    %v1172 = vld [vmem:[#allocation12 + $0xa8] sm:$0xff]
    %v1173 = vld [vmem:[#allocation12 + $0xb0] sm:$0xff]
    %v1174 = vld [vmem:[#allocation12 + $0xb8] sm:$0xff]
    %v1175 = vld [vmem:[#allocation12 + $0xc0] sm:$0xff]
    %v1176 = vld [vmem:[#allocation12 + $0xc8] sm:$0xff]
    %v1177 = vld [vmem:[#allocation12 + $0xd0] sm:$0xff]
    %v1178 = vld [vmem:[#allocation12 + $0xd8] sm:$0xff]
    %v1179 = vld [vmem:[#allocation12 + $0xe0] sm:$0xff]
    %v1180 = vld [vmem:[#allocation12 + $0xe8] sm:$0xff]
    %v1181 = vld [vmem:[#allocation12 + $0xf0] sm:$0xff]
    %v1182 = vld [vmem:[#allocation12 + $0xf8] sm:$0xff]
    %v1183 = vld [vmem:[#allocation12 + $0x100] sm:$0xff]
    %v1184 = vld [vmem:[#allocation12 + $0x108] sm:$0xff]
    %v1185 = vld [vmem:[#allocation12 + $0x110] sm:$0xff]
    %v1186 = vld [vmem:[#allocation12 + $0x118] sm:$0xff]
    %v1187 = vld [vmem:[#allocation12 + $0x120] sm:$0xff]
    %v1188 = vld [vmem:[#allocation12 + $0x128] sm:$0xff]
    %v1189 = vld [vmem:[#allocation12 + $0x130] sm:$0xff]
    %v1190 = vld [vmem:[#allocation12 + $0x138] sm:$0xff]
    %v1191 = vld [vmem:[#allocation12 + $0x140] sm:$0xff]
    %v1192 = vld [vmem:[#allocation12 + $0x148] sm:$0xff]
    %v1193 = vld [vmem:[#allocation12 + $0x150] sm:$0xff]
    %v1194 = vld [vmem:[#allocation12 + $0x158] sm:$0xff]
    %v1195 = vld [vmem:[#allocation12 + $0x160] sm:$0xff]
    %v1196 = vld [vmem:[#allocation12 + $0x168] sm:$0xff]
    %v1197 = vld [vmem:[#allocation12 + $0x170] sm:$0xff]
    %v1198 = vld [vmem:[#allocation12 + $0x178] sm:$0xff]
    %v1199 = vld [vmem:[#allocation12 + $0x180] sm:$0xff]
    %v1200 = vld [vmem:[#allocation12 + $0x188] sm:$0xff]
    %v1201 = vld [vmem:[#allocation12 + $0x190] sm:$0xff]
    %v1202 = vld [vmem:[#allocation12 + $0x198] sm:$0xff]
    %v1203 = vld [vmem:[#allocation12 + $0x1a0] sm:$0xff]
    %v1204 = vld [vmem:[#allocation12 + $0x1a8] sm:$0xff]
    %v1205 = vld [vmem:[#allocation12 + $0x1b0] sm:$0xff]
    %v1206 = vld [vmem:[#allocation12 + $0x1b8] sm:$0xff]
    %v1207 = vld [vmem:[#allocation12 + $0x1c0] sm:$0xff]
    %v1208 = vld [vmem:[#allocation12 + $0x1c8] sm:$0xff]
    %v1209 = vld [vmem:[#allocation12 + $0x1d0] sm:$0xff]
    %v1210 = vld [vmem:[#allocation12 + $0x1d8] sm:$0xff]
    %v1211 = vld [vmem:[#allocation12 + $0x1e0] sm:$0xff]
    %v1212 = vld [vmem:[#allocation12 + $0x1e8] sm:$0xff]
    %v1213 = vld [vmem:[#allocation12 + $0x1f0] sm:$0xff]
    %v1214 = vld [vmem:[#allocation12 + $0x1f8] sm:$0xff]
    %v1215 = vld [vmem:[#allocation12 + $0x200] sm:$0xff]
    %v1216 = vld [vmem:[#allocation12 + $0x208] sm:$0xff]
    %v1217 = vld [vmem:[#allocation12 + $0x210] sm:$0xff]
    %v1218 = vld [vmem:[#allocation12 + $0x218] sm:$0xff]
    %v1219 = vld [vmem:[#allocation12 + $0x220] sm:$0xff]
    %v1220 = vld [vmem:[#allocation12 + $0x228] sm:$0xff]
    %v1221 = vld [vmem:[#allocation12 + $0x230] sm:$0xff]
    %v1222 = vld [vmem:[#allocation12 + $0x238] sm:$0xff]
    %v1223 = vld [vmem:[#allocation12 + $0x240] sm:$0xff]
    %v1224 = vld [vmem:[#allocation12 + $0x248] sm:$0xff]
    %v1225 = vld [vmem:[#allocation12 + $0x250] sm:$0xff]
    %v1226 = vld [vmem:[#allocation12 + $0x258] sm:$0xff]
    %v1227 = vld [vmem:[#allocation12 + $0x260] sm:$0xff]
    %v1228 = vld [vmem:[#allocation12 + $0x268] sm:$0xff]
    %v1229 = vld [vmem:[#allocation12 + $0x270] sm:$0xff]
    %v1230 = vld [vmem:[#allocation12 + $0x278] sm:$0xff]
    %v1231 = vld [vmem:[#allocation12 + $0x280] sm:$0xff]
    %v1232 = vld [vmem:[#allocation12 + $0x288] sm:$0xff]
    %v1233 = vld [vmem:[#allocation12 + $0x290] sm:$0xff]
    %v1234 = vld [vmem:[#allocation12 + $0x298] sm:$0xff]
    %v1235 = vld [vmem:[#allocation12 + $0x2a0] sm:$0xff]
    %v1236 = vld [vmem:[#allocation12 + $0x2a8] sm:$0xff]
    %v1237 = vld [vmem:[#allocation12 + $0x2b0] sm:$0xff]
    %v1238 = vld [vmem:[#allocation12 + $0x2b8] sm:$0xff]
    %v1239 = vld [vmem:[#allocation12 + $0x2c0] sm:$0xff]
    %v1240 = vld [vmem:[#allocation12 + $0x2c8] sm:$0xff]
    %v1241 = vld [vmem:[#allocation12 + $0x2d0] sm:$0xff]
    %v1242 = vld [vmem:[#allocation12 + $0x2d8] sm:$0xff]
    %v1243 = vld [vmem:[#allocation12 + $0x2e0] sm:$0xff]
    %v1244 = vld [vmem:[#allocation12 + $0x2e8] sm:$0xff]
    %v1245 = vld [vmem:[#allocation12 + $0x2f0] sm:$0xff]
    %v1246 = vld [vmem:[#allocation12 + $0x2f8] sm:$0xff]
    %v1247 = vld [vmem:[#allocation14] sm:$0x3f]
    %v1248 = vpack.c.bf16 0.0, 0.0
    %v1250 = vlaneseq
    %v1251 = vshrl.u32 %v1250, 7
    %v1252 = vsub.s32 0, %v1251
    %v1253 = vrot.slane %v1247, %v1252
    %v1254 = vlaneseq
    %v1255 = vshrl.u32 %v1254, 7
    %v1256 = vsub.s32 1, %v1255
    %v1257 = vrot.slane %v1247, %v1256
    %v1258 = vlaneseq
    %v1259 = vshrl.u32 %v1258, 7
    %v1260 = vsub.s32 2, %v1259
    %v1261 = vrot.slane %v1247, %v1260
    %v1262 = vlaneseq
    %v1263 = vshrl.u32 %v1262, 7
    %v1264 = vsub.s32 3, %v1263
    %v1265 = vrot.slane %v1247, %v1264
    %v1266 = vlaneseq
    %v1267 = vshrl.u32 %v1266, 7
    %v1268 = vsub.s32 4, %v1267
    %v1269 = vrot.slane %v1247, %v1268
    %v1270 = vlaneseq
    %v1271 = vshrl.u32 %v1270, 7
    %v1272 = vsub.s32 5, %v1271
    %v1273 = vrot.slane %v1247, %v1272
    %v1376 = vunpack.c.l.b16 %v1151
    %v1377 = vunpack.c.h.b16 %v1151
    %v1378 = vunpack.c.l.b16 %v1152
    %v1379 = vunpack.c.h.b16 %v1152
    %v1380 = vunpack.c.l.b16 %v1153
    %v1381 = vunpack.c.h.b16 %v1153
    %v1382 = vunpack.c.l.b16 %v1154
    %v1383 = vunpack.c.h.b16 %v1154
    %v1384 = vunpack.c.l.b16 %v1155
    %v1385 = vunpack.c.h.b16 %v1155
    %v1386 = vunpack.c.l.b16 %v1156
    %v1387 = vunpack.c.h.b16 %v1156
    %v1388 = vunpack.c.l.b16 %v1157
    %v1389 = vunpack.c.h.b16 %v1157
    %v1390 = vunpack.c.l.b16 %v1158
    %v1391 = vunpack.c.h.b16 %v1158
    %v1392 = vunpack.c.l.b16 %v1159
    %v1393 = vunpack.c.h.b16 %v1159
    %v1394 = vunpack.c.l.b16 %v1160
    %v1395 = vunpack.c.h.b16 %v1160
    %v1396 = vunpack.c.l.b16 %v1161
    %v1397 = vunpack.c.h.b16 %v1161
    %v1398 = vunpack.c.l.b16 %v1162
    %v1399 = vunpack.c.h.b16 %v1162
    %v1400 = vunpack.c.l.b16 %v1163
    %v1401 = vunpack.c.h.b16 %v1163
    %v1402 = vunpack.c.l.b16 %v1164
    %v1403 = vunpack.c.h.b16 %v1164
    %v1404 = vunpack.c.l.b16 %v1165
    %v1405 = vunpack.c.h.b16 %v1165
    %v1406 = vunpack.c.l.b16 %v1166
    %v1407 = vunpack.c.h.b16 %v1166
    %v1408 = vunpack.c.l.b16 %v1167
    %v1409 = vunpack.c.h.b16 %v1167
    %v1410 = vunpack.c.l.b16 %v1168
    %v1411 = vunpack.c.h.b16 %v1168
    %v1412 = vunpack.c.l.b16 %v1169
    %v1413 = vunpack.c.h.b16 %v1169
    %v1414 = vunpack.c.l.b16 %v1170
    %v1415 = vunpack.c.h.b16 %v1170
    %v1416 = vunpack.c.l.b16 %v1171
    %v1417 = vunpack.c.h.b16 %v1171
    %v1418 = vunpack.c.l.b16 %v1172
    %v1419 = vunpack.c.h.b16 %v1172
    %v1420 = vunpack.c.l.b16 %v1173
    %v1421 = vunpack.c.h.b16 %v1173
    %v1422 = vunpack.c.l.b16 %v1174
    %v1423 = vunpack.c.h.b16 %v1174
    %v1424 = vunpack.c.l.b16 %v1175
    %v1425 = vunpack.c.h.b16 %v1175
    %v1426 = vunpack.c.l.b16 %v1176
    %v1427 = vunpack.c.h.b16 %v1176
    %v1428 = vunpack.c.l.b16 %v1177
    %v1429 = vunpack.c.h.b16 %v1177
    %v1430 = vunpack.c.l.b16 %v1178
    %v1431 = vunpack.c.h.b16 %v1178
    %v1432 = vunpack.c.l.b16 %v1179
    %v1433 = vunpack.c.h.b16 %v1179
    %v1434 = vunpack.c.l.b16 %v1180
    %v1435 = vunpack.c.h.b16 %v1180
    %v1436 = vunpack.c.l.b16 %v1181
    %v1437 = vunpack.c.h.b16 %v1181
    %v1438 = vunpack.c.l.b16 %v1182
    %v1439 = vunpack.c.h.b16 %v1182
    %v1440 = vunpack.c.l.b16 %v1183
    %v1441 = vunpack.c.h.b16 %v1183
    %v1442 = vunpack.c.l.b16 %v1184
    %v1443 = vunpack.c.h.b16 %v1184
    %v1444 = vunpack.c.l.b16 %v1185
    %v1445 = vunpack.c.h.b16 %v1185
    %v1446 = vunpack.c.l.b16 %v1186
    %v1447 = vunpack.c.h.b16 %v1186
    %v1448 = vunpack.c.l.b16 %v1187
    %v1449 = vunpack.c.h.b16 %v1187
    %v1450 = vunpack.c.l.b16 %v1188
    %v1451 = vunpack.c.h.b16 %v1188
    %v1452 = vunpack.c.l.b16 %v1189
    %v1453 = vunpack.c.h.b16 %v1189
    %v1454 = vunpack.c.l.b16 %v1190
    %v1455 = vunpack.c.h.b16 %v1190
    %v1456 = vunpack.c.l.b16 %v1191
    %v1457 = vunpack.c.h.b16 %v1191
    %v1458 = vunpack.c.l.b16 %v1192
    %v1459 = vunpack.c.h.b16 %v1192
    %v1460 = vunpack.c.l.b16 %v1193
    %v1461 = vunpack.c.h.b16 %v1193
    %v1462 = vunpack.c.l.b16 %v1194
    %v1463 = vunpack.c.h.b16 %v1194
    %v1464 = vunpack.c.l.b16 %v1195
    %v1465 = vunpack.c.h.b16 %v1195
    %v1466 = vunpack.c.l.b16 %v1196
    %v1467 = vunpack.c.h.b16 %v1196
    %v1468 = vunpack.c.l.b16 %v1197
    %v1469 = vunpack.c.h.b16 %v1197
    %v1470 = vunpack.c.l.b16 %v1198
    %v1471 = vunpack.c.h.b16 %v1198
    %v1472 = vunpack.c.l.b16 %v1199
    %v1473 = vunpack.c.h.b16 %v1199
    %v1474 = vunpack.c.l.b16 %v1200
    %v1475 = vunpack.c.h.b16 %v1200
    %v1476 = vunpack.c.l.b16 %v1201
    %v1477 = vunpack.c.h.b16 %v1201
    %v1478 = vunpack.c.l.b16 %v1202
    %v1479 = vunpack.c.h.b16 %v1202
    %v1480 = vunpack.c.l.b16 %v1203
    %v1481 = vunpack.c.h.b16 %v1203
    %v1482 = vunpack.c.l.b16 %v1204
    %v1483 = vunpack.c.h.b16 %v1204
    %v1484 = vunpack.c.l.b16 %v1205
    %v1485 = vunpack.c.h.b16 %v1205
    %v1486 = vunpack.c.l.b16 %v1206
    %v1487 = vunpack.c.h.b16 %v1206
    %v1488 = vunpack.c.l.b16 %v1207
    %v1489 = vunpack.c.h.b16 %v1207
    %v1490 = vunpack.c.l.b16 %v1208
    %v1491 = vunpack.c.h.b16 %v1208
    %v1492 = vunpack.c.l.b16 %v1209
    %v1493 = vunpack.c.h.b16 %v1209
    %v1494 = vunpack.c.l.b16 %v1210
    %v1495 = vunpack.c.h.b16 %v1210
    %v1496 = vunpack.c.l.b16 %v1211
    %v1497 = vunpack.c.h.b16 %v1211
    %v1498 = vunpack.c.l.b16 %v1212
    %v1499 = vunpack.c.h.b16 %v1212
    %v1500 = vunpack.c.l.b16 %v1213
    %v1501 = vunpack.c.h.b16 %v1213
    %v1502 = vunpack.c.l.b16 %v1214
    %v1503 = vunpack.c.h.b16 %v1214
    %v1504 = vunpack.c.l.b16 %v1215
    %v1505 = vunpack.c.h.b16 %v1215
    %v1506 = vunpack.c.l.b16 %v1216
    %v1507 = vunpack.c.h.b16 %v1216
    %v1508 = vunpack.c.l.b16 %v1217
    %v1509 = vunpack.c.h.b16 %v1217
    %v1510 = vunpack.c.l.b16 %v1218
    %v1511 = vunpack.c.h.b16 %v1218
    %v1512 = vunpack.c.l.b16 %v1219
    %v1513 = vunpack.c.h.b16 %v1219
    %v1514 = vunpack.c.l.b16 %v1220
    %v1515 = vunpack.c.h.b16 %v1220
    %v1516 = vunpack.c.l.b16 %v1221
    %v1517 = vunpack.c.h.b16 %v1221
    %v1518 = vunpack.c.l.b16 %v1222
    %v1519 = vunpack.c.h.b16 %v1222
    %v1520 = vunpack.c.l.b16 %v1223
    %v1521 = vunpack.c.h.b16 %v1223
    %v1522 = vunpack.c.l.b16 %v1224
    %v1523 = vunpack.c.h.b16 %v1224
    %v1524 = vunpack.c.l.b16 %v1225
    %v1525 = vunpack.c.h.b16 %v1225
    %v1526 = vunpack.c.l.b16 %v1226
    %v1527 = vunpack.c.h.b16 %v1226
    %v1528 = vunpack.c.l.b16 %v1227
    %v1529 = vunpack.c.h.b16 %v1227
    %v1530 = vunpack.c.l.b16 %v1228
    %v1531 = vunpack.c.h.b16 %v1228
    %v1532 = vunpack.c.l.b16 %v1229
    %v1533 = vunpack.c.h.b16 %v1229
    %v1534 = vunpack.c.l.b16 %v1230
    %v1535 = vunpack.c.h.b16 %v1230
    %v1536 = vunpack.c.l.b16 %v1231
    %v1537 = vunpack.c.h.b16 %v1231
    %v1538 = vunpack.c.l.b16 %v1232
    %v1539 = vunpack.c.h.b16 %v1232
    %v1540 = vunpack.c.l.b16 %v1233
    %v1541 = vunpack.c.h.b16 %v1233
    %v1542 = vunpack.c.l.b16 %v1234
    %v1543 = vunpack.c.h.b16 %v1234
    %v1544 = vunpack.c.l.b16 %v1235
    %v1545 = vunpack.c.h.b16 %v1235
    %v1546 = vunpack.c.l.b16 %v1236
    %v1547 = vunpack.c.h.b16 %v1236
    %v1548 = vunpack.c.l.b16 %v1237
    %v1549 = vunpack.c.h.b16 %v1237
    %v1550 = vunpack.c.l.b16 %v1238
    %v1551 = vunpack.c.h.b16 %v1238
    %v1552 = vunpack.c.l.b16 %v1239
    %v1553 = vunpack.c.h.b16 %v1239
    %v1554 = vunpack.c.l.b16 %v1240
    %v1555 = vunpack.c.h.b16 %v1240
    %v1556 = vunpack.c.l.b16 %v1241
    %v1557 = vunpack.c.h.b16 %v1241
    %v1558 = vunpack.c.l.b16 %v1242
    %v1559 = vunpack.c.h.b16 %v1242
    %v1560 = vunpack.c.l.b16 %v1243
    %v1561 = vunpack.c.h.b16 %v1243
    %v1562 = vunpack.c.l.b16 %v1244
    %v1563 = vunpack.c.h.b16 %v1244
    %v1564 = vunpack.c.l.b16 %v1245
    %v1565 = vunpack.c.h.b16 %v1245
    %v1566 = vunpack.c.l.b16 %v1246
    %v1567 = vunpack.c.h.b16 %v1246
    %v1568 = vpack.c.b16 %v1382, %v1376
    %v1569 = vpack.c.b16 %v1383, %v1377
    %v1570 = vpack.c.b16 %v1384, %v1378
    %v1571 = vpack.c.b16 %v1385, %v1379
    %v1572 = vpack.c.b16 %v1386, %v1380
    %v1573 = vpack.c.b16 %v1387, %v1381
    %v1574 = vpack.c.b16 %v1394, %v1388
    %v1575 = vpack.c.b16 %v1395, %v1389
    %v1576 = vpack.c.b16 %v1396, %v1390
    %v1577 = vpack.c.b16 %v1397, %v1391
    %v1578 = vpack.c.b16 %v1398, %v1392
    %v1579 = vpack.c.b16 %v1399, %v1393
    %v1580 = vpack.c.b16 %v1406, %v1400
    %v1581 = vpack.c.b16 %v1407, %v1401
    %v1582 = vpack.c.b16 %v1408, %v1402
    %v1583 = vpack.c.b16 %v1409, %v1403
    %v1584 = vpack.c.b16 %v1410, %v1404
    %v1585 = vpack.c.b16 %v1411, %v1405
    %v1586 = vpack.c.b16 %v1418, %v1412
    %v1587 = vpack.c.b16 %v1419, %v1413
    %v1588 = vpack.c.b16 %v1420, %v1414
    %v1589 = vpack.c.b16 %v1421, %v1415
    %v1590 = vpack.c.b16 %v1422, %v1416
    %v1591 = vpack.c.b16 %v1423, %v1417
    %v1592 = vpack.c.b16 %v1430, %v1424
    %v1593 = vpack.c.b16 %v1431, %v1425
    %v1594 = vpack.c.b16 %v1432, %v1426
    %v1595 = vpack.c.b16 %v1433, %v1427
    %v1596 = vpack.c.b16 %v1434, %v1428
    %v1597 = vpack.c.b16 %v1435, %v1429
    %v1598 = vpack.c.b16 %v1442, %v1436
    %v1599 = vpack.c.b16 %v1443, %v1437
    %v1600 = vpack.c.b16 %v1444, %v1438
    %v1601 = vpack.c.b16 %v1445, %v1439
    %v1602 = vpack.c.b16 %v1446, %v1440
    %v1603 = vpack.c.b16 %v1447, %v1441
    %v1604 = vpack.c.b16 %v1454, %v1448
    %v1605 = vpack.c.b16 %v1455, %v1449
    %v1606 = vpack.c.b16 %v1456, %v1450
    %v1607 = vpack.c.b16 %v1457, %v1451
    %v1608 = vpack.c.b16 %v1458, %v1452
    %v1609 = vpack.c.b16 %v1459, %v1453
    %v1610 = vpack.c.b16 %v1466, %v1460
    %v1611 = vpack.c.b16 %v1467, %v1461
    %v1612 = vpack.c.b16 %v1468, %v1462
    %v1613 = vpack.c.b16 %v1469, %v1463
    %v1614 = vpack.c.b16 %v1470, %v1464
    %v1615 = vpack.c.b16 %v1471, %v1465
    %v1616 = vpack.c.b16 %v1478, %v1472
    %v1617 = vpack.c.b16 %v1479, %v1473
    %v1618 = vpack.c.b16 %v1480, %v1474
    %v1619 = vpack.c.b16 %v1481, %v1475
    %v1620 = vpack.c.b16 %v1482, %v1476
    %v1621 = vpack.c.b16 %v1483, %v1477
    %v1622 = vpack.c.b16 %v1490, %v1484
    %v1623 = vpack.c.b16 %v1491, %v1485
    %v1624 = vpack.c.b16 %v1492, %v1486
    %v1625 = vpack.c.b16 %v1493, %v1487
    %v1626 = vpack.c.b16 %v1494, %v1488
    %v1627 = vpack.c.b16 %v1495, %v1489
    %v1628 = vpack.c.b16 %v1502, %v1496
    %v1629 = vpack.c.b16 %v1503, %v1497
    %v1630 = vpack.c.b16 %v1504, %v1498
    %v1631 = vpack.c.b16 %v1505, %v1499
    %v1632 = vpack.c.b16 %v1506, %v1500
    %v1633 = vpack.c.b16 %v1507, %v1501
    %v1634 = vpack.c.b16 %v1514, %v1508
    %v1635 = vpack.c.b16 %v1515, %v1509
    %v1636 = vpack.c.b16 %v1516, %v1510
    %v1637 = vpack.c.b16 %v1517, %v1511
    %v1638 = vpack.c.b16 %v1518, %v1512
    %v1639 = vpack.c.b16 %v1519, %v1513
    %v1640 = vpack.c.b16 %v1526, %v1520
    %v1641 = vpack.c.b16 %v1527, %v1521
    %v1642 = vpack.c.b16 %v1528, %v1522
    %v1643 = vpack.c.b16 %v1529, %v1523
    %v1644 = vpack.c.b16 %v1530, %v1524
    %v1645 = vpack.c.b16 %v1531, %v1525
    %v1646 = vpack.c.b16 %v1538, %v1532
    %v1647 = vpack.c.b16 %v1539, %v1533
    %v1648 = vpack.c.b16 %v1540, %v1534
    %v1649 = vpack.c.b16 %v1541, %v1535
    %v1650 = vpack.c.b16 %v1542, %v1536
    %v1651 = vpack.c.b16 %v1543, %v1537
    %v1652 = vpack.c.b16 %v1550, %v1544
    %v1653 = vpack.c.b16 %v1551, %v1545
    %v1654 = vpack.c.b16 %v1552, %v1546
    %v1655 = vpack.c.b16 %v1553, %v1547
    %v1656 = vpack.c.b16 %v1554, %v1548
    %v1657 = vpack.c.b16 %v1555, %v1549
    %v1658 = vpack.c.b16 %v1562, %v1556
    %v1659 = vpack.c.b16 %v1563, %v1557
    %v1660 = vpack.c.b16 %v1564, %v1558
    %v1661 = vpack.c.b16 %v1565, %v1559
    %v1662 = vpack.c.b16 %v1566, %v1560
    %v1663 = vpack.c.b16 %v1567, %v1561
    %1760 = vmatprep.subr.bf16.mxu0 %v1569
    %1761 = vmatpush1.bf16.msra.mxu0 %v1568
    %1762 = vmatprep.subr.bf16.mxu0 %v1575
    %1763 = vmatpush1.bf16.msra.mxu0 %v1574
    %1764 = vmatprep.subr.bf16.mxu0 %v1581
    %1765 = vmatpush1.bf16.msra.mxu0 %v1580
    %1766 = vmatprep.subr.bf16.mxu0 %v1587
    %1767 = vmatpush1.bf16.msra.mxu0 %v1586
    %1768 = vmatprep.subr.bf16.mxu0 %v1593
    %1769 = vmatpush1.bf16.msra.mxu0 %v1592
    %1770 = vmatprep.subr.bf16.mxu0 %v1599
    %1771 = vmatpush1.bf16.msra.mxu0 %v1598
    %1772 = vmatprep.subr.bf16.mxu0 %v1605
    %1773 = vmatpush1.bf16.msra.mxu0 %v1604
    %1774 = vmatprep.subr.bf16.mxu0 %v1611
    %1775 = vmatpush1.bf16.msra.mxu0 %v1610
    %1776 = vmatprep.subr.bf16.mxu0 %v1617
    %1777 = vmatpush1.bf16.msra.mxu0 %v1616
    %1778 = vmatprep.subr.bf16.mxu0 %v1623
    %1779 = vmatpush1.bf16.msra.mxu0 %v1622
    %1780 = vmatprep.subr.bf16.mxu0 %v1629
    %1781 = vmatpush1.bf16.msra.mxu0 %v1628
    %1782 = vmatprep.subr.bf16.mxu0 %v1635
    %1783 = vmatpush1.bf16.msra.mxu0 %v1634
    %1784 = vmatprep.subr.bf16.mxu0 %v1641
    %1785 = vmatpush1.bf16.msra.mxu0 %v1640
    %1786 = vmatprep.subr.bf16.mxu0 %v1647
    %1787 = vmatpush1.bf16.msra.mxu0 %v1646
    %1788 = vmatprep.subr.bf16.mxu0 %v1653
    %1789 = vmatpush1.bf16.msra.mxu0 %v1652
    %1790 = vmatprep.subr.bf16.mxu0 %v1659
    %1791 = vmatpush1.bf16.msra.mxu0 %v1658
    %1792 = vmatprep.mubr.bf16.mxu0 %v1248
    %1793 = vmatmul.mubr.bf16.gmra.mrb[0].mxu0 %v1248
    %v1794 = vpop.f32.mrb[0].mxu0
    %v1795 = vadd.f32 %v1253, %v1794
    %v1796 = vpop.f32.mrb[0].mxu0
    %v1797 = vadd.f32 %v1257, %v1796
    %v1798 = vpop.f32.mrb[0].mxu0
    %v1799 = vpop.f32.mrb[0].mxu0
    %1800 = vdwg.mxu0
    %1801 = vmatprep.subr.bf16.mxu0 %v1571
    %1802 = vmatpush1.bf16.msra.mxu0 %v1570
    %1803 = vmatprep.subr.bf16.mxu0 %v1577
    %1804 = vmatpush1.bf16.msra.mxu0 %v1576
    %1805 = vmatprep.subr.bf16.mxu0 %v1583
    %1806 = vmatpush1.bf16.msra.mxu0 %v1582
    %1807 = vmatprep.subr.bf16.mxu0 %v1589
    %1808 = vmatpush1.bf16.msra.mxu0 %v1588
    %1809 = vmatprep.subr.bf16.mxu0 %v1595
    %1810 = vmatpush1.bf16.msra.mxu0 %v1594
    %1811 = vmatprep.subr.bf16.mxu0 %v1601
    %1812 = vmatpush1.bf16.msra.mxu0 %v1600
    %1813 = vmatprep.subr.bf16.mxu0 %v1607
    %1814 = vmatpush1.bf16.msra.mxu0 %v1606
    %1815 = vmatprep.subr.bf16.mxu0 %v1613
    %1816 = vmatpush1.bf16.msra.mxu0 %v1612
    %1817 = vmatprep.subr.bf16.mxu0 %v1619
    %1818 = vmatpush1.bf16.msra.mxu0 %v1618
    %1819 = vmatprep.subr.bf16.mxu0 %v1625
    %1820 = vmatpush1.bf16.msra.mxu0 %v1624
    %1821 = vmatprep.subr.bf16.mxu0 %v1631
    %1822 = vmatpush1.bf16.msra.mxu0 %v1630
    %1823 = vmatprep.subr.bf16.mxu0 %v1637
    %1824 = vmatpush1.bf16.msra.mxu0 %v1636
    %1825 = vmatprep.subr.bf16.mxu0 %v1643
    %1826 = vmatpush1.bf16.msra.mxu0 %v1642
    %1827 = vmatprep.subr.bf16.mxu0 %v1649
    %1828 = vmatpush1.bf16.msra.mxu0 %v1648
    %1829 = vmatprep.subr.bf16.mxu0 %v1655
    %1830 = vmatpush1.bf16.msra.mxu0 %v1654
    %1831 = vmatprep.subr.bf16.mxu0 %v1661
    %1832 = vmatpush1.bf16.msra.mxu0 %v1660
    %1833 = vmatprep.mubr.bf16.mxu0 %v1248
    %1834 = vmatmul.mubr.bf16.gmra.mrb[0].mxu0 %v1248
    %v1835 = vpop.f32.mrb[0].mxu0
    %v1836 = vadd.f32 %v1261, %v1835
    %v1837 = vpop.f32.mrb[0].mxu0
    %v1838 = vadd.f32 %v1265, %v1837
    %v1839 = vpop.f32.mrb[0].mxu0
    %v1840 = vpop.f32.mrb[0].mxu0
    %1841 = vdwg.mxu0
    %1842 = vmatprep.subr.bf16.mxu0 %v1573
    %1843 = vmatpush1.bf16.msra.mxu0 %v1572
    %1844 = vmatprep.subr.bf16.mxu0 %v1579
    %1845 = vmatpush1.bf16.msra.mxu0 %v1578
    %1846 = vmatprep.subr.bf16.mxu0 %v1585
    %1847 = vmatpush1.bf16.msra.mxu0 %v1584
    %1848 = vmatprep.subr.bf16.mxu0 %v1591
    %1849 = vmatpush1.bf16.msra.mxu0 %v1590
    %1850 = vmatprep.subr.bf16.mxu0 %v1597
    %1851 = vmatpush1.bf16.msra.mxu0 %v1596
    %1852 = vmatprep.subr.bf16.mxu0 %v1603
    %1853 = vmatpush1.bf16.msra.mxu0 %v1602
    %1854 = vmatprep.subr.bf16.mxu0 %v1609
    %1855 = vmatpush1.bf16.msra.mxu0 %v1608
    %1856 = vmatprep.subr.bf16.mxu0 %v1615
    %1857 = vmatpush1.bf16.msra.mxu0 %v1614
    %1858 = vmatprep.subr.bf16.mxu0 %v1621
    %1859 = vmatpush1.bf16.msra.mxu0 %v1620
    %1860 = vmatprep.subr.bf16.mxu0 %v1627
    %1861 = vmatpush1.bf16.msra.mxu0 %v1626
    %1862 = vmatprep.subr.bf16.mxu0 %v1633
    %1863 = vmatpush1.bf16.msra.mxu0 %v1632
    %1864 = vmatprep.subr.bf16.mxu0 %v1639
    %1865 = vmatpush1.bf16.msra.mxu0 %v1638
    %1866 = vmatprep.subr.bf16.mxu0 %v1645
    %1867 = vmatpush1.bf16.msra.mxu0 %v1644
    %1868 = vmatprep.subr.bf16.mxu0 %v1651
    %1869 = vmatpush1.bf16.msra.mxu0 %v1650
    %1870 = vmatprep.subr.bf16.mxu0 %v1657
    %1871 = vmatpush1.bf16.msra.mxu0 %v1656
    %1872 = vmatprep.subr.bf16.mxu0 %v1663
    %1873 = vmatpush1.bf16.msra.mxu0 %v1662
    %1874 = vmatprep.mubr.bf16.mxu0 %v1248
    %1875 = vmatmul.mubr.bf16.gmra.mrb[0].mxu0 %v1248
    %v1876 = vpop.f32.mrb[0].mxu0
    %v1877 = vadd.f32 %v1269, %v1876
    %v1878 = vpop.f32.mrb[0].mxu0
    %v1879 = vadd.f32 %v1273, %v1878
    %v1880 = vpop.f32.mrb[0].mxu0
    %v1881 = vpop.f32.mrb[0].mxu0
    %1882 = vdwg.mxu0
    %v1883 = vld [vmem:[#allocation3] sm:$0xff]
    %v1884 = vld [vmem:[#allocation3 + $0x8] sm:$0xff]
    %v1885 = vld [vmem:[#allocation3 + $0x10] sm:$0xff]
    %v1886 = vld [vmem:[#allocation3 + $0x168] sm:$0xff]
    %v1887 = vld [vmem:[#allocation3 + $0x170] sm:$0xff]
    %v1888 = vld [vmem:[#allocation3 + $0x178] sm:$0xff]
    %v1889 = vadd.f32 %v1883, %v1795
    %v1890 = vmul.f32 %v1889, 0.5
    %v1891 = vtanh.pop %v1890
    %v1892 = vadd.f32 %v1891, 1.0
    %v1893 = vmul.f32 %v1892, 0.5
    %v1894 = vadd.f32 %v1884, %v1797
    %v1895 = vmul.f32 %v1894, 0.5
    %v1896 = vtanh.pop %v1895
    %v1897 = vadd.f32 %v1896, 1.0
    %v1898 = vmul.f32 %v1897, 0.5
    %v1899 = vmul.f32 %v1893, %v1836
    %v1900 = vadd.f32 %v1885, %v1899
    %v1901 = vtanh.pop %v1900
    %v1902 = vsub.f32 1.0, %v1898
    %v1903 = vmul.f32 %v1902, %v1901
    %v1904 = vmul.f32 %v1898, 0.0
    %v1905 = vadd.f32 %v1903, %v1904
    %v1906 = vadd.f32 %v1886, %v1838
    %v1907 = vmul.f32 %v1906, 0.5
    %v1908 = vtanh.pop %v1907
    %v1909 = vadd.f32 %v1908, 1.0
    %v1910 = vmul.f32 %v1909, 0.5
    %v1911 = vadd.f32 %v1887, %v1877
    %v1912 = vmul.f32 %v1911, 0.5
    %v1913 = vtanh.pop %v1912
    %v1914 = vadd.f32 %v1913, 1.0
    %v1915 = vmul.f32 %v1914, 0.5
    %v1916 = vmul.f32 %v1910, %v1879
    %v1917 = vadd.f32 %v1888, %v1916
    %v1918 = vtanh.pop %v1917
    %v1919 = vsub.f32 1.0, %v1915
    %v1920 = vmul.f32 %v1919, %v1918
    %v1921 = vmul.f32 %v1915, 0.0
    %v1922 = vadd.f32 %v1920, %v1921
    %1923 = vst [vmem:[#allocation4] sm:$0xff] %v1905
    %1924 = vst [vmem:[#allocation4 + $0x78] sm:$0xff] %v1922
    %v1925 = vpack.c.bf16 %v1905, %v1905
    %v1926 = vpack.c.bf16 %v1922, %v1922
    %1927 = vmatprep.subr.bf16.mxu0 %v1569
    %1928 = vmatpush1.bf16.msra.mxu0 %v1568
    %1929 = vmatprep.subr.bf16.mxu0 %v1575
    %1930 = vmatpush1.bf16.msra.mxu0 %v1574
    %1931 = vmatprep.subr.bf16.mxu0 %v1581
    %1932 = vmatpush1.bf16.msra.mxu0 %v1580
    %1933 = vmatprep.subr.bf16.mxu0 %v1587
    %1934 = vmatpush1.bf16.msra.mxu0 %v1586
    %1935 = vmatprep.subr.bf16.mxu0 %v1593
    %1936 = vmatpush1.bf16.msra.mxu0 %v1592
    %1937 = vmatprep.subr.bf16.mxu0 %v1599
    %1938 = vmatpush1.bf16.msra.mxu0 %v1598
    %1939 = vmatprep.subr.bf16.mxu0 %v1605
    %1940 = vmatpush1.bf16.msra.mxu0 %v1604
    %1941 = vmatprep.subr.bf16.mxu0 %v1611
    %1942 = vmatpush1.bf16.msra.mxu0 %v1610
    %1943 = vmatprep.subr.bf16.mxu0 %v1617
    %1944 = vmatpush1.bf16.msra.mxu0 %v1616
    %1945 = vmatprep.subr.bf16.mxu0 %v1623
    %1946 = vmatpush1.bf16.msra.mxu0 %v1622
    %1947 = vmatprep.subr.bf16.mxu0 %v1629
    %1948 = vmatpush1.bf16.msra.mxu0 %v1628
    %1949 = vmatprep.subr.bf16.mxu0 %v1635
    %1950 = vmatpush1.bf16.msra.mxu0 %v1634
    %1951 = vmatprep.subr.bf16.mxu0 %v1641
    %1952 = vmatpush1.bf16.msra.mxu0 %v1640
    %1953 = vmatprep.subr.bf16.mxu0 %v1647
    %1954 = vmatpush1.bf16.msra.mxu0 %v1646
    %1955 = vmatprep.subr.bf16.mxu0 %v1653
    %1956 = vmatpush1.bf16.msra.mxu0 %v1652
    %1957 = vmatprep.subr.bf16.mxu0 %v1659
    %1958 = vmatpush1.bf16.msra.mxu0 %v1658
    %1959 = vmatprep.mubr.bf16.mxu0 %v1926
    %1960 = vmatmul.mubr.bf16.gmra.mrb[0].mxu0 %v1925
    %v1961 = vpop.f32.mrb[0].mxu0
    %v1962 = vadd.f32 %v1253, %v1961
    %v1963 = vpop.f32.mrb[0].mxu0
    %v1964 = vadd.f32 %v1257, %v1963
    %v1965 = vpop.f32.mrb[0].mxu0
    %v1966 = vpop.f32.mrb[0].mxu0
    %1967 = vdwg.mxu0
    %1968 = vmatprep.subr.bf16.mxu0 %v1571
    %1969 = vmatpush1.bf16.msra.mxu0 %v1570
    %1970 = vmatprep.subr.bf16.mxu0 %v1577
    %1971 = vmatpush1.bf16.msra.mxu0 %v1576
    %1972 = vmatprep.subr.bf16.mxu0 %v1583
    %1973 = vmatpush1.bf16.msra.mxu0 %v1582
    %1974 = vmatprep.subr.bf16.mxu0 %v1589
    %1975 = vmatpush1.bf16.msra.mxu0 %v1588
    %1976 = vmatprep.subr.bf16.mxu0 %v1595
    %1977 = vmatpush1.bf16.msra.mxu0 %v1594
    %1978 = vmatprep.subr.bf16.mxu0 %v1601
    %1979 = vmatpush1.bf16.msra.mxu0 %v1600
    %1980 = vmatprep.subr.bf16.mxu0 %v1607
    %1981 = vmatpush1.bf16.msra.mxu0 %v1606
    %1982 = vmatprep.subr.bf16.mxu0 %v1613
    %1983 = vmatpush1.bf16.msra.mxu0 %v1612
    %1984 = vmatprep.subr.bf16.mxu0 %v1619
    %1985 = vmatpush1.bf16.msra.mxu0 %v1618
    %1986 = vmatprep.subr.bf16.mxu0 %v1625
    %1987 = vmatpush1.bf16.msra.mxu0 %v1624
    %1988 = vmatprep.subr.bf16.mxu0 %v1631
    %1989 = vmatpush1.bf16.msra.mxu0 %v1630
    %1990 = vmatprep.subr.bf16.mxu0 %v1637
    %1991 = vmatpush1.bf16.msra.mxu0 %v1636
    %1992 = vmatprep.subr.bf16.mxu0 %v1643
    %1993 = vmatpush1.bf16.msra.mxu0 %v1642
    %1994 = vmatprep.subr.bf16.mxu0 %v1649
    %1995 = vmatpush1.bf16.msra.mxu0 %v1648
    %1996 = vmatprep.subr.bf16.mxu0 %v1655
    %1997 = vmatpush1.bf16.msra.mxu0 %v1654
    %1998 = vmatprep.subr.bf16.mxu0 %v1661
    %1999 = vmatpush1.bf16.msra.mxu0 %v1660
    %2000 = vmatprep.mubr.bf16.mxu0 %v1926
    %2001 = vmatmul.mubr.bf16.gmra.mrb[0].mxu0 %v1925
    %v2002 = vpop.f32.mrb[0].mxu0
    %v2003 = vadd.f32 %v1261, %v2002
    %v2004 = vpop.f32.mrb[0].mxu0
    %v2005 = vadd.f32 %v1265, %v2004
    %v2006 = vpop.f32.mrb[0].mxu0
    %v2007 = vpop.f32.mrb[0].mxu0
    %2008 = vdwg.mxu0
    %2009 = vmatprep.subr.bf16.mxu0 %v1573
    %2010 = vmatpush1.bf16.msra.mxu0 %v1572
    %2011 = vmatprep.subr.bf16.mxu0 %v1579
    %2012 = vmatpush1.bf16.msra.mxu0 %v1578
    %2013 = vmatprep.subr.bf16.mxu0 %v1585
    %2014 = vmatpush1.bf16.msra.mxu0 %v1584
    %2015 = vmatprep.subr.bf16.mxu0 %v1591
    %2016 = vmatpush1.bf16.msra.mxu0 %v1590
    %2017 = vmatprep.subr.bf16.mxu0 %v1597
    %2018 = vmatpush1.bf16.msra.mxu0 %v1596
    %2019 = vmatprep.subr.bf16.mxu0 %v1603
    %2020 = vmatpush1.bf16.msra.mxu0 %v1602
    %2021 = vmatprep.subr.bf16.mxu0 %v1609
    %2022 = vmatpush1.bf16.msra.mxu0 %v1608
    %2023 = vmatprep.subr.bf16.mxu0 %v1615
    %2024 = vmatpush1.bf16.msra.mxu0 %v1614
    %2025 = vmatprep.subr.bf16.mxu0 %v1621
    %2026 = vmatpush1.bf16.msra.mxu0 %v1620
    %2027 = vmatprep.subr.bf16.mxu0 %v1627
    %2028 = vmatpush1.bf16.msra.mxu0 %v1626
    %2029 = vmatprep.subr.bf16.mxu0 %v1633
    %2030 = vmatpush1.bf16.msra.mxu0 %v1632
    %2031 = vmatprep.subr.bf16.mxu0 %v1639
    %2032 = vmatpush1.bf16.msra.mxu0 %v1638
    %2033 = vmatprep.subr.bf16.mxu0 %v1645
    %2034 = vmatpush1.bf16.msra.mxu0 %v1644
    %2035 = vmatprep.subr.bf16.mxu0 %v1651
    %2036 = vmatpush1.bf16.msra.mxu0 %v1650
    %2037 = vmatprep.subr.bf16.mxu0 %v1657
    %2038 = vmatpush1.bf16.msra.mxu0 %v1656
    %2039 = vmatprep.subr.bf16.mxu0 %v1663
    %2040 = vmatpush1.bf16.msra.mxu0 %v1662
    %2041 = vmatprep.mubr.bf16.mxu0 %v1926
    %2042 = vmatmul.mubr.bf16.gmra.mrb[0].mxu0 %v1925
    %v2043 = vpop.f32.mrb[0].mxu0
    %v2044 = vadd.f32 %v1269, %v2043
    %v2045 = vpop.f32.mrb[0].mxu0
    %v2046 = vadd.f32 %v1273, %v2045
    %v2047 = vpop.f32.mrb[0].mxu0
    %v2048 = vpop.f32.mrb[0].mxu0
    %2049 = vdwg.mxu0
    %v2050 = vld [vmem:[#allocation3 + $0x30] sm:$0xff]
    %v2051 = vld [vmem:[#allocation3 + $0x38] sm:$0xff]
    %v2052 = vld [vmem:[#allocation3 + $0x40] sm:$0xff]
    %v2053 = vld [vmem:[#allocation3 + $0x138] sm:$0xff]
    %v2054 = vld [vmem:[#allocation3 + $0x140] sm:$0xff]
    %v2055 = vld [vmem:[#allocation3 + $0x148] sm:$0xff]
    %v2056 = vadd.f32 %v2050, %v1962
    %v2057 = vmul.f32 %v2056, 0.5
    %v2058 = vtanh.pop %v2057
    %v2059 = vadd.f32 %v2058, 1.0
    %v2060 = vmul.f32 %v2059, 0.5
    %v2061 = vadd.f32 %v2051, %v1964
    %v2062 = vmul.f32 %v2061, 0.5
    %v2063 = vtanh.pop %v2062
    %v2064 = vadd.f32 %v2063, 1.0
    %v2065 = vmul.f32 %v2064, 0.5
    %v2066 = vmul.f32 %v2060, %v2003
    %v2067 = vadd.f32 %v2052, %v2066
    %v2068 = vtanh.pop %v2067
    %v2069 = vsub.f32 1.0, %v2065
    %v2070 = vmul.f32 %v2069, %v2068
    %v2071 = vmul.f32 %v2065, %v1905
    %v2072 = vadd.f32 %v2070, %v2071
    %v2073 = vadd.f32 %v2053, %v2005
    %v2074 = vmul.f32 %v2073, 0.5
    %v2075 = vtanh.pop %v2074
    %v2076 = vadd.f32 %v2075, 1.0
    %v2077 = vmul.f32 %v2076, 0.5
    %v2078 = vadd.f32 %v2054, %v2044
    %v2079 = vmul.f32 %v2078, 0.5
    %v2080 = vtanh.pop %v2079
    %v2081 = vadd.f32 %v2080, 1.0
    %v2082 = vmul.f32 %v2081, 0.5
    %v2083 = vmul.f32 %v2077, %v2046
    %v2084 = vadd.f32 %v2055, %v2083
    %v2085 = vtanh.pop %v2084
    %v2086 = vsub.f32 1.0, %v2082
    %v2087 = vmul.f32 %v2086, %v2085
    %v2088 = vmul.f32 %v2082, %v1922
    %v2089 = vadd.f32 %v2087, %v2088
    %2090 = vst [vmem:[#allocation4 + $0x10] sm:$0xff] %v2072
    %2091 = vst [vmem:[#allocation4 + $0x68] sm:$0xff] %v2089
    %v2092 = vpack.c.bf16 %v2072, %v2072
    %v2093 = vpack.c.bf16 %v2089, %v2089
    %2094 = vmatprep.subr.bf16.mxu0 %v1569
    %2095 = vmatpush1.bf16.msra.mxu0 %v1568
    %2096 = vmatprep.subr.bf16.mxu0 %v1575
    %2097 = vmatpush1.bf16.msra.mxu0 %v1574
    %2098 = vmatprep.subr.bf16.mxu0 %v1581
    %2099 = vmatpush1.bf16.msra.mxu0 %v1580
    %2100 = vmatprep.subr.bf16.mxu0 %v1587
    %2101 = vmatpush1.bf16.msra.mxu0 %v1586
    %2102 = vmatprep.subr.bf16.mxu0 %v1593
    %2103 = vmatpush1.bf16.msra.mxu0 %v1592
    %2104 = vmatprep.subr.bf16.mxu0 %v1599
    %2105 = vmatpush1.bf16.msra.mxu0 %v1598
    %2106 = vmatprep.subr.bf16.mxu0 %v1605
    %2107 = vmatpush1.bf16.msra.mxu0 %v1604
    %2108 = vmatprep.subr.bf16.mxu0 %v1611
    %2109 = vmatpush1.bf16.msra.mxu0 %v1610
    %2110 = vmatprep.subr.bf16.mxu0 %v1617
    %2111 = vmatpush1.bf16.msra.mxu0 %v1616
    %2112 = vmatprep.subr.bf16.mxu0 %v1623
    %2113 = vmatpush1.bf16.msra.mxu0 %v1622
    %2114 = vmatprep.subr.bf16.mxu0 %v1629
    %2115 = vmatpush1.bf16.msra.mxu0 %v1628
    %2116 = vmatprep.subr.bf16.mxu0 %v1635
    %2117 = vmatpush1.bf16.msra.mxu0 %v1634
    %2118 = vmatprep.subr.bf16.mxu0 %v1641
    %2119 = vmatpush1.bf16.msra.mxu0 %v1640
    %2120 = vmatprep.subr.bf16.mxu0 %v1647
    %2121 = vmatpush1.bf16.msra.mxu0 %v1646
    %2122 = vmatprep.subr.bf16.mxu0 %v1653
    %2123 = vmatpush1.bf16.msra.mxu0 %v1652
    %2124 = vmatprep.subr.bf16.mxu0 %v1659
    %2125 = vmatpush1.bf16.msra.mxu0 %v1658
    %2126 = vmatprep.mubr.bf16.mxu0 %v2093
    %2127 = vmatmul.mubr.bf16.gmra.mrb[0].mxu0 %v2092
    %v2128 = vpop.f32.mrb[0].mxu0
    %v2129 = vadd.f32 %v1253, %v2128
    %v2130 = vpop.f32.mrb[0].mxu0
    %v2131 = vadd.f32 %v1257, %v2130
    %v2132 = vpop.f32.mrb[0].mxu0
    %v2133 = vpop.f32.mrb[0].mxu0
    %2134 = vdwg.mxu0
    %2135 = vmatprep.subr.bf16.mxu0 %v1571
    %2136 = vmatpush1.bf16.msra.mxu0 %v1570
    %2137 = vmatprep.subr.bf16.mxu0 %v1577
    %2138 = vmatpush1.bf16.msra.mxu0 %v1576
    %2139 = vmatprep.subr.bf16.mxu0 %v1583
    %2140 = vmatpush1.bf16.msra.mxu0 %v1582
    %2141 = vmatprep.subr.bf16.mxu0 %v1589
    %2142 = vmatpush1.bf16.msra.mxu0 %v1588
    %2143 = vmatprep.subr.bf16.mxu0 %v1595
    %2144 = vmatpush1.bf16.msra.mxu0 %v1594
    %2145 = vmatprep.subr.bf16.mxu0 %v1601
    %2146 = vmatpush1.bf16.msra.mxu0 %v1600
    %2147 = vmatprep.subr.bf16.mxu0 %v1607
    %2148 = vmatpush1.bf16.msra.mxu0 %v1606
    %2149 = vmatprep.subr.bf16.mxu0 %v1613
    %2150 = vmatpush1.bf16.msra.mxu0 %v1612
    %2151 = vmatprep.subr.bf16.mxu0 %v1619
    %2152 = vmatpush1.bf16.msra.mxu0 %v1618
    %2153 = vmatprep.subr.bf16.mxu0 %v1625
    %2154 = vmatpush1.bf16.msra.mxu0 %v1624
    %2155 = vmatprep.subr.bf16.mxu0 %v1631
    %2156 = vmatpush1.bf16.msra.mxu0 %v1630
    %2157 = vmatprep.subr.bf16.mxu0 %v1637
    %2158 = vmatpush1.bf16.msra.mxu0 %v1636
    %2159 = vmatprep.subr.bf16.mxu0 %v1643
    %2160 = vmatpush1.bf16.msra.mxu0 %v1642
    %2161 = vmatprep.subr.bf16.mxu0 %v1649
    %2162 = vmatpush1.bf16.msra.mxu0 %v1648
    %2163 = vmatprep.subr.bf16.mxu0 %v1655
    %2164 = vmatpush1.bf16.msra.mxu0 %v1654
    %2165 = vmatprep.subr.bf16.mxu0 %v1661
    %2166 = vmatpush1.bf16.msra.mxu0 %v1660
    %2167 = vmatprep.mubr.bf16.mxu0 %v2093
    %2168 = vmatmul.mubr.bf16.gmra.mrb[0].mxu0 %v2092
    %v2169 = vpop.f32.mrb[0].mxu0
    %v2170 = vadd.f32 %v1261, %v2169
    %v2171 = vpop.f32.mrb[0].mxu0
    %v2172 = vadd.f32 %v1265, %v2171
    %v2173 = vpop.f32.mrb[0].mxu0
    %v2174 = vpop.f32.mrb[0].mxu0
    %2175 = vdwg.mxu0
    %2176 = vmatprep.subr.bf16.mxu0 %v1573
    %2177 = vmatpush1.bf16.msra.mxu0 %v1572
    %2178 = vmatprep.subr.bf16.mxu0 %v1579
    %2179 = vmatpush1.bf16.msra.mxu0 %v1578
    %2180 = vmatprep.subr.bf16.mxu0 %v1585
    %2181 = vmatpush1.bf16.msra.mxu0 %v1584
    %2182 = vmatprep.subr.bf16.mxu0 %v1591
    %2183 = vmatpush1.bf16.msra.mxu0 %v1590
    %2184 = vmatprep.subr.bf16.mxu0 %v1597
    %2185 = vmatpush1.bf16.msra.mxu0 %v1596
    %2186 = vmatprep.subr.bf16.mxu0 %v1603
    %2187 = vmatpush1.bf16.msra.mxu0 %v1602
    %2188 = vmatprep.subr.bf16.mxu0 %v1609
    %2189 = vmatpush1.bf16.msra.mxu0 %v1608
    %2190 = vmatprep.subr.bf16.mxu0 %v1615
    %2191 = vmatpush1.bf16.msra.mxu0 %v1614
    %2192 = vmatprep.subr.bf16.mxu0 %v1621
    %2193 = vmatpush1.bf16.msra.mxu0 %v1620
    %2194 = vmatprep.subr.bf16.mxu0 %v1627
    %2195 = vmatpush1.bf16.msra.mxu0 %v1626
    %2196 = vmatprep.subr.bf16.mxu0 %v1633
    %2197 = vmatpush1.bf16.msra.mxu0 %v1632
    %2198 = vmatprep.subr.bf16.mxu0 %v1639
    %2199 = vmatpush1.bf16.msra.mxu0 %v1638
    %2200 = vmatprep.subr.bf16.mxu0 %v1645
    %2201 = vmatpush1.bf16.msra.mxu0 %v1644
    %2202 = vmatprep.subr.bf16.mxu0 %v1651
    %2203 = vmatpush1.bf16.msra.mxu0 %v1650
    %2204 = vmatprep.subr.bf16.mxu0 %v1657
    %2205 = vmatpush1.bf16.msra.mxu0 %v1656
    %2206 = vmatprep.subr.bf16.mxu0 %v1663
    %2207 = vmatpush1.bf16.msra.mxu0 %v1662
    %2208 = vmatprep.mubr.bf16.mxu0 %v2093
    %2209 = vmatmul.mubr.bf16.gmra.mrb[0].mxu0 %v2092
    %v2210 = vpop.f32.mrb[0].mxu0
    %v2211 = vadd.f32 %v1269, %v2210
    %v2212 = vpop.f32.mrb[0].mxu0
    %v2213 = vadd.f32 %v1273, %v2212
    %v2214 = vpop.f32.mrb[0].mxu0
    %v2215 = vpop.f32.mrb[0].mxu0
    %2216 = vdwg.mxu0
    %v2217 = vld [vmem:[#allocation3 + $0x60] sm:$0xff]
    %v2218 = vld [vmem:[#allocation3 + $0x68] sm:$0xff]
    %v2219 = vld [vmem:[#allocation3 + $0x70] sm:$0xff]
    %v2220 = vld [vmem:[#allocation3 + $0x108] sm:$0xff]
    %v2221 = vld [vmem:[#allocation3 + $0x110] sm:$0xff]
    %v2222 = vld [vmem:[#allocation3 + $0x118] sm:$0xff]
    %v2223 = vadd.f32 %v2217, %v2129
    %v2224 = vmul.f32 %v2223, 0.5
    %v2225 = vtanh.pop %v2224
    %v2226 = vadd.f32 %v2225, 1.0
    %v2227 = vmul.f32 %v2226, 0.5
    %v2228 = vadd.f32 %v2218, %v2131
    %v2229 = vmul.f32 %v2228, 0.5
    %v2230 = vtanh.pop %v2229
    %v2231 = vadd.f32 %v2230, 1.0
    %v2232 = vmul.f32 %v2231, 0.5
    %v2233 = vmul.f32 %v2227, %v2170
    %v2234 = vadd.f32 %v2219, %v2233
    %v2235 = vtanh.pop %v2234
    %v2236 = vsub.f32 1.0, %v2232
    %v2237 = vmul.f32 %v2236, %v2235
    %v2238 = vmul.f32 %v2232, %v2072
    %v2239 = vadd.f32 %v2237, %v2238
    %v2240 = vadd.f32 %v2220, %v2172
    %v2241 = vmul.f32 %v2240, 0.5
    %v2242 = vtanh.pop %v2241
    %v2243 = vadd.f32 %v2242, 1.0
    %v2244 = vmul.f32 %v2243, 0.5
    %v2245 = vadd.f32 %v2221, %v2211
    %v2246 = vmul.f32 %v2245, 0.5
    %v2247 = vtanh.pop %v2246
    %v2248 = vadd.f32 %v2247, 1.0
    %v2249 = vmul.f32 %v2248, 0.5
    %v2250 = vmul.f32 %v2244, %v2213
    %v2251 = vadd.f32 %v2222, %v2250
    %v2252 = vtanh.pop %v2251
    %v2253 = vsub.f32 1.0, %v2249
    %v2254 = vmul.f32 %v2253, %v2252
    %v2255 = vmul.f32 %v2249, %v2089
    %v2256 = vadd.f32 %v2254, %v2255
    %2257 = vst [vmem:[#allocation4 + $0x20] sm:$0xff] %v2239
    %2258 = vst [vmem:[#allocation4 + $0x58] sm:$0xff] %v2256
    %v2259 = vpack.c.bf16 %v2239, %v2239
    %v2260 = vpack.c.bf16 %v2256, %v2256
    %2261 = vmatprep.subr.bf16.mxu0 %v1569
    %2262 = vmatpush1.bf16.msra.mxu0 %v1568
    %2263 = vmatprep.subr.bf16.mxu0 %v1575
    %2264 = vmatpush1.bf16.msra.mxu0 %v1574
    %2265 = vmatprep.subr.bf16.mxu0 %v1581
    %2266 = vmatpush1.bf16.msra.mxu0 %v1580
    %2267 = vmatprep.subr.bf16.mxu0 %v1587
    %2268 = vmatpush1.bf16.msra.mxu0 %v1586
    %2269 = vmatprep.subr.bf16.mxu0 %v1593
    %2270 = vmatpush1.bf16.msra.mxu0 %v1592
    %2271 = vmatprep.subr.bf16.mxu0 %v1599
    %2272 = vmatpush1.bf16.msra.mxu0 %v1598
    %2273 = vmatprep.subr.bf16.mxu0 %v1605
    %2274 = vmatpush1.bf16.msra.mxu0 %v1604
    %2275 = vmatprep.subr.bf16.mxu0 %v1611
    %2276 = vmatpush1.bf16.msra.mxu0 %v1610
    %2277 = vmatprep.subr.bf16.mxu0 %v1617
    %2278 = vmatpush1.bf16.msra.mxu0 %v1616
    %2279 = vmatprep.subr.bf16.mxu0 %v1623
    %2280 = vmatpush1.bf16.msra.mxu0 %v1622
    %2281 = vmatprep.subr.bf16.mxu0 %v1629
    %2282 = vmatpush1.bf16.msra.mxu0 %v1628
    %2283 = vmatprep.subr.bf16.mxu0 %v1635
    %2284 = vmatpush1.bf16.msra.mxu0 %v1634
    %2285 = vmatprep.subr.bf16.mxu0 %v1641
    %2286 = vmatpush1.bf16.msra.mxu0 %v1640
    %2287 = vmatprep.subr.bf16.mxu0 %v1647
    %2288 = vmatpush1.bf16.msra.mxu0 %v1646
    %2289 = vmatprep.subr.bf16.mxu0 %v1653
    %2290 = vmatpush1.bf16.msra.mxu0 %v1652
    %2291 = vmatprep.subr.bf16.mxu0 %v1659
    %2292 = vmatpush1.bf16.msra.mxu0 %v1658
    %2293 = vmatprep.mubr.bf16.mxu0 %v2260
    %2294 = vmatmul.mubr.bf16.gmra.mrb[0].mxu0 %v2259
    %v2295 = vpop.f32.mrb[0].mxu0
    %v2296 = vadd.f32 %v1253, %v2295
    %v2297 = vpop.f32.mrb[0].mxu0
    %v2298 = vadd.f32 %v1257, %v2297
    %v2299 = vpop.f32.mrb[0].mxu0
    %v2300 = vpop.f32.mrb[0].mxu0
    %2301 = vdwg.mxu0
    %2302 = vmatprep.subr.bf16.mxu0 %v1571
    %2303 = vmatpush1.bf16.msra.mxu0 %v1570
    %2304 = vmatprep.subr.bf16.mxu0 %v1577
    %2305 = vmatpush1.bf16.msra.mxu0 %v1576
    %2306 = vmatprep.subr.bf16.mxu0 %v1583
    %2307 = vmatpush1.bf16.msra.mxu0 %v1582
    %2308 = vmatprep.subr.bf16.mxu0 %v1589
    %2309 = vmatpush1.bf16.msra.mxu0 %v1588
    %2310 = vmatprep.subr.bf16.mxu0 %v1595
    %2311 = vmatpush1.bf16.msra.mxu0 %v1594
    %2312 = vmatprep.subr.bf16.mxu0 %v1601
    %2313 = vmatpush1.bf16.msra.mxu0 %v1600
    %2314 = vmatprep.subr.bf16.mxu0 %v1607
    %2315 = vmatpush1.bf16.msra.mxu0 %v1606
    %2316 = vmatprep.subr.bf16.mxu0 %v1613
    %2317 = vmatpush1.bf16.msra.mxu0 %v1612
    %2318 = vmatprep.subr.bf16.mxu0 %v1619
    %2319 = vmatpush1.bf16.msra.mxu0 %v1618
    %2320 = vmatprep.subr.bf16.mxu0 %v1625
    %2321 = vmatpush1.bf16.msra.mxu0 %v1624
    %2322 = vmatprep.subr.bf16.mxu0 %v1631
    %2323 = vmatpush1.bf16.msra.mxu0 %v1630
    %2324 = vmatprep.subr.bf16.mxu0 %v1637
    %2325 = vmatpush1.bf16.msra.mxu0 %v1636
    %2326 = vmatprep.subr.bf16.mxu0 %v1643
    %2327 = vmatpush1.bf16.msra.mxu0 %v1642
    %2328 = vmatprep.subr.bf16.mxu0 %v1649
    %2329 = vmatpush1.bf16.msra.mxu0 %v1648
    %2330 = vmatprep.subr.bf16.mxu0 %v1655
    %2331 = vmatpush1.bf16.msra.mxu0 %v1654
    %2332 = vmatprep.subr.bf16.mxu0 %v1661
    %2333 = vmatpush1.bf16.msra.mxu0 %v1660
    %2334 = vmatprep.mubr.bf16.mxu0 %v2260
    %2335 = vmatmul.mubr.bf16.gmra.mrb[0].mxu0 %v2259
    %v2336 = vpop.f32.mrb[0].mxu0
    %v2337 = vadd.f32 %v1261, %v2336
    %v2338 = vpop.f32.mrb[0].mxu0
    %v2339 = vadd.f32 %v1265, %v2338
    %v2340 = vpop.f32.mrb[0].mxu0
    %v2341 = vpop.f32.mrb[0].mxu0
    %2342 = vdwg.mxu0
    %2343 = vmatprep.subr.bf16.mxu0 %v1573
    %2344 = vmatpush1.bf16.msra.mxu0 %v1572
    %2345 = vmatprep.subr.bf16.mxu0 %v1579
    %2346 = vmatpush1.bf16.msra.mxu0 %v1578
    %2347 = vmatprep.subr.bf16.mxu0 %v1585
    %2348 = vmatpush1.bf16.msra.mxu0 %v1584
    %2349 = vmatprep.subr.bf16.mxu0 %v1591
    %2350 = vmatpush1.bf16.msra.mxu0 %v1590
    %2351 = vmatprep.subr.bf16.mxu0 %v1597
    %2352 = vmatpush1.bf16.msra.mxu0 %v1596
    %2353 = vmatprep.subr.bf16.mxu0 %v1603
    %2354 = vmatpush1.bf16.msra.mxu0 %v1602
    %2355 = vmatprep.subr.bf16.mxu0 %v1609
    %2356 = vmatpush1.bf16.msra.mxu0 %v1608
    %2357 = vmatprep.subr.bf16.mxu0 %v1615
    %2358 = vmatpush1.bf16.msra.mxu0 %v1614
    %2359 = vmatprep.subr.bf16.mxu0 %v1621
    %2360 = vmatpush1.bf16.msra.mxu0 %v1620
    %2361 = vmatprep.subr.bf16.mxu0 %v1627
    %2362 = vmatpush1.bf16.msra.mxu0 %v1626
    %2363 = vmatprep.subr.bf16.mxu0 %v1633
    %2364 = vmatpush1.bf16.msra.mxu0 %v1632
    %2365 = vmatprep.subr.bf16.mxu0 %v1639
    %2366 = vmatpush1.bf16.msra.mxu0 %v1638
    %2367 = vmatprep.subr.bf16.mxu0 %v1645
    %2368 = vmatpush1.bf16.msra.mxu0 %v1644
    %2369 = vmatprep.subr.bf16.mxu0 %v1651
    %2370 = vmatpush1.bf16.msra.mxu0 %v1650
    %2371 = vmatprep.subr.bf16.mxu0 %v1657
    %2372 = vmatpush1.bf16.msra.mxu0 %v1656
    %2373 = vmatprep.subr.bf16.mxu0 %v1663
    %2374 = vmatpush1.bf16.msra.mxu0 %v1662
    %2375 = vmatprep.mubr.bf16.mxu0 %v2260
    %2376 = vmatmul.mubr.bf16.gmra.mrb[0].mxu0 %v2259
    %v2377 = vpop.f32.mrb[0].mxu0
    %v2378 = vadd.f32 %v1269, %v2377
    %v2379 = vpop.f32.mrb[0].mxu0
    %v2380 = vadd.f32 %v1273, %v2379
    %v2381 = vpop.f32.mrb[0].mxu0
    %v2382 = vpop.f32.mrb[0].mxu0
    %2383 = vdwg.mxu0
    %v2384 = vld [vmem:[#allocation3 + $0x90] sm:$0xff]
    %v2385 = vld [vmem:[#allocation3 + $0x98] sm:$0xff]
    %v2386 = vld [vmem:[#allocation3 + $0xa0] sm:$0xff]
    %v2387 = vld [vmem:[#allocation3 + $0xd8] sm:$0xff]
    %v2388 = vld [vmem:[#allocation3 + $0xe0] sm:$0xff]
    %v2389 = vld [vmem:[#allocation3 + $0xe8] sm:$0xff]
    %v2390 = vadd.f32 %v2384, %v2296
    %v2391 = vmul.f32 %v2390, 0.5
    %v2392 = vtanh.pop %v2391
    %v2393 = vadd.f32 %v2392, 1.0
    %v2394 = vmul.f32 %v2393, 0.5
    %v2395 = vadd.f32 %v2385, %v2298
    %v2396 = vmul.f32 %v2395, 0.5
    %v2397 = vtanh.pop %v2396
    %v2398 = vadd.f32 %v2397, 1.0
    %v2399 = vmul.f32 %v2398, 0.5
    %v2400 = vmul.f32 %v2394, %v2337
    %v2401 = vadd.f32 %v2386, %v2400
    %v2402 = vtanh.pop %v2401
    %v2403 = vsub.f32 1.0, %v2399
    %v2404 = vmul.f32 %v2403, %v2402
    %v2405 = vmul.f32 %v2399, %v2239
    %v2406 = vadd.f32 %v2404, %v2405
    %v2407 = vadd.f32 %v2387, %v2339
    %v2408 = vmul.f32 %v2407, 0.5
    %v2409 = vtanh.pop %v2408
    %v2410 = vadd.f32 %v2409, 1.0
    %v2411 = vmul.f32 %v2410, 0.5
    %v2412 = vadd.f32 %v2388, %v2378
    %v2413 = vmul.f32 %v2412, 0.5
    %v2414 = vtanh.pop %v2413
    %v2415 = vadd.f32 %v2414, 1.0
    %v2416 = vmul.f32 %v2415, 0.5
    %v2417 = vmul.f32 %v2411, %v2380
    %v2418 = vadd.f32 %v2389, %v2417
    %v2419 = vtanh.pop %v2418
    %v2420 = vsub.f32 1.0, %v2416
    %v2421 = vmul.f32 %v2420, %v2419
    %v2422 = vmul.f32 %v2416, %v2256
    %v2423 = vadd.f32 %v2421, %v2422
    %2424 = vst [vmem:[#allocation4 + $0x30] sm:$0xff] %v2406
    %2425 = vst [vmem:[#allocation4 + $0x48] sm:$0xff] %v2423
    %v2426 = vpack.c.bf16 %v2406, %v2406
    %v2427 = vpack.c.bf16 %v2423, %v2423
    %2428 = vmatprep.subr.bf16.mxu0 %v1569
    %2429 = vmatpush1.bf16.msra.mxu0 %v1568
    %2430 = vmatprep.subr.bf16.mxu0 %v1575
    %2431 = vmatpush1.bf16.msra.mxu0 %v1574
    %2432 = vmatprep.subr.bf16.mxu0 %v1581
    %2433 = vmatpush1.bf16.msra.mxu0 %v1580
    %2434 = vmatprep.subr.bf16.mxu0 %v1587
    %2435 = vmatpush1.bf16.msra.mxu0 %v1586
    %2436 = vmatprep.subr.bf16.mxu0 %v1593
    %2437 = vmatpush1.bf16.msra.mxu0 %v1592
    %2438 = vmatprep.subr.bf16.mxu0 %v1599
    %2439 = vmatpush1.bf16.msra.mxu0 %v1598
    %2440 = vmatprep.subr.bf16.mxu0 %v1605
    %2441 = vmatpush1.bf16.msra.mxu0 %v1604
    %2442 = vmatprep.subr.bf16.mxu0 %v1611
    %2443 = vmatpush1.bf16.msra.mxu0 %v1610
    %2444 = vmatprep.subr.bf16.mxu0 %v1617
    %2445 = vmatpush1.bf16.msra.mxu0 %v1616
    %2446 = vmatprep.subr.bf16.mxu0 %v1623
    %2447 = vmatpush1.bf16.msra.mxu0 %v1622
    %2448 = vmatprep.subr.bf16.mxu0 %v1629
    %2449 = vmatpush1.bf16.msra.mxu0 %v1628
    %2450 = vmatprep.subr.bf16.mxu0 %v1635
    %2451 = vmatpush1.bf16.msra.mxu0 %v1634
    %2452 = vmatprep.subr.bf16.mxu0 %v1641
    %2453 = vmatpush1.bf16.msra.mxu0 %v1640
    %2454 = vmatprep.subr.bf16.mxu0 %v1647
    %2455 = vmatpush1.bf16.msra.mxu0 %v1646
    %2456 = vmatprep.subr.bf16.mxu0 %v1653
    %2457 = vmatpush1.bf16.msra.mxu0 %v1652
    %2458 = vmatprep.subr.bf16.mxu0 %v1659
    %2459 = vmatpush1.bf16.msra.mxu0 %v1658
    %2460 = vmatprep.mubr.bf16.mxu0 %v2427
    %2461 = vmatmul.mubr.bf16.gmra.mrb[0].mxu0 %v2426
    %v2462 = vpop.f32.mrb[0].mxu0
    %v2463 = vadd.f32 %v1253, %v2462
    %v2464 = vpop.f32.mrb[0].mxu0
    %v2465 = vadd.f32 %v1257, %v2464
    %v2466 = vpop.f32.mrb[0].mxu0
    %v2467 = vpop.f32.mrb[0].mxu0
    %2468 = vdwg.mxu0
    %2469 = vmatprep.subr.bf16.mxu0 %v1571
    %2470 = vmatpush1.bf16.msra.mxu0 %v1570
    %2471 = vmatprep.subr.bf16.mxu0 %v1577
    %2472 = vmatpush1.bf16.msra.mxu0 %v1576
    %2473 = vmatprep.subr.bf16.mxu0 %v1583
    %2474 = vmatpush1.bf16.msra.mxu0 %v1582
    %2475 = vmatprep.subr.bf16.mxu0 %v1589
    %2476 = vmatpush1.bf16.msra.mxu0 %v1588
    %2477 = vmatprep.subr.bf16.mxu0 %v1595
    %2478 = vmatpush1.bf16.msra.mxu0 %v1594
    %2479 = vmatprep.subr.bf16.mxu0 %v1601
    %2480 = vmatpush1.bf16.msra.mxu0 %v1600
    %2481 = vmatprep.subr.bf16.mxu0 %v1607
    %2482 = vmatpush1.bf16.msra.mxu0 %v1606
    %2483 = vmatprep.subr.bf16.mxu0 %v1613
    %2484 = vmatpush1.bf16.msra.mxu0 %v1612
    %2485 = vmatprep.subr.bf16.mxu0 %v1619
    %2486 = vmatpush1.bf16.msra.mxu0 %v1618
    %2487 = vmatprep.subr.bf16.mxu0 %v1625
    %2488 = vmatpush1.bf16.msra.mxu0 %v1624
    %2489 = vmatprep.subr.bf16.mxu0 %v1631
    %2490 = vmatpush1.bf16.msra.mxu0 %v1630
    %2491 = vmatprep.subr.bf16.mxu0 %v1637
    %2492 = vmatpush1.bf16.msra.mxu0 %v1636
    %2493 = vmatprep.subr.bf16.mxu0 %v1643
    %2494 = vmatpush1.bf16.msra.mxu0 %v1642
    %2495 = vmatprep.subr.bf16.mxu0 %v1649
    %2496 = vmatpush1.bf16.msra.mxu0 %v1648
    %2497 = vmatprep.subr.bf16.mxu0 %v1655
    %2498 = vmatpush1.bf16.msra.mxu0 %v1654
    %2499 = vmatprep.subr.bf16.mxu0 %v1661
    %2500 = vmatpush1.bf16.msra.mxu0 %v1660
    %2501 = vmatprep.mubr.bf16.mxu0 %v2427
    %2502 = vmatmul.mubr.bf16.gmra.mrb[0].mxu0 %v2426
    %v2503 = vpop.f32.mrb[0].mxu0
    %v2504 = vadd.f32 %v1261, %v2503
    %v2505 = vpop.f32.mrb[0].mxu0
    %v2506 = vadd.f32 %v1265, %v2505
    %v2507 = vpop.f32.mrb[0].mxu0
    %v2508 = vpop.f32.mrb[0].mxu0
    %2509 = vdwg.mxu0
    %2510 = vmatprep.subr.bf16.mxu0 %v1573
    %2511 = vmatpush1.bf16.msra.mxu0 %v1572
    %2512 = vmatprep.subr.bf16.mxu0 %v1579
    %2513 = vmatpush1.bf16.msra.mxu0 %v1578
    %2514 = vmatprep.subr.bf16.mxu0 %v1585
    %2515 = vmatpush1.bf16.msra.mxu0 %v1584
    %2516 = vmatprep.subr.bf16.mxu0 %v1591
    %2517 = vmatpush1.bf16.msra.mxu0 %v1590
    %2518 = vmatprep.subr.bf16.mxu0 %v1597
    %2519 = vmatpush1.bf16.msra.mxu0 %v1596
    %2520 = vmatprep.subr.bf16.mxu0 %v1603
    %2521 = vmatpush1.bf16.msra.mxu0 %v1602
    %2522 = vmatprep.subr.bf16.mxu0 %v1609
    %2523 = vmatpush1.bf16.msra.mxu0 %v1608
    %2524 = vmatprep.subr.bf16.mxu0 %v1615
    %2525 = vmatpush1.bf16.msra.mxu0 %v1614
    %2526 = vmatprep.subr.bf16.mxu0 %v1621
    %2527 = vmatpush1.bf16.msra.mxu0 %v1620
    %2528 = vmatprep.subr.bf16.mxu0 %v1627
    %2529 = vmatpush1.bf16.msra.mxu0 %v1626
    %2530 = vmatprep.subr.bf16.mxu0 %v1633
    %2531 = vmatpush1.bf16.msra.mxu0 %v1632
    %2532 = vmatprep.subr.bf16.mxu0 %v1639
    %2533 = vmatpush1.bf16.msra.mxu0 %v1638
    %2534 = vmatprep.subr.bf16.mxu0 %v1645
    %2535 = vmatpush1.bf16.msra.mxu0 %v1644
    %2536 = vmatprep.subr.bf16.mxu0 %v1651
    %2537 = vmatpush1.bf16.msra.mxu0 %v1650
    %2538 = vmatprep.subr.bf16.mxu0 %v1657
    %2539 = vmatpush1.bf16.msra.mxu0 %v1656
    %2540 = vmatprep.subr.bf16.mxu0 %v1663
    %2541 = vmatpush1.bf16.msra.mxu0 %v1662
    %2542 = vmatprep.mubr.bf16.mxu0 %v2427
    %2543 = vmatmul.mubr.bf16.gmra.mrb[0].mxu0 %v2426
    %v2544 = vpop.f32.mrb[0].mxu0
    %v2545 = vadd.f32 %v1269, %v2544
    %v2546 = vpop.f32.mrb[0].mxu0
    %v2547 = vadd.f32 %v1273, %v2546
    %v2548 = vpop.f32.mrb[0].mxu0
    %v2549 = vpop.f32.mrb[0].mxu0
    %2550 = vdwg.mxu0
    %v2551 = vld [vmem:[#allocation3 + $0xc0] sm:$0xff]
    %v2552 = vld [vmem:[#allocation3 + $0xc8] sm:$0xff]
    %v2553 = vld [vmem:[#allocation3 + $0xd0] sm:$0xff]
    %v2554 = vld [vmem:[#allocation3 + $0xa8] sm:$0xff]
    %v2555 = vld [vmem:[#allocation3 + $0xb0] sm:$0xff]
    %v2556 = vld [vmem:[#allocation3 + $0xb8] sm:$0xff]
    %v2557 = vadd.f32 %v2551, %v2463
    %v2558 = vmul.f32 %v2557, 0.5
    %v2559 = vtanh.pop %v2558
    %v2560 = vadd.f32 %v2559, 1.0
    %v2561 = vmul.f32 %v2560, 0.5
    %v2562 = vadd.f32 %v2552, %v2465
    %v2563 = vmul.f32 %v2562, 0.5
    %v2564 = vtanh.pop %v2563
    %v2565 = vadd.f32 %v2564, 1.0
    %v2566 = vmul.f32 %v2565, 0.5
    %v2567 = vmul.f32 %v2561, %v2504
    %v2568 = vadd.f32 %v2553, %v2567
    %v2569 = vtanh.pop %v2568
    %v2570 = vsub.f32 1.0, %v2566
    %v2571 = vmul.f32 %v2570, %v2569
    %v2572 = vmul.f32 %v2566, %v2406
    %v2573 = vadd.f32 %v2571, %v2572
    %v2574 = vadd.f32 %v2554, %v2506
    %v2575 = vmul.f32 %v2574, 0.5
    %v2576 = vtanh.pop %v2575
    %v2577 = vadd.f32 %v2576, 1.0
    %v2578 = vmul.f32 %v2577, 0.5
    %v2579 = vadd.f32 %v2555, %v2545
    %v2580 = vmul.f32 %v2579, 0.5
    %v2581 = vtanh.pop %v2580
    %v2582 = vadd.f32 %v2581, 1.0
    %v2583 = vmul.f32 %v2582, 0.5
    %v2584 = vmul.f32 %v2578, %v2547
    %v2585 = vadd.f32 %v2556, %v2584
    %v2586 = vtanh.pop %v2585
    %v2587 = vsub.f32 1.0, %v2583
    %v2588 = vmul.f32 %v2587, %v2586
    %v2589 = vmul.f32 %v2583, %v2423
    %v2590 = vadd.f32 %v2588, %v2589
    %2591 = vst [vmem:[#allocation4 + $0x40] sm:$0xff] %v2573
    %2592 = vst [vmem:[#allocation4 + $0x38] sm:$0xff] %v2590
    %v2593 = vpack.c.bf16 %v2573, %v2573
    %v2594 = vpack.c.bf16 %v2590, %v2590
    %2595 = vmatprep.subr.bf16.mxu0 %v1569
    %2596 = vmatpush1.bf16.msra.mxu0 %v1568
    %2597 = vmatprep.subr.bf16.mxu0 %v1575
    %2598 = vmatpush1.bf16.msra.mxu0 %v1574
    %2599 = vmatprep.subr.bf16.mxu0 %v1581
    %2600 = vmatpush1.bf16.msra.mxu0 %v1580
    %2601 = vmatprep.subr.bf16.mxu0 %v1587
    %2602 = vmatpush1.bf16.msra.mxu0 %v1586
    %2603 = vmatprep.subr.bf16.mxu0 %v1593
    %2604 = vmatpush1.bf16.msra.mxu0 %v1592
    %2605 = vmatprep.subr.bf16.mxu0 %v1599
    %2606 = vmatpush1.bf16.msra.mxu0 %v1598
    %2607 = vmatprep.subr.bf16.mxu0 %v1605
    %2608 = vmatpush1.bf16.msra.mxu0 %v1604
    %2609 = vmatprep.subr.bf16.mxu0 %v1611
    %2610 = vmatpush1.bf16.msra.mxu0 %v1610
    %2611 = vmatprep.subr.bf16.mxu0 %v1617
    %2612 = vmatpush1.bf16.msra.mxu0 %v1616
    %2613 = vmatprep.subr.bf16.mxu0 %v1623
    %2614 = vmatpush1.bf16.msra.mxu0 %v1622
    %2615 = vmatprep.subr.bf16.mxu0 %v1629
    %2616 = vmatpush1.bf16.msra.mxu0 %v1628
    %2617 = vmatprep.subr.bf16.mxu0 %v1635
    %2618 = vmatpush1.bf16.msra.mxu0 %v1634
    %2619 = vmatprep.subr.bf16.mxu0 %v1641
    %2620 = vmatpush1.bf16.msra.mxu0 %v1640
    %2621 = vmatprep.subr.bf16.mxu0 %v1647
    %2622 = vmatpush1.bf16.msra.mxu0 %v1646
    %2623 = vmatprep.subr.bf16.mxu0 %v1653
    %2624 = vmatpush1.bf16.msra.mxu0 %v1652
    %2625 = vmatprep.subr.bf16.mxu0 %v1659
    %2626 = vmatpush1.bf16.msra.mxu0 %v1658
    %2627 = vmatprep.mubr.bf16.mxu0 %v2594
    %2628 = vmatmul.mubr.bf16.gmra.mrb[0].mxu0 %v2593
    %v2629 = vpop.f32.mrb[0].mxu0
    %v2630 = vadd.f32 %v1253, %v2629
    %v2631 = vpop.f32.mrb[0].mxu0
    %v2632 = vadd.f32 %v1257, %v2631
    %v2633 = vpop.f32.mrb[0].mxu0
    %v2634 = vpop.f32.mrb[0].mxu0
    %2635 = vdwg.mxu0
    %2636 = vmatprep.subr.bf16.mxu0 %v1571
    %2637 = vmatpush1.bf16.msra.mxu0 %v1570
    %2638 = vmatprep.subr.bf16.mxu0 %v1577
    %2639 = vmatpush1.bf16.msra.mxu0 %v1576
    %2640 = vmatprep.subr.bf16.mxu0 %v1583
    %2641 = vmatpush1.bf16.msra.mxu0 %v1582
    %2642 = vmatprep.subr.bf16.mxu0 %v1589
    %2643 = vmatpush1.bf16.msra.mxu0 %v1588
    %2644 = vmatprep.subr.bf16.mxu0 %v1595
    %2645 = vmatpush1.bf16.msra.mxu0 %v1594
    %2646 = vmatprep.subr.bf16.mxu0 %v1601
    %2647 = vmatpush1.bf16.msra.mxu0 %v1600
    %2648 = vmatprep.subr.bf16.mxu0 %v1607
    %2649 = vmatpush1.bf16.msra.mxu0 %v1606
    %2650 = vmatprep.subr.bf16.mxu0 %v1613
    %2651 = vmatpush1.bf16.msra.mxu0 %v1612
    %2652 = vmatprep.subr.bf16.mxu0 %v1619
    %2653 = vmatpush1.bf16.msra.mxu0 %v1618
    %2654 = vmatprep.subr.bf16.mxu0 %v1625
    %2655 = vmatpush1.bf16.msra.mxu0 %v1624
    %2656 = vmatprep.subr.bf16.mxu0 %v1631
    %2657 = vmatpush1.bf16.msra.mxu0 %v1630
    %2658 = vmatprep.subr.bf16.mxu0 %v1637
    %2659 = vmatpush1.bf16.msra.mxu0 %v1636
    %2660 = vmatprep.subr.bf16.mxu0 %v1643
    %2661 = vmatpush1.bf16.msra.mxu0 %v1642
    %2662 = vmatprep.subr.bf16.mxu0 %v1649
    %2663 = vmatpush1.bf16.msra.mxu0 %v1648
    %2664 = vmatprep.subr.bf16.mxu0 %v1655
    %2665 = vmatpush1.bf16.msra.mxu0 %v1654
    %2666 = vmatprep.subr.bf16.mxu0 %v1661
    %2667 = vmatpush1.bf16.msra.mxu0 %v1660
    %2668 = vmatprep.mubr.bf16.mxu0 %v2594
    %2669 = vmatmul.mubr.bf16.gmra.mrb[0].mxu0 %v2593
    %v2670 = vpop.f32.mrb[0].mxu0
    %v2671 = vadd.f32 %v1261, %v2670
    %v2672 = vpop.f32.mrb[0].mxu0
    %v2673 = vadd.f32 %v1265, %v2672
    %v2674 = vpop.f32.mrb[0].mxu0
    %v2675 = vpop.f32.mrb[0].mxu0
    %2676 = vdwg.mxu0
    %2677 = vmatprep.subr.bf16.mxu0 %v1573
    %2678 = vmatpush1.bf16.msra.mxu0 %v1572
    %2679 = vmatprep.subr.bf16.mxu0 %v1579
    %2680 = vmatpush1.bf16.msra.mxu0 %v1578
    %2681 = vmatprep.subr.bf16.mxu0 %v1585
    %2682 = vmatpush1.bf16.msra.mxu0 %v1584
    %2683 = vmatprep.subr.bf16.mxu0 %v1591
    %2684 = vmatpush1.bf16.msra.mxu0 %v1590
    %2685 = vmatprep.subr.bf16.mxu0 %v1597
    %2686 = vmatpush1.bf16.msra.mxu0 %v1596
    %2687 = vmatprep.subr.bf16.mxu0 %v1603
    %2688 = vmatpush1.bf16.msra.mxu0 %v1602
    %2689 = vmatprep.subr.bf16.mxu0 %v1609
    %2690 = vmatpush1.bf16.msra.mxu0 %v1608
    %2691 = vmatprep.subr.bf16.mxu0 %v1615
    %2692 = vmatpush1.bf16.msra.mxu0 %v1614
    %2693 = vmatprep.subr.bf16.mxu0 %v1621
    %2694 = vmatpush1.bf16.msra.mxu0 %v1620
    %2695 = vmatprep.subr.bf16.mxu0 %v1627
    %2696 = vmatpush1.bf16.msra.mxu0 %v1626
    %2697 = vmatprep.subr.bf16.mxu0 %v1633
    %2698 = vmatpush1.bf16.msra.mxu0 %v1632
    %2699 = vmatprep.subr.bf16.mxu0 %v1639
    %2700 = vmatpush1.bf16.msra.mxu0 %v1638
    %2701 = vmatprep.subr.bf16.mxu0 %v1645
    %2702 = vmatpush1.bf16.msra.mxu0 %v1644
    %2703 = vmatprep.subr.bf16.mxu0 %v1651
    %2704 = vmatpush1.bf16.msra.mxu0 %v1650
    %2705 = vmatprep.subr.bf16.mxu0 %v1657
    %2706 = vmatpush1.bf16.msra.mxu0 %v1656
    %2707 = vmatprep.subr.bf16.mxu0 %v1663
    %2708 = vmatpush1.bf16.msra.mxu0 %v1662
    %2709 = vmatprep.mubr.bf16.mxu0 %v2594
    %2710 = vmatmul.mubr.bf16.gmra.mrb[0].mxu0 %v2593
    %v2711 = vpop.f32.mrb[0].mxu0
    %v2712 = vadd.f32 %v1269, %v2711
    %v2713 = vpop.f32.mrb[0].mxu0
    %v2714 = vadd.f32 %v1273, %v2713
    %v2715 = vpop.f32.mrb[0].mxu0
    %v2716 = vpop.f32.mrb[0].mxu0
    %2717 = vdwg.mxu0
    %v2718 = vld [vmem:[#allocation3 + $0xf0] sm:$0xff]
    %v2719 = vld [vmem:[#allocation3 + $0xf8] sm:$0xff]
    %v2720 = vld [vmem:[#allocation3 + $0x100] sm:$0xff]
    %v2721 = vld [vmem:[#allocation3 + $0x78] sm:$0xff]
    %v2722 = vld [vmem:[#allocation3 + $0x80] sm:$0xff]
    %v2723 = vld [vmem:[#allocation3 + $0x88] sm:$0xff]
    %v2724 = vadd.f32 %v2718, %v2630
    %v2725 = vmul.f32 %v2724, 0.5
    %v2726 = vtanh.pop %v2725
    %v2727 = vadd.f32 %v2726, 1.0
    %v2728 = vmul.f32 %v2727, 0.5
    %v2729 = vadd.f32 %v2719, %v2632
    %v2730 = vmul.f32 %v2729, 0.5
    %v2731 = vtanh.pop %v2730
    %v2732 = vadd.f32 %v2731, 1.0
    %v2733 = vmul.f32 %v2732, 0.5
    %v2734 = vmul.f32 %v2728, %v2671
    %v2735 = vadd.f32 %v2720, %v2734
    %v2736 = vtanh.pop %v2735
    %v2737 = vsub.f32 1.0, %v2733
    %v2738 = vmul.f32 %v2737, %v2736
    %v2739 = vmul.f32 %v2733, %v2573
    %v2740 = vadd.f32 %v2738, %v2739
    %v2741 = vadd.f32 %v2721, %v2673
    %v2742 = vmul.f32 %v2741, 0.5
    %v2743 = vtanh.pop %v2742
    %v2744 = vadd.f32 %v2743, 1.0
    %v2745 = vmul.f32 %v2744, 0.5
    %v2746 = vadd.f32 %v2722, %v2712
    %v2747 = vmul.f32 %v2746, 0.5
    %v2748 = vtanh.pop %v2747
    %v2749 = vadd.f32 %v2748, 1.0
    %v2750 = vmul.f32 %v2749, 0.5
    %v2751 = vmul.f32 %v2745, %v2714
    %v2752 = vadd.f32 %v2723, %v2751
    %v2753 = vtanh.pop %v2752
    %v2754 = vsub.f32 1.0, %v2750
    %v2755 = vmul.f32 %v2754, %v2753
    %v2756 = vmul.f32 %v2750, %v2590
    %v2757 = vadd.f32 %v2755, %v2756
    %2758 = vst [vmem:[#allocation4 + $0x50] sm:$0xff] %v2740
    %2759 = vst [vmem:[#allocation4 + $0x28] sm:$0xff] %v2757
    %v2760 = vpack.c.bf16 %v2740, %v2740
    %v2761 = vpack.c.bf16 %v2757, %v2757
    %2762 = vmatprep.subr.bf16.mxu0 %v1569
    %2763 = vmatpush1.bf16.msra.mxu0 %v1568
    %2764 = vmatprep.subr.bf16.mxu0 %v1575
    %2765 = vmatpush1.bf16.msra.mxu0 %v1574
    %2766 = vmatprep.subr.bf16.mxu0 %v1581
    %2767 = vmatpush1.bf16.msra.mxu0 %v1580
    %2768 = vmatprep.subr.bf16.mxu0 %v1587
    %2769 = vmatpush1.bf16.msra.mxu0 %v1586
    %2770 = vmatprep.subr.bf16.mxu0 %v1593
    %2771 = vmatpush1.bf16.msra.mxu0 %v1592
    %2772 = vmatprep.subr.bf16.mxu0 %v1599
    %2773 = vmatpush1.bf16.msra.mxu0 %v1598
    %2774 = vmatprep.subr.bf16.mxu0 %v1605
    %2775 = vmatpush1.bf16.msra.mxu0 %v1604
    %2776 = vmatprep.subr.bf16.mxu0 %v1611
    %2777 = vmatpush1.bf16.msra.mxu0 %v1610
    %2778 = vmatprep.subr.bf16.mxu0 %v1617
    %2779 = vmatpush1.bf16.msra.mxu0 %v1616
    %2780 = vmatprep.subr.bf16.mxu0 %v1623
    %2781 = vmatpush1.bf16.msra.mxu0 %v1622
    %2782 = vmatprep.subr.bf16.mxu0 %v1629
    %2783 = vmatpush1.bf16.msra.mxu0 %v1628
    %2784 = vmatprep.subr.bf16.mxu0 %v1635
    %2785 = vmatpush1.bf16.msra.mxu0 %v1634
    %2786 = vmatprep.subr.bf16.mxu0 %v1641
    %2787 = vmatpush1.bf16.msra.mxu0 %v1640
    %2788 = vmatprep.subr.bf16.mxu0 %v1647
    %2789 = vmatpush1.bf16.msra.mxu0 %v1646
    %2790 = vmatprep.subr.bf16.mxu0 %v1653
    %2791 = vmatpush1.bf16.msra.mxu0 %v1652
    %2792 = vmatprep.subr.bf16.mxu0 %v1659
    %2793 = vmatpush1.bf16.msra.mxu0 %v1658
    %2794 = vmatprep.mubr.bf16.mxu0 %v2761
    %2795 = vmatmul.mubr.bf16.gmra.mrb[0].mxu0 %v2760
    %v2796 = vpop.f32.mrb[0].mxu0
    %v2797 = vadd.f32 %v1253, %v2796
    %v2798 = vpop.f32.mrb[0].mxu0
    %v2799 = vadd.f32 %v1257, %v2798
    %v2800 = vpop.f32.mrb[0].mxu0
    %v2801 = vpop.f32.mrb[0].mxu0
    %2802 = vdwg.mxu0
    %2803 = vmatprep.subr.bf16.mxu0 %v1571
    %2804 = vmatpush1.bf16.msra.mxu0 %v1570
    %2805 = vmatprep.subr.bf16.mxu0 %v1577
    %2806 = vmatpush1.bf16.msra.mxu0 %v1576
    %2807 = vmatprep.subr.bf16.mxu0 %v1583
    %2808 = vmatpush1.bf16.msra.mxu0 %v1582
    %2809 = vmatprep.subr.bf16.mxu0 %v1589
    %2810 = vmatpush1.bf16.msra.mxu0 %v1588
    %2811 = vmatprep.subr.bf16.mxu0 %v1595
    %2812 = vmatpush1.bf16.msra.mxu0 %v1594
    %2813 = vmatprep.subr.bf16.mxu0 %v1601
    %2814 = vmatpush1.bf16.msra.mxu0 %v1600
    %2815 = vmatprep.subr.bf16.mxu0 %v1607
    %2816 = vmatpush1.bf16.msra.mxu0 %v1606
    %2817 = vmatprep.subr.bf16.mxu0 %v1613
    %2818 = vmatpush1.bf16.msra.mxu0 %v1612
    %2819 = vmatprep.subr.bf16.mxu0 %v1619
    %2820 = vmatpush1.bf16.msra.mxu0 %v1618
    %2821 = vmatprep.subr.bf16.mxu0 %v1625
    %2822 = vmatpush1.bf16.msra.mxu0 %v1624
    %2823 = vmatprep.subr.bf16.mxu0 %v1631
    %2824 = vmatpush1.bf16.msra.mxu0 %v1630
    %2825 = vmatprep.subr.bf16.mxu0 %v1637
    %2826 = vmatpush1.bf16.msra.mxu0 %v1636
    %2827 = vmatprep.subr.bf16.mxu0 %v1643
    %2828 = vmatpush1.bf16.msra.mxu0 %v1642
    %2829 = vmatprep.subr.bf16.mxu0 %v1649
    %2830 = vmatpush1.bf16.msra.mxu0 %v1648
    %2831 = vmatprep.subr.bf16.mxu0 %v1655
    %2832 = vmatpush1.bf16.msra.mxu0 %v1654
    %2833 = vmatprep.subr.bf16.mxu0 %v1661
    %2834 = vmatpush1.bf16.msra.mxu0 %v1660
    %2835 = vmatprep.mubr.bf16.mxu0 %v2761
    %2836 = vmatmul.mubr.bf16.gmra.mrb[0].mxu0 %v2760
    %v2837 = vpop.f32.mrb[0].mxu0
    %v2838 = vadd.f32 %v1261, %v2837
    %v2839 = vpop.f32.mrb[0].mxu0
    %v2840 = vadd.f32 %v1265, %v2839
    %v2841 = vpop.f32.mrb[0].mxu0
    %v2842 = vpop.f32.mrb[0].mxu0
    %2843 = vdwg.mxu0
    %2844 = vmatprep.subr.bf16.mxu0 %v1573
    %2845 = vmatpush1.bf16.msra.mxu0 %v1572
    %2846 = vmatprep.subr.bf16.mxu0 %v1579
    %2847 = vmatpush1.bf16.msra.mxu0 %v1578
    %2848 = vmatprep.subr.bf16.mxu0 %v1585
    %2849 = vmatpush1.bf16.msra.mxu0 %v1584
    %2850 = vmatprep.subr.bf16.mxu0 %v1591
    %2851 = vmatpush1.bf16.msra.mxu0 %v1590
    %2852 = vmatprep.subr.bf16.mxu0 %v1597
    %2853 = vmatpush1.bf16.msra.mxu0 %v1596
    %2854 = vmatprep.subr.bf16.mxu0 %v1603
    %2855 = vmatpush1.bf16.msra.mxu0 %v1602
    %2856 = vmatprep.subr.bf16.mxu0 %v1609
    %2857 = vmatpush1.bf16.msra.mxu0 %v1608
    %2858 = vmatprep.subr.bf16.mxu0 %v1615
    %2859 = vmatpush1.bf16.msra.mxu0 %v1614
    %2860 = vmatprep.subr.bf16.mxu0 %v1621
    %2861 = vmatpush1.bf16.msra.mxu0 %v1620
    %2862 = vmatprep.subr.bf16.mxu0 %v1627
    %2863 = vmatpush1.bf16.msra.mxu0 %v1626
    %2864 = vmatprep.subr.bf16.mxu0 %v1633
    %2865 = vmatpush1.bf16.msra.mxu0 %v1632
    %2866 = vmatprep.subr.bf16.mxu0 %v1639
    %2867 = vmatpush1.bf16.msra.mxu0 %v1638
    %2868 = vmatprep.subr.bf16.mxu0 %v1645
    %2869 = vmatpush1.bf16.msra.mxu0 %v1644
    %2870 = vmatprep.subr.bf16.mxu0 %v1651
    %2871 = vmatpush1.bf16.msra.mxu0 %v1650
    %2872 = vmatprep.subr.bf16.mxu0 %v1657
    %2873 = vmatpush1.bf16.msra.mxu0 %v1656
    %2874 = vmatprep.subr.bf16.mxu0 %v1663
    %2875 = vmatpush1.bf16.msra.mxu0 %v1662
    %2876 = vmatprep.mubr.bf16.mxu0 %v2761
    %2877 = vmatmul.mubr.bf16.gmra.mrb[0].mxu0 %v2760
    %v2878 = vpop.f32.mrb[0].mxu0
    %v2879 = vadd.f32 %v1269, %v2878
    %v2880 = vpop.f32.mrb[0].mxu0
    %v2881 = vadd.f32 %v1273, %v2880
    %v2882 = vpop.f32.mrb[0].mxu0
    %v2883 = vpop.f32.mrb[0].mxu0
    %2884 = vdwg.mxu0
    %v2885 = vld [vmem:[#allocation3 + $0x120] sm:$0xff]
    %v2886 = vld [vmem:[#allocation3 + $0x128] sm:$0xff]
    %v2887 = vld [vmem:[#allocation3 + $0x130] sm:$0xff]
    %v2888 = vld [vmem:[#allocation3 + $0x48] sm:$0xff]
    %v2889 = vld [vmem:[#allocation3 + $0x50] sm:$0xff]
    %v2890 = vld [vmem:[#allocation3 + $0x58] sm:$0xff]
    %v2891 = vadd.f32 %v2885, %v2797
    %v2892 = vmul.f32 %v2891, 0.5
    %v2893 = vtanh.pop %v2892
    %v2894 = vadd.f32 %v2893, 1.0
    %v2895 = vmul.f32 %v2894, 0.5
    %v2896 = vadd.f32 %v2886, %v2799
    %v2897 = vmul.f32 %v2896, 0.5
    %v2898 = vtanh.pop %v2897
    %v2899 = vadd.f32 %v2898, 1.0
    %v2900 = vmul.f32 %v2899, 0.5
    %v2901 = vmul.f32 %v2895, %v2838
    %v2902 = vadd.f32 %v2887, %v2901
    %v2903 = vtanh.pop %v2902
    %v2904 = vsub.f32 1.0, %v2900
    %v2905 = vmul.f32 %v2904, %v2903
    %v2906 = vmul.f32 %v2900, %v2740
    %v2907 = vadd.f32 %v2905, %v2906
    %v2908 = vadd.f32 %v2888, %v2840
    %v2909 = vmul.f32 %v2908, 0.5
    %v2910 = vtanh.pop %v2909
    %v2911 = vadd.f32 %v2910, 1.0
    %v2912 = vmul.f32 %v2911, 0.5
    %v2913 = vadd.f32 %v2889, %v2879
    %v2914 = vmul.f32 %v2913, 0.5
    %v2915 = vtanh.pop %v2914
    %v2916 = vadd.f32 %v2915, 1.0
    %v2917 = vmul.f32 %v2916, 0.5
    %v2918 = vmul.f32 %v2912, %v2881
    %v2919 = vadd.f32 %v2890, %v2918
    %v2920 = vtanh.pop %v2919
    %v2921 = vsub.f32 1.0, %v2917
    %v2922 = vmul.f32 %v2921, %v2920
    %v2923 = vmul.f32 %v2917, %v2757
    %v2924 = vadd.f32 %v2922, %v2923
    %2925 = vst [vmem:[#allocation4 + $0x60] sm:$0xff] %v2907
    %2926 = vst [vmem:[#allocation4 + $0x18] sm:$0xff] %v2924
    %v2927 = vpack.c.bf16 %v2907, %v2907
    %v2928 = vpack.c.bf16 %v2924, %v2924
    %2929 = vmatprep.subr.bf16.mxu0 %v1569
    %2930 = vmatpush1.bf16.msra.mxu0 %v1568
    %2931 = vmatprep.subr.bf16.mxu0 %v1575
    %2932 = vmatpush1.bf16.msra.mxu0 %v1574
    %2933 = vmatprep.subr.bf16.mxu0 %v1581
    %2934 = vmatpush1.bf16.msra.mxu0 %v1580
    %2935 = vmatprep.subr.bf16.mxu0 %v1587
    %2936 = vmatpush1.bf16.msra.mxu0 %v1586
    %2937 = vmatprep.subr.bf16.mxu0 %v1593
    %2938 = vmatpush1.bf16.msra.mxu0 %v1592
    %2939 = vmatprep.subr.bf16.mxu0 %v1599
    %2940 = vmatpush1.bf16.msra.mxu0 %v1598
    %2941 = vmatprep.subr.bf16.mxu0 %v1605
    %2942 = vmatpush1.bf16.msra.mxu0 %v1604
    %2943 = vmatprep.subr.bf16.mxu0 %v1611
    %2944 = vmatpush1.bf16.msra.mxu0 %v1610
    %2945 = vmatprep.subr.bf16.mxu0 %v1617
    %2946 = vmatpush1.bf16.msra.mxu0 %v1616
    %2947 = vmatprep.subr.bf16.mxu0 %v1623
    %2948 = vmatpush1.bf16.msra.mxu0 %v1622
    %2949 = vmatprep.subr.bf16.mxu0 %v1629
    %2950 = vmatpush1.bf16.msra.mxu0 %v1628
    %2951 = vmatprep.subr.bf16.mxu0 %v1635
    %2952 = vmatpush1.bf16.msra.mxu0 %v1634
    %2953 = vmatprep.subr.bf16.mxu0 %v1641
    %2954 = vmatpush1.bf16.msra.mxu0 %v1640
    %2955 = vmatprep.subr.bf16.mxu0 %v1647
    %2956 = vmatpush1.bf16.msra.mxu0 %v1646
    %2957 = vmatprep.subr.bf16.mxu0 %v1653
    %2958 = vmatpush1.bf16.msra.mxu0 %v1652
    %2959 = vmatprep.subr.bf16.mxu0 %v1659
    %2960 = vmatpush1.bf16.msra.mxu0 %v1658
    %2961 = vmatprep.mubr.bf16.mxu0 %v2928
    %2962 = vmatmul.mubr.bf16.gmra.mrb[0].mxu0 %v2927
    %v2963 = vpop.f32.mrb[0].mxu0
    %v2964 = vadd.f32 %v1253, %v2963
    %v2965 = vpop.f32.mrb[0].mxu0
    %v2966 = vadd.f32 %v1257, %v2965
    %v2967 = vpop.f32.mrb[0].mxu0
    %v2968 = vpop.f32.mrb[0].mxu0
    %2969 = vdwg.mxu0
    %2970 = vmatprep.subr.bf16.mxu0 %v1571
    %2971 = vmatpush1.bf16.msra.mxu0 %v1570
    %2972 = vmatprep.subr.bf16.mxu0 %v1577
    %2973 = vmatpush1.bf16.msra.mxu0 %v1576
    %2974 = vmatprep.subr.bf16.mxu0 %v1583
    %2975 = vmatpush1.bf16.msra.mxu0 %v1582
    %2976 = vmatprep.subr.bf16.mxu0 %v1589
    %2977 = vmatpush1.bf16.msra.mxu0 %v1588
    %2978 = vmatprep.subr.bf16.mxu0 %v1595
    %2979 = vmatpush1.bf16.msra.mxu0 %v1594
    %2980 = vmatprep.subr.bf16.mxu0 %v1601
    %2981 = vmatpush1.bf16.msra.mxu0 %v1600
    %2982 = vmatprep.subr.bf16.mxu0 %v1607
    %2983 = vmatpush1.bf16.msra.mxu0 %v1606
    %2984 = vmatprep.subr.bf16.mxu0 %v1613
    %2985 = vmatpush1.bf16.msra.mxu0 %v1612
    %2986 = vmatprep.subr.bf16.mxu0 %v1619
    %2987 = vmatpush1.bf16.msra.mxu0 %v1618
    %2988 = vmatprep.subr.bf16.mxu0 %v1625
    %2989 = vmatpush1.bf16.msra.mxu0 %v1624
    %2990 = vmatprep.subr.bf16.mxu0 %v1631
    %2991 = vmatpush1.bf16.msra.mxu0 %v1630
    %2992 = vmatprep.subr.bf16.mxu0 %v1637
    %2993 = vmatpush1.bf16.msra.mxu0 %v1636
    %2994 = vmatprep.subr.bf16.mxu0 %v1643
    %2995 = vmatpush1.bf16.msra.mxu0 %v1642
    %2996 = vmatprep.subr.bf16.mxu0 %v1649
    %2997 = vmatpush1.bf16.msra.mxu0 %v1648
    %2998 = vmatprep.subr.bf16.mxu0 %v1655
    %2999 = vmatpush1.bf16.msra.mxu0 %v1654
    %3000 = vmatprep.subr.bf16.mxu0 %v1661
    %3001 = vmatpush1.bf16.msra.mxu0 %v1660
    %3002 = vmatprep.mubr.bf16.mxu0 %v2928
    %3003 = vmatmul.mubr.bf16.gmra.mrb[0].mxu0 %v2927
    %v3004 = vpop.f32.mrb[0].mxu0
    %v3005 = vadd.f32 %v1261, %v3004
    %v3006 = vpop.f32.mrb[0].mxu0
    %v3007 = vadd.f32 %v1265, %v3006
    %v3008 = vpop.f32.mrb[0].mxu0
    %v3009 = vpop.f32.mrb[0].mxu0
    %3010 = vdwg.mxu0
    %3011 = vmatprep.subr.bf16.mxu0 %v1573
    %3012 = vmatpush1.bf16.msra.mxu0 %v1572
    %3013 = vmatprep.subr.bf16.mxu0 %v1579
    %3014 = vmatpush1.bf16.msra.mxu0 %v1578
    %3015 = vmatprep.subr.bf16.mxu0 %v1585
    %3016 = vmatpush1.bf16.msra.mxu0 %v1584
    %3017 = vmatprep.subr.bf16.mxu0 %v1591
    %3018 = vmatpush1.bf16.msra.mxu0 %v1590
    %3019 = vmatprep.subr.bf16.mxu0 %v1597
    %3020 = vmatpush1.bf16.msra.mxu0 %v1596
    %3021 = vmatprep.subr.bf16.mxu0 %v1603
    %3022 = vmatpush1.bf16.msra.mxu0 %v1602
    %3023 = vmatprep.subr.bf16.mxu0 %v1609
    %3024 = vmatpush1.bf16.msra.mxu0 %v1608
    %3025 = vmatprep.subr.bf16.mxu0 %v1615
    %3026 = vmatpush1.bf16.msra.mxu0 %v1614
    %3027 = vmatprep.subr.bf16.mxu0 %v1621
    %3028 = vmatpush1.bf16.msra.mxu0 %v1620
    %3029 = vmatprep.subr.bf16.mxu0 %v1627
    %3030 = vmatpush1.bf16.msra.mxu0 %v1626
    %3031 = vmatprep.subr.bf16.mxu0 %v1633
    %3032 = vmatpush1.bf16.msra.mxu0 %v1632
    %3033 = vmatprep.subr.bf16.mxu0 %v1639
    %3034 = vmatpush1.bf16.msra.mxu0 %v1638
    %3035 = vmatprep.subr.bf16.mxu0 %v1645
    %3036 = vmatpush1.bf16.msra.mxu0 %v1644
    %3037 = vmatprep.subr.bf16.mxu0 %v1651
    %3038 = vmatpush1.bf16.msra.mxu0 %v1650
    %3039 = vmatprep.subr.bf16.mxu0 %v1657
    %3040 = vmatpush1.bf16.msra.mxu0 %v1656
    %3041 = vmatprep.subr.bf16.mxu0 %v1663
    %3042 = vmatpush1.bf16.msra.mxu0 %v1662
    %3043 = vmatprep.mubr.bf16.mxu0 %v2928
    %3044 = vmatmul.mubr.bf16.gmra.mrb[0].mxu0 %v2927
    %v3045 = vpop.f32.mrb[0].mxu0
    %v3046 = vadd.f32 %v1269, %v3045
    %v3047 = vpop.f32.mrb[0].mxu0
    %v3048 = vadd.f32 %v1273, %v3047
    %v3049 = vpop.f32.mrb[0].mxu0
    %v3050 = vpop.f32.mrb[0].mxu0
    %3051 = vdwg.mxu0
    %v3052 = vld [vmem:[#allocation3 + $0x150] sm:$0xff]
    %v3053 = vld [vmem:[#allocation3 + $0x158] sm:$0xff]
    %v3054 = vld [vmem:[#allocation3 + $0x160] sm:$0xff]
    %v3055 = vld [vmem:[#allocation3 + $0x18] sm:$0xff]
    %v3056 = vld [vmem:[#allocation3 + $0x20] sm:$0xff]
    %v3057 = vld [vmem:[#allocation3 + $0x28] sm:$0xff]
    %v3058 = vadd.f32 %v3052, %v2964
    %v3059 = vmul.f32 %v3058, 0.5
    %v3060 = vtanh.pop %v3059
    %v3061 = vadd.f32 %v3060, 1.0
    %v3062 = vmul.f32 %v3061, 0.5
    %v3063 = vadd.f32 %v3053, %v2966
    %v3064 = vmul.f32 %v3063, 0.5
    %v3065 = vtanh.pop %v3064
    %v3066 = vadd.f32 %v3065, 1.0
    %v3067 = vmul.f32 %v3066, 0.5
    %v3068 = vmul.f32 %v3062, %v3005
    %v3069 = vadd.f32 %v3054, %v3068
    %v3070 = vtanh.pop %v3069
    %v3071 = vsub.f32 1.0, %v3067
    %v3072 = vmul.f32 %v3071, %v3070
    %v3073 = vmul.f32 %v3067, %v2907
    %v3074 = vadd.f32 %v3072, %v3073
    %v3075 = vadd.f32 %v3055, %v3007
    %v3076 = vmul.f32 %v3075, 0.5
    %v3077 = vtanh.pop %v3076
    %v3078 = vadd.f32 %v3077, 1.0
    %v3079 = vmul.f32 %v3078, 0.5
    %v3080 = vadd.f32 %v3056, %v3046
    %v3081 = vmul.f32 %v3080, 0.5
    %v3082 = vtanh.pop %v3081
    %v3083 = vadd.f32 %v3082, 1.0
    %v3084 = vmul.f32 %v3083, 0.5
    %v3085 = vmul.f32 %v3079, %v3048
    %v3086 = vadd.f32 %v3057, %v3085
    %v3087 = vtanh.pop %v3086
    %v3088 = vsub.f32 1.0, %v3084
    %v3089 = vmul.f32 %v3088, %v3087
    %v3090 = vmul.f32 %v3084, %v2924
    %v3091 = vadd.f32 %v3089, %v3090
    %3092 = vst [vmem:[#allocation4 + $0x70] sm:$0xff] %v3074
    %3093 = vst [vmem:[#allocation4 + $0x8] sm:$0xff] %v3091
    %v3094 = vld [vmem:[#allocation4] sm:$0xff]
    %v3095 = vld [vmem:[#allocation4 + $0x8] sm:$0xff]
    %v3096 = vld [vmem:[#allocation4 + $0x10] sm:$0xff]
    %v3097 = vld [vmem:[#allocation4 + $0x18] sm:$0xff]
    %v3098 = vld [vmem:[#allocation4 + $0x20] sm:$0xff]
    %v3099 = vld [vmem:[#allocation4 + $0x28] sm:$0xff]
    %v3100 = vld [vmem:[#allocation4 + $0x30] sm:$0xff]
    %v3101 = vld [vmem:[#allocation4 + $0x38] sm:$0xff]
    %v3102 = vld [vmem:[#allocation4 + $0x40] sm:$0xff]
    %v3103 = vld [vmem:[#allocation4 + $0x48] sm:$0xff]
    %v3104 = vld [vmem:[#allocation4 + $0x50] sm:$0xff]
    %v3105 = vld [vmem:[#allocation4 + $0x58] sm:$0xff]
    %v3106 = vld [vmem:[#allocation4 + $0x60] sm:$0xff]
    %v3107 = vld [vmem:[#allocation4 + $0x68] sm:$0xff]
    %v3108 = vld [vmem:[#allocation4 + $0x70] sm:$0xff]
    %v3109 = vld [vmem:[#allocation4 + $0x78] sm:$0xff]
    %v3110 = vld [vmem:[#allocation15] sm:$0xff]
    %v3111 = vld [vmem:[#allocation15 + $0x8] sm:$0xff]
    %v3112 = vld [vmem:[#allocation15 + $0x10] sm:$0xff]
    %v3113 = vld [vmem:[#allocation15 + $0x18] sm:$0xff]
    %v3114 = vld [vmem:[#allocation15 + $0x20] sm:$0xff]
    %v3115 = vld [vmem:[#allocation15 + $0x28] sm:$0xff]
    %v3116 = vld [vmem:[#allocation15 + $0x30] sm:$0xff]
    %v3117 = vld [vmem:[#allocation15 + $0x38] sm:$0xff]
    %v3118 = vld [vmem:[#allocation15 + $0x40] sm:$0xff]
    %v3119 = vld [vmem:[#allocation15 + $0x48] sm:$0xff]
    %v3120 = vld [vmem:[#allocation15 + $0x50] sm:$0xff]
    %v3121 = vld [vmem:[#allocation15 + $0x58] sm:$0xff]
    %v3122 = vld [vmem:[#allocation15 + $0x60] sm:$0xff]
    %v3123 = vld [vmem:[#allocation15 + $0x68] sm:$0xff]
    %v3124 = vld [vmem:[#allocation15 + $0x70] sm:$0xff]
    %v3125 = vld [vmem:[#allocation15 + $0x78] sm:$0xff]
    %v3126 = vld [vmem:[#allocation15 + $0x80] sm:$0xff]
    %v3127 = vld [vmem:[#allocation15 + $0x88] sm:$0xff]
    %v3128 = vld [vmem:[#allocation15 + $0x90] sm:$0xff]
    %v3129 = vld [vmem:[#allocation15 + $0x98] sm:$0xff]
    %v3130 = vld [vmem:[#allocation15 + $0xa0] sm:$0xff]
    %v3131 = vld [vmem:[#allocation15 + $0xa8] sm:$0xff]
    %v3132 = vld [vmem:[#allocation15 + $0xb0] sm:$0xff]
    %v3133 = vld [vmem:[#allocation15 + $0xb8] sm:$0xff]
    %v3134 = vld [vmem:[#allocation15 + $0xc0] sm:$0xff]
    %v3135 = vld [vmem:[#allocation15 + $0xc8] sm:$0xff]
    %v3136 = vld [vmem:[#allocation15 + $0xd0] sm:$0xff]
    %v3137 = vld [vmem:[#allocation15 + $0xd8] sm:$0xff]
    %v3138 = vld [vmem:[#allocation15 + $0xe0] sm:$0xff]
    %v3139 = vld [vmem:[#allocation15 + $0xe8] sm:$0xff]
    %v3140 = vld [vmem:[#allocation15 + $0xf0] sm:$0xff]
    %v3141 = vld [vmem:[#allocation15 + $0xf8] sm:$0xff]
    %v3142 = vld [vmem:[#allocation15 + $0x100] sm:$0xff]
    %v3143 = vld [vmem:[#allocation15 + $0x108] sm:$0xff]
    %v3144 = vld [vmem:[#allocation15 + $0x110] sm:$0xff]
    %v3145 = vld [vmem:[#allocation15 + $0x118] sm:$0xff]
    %v3146 = vld [vmem:[#allocation15 + $0x120] sm:$0xff]
    %v3147 = vld [vmem:[#allocation15 + $0x128] sm:$0xff]
    %v3148 = vld [vmem:[#allocation15 + $0x130] sm:$0xff]
    %v3149 = vld [vmem:[#allocation15 + $0x138] sm:$0xff]
    %v3150 = vld [vmem:[#allocation15 + $0x140] sm:$0xff]
    %v3151 = vld [vmem:[#allocation15 + $0x148] sm:$0xff]
    %v3152 = vld [vmem:[#allocation15 + $0x150] sm:$0xff]
    %v3153 = vld [vmem:[#allocation15 + $0x158] sm:$0xff]
    %v3154 = vld [vmem:[#allocation15 + $0x160] sm:$0xff]
    %v3155 = vld [vmem:[#allocation15 + $0x168] sm:$0xff]
    %v3156 = vld [vmem:[#allocation15 + $0x170] sm:$0xff]
    %v3157 = vld [vmem:[#allocation15 + $0x178] sm:$0xff]
    %v3158 = vld [vmem:[#allocation15 + $0x180] sm:$0xff]
    %v3159 = vld [vmem:[#allocation15 + $0x188] sm:$0xff]
    %v3160 = vld [vmem:[#allocation15 + $0x190] sm:$0xff]
    %v3161 = vld [vmem:[#allocation15 + $0x198] sm:$0xff]
    %v3162 = vld [vmem:[#allocation15 + $0x1a0] sm:$0xff]
    %v3163 = vld [vmem:[#allocation15 + $0x1a8] sm:$0xff]
    %v3164 = vld [vmem:[#allocation15 + $0x1b0] sm:$0xff]
    %v3165 = vld [vmem:[#allocation15 + $0x1b8] sm:$0xff]
    %v3166 = vld [vmem:[#allocation15 + $0x1c0] sm:$0xff]
    %v3167 = vld [vmem:[#allocation15 + $0x1c8] sm:$0xff]
    %v3168 = vld [vmem:[#allocation15 + $0x1d0] sm:$0xff]
    %v3169 = vld [vmem:[#allocation15 + $0x1d8] sm:$0xff]
    %v3170 = vld [vmem:[#allocation15 + $0x1e0] sm:$0xff]
    %v3171 = vld [vmem:[#allocation15 + $0x1e8] sm:$0xff]
    %v3172 = vld [vmem:[#allocation15 + $0x1f0] sm:$0xff]
    %v3173 = vld [vmem:[#allocation15 + $0x1f8] sm:$0xff]
    %v3174 = vld [vmem:[#allocation15 + $0x200] sm:$0xff]
    %v3175 = vld [vmem:[#allocation15 + $0x208] sm:$0xff]
    %v3176 = vld [vmem:[#allocation15 + $0x210] sm:$0xff]
    %v3177 = vld [vmem:[#allocation15 + $0x218] sm:$0xff]
    %v3178 = vld [vmem:[#allocation15 + $0x220] sm:$0xff]
    %v3179 = vld [vmem:[#allocation15 + $0x228] sm:$0xff]
    %v3180 = vld [vmem:[#allocation15 + $0x230] sm:$0xff]
    %v3181 = vld [vmem:[#allocation15 + $0x238] sm:$0xff]
    %v3182 = vld [vmem:[#allocation15 + $0x240] sm:$0xff]
    %v3183 = vld [vmem:[#allocation15 + $0x248] sm:$0xff]
    %v3184 = vld [vmem:[#allocation15 + $0x250] sm:$0xff]
    %v3185 = vld [vmem:[#allocation15 + $0x258] sm:$0xff]
    %v3186 = vld [vmem:[#allocation15 + $0x260] sm:$0xff]
    %v3187 = vld [vmem:[#allocation15 + $0x268] sm:$0xff]
    %v3188 = vld [vmem:[#allocation15 + $0x270] sm:$0xff]
    %v3189 = vld [vmem:[#allocation15 + $0x278] sm:$0xff]
    %v3190 = vld [vmem:[#allocation15 + $0x280] sm:$0xff]
    %v3191 = vld [vmem:[#allocation15 + $0x288] sm:$0xff]
    %v3192 = vld [vmem:[#allocation15 + $0x290] sm:$0xff]
    %v3193 = vld [vmem:[#allocation15 + $0x298] sm:$0xff]
    %v3194 = vld [vmem:[#allocation15 + $0x2a0] sm:$0xff]
    %v3195 = vld [vmem:[#allocation15 + $0x2a8] sm:$0xff]
    %v3196 = vld [vmem:[#allocation15 + $0x2b0] sm:$0xff]
    %v3197 = vld [vmem:[#allocation15 + $0x2b8] sm:$0xff]
    %v3198 = vld [vmem:[#allocation15 + $0x2c0] sm:$0xff]
    %v3199 = vld [vmem:[#allocation15 + $0x2c8] sm:$0xff]
    %v3200 = vld [vmem:[#allocation15 + $0x2d0] sm:$0xff]
    %v3201 = vld [vmem:[#allocation15 + $0x2d8] sm:$0xff]
    %v3202 = vld [vmem:[#allocation15 + $0x2e0] sm:$0xff]
    %v3203 = vld [vmem:[#allocation15 + $0x2e8] sm:$0xff]
    %v3204 = vld [vmem:[#allocation15 + $0x2f0] sm:$0xff]
    %v3205 = vld [vmem:[#allocation15 + $0x2f8] sm:$0xff]
    %v3206 = vld [vmem:[#allocation15 + $0x300] sm:$0xff]
    %v3207 = vld [vmem:[#allocation15 + $0x308] sm:$0xff]
    %v3208 = vld [vmem:[#allocation15 + $0x310] sm:$0xff]
    %v3209 = vld [vmem:[#allocation15 + $0x318] sm:$0xff]
    %v3210 = vld [vmem:[#allocation15 + $0x320] sm:$0xff]
    %v3211 = vld [vmem:[#allocation15 + $0x328] sm:$0xff]
    %v3212 = vld [vmem:[#allocation15 + $0x330] sm:$0xff]
    %v3213 = vld [vmem:[#allocation15 + $0x338] sm:$0xff]
    %v3214 = vld [vmem:[#allocation15 + $0x340] sm:$0xff]
    %v3215 = vld [vmem:[#allocation15 + $0x348] sm:$0xff]
    %v3216 = vld [vmem:[#allocation15 + $0x350] sm:$0xff]
    %v3217 = vld [vmem:[#allocation15 + $0x358] sm:$0xff]
    %v3218 = vld [vmem:[#allocation15 + $0x360] sm:$0xff]
    %v3219 = vld [vmem:[#allocation15 + $0x368] sm:$0xff]
    %v3220 = vld [vmem:[#allocation15 + $0x370] sm:$0xff]
    %v3221 = vld [vmem:[#allocation15 + $0x378] sm:$0xff]
    %v3222 = vld [vmem:[#allocation15 + $0x380] sm:$0xff]
    %v3223 = vld [vmem:[#allocation15 + $0x388] sm:$0xff]
    %v3224 = vld [vmem:[#allocation15 + $0x390] sm:$0xff]
    %v3225 = vld [vmem:[#allocation15 + $0x398] sm:$0xff]
    %v3226 = vld [vmem:[#allocation15 + $0x3a0] sm:$0xff]
    %v3227 = vld [vmem:[#allocation15 + $0x3a8] sm:$0xff]
    %v3228 = vld [vmem:[#allocation15 + $0x3b0] sm:$0xff]
    %v3229 = vld [vmem:[#allocation15 + $0x3b8] sm:$0xff]
    %v3230 = vld [vmem:[#allocation15 + $0x3c0] sm:$0xff]
    %v3231 = vld [vmem:[#allocation15 + $0x3c8] sm:$0xff]
    %v3232 = vld [vmem:[#allocation15 + $0x3d0] sm:$0xff]
    %v3233 = vld [vmem:[#allocation15 + $0x3d8] sm:$0xff]
    %v3234 = vld [vmem:[#allocation15 + $0x3e0] sm:$0xff]
    %v3235 = vld [vmem:[#allocation15 + $0x3e8] sm:$0xff]
    %v3236 = vld [vmem:[#allocation15 + $0x3f0] sm:$0xff]
    %v3237 = vld [vmem:[#allocation15 + $0x3f8] sm:$0xff]
    %v3238 = vld [vmem:[#allocation15 + $0x400] sm:$0xff]
    %v3239 = vld [vmem:[#allocation15 + $0x408] sm:$0xff]
    %v3240 = vld [vmem:[#allocation15 + $0x410] sm:$0xff]
    %v3241 = vld [vmem:[#allocation15 + $0x418] sm:$0xff]
    %v3242 = vld [vmem:[#allocation15 + $0x420] sm:$0xff]
    %v3243 = vld [vmem:[#allocation15 + $0x428] sm:$0xff]
    %v3244 = vld [vmem:[#allocation15 + $0x430] sm:$0xff]
    %v3245 = vld [vmem:[#allocation15 + $0x438] sm:$0xff]
    %v3246 = vld [vmem:[#allocation15 + $0x440] sm:$0xff]
    %v3247 = vld [vmem:[#allocation15 + $0x448] sm:$0xff]
    %v3248 = vld [vmem:[#allocation15 + $0x450] sm:$0xff]
    %v3249 = vld [vmem:[#allocation15 + $0x458] sm:$0xff]
    %v3250 = vld [vmem:[#allocation15 + $0x460] sm:$0xff]
    %v3251 = vld [vmem:[#allocation15 + $0x468] sm:$0xff]
    %v3252 = vld [vmem:[#allocation15 + $0x470] sm:$0xff]
    %v3253 = vld [vmem:[#allocation15 + $0x478] sm:$0xff]
    %v3254 = vld [vmem:[#allocation15 + $0x480] sm:$0xff]
    %v3255 = vld [vmem:[#allocation15 + $0x488] sm:$0xff]
    %v3256 = vld [vmem:[#allocation15 + $0x490] sm:$0xff]
    %v3257 = vld [vmem:[#allocation15 + $0x498] sm:$0xff]
    %v3258 = vld [vmem:[#allocation15 + $0x4a0] sm:$0xff]
    %v3259 = vld [vmem:[#allocation15 + $0x4a8] sm:$0xff]
    %v3260 = vld [vmem:[#allocation15 + $0x4b0] sm:$0xff]
    %v3261 = vld [vmem:[#allocation15 + $0x4b8] sm:$0xff]
    %v3262 = vld [vmem:[#allocation15 + $0x4c0] sm:$0xff]
    %v3263 = vld [vmem:[#allocation15 + $0x4c8] sm:$0xff]
    %v3264 = vld [vmem:[#allocation15 + $0x4d0] sm:$0xff]
    %v3265 = vld [vmem:[#allocation15 + $0x4d8] sm:$0xff]
    %v3266 = vld [vmem:[#allocation15 + $0x4e0] sm:$0xff]
    %v3267 = vld [vmem:[#allocation15 + $0x4e8] sm:$0xff]
    %v3268 = vld [vmem:[#allocation15 + $0x4f0] sm:$0xff]
    %v3269 = vld [vmem:[#allocation15 + $0x4f8] sm:$0xff]
    %v3270 = vld [vmem:[#allocation15 + $0x500] sm:$0xff]
    %v3271 = vld [vmem:[#allocation15 + $0x508] sm:$0xff]
    %v3272 = vld [vmem:[#allocation15 + $0x510] sm:$0xff]
    %v3273 = vld [vmem:[#allocation15 + $0x518] sm:$0xff]
    %v3274 = vld [vmem:[#allocation15 + $0x520] sm:$0xff]
    %v3275 = vld [vmem:[#allocation15 + $0x528] sm:$0xff]
    %v3276 = vld [vmem:[#allocation15 + $0x530] sm:$0xff]
    %v3277 = vld [vmem:[#allocation15 + $0x538] sm:$0xff]
    %v3278 = vld [vmem:[#allocation15 + $0x540] sm:$0xff]
    %v3279 = vld [vmem:[#allocation15 + $0x548] sm:$0xff]
    %v3280 = vld [vmem:[#allocation15 + $0x550] sm:$0xff]
    %v3281 = vld [vmem:[#allocation15 + $0x558] sm:$0xff]
    %v3282 = vld [vmem:[#allocation15 + $0x560] sm:$0xff]
    %v3283 = vld [vmem:[#allocation15 + $0x568] sm:$0xff]
    %v3284 = vld [vmem:[#allocation15 + $0x570] sm:$0xff]
    %v3285 = vld [vmem:[#allocation15 + $0x578] sm:$0xff]
    %v3286 = vld [vmem:[#allocation15 + $0x580] sm:$0xff]
    %v3287 = vld [vmem:[#allocation15 + $0x588] sm:$0xff]
    %v3288 = vld [vmem:[#allocation15 + $0x590] sm:$0xff]
    %v3289 = vld [vmem:[#allocation15 + $0x598] sm:$0xff]
    %v3290 = vld [vmem:[#allocation15 + $0x5a0] sm:$0xff]
    %v3291 = vld [vmem:[#allocation15 + $0x5a8] sm:$0xff]
    %v3292 = vld [vmem:[#allocation15 + $0x5b0] sm:$0xff]
    %v3293 = vld [vmem:[#allocation15 + $0x5b8] sm:$0xff]
    %v3294 = vld [vmem:[#allocation15 + $0x5c0] sm:$0xff]
    %v3295 = vld [vmem:[#allocation15 + $0x5c8] sm:$0xff]
    %v3296 = vld [vmem:[#allocation15 + $0x5d0] sm:$0xff]
    %v3297 = vld [vmem:[#allocation15 + $0x5d8] sm:$0xff]
    %v3298 = vld [vmem:[#allocation15 + $0x5e0] sm:$0xff]
    %v3299 = vld [vmem:[#allocation15 + $0x5e8] sm:$0xff]
    %v3300 = vld [vmem:[#allocation15 + $0x5f0] sm:$0xff]
    %v3301 = vld [vmem:[#allocation15 + $0x5f8] sm:$0xff]
    %v3302 = vld [vmem:[%s8] sm:$0x3f]
    %v3304 = vlaneseq
    %v3305 = vshrl.u32 %v3304, 7
    %v3306 = vsub.s32 0, %v3305
    %v3307 = vrot.slane %v3302, %v3306
    %v3308 = vlaneseq
    %v3309 = vshrl.u32 %v3308, 7
    %v3310 = vsub.s32 1, %v3309
    %v3311 = vrot.slane %v3302, %v3310
    %v3312 = vlaneseq
    %v3313 = vshrl.u32 %v3312, 7
    %v3314 = vsub.s32 2, %v3313
    %v3315 = vrot.slane %v3302, %v3314
    %v3316 = vlaneseq
    %v3317 = vshrl.u32 %v3316, 7
    %v3318 = vsub.s32 3, %v3317
    %v3319 = vrot.slane %v3302, %v3318
    %v3320 = vlaneseq
    %v3321 = vshrl.u32 %v3320, 7
    %v3322 = vsub.s32 4, %v3321
    %v3323 = vrot.slane %v3302, %v3322
    %v3324 = vlaneseq
    %v3325 = vshrl.u32 %v3324, 7
    %v3326 = vsub.s32 5, %v3325
    %v3327 = vrot.slane %v3302, %v3326
    %3334 = vmatprep.subr.mxu0 %v3111
    %3335 = vmatpush1.msra.mxu0 %v3110
    %3336 = vmatprep.subr.mxu0 %v3117
    %3337 = vmatpush1.msra.mxu0 %v3116
    %3338 = vmatprep.subr.mxu0 %v3123
    %3339 = vmatpush1.msra.mxu0 %v3122
    %3340 = vmatprep.subr.mxu0 %v3129
    %3341 = vmatpush1.msra.mxu0 %v3128
    %3342 = vmatprep.subr.mxu0 %v3135
    %3343 = vmatpush1.msra.mxu0 %v3134
    %3344 = vmatprep.subr.mxu0 %v3141
    %3345 = vmatpush1.msra.mxu0 %v3140
    %3346 = vmatprep.subr.mxu0 %v3147
    %3347 = vmatpush1.msra.mxu0 %v3146
    %3348 = vmatprep.subr.mxu0 %v3153
    %3349 = vmatpush1.msra.mxu0 %v3152
    %3350 = vmatprep.subr.mxu0 %v3159
    %3351 = vmatpush1.msra.mxu0 %v3158
    %3352 = vmatprep.subr.mxu0 %v3165
    %3353 = vmatpush1.msra.mxu0 %v3164
    %3354 = vmatprep.subr.mxu0 %v3171
    %3355 = vmatpush1.msra.mxu0 %v3170
    %3356 = vmatprep.subr.mxu0 %v3177
    %3357 = vmatpush1.msra.mxu0 %v3176
    %3358 = vmatprep.subr.mxu0 %v3183
    %3359 = vmatpush1.msra.mxu0 %v3182
    %3360 = vmatprep.subr.mxu0 %v3189
    %3361 = vmatpush1.msra.mxu0 %v3188
    %3362 = vmatprep.subr.mxu0 %v3195
    %3363 = vmatpush1.msra.mxu0 %v3194
    %3364 = vmatprep.subr.mxu0 %v3201
    %3365 = vmatpush1.msra.mxu0 %v3200
    %3366 = vmatprep.subr.mxu0 %v3207
    %3367 = vmatpush1.msra.mxu0 %v3206
    %3368 = vmatprep.subr.mxu0 %v3213
    %3369 = vmatpush1.msra.mxu0 %v3212
    %3370 = vmatprep.subr.mxu0 %v3219
    %3371 = vmatpush1.msra.mxu0 %v3218
    %3372 = vmatprep.subr.mxu0 %v3225
    %3373 = vmatpush1.msra.mxu0 %v3224
    %3374 = vmatprep.subr.mxu0 %v3231
    %3375 = vmatpush1.msra.mxu0 %v3230
    %3376 = vmatprep.subr.mxu0 %v3237
    %3377 = vmatpush1.msra.mxu0 %v3236
    %3378 = vmatprep.subr.mxu0 %v3243
    %3379 = vmatpush1.msra.mxu0 %v3242
    %3380 = vmatprep.subr.mxu0 %v3249
    %3381 = vmatpush1.msra.mxu0 %v3248
    %3382 = vmatprep.subr.mxu0 %v3255
    %3383 = vmatpush1.msra.mxu0 %v3254
    %3384 = vmatprep.subr.mxu0 %v3261
    %3385 = vmatpush1.msra.mxu0 %v3260
    %3386 = vmatprep.subr.mxu0 %v3267
    %3387 = vmatpush1.msra.mxu0 %v3266
    %3388 = vmatprep.subr.mxu0 %v3273
    %3389 = vmatpush1.msra.mxu0 %v3272
    %3390 = vmatprep.subr.mxu0 %v3279
    %3391 = vmatpush1.msra.mxu0 %v3278
    %3392 = vmatprep.subr.mxu0 %v3285
    %3393 = vmatpush1.msra.mxu0 %v3284
    %3394 = vmatprep.subr.mxu0 %v3291
    %3395 = vmatpush1.msra.mxu0 %v3290
    %3396 = vmatprep.subr.mxu0 %v3297
    %3397 = vmatpush1.msra.mxu0 %v3296
    %3398 = vmatprep.mubr.f32.mxu0 %v3095
    %3399 = vmatmul.mubr.f32.gmra.mrb[0].mxu0 %v3094
    %v3400 = vpop.f32.mrb[0].mxu0
    %v3401 = vadd.f32 %v3307, %v3400
    %v3402 = vpop.f32.mrb[0].mxu0
    %v3403 = vadd.f32 %v3311, %v3402
    %3404 = vmatprep.mubr.f32.mxu0 %v3097
    %3405 = vmatmul.mubr.f32.gmra.mrb[0].mxu0 %v3096
    %v3406 = vpop.f32.mrb[0].mxu0
    %v3407 = vadd.f32 %v3307, %v3406
    %v3408 = vpop.f32.mrb[0].mxu0
    %v3409 = vadd.f32 %v3311, %v3408
    %3410 = vmatprep.mubr.f32.mxu0 %v3099
    %3411 = vmatmul.mubr.f32.gmra.mrb[0].mxu0 %v3098
    %v3412 = vpop.f32.mrb[0].mxu0
    %v3413 = vadd.f32 %v3307, %v3412
    %v3414 = vpop.f32.mrb[0].mxu0
    %v3415 = vadd.f32 %v3311, %v3414
    %3416 = vmatprep.mubr.f32.mxu0 %v3101
    %3417 = vmatmul.mubr.f32.gmra.mrb[0].mxu0 %v3100
    %v3418 = vpop.f32.mrb[0].mxu0
    %v3419 = vadd.f32 %v3307, %v3418
    %v3420 = vpop.f32.mrb[0].mxu0
    %v3421 = vadd.f32 %v3311, %v3420
    %3422 = vmatprep.mubr.f32.mxu0 %v3103
    %3423 = vmatmul.mubr.f32.gmra.mrb[0].mxu0 %v3102
    %v3424 = vpop.f32.mrb[0].mxu0
    %v3425 = vadd.f32 %v3307, %v3424
    %v3426 = vpop.f32.mrb[0].mxu0
    %v3427 = vadd.f32 %v3311, %v3426
    %3428 = vmatprep.mubr.f32.mxu0 %v3105
    %3429 = vmatmul.mubr.f32.gmra.mrb[0].mxu0 %v3104
    %v3430 = vpop.f32.mrb[0].mxu0
    %v3431 = vadd.f32 %v3307, %v3430
    %v3432 = vpop.f32.mrb[0].mxu0
    %v3433 = vadd.f32 %v3311, %v3432
    %3434 = vmatprep.mubr.f32.mxu0 %v3107
    %3435 = vmatmul.mubr.f32.gmra.mrb[0].mxu0 %v3106
    %v3436 = vpop.f32.mrb[0].mxu0
    %v3437 = vadd.f32 %v3307, %v3436
    %v3438 = vpop.f32.mrb[0].mxu0
    %v3439 = vadd.f32 %v3311, %v3438
    %3440 = vmatprep.mubr.f32.mxu0 %v3109
    %3441 = vmatmul.mubr.f32.gmra.mrb[0].mxu0 %v3108
    %v3442 = vpop.f32.mrb[0].mxu0
    %v3443 = vadd.f32 %v3307, %v3442
    %v3444 = vpop.f32.mrb[0].mxu0
    %v3445 = vadd.f32 %v3311, %v3444
    %3446 = vdwg.mxu0
    %3447 = vmatprep.subr.mxu0 %v3113
    %3448 = vmatpush1.msra.mxu0 %v3112
    %3449 = vmatprep.subr.mxu0 %v3119
    %3450 = vmatpush1.msra.mxu0 %v3118
    %3451 = vmatprep.subr.mxu0 %v3125
    %3452 = vmatpush1.msra.mxu0 %v3124
    %3453 = vmatprep.subr.mxu0 %v3131
    %3454 = vmatpush1.msra.mxu0 %v3130
    %3455 = vmatprep.subr.mxu0 %v3137
    %3456 = vmatpush1.msra.mxu0 %v3136
    %3457 = vmatprep.subr.mxu0 %v3143
    %3458 = vmatpush1.msra.mxu0 %v3142
    %3459 = vmatprep.subr.mxu0 %v3149
    %3460 = vmatpush1.msra.mxu0 %v3148
    %3461 = vmatprep.subr.mxu0 %v3155
    %3462 = vmatpush1.msra.mxu0 %v3154
    %3463 = vmatprep.subr.mxu0 %v3161
    %3464 = vmatpush1.msra.mxu0 %v3160
    %3465 = vmatprep.subr.mxu0 %v3167
    %3466 = vmatpush1.msra.mxu0 %v3166
    %3467 = vmatprep.subr.mxu0 %v3173
    %3468 = vmatpush1.msra.mxu0 %v3172
    %3469 = vmatprep.subr.mxu0 %v3179
    %3470 = vmatpush1.msra.mxu0 %v3178
    %3471 = vmatprep.subr.mxu0 %v3185
    %3472 = vmatpush1.msra.mxu0 %v3184
    %3473 = vmatprep.subr.mxu0 %v3191
    %3474 = vmatpush1.msra.mxu0 %v3190
    %3475 = vmatprep.subr.mxu0 %v3197
    %3476 = vmatpush1.msra.mxu0 %v3196
    %3477 = vmatprep.subr.mxu0 %v3203
    %3478 = vmatpush1.msra.mxu0 %v3202
    %3479 = vmatprep.subr.mxu0 %v3209
    %3480 = vmatpush1.msra.mxu0 %v3208
    %3481 = vmatprep.subr.mxu0 %v3215
    %3482 = vmatpush1.msra.mxu0 %v3214
    %3483 = vmatprep.subr.mxu0 %v3221
    %3484 = vmatpush1.msra.mxu0 %v3220
    %3485 = vmatprep.subr.mxu0 %v3227
    %3486 = vmatpush1.msra.mxu0 %v3226
    %3487 = vmatprep.subr.mxu0 %v3233
    %3488 = vmatpush1.msra.mxu0 %v3232
    %3489 = vmatprep.subr.mxu0 %v3239
    %3490 = vmatpush1.msra.mxu0 %v3238
    %3491 = vmatprep.subr.mxu0 %v3245
    %3492 = vmatpush1.msra.mxu0 %v3244
    %3493 = vmatprep.subr.mxu0 %v3251
    %3494 = vmatpush1.msra.mxu0 %v3250
    %3495 = vmatprep.subr.mxu0 %v3257
    %3496 = vmatpush1.msra.mxu0 %v3256
    %3497 = vmatprep.subr.mxu0 %v3263
    %3498 = vmatpush1.msra.mxu0 %v3262
    %3499 = vmatprep.subr.mxu0 %v3269
    %3500 = vmatpush1.msra.mxu0 %v3268
    %3501 = vmatprep.subr.mxu0 %v3275
    %3502 = vmatpush1.msra.mxu0 %v3274
    %3503 = vmatprep.subr.mxu0 %v3281
    %3504 = vmatpush1.msra.mxu0 %v3280
    %3505 = vmatprep.subr.mxu0 %v3287
    %3506 = vmatpush1.msra.mxu0 %v3286
    %3507 = vmatprep.subr.mxu0 %v3293
    %3508 = vmatpush1.msra.mxu0 %v3292
    %3509 = vmatprep.subr.mxu0 %v3299
    %3510 = vmatpush1.msra.mxu0 %v3298
    %3511 = vmatprep.mubr.f32.mxu0 %v3095
    %3512 = vmatmul.mubr.f32.gmra.mrb[0].mxu0 %v3094
    %v3513 = vpop.f32.mrb[0].mxu0
    %v3514 = vadd.f32 %v3315, %v3513
    %v3515 = vpop.f32.mrb[0].mxu0
    %v3516 = vadd.f32 %v3319, %v3515
    %3517 = vmatprep.mubr.f32.mxu0 %v3097
    %3518 = vmatmul.mubr.f32.gmra.mrb[0].mxu0 %v3096
    %v3519 = vpop.f32.mrb[0].mxu0
    %v3520 = vadd.f32 %v3315, %v3519
    %v3521 = vpop.f32.mrb[0].mxu0
    %v3522 = vadd.f32 %v3319, %v3521
    %3523 = vmatprep.mubr.f32.mxu0 %v3099
    %3524 = vmatmul.mubr.f32.gmra.mrb[0].mxu0 %v3098
    %v3525 = vpop.f32.mrb[0].mxu0
    %v3526 = vadd.f32 %v3315, %v3525
    %v3527 = vpop.f32.mrb[0].mxu0
    %v3528 = vadd.f32 %v3319, %v3527
    %3529 = vmatprep.mubr.f32.mxu0 %v3101
    %3530 = vmatmul.mubr.f32.gmra.mrb[0].mxu0 %v3100
    %v3531 = vpop.f32.mrb[0].mxu0
    %v3532 = vadd.f32 %v3315, %v3531
    %v3533 = vpop.f32.mrb[0].mxu0
    %v3534 = vadd.f32 %v3319, %v3533
    %3535 = vmatprep.mubr.f32.mxu0 %v3103
    %3536 = vmatmul.mubr.f32.gmra.mrb[0].mxu0 %v3102
    %v3537 = vpop.f32.mrb[0].mxu0
    %v3538 = vadd.f32 %v3315, %v3537
    %v3539 = vpop.f32.mrb[0].mxu0
    %v3540 = vadd.f32 %v3319, %v3539
    %3541 = vmatprep.mubr.f32.mxu0 %v3105
    %3542 = vmatmul.mubr.f32.gmra.mrb[0].mxu0 %v3104
    %v3543 = vpop.f32.mrb[0].mxu0
    %v3544 = vadd.f32 %v3315, %v3543
    %v3545 = vpop.f32.mrb[0].mxu0
    %v3546 = vadd.f32 %v3319, %v3545
    %3547 = vmatprep.mubr.f32.mxu0 %v3107
    %3548 = vmatmul.mubr.f32.gmra.mrb[0].mxu0 %v3106
    %v3549 = vpop.f32.mrb[0].mxu0
    %v3550 = vadd.f32 %v3315, %v3549
    %v3551 = vpop.f32.mrb[0].mxu0
    %v3552 = vadd.f32 %v3319, %v3551
    %3553 = vmatprep.mubr.f32.mxu0 %v3109
    %3554 = vmatmul.mubr.f32.gmra.mrb[0].mxu0 %v3108
    %v3555 = vpop.f32.mrb[0].mxu0
    %v3556 = vadd.f32 %v3315, %v3555
    %v3557 = vpop.f32.mrb[0].mxu0
    %v3558 = vadd.f32 %v3319, %v3557
    %3559 = vdwg.mxu0
    %3560 = vmatprep.subr.mxu0 %v3115
    %3561 = vmatpush1.msra.mxu0 %v3114
    %3562 = vmatprep.subr.mxu0 %v3121
    %3563 = vmatpush1.msra.mxu0 %v3120
    %3564 = vmatprep.subr.mxu0 %v3127
    %3565 = vmatpush1.msra.mxu0 %v3126
    %3566 = vmatprep.subr.mxu0 %v3133
    %3567 = vmatpush1.msra.mxu0 %v3132
    %3568 = vmatprep.subr.mxu0 %v3139
    %3569 = vmatpush1.msra.mxu0 %v3138
    %3570 = vmatprep.subr.mxu0 %v3145
    %3571 = vmatpush1.msra.mxu0 %v3144
    %3572 = vmatprep.subr.mxu0 %v3151
    %3573 = vmatpush1.msra.mxu0 %v3150
    %3574 = vmatprep.subr.mxu0 %v3157
    %3575 = vmatpush1.msra.mxu0 %v3156
    %3576 = vmatprep.subr.mxu0 %v3163
    %3577 = vmatpush1.msra.mxu0 %v3162
    %3578 = vmatprep.subr.mxu0 %v3169
    %3579 = vmatpush1.msra.mxu0 %v3168
    %3580 = vmatprep.subr.mxu0 %v3175
    %3581 = vmatpush1.msra.mxu0 %v3174
    %3582 = vmatprep.subr.mxu0 %v3181
    %3583 = vmatpush1.msra.mxu0 %v3180
    %3584 = vmatprep.subr.mxu0 %v3187
    %3585 = vmatpush1.msra.mxu0 %v3186
    %3586 = vmatprep.subr.mxu0 %v3193
    %3587 = vmatpush1.msra.mxu0 %v3192
    %3588 = vmatprep.subr.mxu0 %v3199
    %3589 = vmatpush1.msra.mxu0 %v3198
    %3590 = vmatprep.subr.mxu0 %v3205
    %3591 = vmatpush1.msra.mxu0 %v3204
    %3592 = vmatprep.subr.mxu0 %v3211
    %3593 = vmatpush1.msra.mxu0 %v3210
    %3594 = vmatprep.subr.mxu0 %v3217
    %3595 = vmatpush1.msra.mxu0 %v3216
    %3596 = vmatprep.subr.mxu0 %v3223
    %3597 = vmatpush1.msra.mxu0 %v3222
    %3598 = vmatprep.subr.mxu0 %v3229
    %3599 = vmatpush1.msra.mxu0 %v3228
    %3600 = vmatprep.subr.mxu0 %v3235
    %3601 = vmatpush1.msra.mxu0 %v3234
    %3602 = vmatprep.subr.mxu0 %v3241
    %3603 = vmatpush1.msra.mxu0 %v3240
    %3604 = vmatprep.subr.mxu0 %v3247
    %3605 = vmatpush1.msra.mxu0 %v3246
    %3606 = vmatprep.subr.mxu0 %v3253
    %3607 = vmatpush1.msra.mxu0 %v3252
    %3608 = vmatprep.subr.mxu0 %v3259
    %3609 = vmatpush1.msra.mxu0 %v3258
    %3610 = vmatprep.subr.mxu0 %v3265
    %3611 = vmatpush1.msra.mxu0 %v3264
    %3612 = vmatprep.subr.mxu0 %v3271
    %3613 = vmatpush1.msra.mxu0 %v3270
    %3614 = vmatprep.subr.mxu0 %v3277
    %3615 = vmatpush1.msra.mxu0 %v3276
    %3616 = vmatprep.subr.mxu0 %v3283
    %3617 = vmatpush1.msra.mxu0 %v3282
    %3618 = vmatprep.subr.mxu0 %v3289
    %3619 = vmatpush1.msra.mxu0 %v3288
    %3620 = vmatprep.subr.mxu0 %v3295
    %3621 = vmatpush1.msra.mxu0 %v3294
    %3622 = vmatprep.subr.mxu0 %v3301
    %3623 = vmatpush1.msra.mxu0 %v3300
    %3624 = vmatprep.mubr.f32.mxu0 %v3095
    %3625 = vmatmul.mubr.f32.gmra.mrb[0].mxu0 %v3094
    %v3626 = vpop.f32.mrb[0].mxu0
    %v3627 = vadd.f32 %v3323, %v3626
    %v3628 = vpop.f32.mrb[0].mxu0
    %v3629 = vadd.f32 %v3327, %v3628
    %3630 = vmatprep.mubr.f32.mxu0 %v3097
    %3631 = vmatmul.mubr.f32.gmra.mrb[0].mxu0 %v3096
    %v3632 = vpop.f32.mrb[0].mxu0
    %v3633 = vadd.f32 %v3323, %v3632
    %v3634 = vpop.f32.mrb[0].mxu0
    %v3635 = vadd.f32 %v3327, %v3634
    %3636 = vmatprep.mubr.f32.mxu0 %v3099
    %3637 = vmatmul.mubr.f32.gmra.mrb[0].mxu0 %v3098
    %v3638 = vpop.f32.mrb[0].mxu0
    %v3639 = vadd.f32 %v3323, %v3638
    %v3640 = vpop.f32.mrb[0].mxu0
    %v3641 = vadd.f32 %v3327, %v3640
    %3642 = vmatprep.mubr.f32.mxu0 %v3101
    %3643 = vmatmul.mubr.f32.gmra.mrb[0].mxu0 %v3100
    %v3644 = vpop.f32.mrb[0].mxu0
    %v3645 = vadd.f32 %v3323, %v3644
    %v3646 = vpop.f32.mrb[0].mxu0
    %v3647 = vadd.f32 %v3327, %v3646
    %3648 = vmatprep.mubr.f32.mxu0 %v3103
    %3649 = vmatmul.mubr.f32.gmra.mrb[0].mxu0 %v3102
    %v3650 = vpop.f32.mrb[0].mxu0
    %v3651 = vadd.f32 %v3323, %v3650
    %v3652 = vpop.f32.mrb[0].mxu0
    %v3653 = vadd.f32 %v3327, %v3652
    %3654 = vmatprep.mubr.f32.mxu0 %v3105
    %3655 = vmatmul.mubr.f32.gmra.mrb[0].mxu0 %v3104
    %v3656 = vpop.f32.mrb[0].mxu0
    %v3657 = vadd.f32 %v3323, %v3656
    %v3658 = vpop.f32.mrb[0].mxu0
    %v3659 = vadd.f32 %v3327, %v3658
    %3660 = vmatprep.mubr.f32.mxu0 %v3107
    %3661 = vmatmul.mubr.f32.gmra.mrb[0].mxu0 %v3106
    %v3662 = vpop.f32.mrb[0].mxu0
    %v3663 = vadd.f32 %v3323, %v3662
    %v3664 = vpop.f32.mrb[0].mxu0
    %v3665 = vadd.f32 %v3327, %v3664
    %3666 = vmatprep.mubr.f32.mxu0 %v3109
    %3667 = vmatmul.mubr.f32.gmra.mrb[0].mxu0 %v3108
    %v3668 = vpop.f32.mrb[0].mxu0
    %v3669 = vadd.f32 %v3323, %v3668
    %v3670 = vpop.f32.mrb[0].mxu0
    %v3671 = vadd.f32 %v3327, %v3670
    %3672 = vdwg.mxu0
    %3673 = vst [vmem:[#allocation3] sm:$0xff] %v3401
    %3674 = vst [vmem:[#allocation3 + $0x8] sm:$0xff] %v3403
    %3675 = vst [vmem:[#allocation3 + $0x10] sm:$0xff] %v3514
    %3676 = vst [vmem:[#allocation3 + $0x18] sm:$0xff] %v3516
    %3677 = vst [vmem:[#allocation3 + $0x20] sm:$0xff] %v3627
    %3678 = vst [vmem:[#allocation3 + $0x28] sm:$0xff] %v3629
    %3679 = vst [vmem:[#allocation3 + $0x30] sm:$0xff] %v3407
    %3680 = vst [vmem:[#allocation3 + $0x38] sm:$0xff] %v3409
    %3681 = vst [vmem:[#allocation3 + $0x40] sm:$0xff] %v3520
    %3682 = vst [vmem:[#allocation3 + $0x48] sm:$0xff] %v3522
    %3683 = vst [vmem:[#allocation3 + $0x50] sm:$0xff] %v3633
    %3684 = vst [vmem:[#allocation3 + $0x58] sm:$0xff] %v3635
    %3685 = vst [vmem:[#allocation3 + $0x60] sm:$0xff] %v3413
    %3686 = vst [vmem:[#allocation3 + $0x68] sm:$0xff] %v3415
    %3687 = vst [vmem:[#allocation3 + $0x70] sm:$0xff] %v3526
    %3688 = vst [vmem:[#allocation3 + $0x78] sm:$0xff] %v3528
    %3689 = vst [vmem:[#allocation3 + $0x80] sm:$0xff] %v3639
    %3690 = vst [vmem:[#allocation3 + $0x88] sm:$0xff] %v3641
    %3691 = vst [vmem:[#allocation3 + $0x90] sm:$0xff] %v3419
    %3692 = vst [vmem:[#allocation3 + $0x98] sm:$0xff] %v3421
    %3693 = vst [vmem:[#allocation3 + $0xa0] sm:$0xff] %v3532
    %3694 = vst [vmem:[#allocation3 + $0xa8] sm:$0xff] %v3534
    %3695 = vst [vmem:[#allocation3 + $0xb0] sm:$0xff] %v3645
    %3696 = vst [vmem:[#allocation3 + $0xb8] sm:$0xff] %v3647
    %3697 = vst [vmem:[#allocation3 + $0xc0] sm:$0xff] %v3425
    %3698 = vst [vmem:[#allocation3 + $0xc8] sm:$0xff] %v3427
    %3699 = vst [vmem:[#allocation3 + $0xd0] sm:$0xff] %v3538
    %3700 = vst [vmem:[#allocation3 + $0xd8] sm:$0xff] %v3540
    %3701 = vst [vmem:[#allocation3 + $0xe0] sm:$0xff] %v3651
    %3702 = vst [vmem:[#allocation3 + $0xe8] sm:$0xff] %v3653
    %3703 = vst [vmem:[#allocation3 + $0xf0] sm:$0xff] %v3431
    %3704 = vst [vmem:[#allocation3 + $0xf8] sm:$0xff] %v3433
    %3705 = vst [vmem:[#allocation3 + $0x100] sm:$0xff] %v3544
    %3706 = vst [vmem:[#allocation3 + $0x108] sm:$0xff] %v3546
    %3707 = vst [vmem:[#allocation3 + $0x110] sm:$0xff] %v3657
    %3708 = vst [vmem:[#allocation3 + $0x118] sm:$0xff] %v3659
    %3709 = vst [vmem:[#allocation3 + $0x120] sm:$0xff] %v3437
    %3710 = vst [vmem:[#allocation3 + $0x128] sm:$0xff] %v3439
    %3711 = vst [vmem:[#allocation3 + $0x130] sm:$0xff] %v3550
    %3712 = vst [vmem:[#allocation3 + $0x138] sm:$0xff] %v3552
    %3713 = vst [vmem:[#allocation3 + $0x140] sm:$0xff] %v3663
    %3714 = vst [vmem:[#allocation3 + $0x148] sm:$0xff] %v3665
    %3715 = vst [vmem:[#allocation3 + $0x150] sm:$0xff] %v3443
    %3716 = vst [vmem:[#allocation3 + $0x158] sm:$0xff] %v3445
    %3717 = vst [vmem:[#allocation3 + $0x160] sm:$0xff] %v3556
    %3718 = vst [vmem:[#allocation3 + $0x168] sm:$0xff] %v3558
    %3719 = vst [vmem:[#allocation3 + $0x170] sm:$0xff] %v3669
    %3720 = vst [vmem:[#allocation3 + $0x178] sm:$0xff] %v3671
    %v3721 = vld [vmem:[#allocation17] sm:$0xff]
    %v3722 = vld [vmem:[#allocation17 + $0x8] sm:$0xff]
    %v3723 = vld [vmem:[#allocation17 + $0x10] sm:$0xff]
    %v3724 = vld [vmem:[#allocation17 + $0x18] sm:$0xff]
    %v3725 = vld [vmem:[#allocation17 + $0x20] sm:$0xff]
    %v3726 = vld [vmem:[#allocation17 + $0x28] sm:$0xff]
    %v3727 = vld [vmem:[#allocation17 + $0x30] sm:$0xff]
    %v3728 = vld [vmem:[#allocation17 + $0x38] sm:$0xff]
    %v3729 = vld [vmem:[#allocation17 + $0x40] sm:$0xff]
    %v3730 = vld [vmem:[#allocation17 + $0x48] sm:$0xff]
    %v3731 = vld [vmem:[#allocation17 + $0x50] sm:$0xff]
    %v3732 = vld [vmem:[#allocation17 + $0x58] sm:$0xff]
    %v3733 = vld [vmem:[#allocation17 + $0x60] sm:$0xff]
    %v3734 = vld [vmem:[#allocation17 + $0x68] sm:$0xff]
    %v3735 = vld [vmem:[#allocation17 + $0x70] sm:$0xff]
    %v3736 = vld [vmem:[#allocation17 + $0x78] sm:$0xff]
    %v3737 = vld [vmem:[#allocation17 + $0x80] sm:$0xff]
    %v3738 = vld [vmem:[#allocation17 + $0x88] sm:$0xff]
    %v3739 = vld [vmem:[#allocation17 + $0x90] sm:$0xff]
    %v3740 = vld [vmem:[#allocation17 + $0x98] sm:$0xff]
    %v3741 = vld [vmem:[#allocation17 + $0xa0] sm:$0xff]
    %v3742 = vld [vmem:[#allocation17 + $0xa8] sm:$0xff]
    %v3743 = vld [vmem:[#allocation17 + $0xb0] sm:$0xff]
    %v3744 = vld [vmem:[#allocation17 + $0xb8] sm:$0xff]
    %v3745 = vld [vmem:[#allocation17 + $0xc0] sm:$0xff]
    %v3746 = vld [vmem:[#allocation17 + $0xc8] sm:$0xff]
    %v3747 = vld [vmem:[#allocation17 + $0xd0] sm:$0xff]
    %v3748 = vld [vmem:[#allocation17 + $0xd8] sm:$0xff]
    %v3749 = vld [vmem:[#allocation17 + $0xe0] sm:$0xff]
    %v3750 = vld [vmem:[#allocation17 + $0xe8] sm:$0xff]
    %v3751 = vld [vmem:[#allocation17 + $0xf0] sm:$0xff]
    %v3752 = vld [vmem:[#allocation17 + $0xf8] sm:$0xff]
    %v3753 = vld [vmem:[#allocation17 + $0x100] sm:$0xff]
    %v3754 = vld [vmem:[#allocation17 + $0x108] sm:$0xff]
    %v3755 = vld [vmem:[#allocation17 + $0x110] sm:$0xff]
    %v3756 = vld [vmem:[#allocation17 + $0x118] sm:$0xff]
    %v3757 = vld [vmem:[#allocation17 + $0x120] sm:$0xff]
    %v3758 = vld [vmem:[#allocation17 + $0x128] sm:$0xff]
    %v3759 = vld [vmem:[#allocation17 + $0x130] sm:$0xff]
    %v3760 = vld [vmem:[#allocation17 + $0x138] sm:$0xff]
    %v3761 = vld [vmem:[#allocation17 + $0x140] sm:$0xff]
    %v3762 = vld [vmem:[#allocation17 + $0x148] sm:$0xff]
    %v3763 = vld [vmem:[#allocation17 + $0x150] sm:$0xff]
    %v3764 = vld [vmem:[#allocation17 + $0x158] sm:$0xff]
    %v3765 = vld [vmem:[#allocation17 + $0x160] sm:$0xff]
    %v3766 = vld [vmem:[#allocation17 + $0x168] sm:$0xff]
    %v3767 = vld [vmem:[#allocation17 + $0x170] sm:$0xff]
    %v3768 = vld [vmem:[#allocation17 + $0x178] sm:$0xff]
    %v3769 = vld [vmem:[#allocation17 + $0x180] sm:$0xff]
    %v3770 = vld [vmem:[#allocation17 + $0x188] sm:$0xff]
    %v3771 = vld [vmem:[#allocation17 + $0x190] sm:$0xff]
    %v3772 = vld [vmem:[#allocation17 + $0x198] sm:$0xff]
    %v3773 = vld [vmem:[#allocation17 + $0x1a0] sm:$0xff]
    %v3774 = vld [vmem:[#allocation17 + $0x1a8] sm:$0xff]
    %v3775 = vld [vmem:[#allocation17 + $0x1b0] sm:$0xff]
    %v3776 = vld [vmem:[#allocation17 + $0x1b8] sm:$0xff]
    %v3777 = vld [vmem:[#allocation17 + $0x1c0] sm:$0xff]
    %v3778 = vld [vmem:[#allocation17 + $0x1c8] sm:$0xff]
    %v3779 = vld [vmem:[#allocation17 + $0x1d0] sm:$0xff]
    %v3780 = vld [vmem:[#allocation17 + $0x1d8] sm:$0xff]
    %v3781 = vld [vmem:[#allocation17 + $0x1e0] sm:$0xff]
    %v3782 = vld [vmem:[#allocation17 + $0x1e8] sm:$0xff]
    %v3783 = vld [vmem:[#allocation17 + $0x1f0] sm:$0xff]
    %v3784 = vld [vmem:[#allocation17 + $0x1f8] sm:$0xff]
    %v3785 = vld [vmem:[#allocation17 + $0x200] sm:$0xff]
    %v3786 = vld [vmem:[#allocation17 + $0x208] sm:$0xff]
    %v3787 = vld [vmem:[#allocation17 + $0x210] sm:$0xff]
    %v3788 = vld [vmem:[#allocation17 + $0x218] sm:$0xff]
    %v3789 = vld [vmem:[#allocation17 + $0x220] sm:$0xff]
    %v3790 = vld [vmem:[#allocation17 + $0x228] sm:$0xff]
    %v3791 = vld [vmem:[#allocation17 + $0x230] sm:$0xff]
    %v3792 = vld [vmem:[#allocation17 + $0x238] sm:$0xff]
    %v3793 = vld [vmem:[#allocation17 + $0x240] sm:$0xff]
    %v3794 = vld [vmem:[#allocation17 + $0x248] sm:$0xff]
    %v3795 = vld [vmem:[#allocation17 + $0x250] sm:$0xff]
    %v3796 = vld [vmem:[#allocation17 + $0x258] sm:$0xff]
    %v3797 = vld [vmem:[#allocation17 + $0x260] sm:$0xff]
    %v3798 = vld [vmem:[#allocation17 + $0x268] sm:$0xff]
    %v3799 = vld [vmem:[#allocation17 + $0x270] sm:$0xff]
    %v3800 = vld [vmem:[#allocation17 + $0x278] sm:$0xff]
    %v3801 = vld [vmem:[#allocation17 + $0x280] sm:$0xff]
    %v3802 = vld [vmem:[#allocation17 + $0x288] sm:$0xff]
    %v3803 = vld [vmem:[#allocation17 + $0x290] sm:$0xff]
    %v3804 = vld [vmem:[#allocation17 + $0x298] sm:$0xff]
    %v3805 = vld [vmem:[#allocation17 + $0x2a0] sm:$0xff]
    %v3806 = vld [vmem:[#allocation17 + $0x2a8] sm:$0xff]
    %v3807 = vld [vmem:[#allocation17 + $0x2b0] sm:$0xff]
    %v3808 = vld [vmem:[#allocation17 + $0x2b8] sm:$0xff]
    %v3809 = vld [vmem:[#allocation17 + $0x2c0] sm:$0xff]
    %v3810 = vld [vmem:[#allocation17 + $0x2c8] sm:$0xff]
    %v3811 = vld [vmem:[#allocation17 + $0x2d0] sm:$0xff]
    %v3812 = vld [vmem:[#allocation17 + $0x2d8] sm:$0xff]
    %v3813 = vld [vmem:[#allocation17 + $0x2e0] sm:$0xff]
    %v3814 = vld [vmem:[#allocation17 + $0x2e8] sm:$0xff]
    %v3815 = vld [vmem:[#allocation17 + $0x2f0] sm:$0xff]
    %v3816 = vld [vmem:[#allocation17 + $0x2f8] sm:$0xff]
    %v3817 = vld [vmem:[#allocation18] sm:$0x3f]
    %v3819 = vlaneseq
    %v3820 = vshrl.u32 %v3819, 7
    %v3821 = vsub.s32 0, %v3820
    %v3822 = vrot.slane %v3817, %v3821
    %v3823 = vlaneseq
    %v3824 = vshrl.u32 %v3823, 7
    %v3825 = vsub.s32 1, %v3824
    %v3826 = vrot.slane %v3817, %v3825
    %v3827 = vlaneseq
    %v3828 = vshrl.u32 %v3827, 7
    %v3829 = vsub.s32 2, %v3828
    %v3830 = vrot.slane %v3817, %v3829
    %v3831 = vlaneseq
    %v3832 = vshrl.u32 %v3831, 7
    %v3833 = vsub.s32 3, %v3832
    %v3834 = vrot.slane %v3817, %v3833
    %v3835 = vlaneseq
    %v3836 = vshrl.u32 %v3835, 7
    %v3837 = vsub.s32 4, %v3836
    %v3838 = vrot.slane %v3817, %v3837
    %v3839 = vlaneseq
    %v3840 = vshrl.u32 %v3839, 7
    %v3841 = vsub.s32 5, %v3840
    %v3842 = vrot.slane %v3817, %v3841
    %v3945 = vunpack.c.l.b16 %v3721
    %v3946 = vunpack.c.h.b16 %v3721
    %v3947 = vunpack.c.l.b16 %v3722
    %v3948 = vunpack.c.h.b16 %v3722
    %v3949 = vunpack.c.l.b16 %v3723
    %v3950 = vunpack.c.h.b16 %v3723
    %v3951 = vunpack.c.l.b16 %v3724
    %v3952 = vunpack.c.h.b16 %v3724
    %v3953 = vunpack.c.l.b16 %v3725
    %v3954 = vunpack.c.h.b16 %v3725
    %v3955 = vunpack.c.l.b16 %v3726
    %v3956 = vunpack.c.h.b16 %v3726
    %v3957 = vunpack.c.l.b16 %v3727
    %v3958 = vunpack.c.h.b16 %v3727
    %v3959 = vunpack.c.l.b16 %v3728
    %v3960 = vunpack.c.h.b16 %v3728
    %v3961 = vunpack.c.l.b16 %v3729
    %v3962 = vunpack.c.h.b16 %v3729
    %v3963 = vunpack.c.l.b16 %v3730
    %v3964 = vunpack.c.h.b16 %v3730
    %v3965 = vunpack.c.l.b16 %v3731
    %v3966 = vunpack.c.h.b16 %v3731
    %v3967 = vunpack.c.l.b16 %v3732
    %v3968 = vunpack.c.h.b16 %v3732
    %v3969 = vunpack.c.l.b16 %v3733
    %v3970 = vunpack.c.h.b16 %v3733
    %v3971 = vunpack.c.l.b16 %v3734
    %v3972 = vunpack.c.h.b16 %v3734
    %v3973 = vunpack.c.l.b16 %v3735
    %v3974 = vunpack.c.h.b16 %v3735
    %v3975 = vunpack.c.l.b16 %v3736
    %v3976 = vunpack.c.h.b16 %v3736
    %v3977 = vunpack.c.l.b16 %v3737
    %v3978 = vunpack.c.h.b16 %v3737
    %v3979 = vunpack.c.l.b16 %v3738
    %v3980 = vunpack.c.h.b16 %v3738
    %v3981 = vunpack.c.l.b16 %v3739
    %v3982 = vunpack.c.h.b16 %v3739
    %v3983 = vunpack.c.l.b16 %v3740
    %v3984 = vunpack.c.h.b16 %v3740
    %v3985 = vunpack.c.l.b16 %v3741
    %v3986 = vunpack.c.h.b16 %v3741
    %v3987 = vunpack.c.l.b16 %v3742
    %v3988 = vunpack.c.h.b16 %v3742
    %v3989 = vunpack.c.l.b16 %v3743
    %v3990 = vunpack.c.h.b16 %v3743
    %v3991 = vunpack.c.l.b16 %v3744
    %v3992 = vunpack.c.h.b16 %v3744
    %v3993 = vunpack.c.l.b16 %v3745
    %v3994 = vunpack.c.h.b16 %v3745
    %v3995 = vunpack.c.l.b16 %v3746
    %v3996 = vunpack.c.h.b16 %v3746
    %v3997 = vunpack.c.l.b16 %v3747
    %v3998 = vunpack.c.h.b16 %v3747
    %v3999 = vunpack.c.l.b16 %v3748
    %v4000 = vunpack.c.h.b16 %v3748
    %v4001 = vunpack.c.l.b16 %v3749
    %v4002 = vunpack.c.h.b16 %v3749
    %v4003 = vunpack.c.l.b16 %v3750
    %v4004 = vunpack.c.h.b16 %v3750
    %v4005 = vunpack.c.l.b16 %v3751
    %v4006 = vunpack.c.h.b16 %v3751
    %v4007 = vunpack.c.l.b16 %v3752
    %v4008 = vunpack.c.h.b16 %v3752
    %v4009 = vunpack.c.l.b16 %v3753
    %v4010 = vunpack.c.h.b16 %v3753
    %v4011 = vunpack.c.l.b16 %v3754
    %v4012 = vunpack.c.h.b16 %v3754
    %v4013 = vunpack.c.l.b16 %v3755
    %v4014 = vunpack.c.h.b16 %v3755
    %v4015 = vunpack.c.l.b16 %v3756
    %v4016 = vunpack.c.h.b16 %v3756
    %v4017 = vunpack.c.l.b16 %v3757
    %v4018 = vunpack.c.h.b16 %v3757
    %v4019 = vunpack.c.l.b16 %v3758
    %v4020 = vunpack.c.h.b16 %v3758
    %v4021 = vunpack.c.l.b16 %v3759
    %v4022 = vunpack.c.h.b16 %v3759
    %v4023 = vunpack.c.l.b16 %v3760
    %v4024 = vunpack.c.h.b16 %v3760
    %v4025 = vunpack.c.l.b16 %v3761
    %v4026 = vunpack.c.h.b16 %v3761
    %v4027 = vunpack.c.l.b16 %v3762
    %v4028 = vunpack.c.h.b16 %v3762
    %v4029 = vunpack.c.l.b16 %v3763
    %v4030 = vunpack.c.h.b16 %v3763
    %v4031 = vunpack.c.l.b16 %v3764
    %v4032 = vunpack.c.h.b16 %v3764
    %v4033 = vunpack.c.l.b16 %v3765
    %v4034 = vunpack.c.h.b16 %v3765
    %v4035 = vunpack.c.l.b16 %v3766
    %v4036 = vunpack.c.h.b16 %v3766
    %v4037 = vunpack.c.l.b16 %v3767
    %v4038 = vunpack.c.h.b16 %v3767
    %v4039 = vunpack.c.l.b16 %v3768
    %v4040 = vunpack.c.h.b16 %v3768
    %v4041 = vunpack.c.l.b16 %v3769
    %v4042 = vunpack.c.h.b16 %v3769
    %v4043 = vunpack.c.l.b16 %v3770
    %v4044 = vunpack.c.h.b16 %v3770
    %v4045 = vunpack.c.l.b16 %v3771
    %v4046 = vunpack.c.h.b16 %v3771
    %v4047 = vunpack.c.l.b16 %v3772
    %v4048 = vunpack.c.h.b16 %v3772
    %v4049 = vunpack.c.l.b16 %v3773
    %v4050 = vunpack.c.h.b16 %v3773
    %v4051 = vunpack.c.l.b16 %v3774
    %v4052 = vunpack.c.h.b16 %v3774
    %v4053 = vunpack.c.l.b16 %v3775
    %v4054 = vunpack.c.h.b16 %v3775
    %v4055 = vunpack.c.l.b16 %v3776
    %v4056 = vunpack.c.h.b16 %v3776
    %v4057 = vunpack.c.l.b16 %v3777
    %v4058 = vunpack.c.h.b16 %v3777
    %v4059 = vunpack.c.l.b16 %v3778
    %v4060 = vunpack.c.h.b16 %v3778
    %v4061 = vunpack.c.l.b16 %v3779
    %v4062 = vunpack.c.h.b16 %v3779
    %v4063 = vunpack.c.l.b16 %v3780
    %v4064 = vunpack.c.h.b16 %v3780
    %v4065 = vunpack.c.l.b16 %v3781
    %v4066 = vunpack.c.h.b16 %v3781
    %v4067 = vunpack.c.l.b16 %v3782
    %v4068 = vunpack.c.h.b16 %v3782
    %v4069 = vunpack.c.l.b16 %v3783
    %v4070 = vunpack.c.h.b16 %v3783
    %v4071 = vunpack.c.l.b16 %v3784
    %v4072 = vunpack.c.h.b16 %v3784
    %v4073 = vunpack.c.l.b16 %v3785
    %v4074 = vunpack.c.h.b16 %v3785
    %v4075 = vunpack.c.l.b16 %v3786
    %v4076 = vunpack.c.h.b16 %v3786
    %v4077 = vunpack.c.l.b16 %v3787
    %v4078 = vunpack.c.h.b16 %v3787
    %v4079 = vunpack.c.l.b16 %v3788
    %v4080 = vunpack.c.h.b16 %v3788
    %v4081 = vunpack.c.l.b16 %v3789
    %v4082 = vunpack.c.h.b16 %v3789
    %v4083 = vunpack.c.l.b16 %v3790
    %v4084 = vunpack.c.h.b16 %v3790
    %v4085 = vunpack.c.l.b16 %v3791
    %v4086 = vunpack.c.h.b16 %v3791
    %v4087 = vunpack.c.l.b16 %v3792
    %v4088 = vunpack.c.h.b16 %v3792
    %v4089 = vunpack.c.l.b16 %v3793
    %v4090 = vunpack.c.h.b16 %v3793
    %v4091 = vunpack.c.l.b16 %v3794
    %v4092 = vunpack.c.h.b16 %v3794
    %v4093 = vunpack.c.l.b16 %v3795
    %v4094 = vunpack.c.h.b16 %v3795
    %v4095 = vunpack.c.l.b16 %v3796
    %v4096 = vunpack.c.h.b16 %v3796
    %v4097 = vunpack.c.l.b16 %v3797
    %v4098 = vunpack.c.h.b16 %v3797
    %v4099 = vunpack.c.l.b16 %v3798
    %v4100 = vunpack.c.h.b16 %v3798
    %v4101 = vunpack.c.l.b16 %v3799
    %v4102 = vunpack.c.h.b16 %v3799
    %v4103 = vunpack.c.l.b16 %v3800
    %v4104 = vunpack.c.h.b16 %v3800
    %v4105 = vunpack.c.l.b16 %v3801
    %v4106 = vunpack.c.h.b16 %v3801
    %v4107 = vunpack.c.l.b16 %v3802
    %v4108 = vunpack.c.h.b16 %v3802
    %v4109 = vunpack.c.l.b16 %v3803
    %v4110 = vunpack.c.h.b16 %v3803
    %v4111 = vunpack.c.l.b16 %v3804
    %v4112 = vunpack.c.h.b16 %v3804
    %v4113 = vunpack.c.l.b16 %v3805
    %v4114 = vunpack.c.h.b16 %v3805
    %v4115 = vunpack.c.l.b16 %v3806
    %v4116 = vunpack.c.h.b16 %v3806
    %v4117 = vunpack.c.l.b16 %v3807
    %v4118 = vunpack.c.h.b16 %v3807
    %v4119 = vunpack.c.l.b16 %v3808
    %v4120 = vunpack.c.h.b16 %v3808
    %v4121 = vunpack.c.l.b16 %v3809
    %v4122 = vunpack.c.h.b16 %v3809
    %v4123 = vunpack.c.l.b16 %v3810
    %v4124 = vunpack.c.h.b16 %v3810
    %v4125 = vunpack.c.l.b16 %v3811
    %v4126 = vunpack.c.h.b16 %v3811
    %v4127 = vunpack.c.l.b16 %v3812
    %v4128 = vunpack.c.h.b16 %v3812
    %v4129 = vunpack.c.l.b16 %v3813
    %v4130 = vunpack.c.h.b16 %v3813
    %v4131 = vunpack.c.l.b16 %v3814
    %v4132 = vunpack.c.h.b16 %v3814
    %v4133 = vunpack.c.l.b16 %v3815
    %v4134 = vunpack.c.h.b16 %v3815
    %v4135 = vunpack.c.l.b16 %v3816
    %v4136 = vunpack.c.h.b16 %v3816
    %v4137 = vpack.c.b16 %v3951, %v3945
    %v4138 = vpack.c.b16 %v3952, %v3946
    %v4139 = vpack.c.b16 %v3953, %v3947
    %v4140 = vpack.c.b16 %v3954, %v3948
    %v4141 = vpack.c.b16 %v3955, %v3949
    %v4142 = vpack.c.b16 %v3956, %v3950
    %v4143 = vpack.c.b16 %v3963, %v3957
    %v4144 = vpack.c.b16 %v3964, %v3958
    %v4145 = vpack.c.b16 %v3965, %v3959
    %v4146 = vpack.c.b16 %v3966, %v3960
    %v4147 = vpack.c.b16 %v3967, %v3961
    %v4148 = vpack.c.b16 %v3968, %v3962
    %v4149 = vpack.c.b16 %v3975, %v3969
    %v4150 = vpack.c.b16 %v3976, %v3970
    %v4151 = vpack.c.b16 %v3977, %v3971
    %v4152 = vpack.c.b16 %v3978, %v3972
    %v4153 = vpack.c.b16 %v3979, %v3973
    %v4154 = vpack.c.b16 %v3980, %v3974
    %v4155 = vpack.c.b16 %v3987, %v3981
    %v4156 = vpack.c.b16 %v3988, %v3982
    %v4157 = vpack.c.b16 %v3989, %v3983
    %v4158 = vpack.c.b16 %v3990, %v3984
    %v4159 = vpack.c.b16 %v3991, %v3985
    %v4160 = vpack.c.b16 %v3992, %v3986
    %v4161 = vpack.c.b16 %v3999, %v3993
    %v4162 = vpack.c.b16 %v4000, %v3994
    %v4163 = vpack.c.b16 %v4001, %v3995
    %v4164 = vpack.c.b16 %v4002, %v3996
    %v4165 = vpack.c.b16 %v4003, %v3997
    %v4166 = vpack.c.b16 %v4004, %v3998
    %v4167 = vpack.c.b16 %v4011, %v4005
    %v4168 = vpack.c.b16 %v4012, %v4006
    %v4169 = vpack.c.b16 %v4013, %v4007
    %v4170 = vpack.c.b16 %v4014, %v4008
    %v4171 = vpack.c.b16 %v4015, %v4009
    %v4172 = vpack.c.b16 %v4016, %v4010
    %v4173 = vpack.c.b16 %v4023, %v4017
    %v4174 = vpack.c.b16 %v4024, %v4018
    %v4175 = vpack.c.b16 %v4025, %v4019
    %v4176 = vpack.c.b16 %v4026, %v4020
    %v4177 = vpack.c.b16 %v4027, %v4021
    %v4178 = vpack.c.b16 %v4028, %v4022
    %v4179 = vpack.c.b16 %v4035, %v4029
    %v4180 = vpack.c.b16 %v4036, %v4030
    %v4181 = vpack.c.b16 %v4037, %v4031
    %v4182 = vpack.c.b16 %v4038, %v4032
    %v4183 = vpack.c.b16 %v4039, %v4033
    %v4184 = vpack.c.b16 %v4040, %v4034
    %v4185 = vpack.c.b16 %v4047, %v4041
    %v4186 = vpack.c.b16 %v4048, %v4042
    %v4187 = vpack.c.b16 %v4049, %v4043
    %v4188 = vpack.c.b16 %v4050, %v4044
    %v4189 = vpack.c.b16 %v4051, %v4045
    %v4190 = vpack.c.b16 %v4052, %v4046
    %v4191 = vpack.c.b16 %v4059, %v4053
    %v4192 = vpack.c.b16 %v4060, %v4054
    %v4193 = vpack.c.b16 %v4061, %v4055
    %v4194 = vpack.c.b16 %v4062, %v4056
    %v4195 = vpack.c.b16 %v4063, %v4057
    %v4196 = vpack.c.b16 %v4064, %v4058
    %v4197 = vpack.c.b16 %v4071, %v4065
    %v4198 = vpack.c.b16 %v4072, %v4066
    %v4199 = vpack.c.b16 %v4073, %v4067
    %v4200 = vpack.c.b16 %v4074, %v4068
    %v4201 = vpack.c.b16 %v4075, %v4069
    %v4202 = vpack.c.b16 %v4076, %v4070
    %v4203 = vpack.c.b16 %v4083, %v4077
    %v4204 = vpack.c.b16 %v4084, %v4078
    %v4205 = vpack.c.b16 %v4085, %v4079
    %v4206 = vpack.c.b16 %v4086, %v4080
    %v4207 = vpack.c.b16 %v4087, %v4081
    %v4208 = vpack.c.b16 %v4088, %v4082
    %v4209 = vpack.c.b16 %v4095, %v4089
    %v4210 = vpack.c.b16 %v4096, %v4090
    %v4211 = vpack.c.b16 %v4097, %v4091
    %v4212 = vpack.c.b16 %v4098, %v4092
    %v4213 = vpack.c.b16 %v4099, %v4093
    %v4214 = vpack.c.b16 %v4100, %v4094
    %v4215 = vpack.c.b16 %v4107, %v4101
    %v4216 = vpack.c.b16 %v4108, %v4102
    %v4217 = vpack.c.b16 %v4109, %v4103
    %v4218 = vpack.c.b16 %v4110, %v4104
    %v4219 = vpack.c.b16 %v4111, %v4105
    %v4220 = vpack.c.b16 %v4112, %v4106
    %v4221 = vpack.c.b16 %v4119, %v4113
    %v4222 = vpack.c.b16 %v4120, %v4114
    %v4223 = vpack.c.b16 %v4121, %v4115
    %v4224 = vpack.c.b16 %v4122, %v4116
    %v4225 = vpack.c.b16 %v4123, %v4117
    %v4226 = vpack.c.b16 %v4124, %v4118
    %v4227 = vpack.c.b16 %v4131, %v4125
    %v4228 = vpack.c.b16 %v4132, %v4126
    %v4229 = vpack.c.b16 %v4133, %v4127
    %v4230 = vpack.c.b16 %v4134, %v4128
    %v4231 = vpack.c.b16 %v4135, %v4129
    %v4232 = vpack.c.b16 %v4136, %v4130
    %4329 = vmatprep.subr.bf16.mxu0 %v4138
    %4330 = vmatpush1.bf16.msra.mxu0 %v4137
    %4331 = vmatprep.subr.bf16.mxu0 %v4144
    %4332 = vmatpush1.bf16.msra.mxu0 %v4143
    %4333 = vmatprep.subr.bf16.mxu0 %v4150
    %4334 = vmatpush1.bf16.msra.mxu0 %v4149
    %4335 = vmatprep.subr.bf16.mxu0 %v4156
    %4336 = vmatpush1.bf16.msra.mxu0 %v4155
    %4337 = vmatprep.subr.bf16.mxu0 %v4162
    %4338 = vmatpush1.bf16.msra.mxu0 %v4161
    %4339 = vmatprep.subr.bf16.mxu0 %v4168
    %4340 = vmatpush1.bf16.msra.mxu0 %v4167
    %4341 = vmatprep.subr.bf16.mxu0 %v4174
    %4342 = vmatpush1.bf16.msra.mxu0 %v4173
    %4343 = vmatprep.subr.bf16.mxu0 %v4180
    %4344 = vmatpush1.bf16.msra.mxu0 %v4179
    %4345 = vmatprep.subr.bf16.mxu0 %v4186
    %4346 = vmatpush1.bf16.msra.mxu0 %v4185
    %4347 = vmatprep.subr.bf16.mxu0 %v4192
    %4348 = vmatpush1.bf16.msra.mxu0 %v4191
    %4349 = vmatprep.subr.bf16.mxu0 %v4198
    %4350 = vmatpush1.bf16.msra.mxu0 %v4197
    %4351 = vmatprep.subr.bf16.mxu0 %v4204
    %4352 = vmatpush1.bf16.msra.mxu0 %v4203
    %4353 = vmatprep.subr.bf16.mxu0 %v4210
    %4354 = vmatpush1.bf16.msra.mxu0 %v4209
    %4355 = vmatprep.subr.bf16.mxu0 %v4216
    %4356 = vmatpush1.bf16.msra.mxu0 %v4215
    %4357 = vmatprep.subr.bf16.mxu0 %v4222
    %4358 = vmatpush1.bf16.msra.mxu0 %v4221
    %4359 = vmatprep.subr.bf16.mxu0 %v4228
    %4360 = vmatpush1.bf16.msra.mxu0 %v4227
    %4361 = vmatprep.mubr.bf16.mxu0 %v1248
    %4362 = vmatmul.mubr.bf16.gmra.mrb[0].mxu0 %v1248
    %v4363 = vpop.f32.mrb[0].mxu0
    %v4364 = vadd.f32 %v3822, %v4363
    %v4365 = vpop.f32.mrb[0].mxu0
    %v4366 = vadd.f32 %v3826, %v4365
    %v4367 = vpop.f32.mrb[0].mxu0
    %v4368 = vpop.f32.mrb[0].mxu0
    %4369 = vdwg.mxu0
    %4370 = vmatprep.subr.bf16.mxu0 %v4140
    %4371 = vmatpush1.bf16.msra.mxu0 %v4139
    %4372 = vmatprep.subr.bf16.mxu0 %v4146
    %4373 = vmatpush1.bf16.msra.mxu0 %v4145
    %4374 = vmatprep.subr.bf16.mxu0 %v4152
    %4375 = vmatpush1.bf16.msra.mxu0 %v4151
    %4376 = vmatprep.subr.bf16.mxu0 %v4158
    %4377 = vmatpush1.bf16.msra.mxu0 %v4157
    %4378 = vmatprep.subr.bf16.mxu0 %v4164
    %4379 = vmatpush1.bf16.msra.mxu0 %v4163
    %4380 = vmatprep.subr.bf16.mxu0 %v4170
    %4381 = vmatpush1.bf16.msra.mxu0 %v4169
    %4382 = vmatprep.subr.bf16.mxu0 %v4176
    %4383 = vmatpush1.bf16.msra.mxu0 %v4175
    %4384 = vmatprep.subr.bf16.mxu0 %v4182
    %4385 = vmatpush1.bf16.msra.mxu0 %v4181
    %4386 = vmatprep.subr.bf16.mxu0 %v4188
    %4387 = vmatpush1.bf16.msra.mxu0 %v4187
    %4388 = vmatprep.subr.bf16.mxu0 %v4194
    %4389 = vmatpush1.bf16.msra.mxu0 %v4193
    %4390 = vmatprep.subr.bf16.mxu0 %v4200
    %4391 = vmatpush1.bf16.msra.mxu0 %v4199
    %4392 = vmatprep.subr.bf16.mxu0 %v4206
    %4393 = vmatpush1.bf16.msra.mxu0 %v4205
    %4394 = vmatprep.subr.bf16.mxu0 %v4212
    %4395 = vmatpush1.bf16.msra.mxu0 %v4211
    %4396 = vmatprep.subr.bf16.mxu0 %v4218
    %4397 = vmatpush1.bf16.msra.mxu0 %v4217
    %4398 = vmatprep.subr.bf16.mxu0 %v4224
    %4399 = vmatpush1.bf16.msra.mxu0 %v4223
    %4400 = vmatprep.subr.bf16.mxu0 %v4230
    %4401 = vmatpush1.bf16.msra.mxu0 %v4229
    %4402 = vmatprep.mubr.bf16.mxu0 %v1248
    %4403 = vmatmul.mubr.bf16.gmra.mrb[0].mxu0 %v1248
    %v4404 = vpop.f32.mrb[0].mxu0
    %v4405 = vadd.f32 %v3830, %v4404
    %v4406 = vpop.f32.mrb[0].mxu0
    %v4407 = vadd.f32 %v3834, %v4406
    %v4408 = vpop.f32.mrb[0].mxu0
    %v4409 = vpop.f32.mrb[0].mxu0
    %4410 = vdwg.mxu0
    %4411 = vmatprep.subr.bf16.mxu0 %v4142
    %4412 = vmatpush1.bf16.msra.mxu0 %v4141
    %4413 = vmatprep.subr.bf16.mxu0 %v4148
    %4414 = vmatpush1.bf16.msra.mxu0 %v4147
    %4415 = vmatprep.subr.bf16.mxu0 %v4154
    %4416 = vmatpush1.bf16.msra.mxu0 %v4153
    %4417 = vmatprep.subr.bf16.mxu0 %v4160
    %4418 = vmatpush1.bf16.msra.mxu0 %v4159
    %4419 = vmatprep.subr.bf16.mxu0 %v4166
    %4420 = vmatpush1.bf16.msra.mxu0 %v4165
    %4421 = vmatprep.subr.bf16.mxu0 %v4172
    %4422 = vmatpush1.bf16.msra.mxu0 %v4171
    %4423 = vmatprep.subr.bf16.mxu0 %v4178
    %4424 = vmatpush1.bf16.msra.mxu0 %v4177
    %4425 = vmatprep.subr.bf16.mxu0 %v4184
    %4426 = vmatpush1.bf16.msra.mxu0 %v4183
    %4427 = vmatprep.subr.bf16.mxu0 %v4190
    %4428 = vmatpush1.bf16.msra.mxu0 %v4189
    %4429 = vmatprep.subr.bf16.mxu0 %v4196
    %4430 = vmatpush1.bf16.msra.mxu0 %v4195
    %4431 = vmatprep.subr.bf16.mxu0 %v4202
    %4432 = vmatpush1.bf16.msra.mxu0 %v4201
    %4433 = vmatprep.subr.bf16.mxu0 %v4208
    %4434 = vmatpush1.bf16.msra.mxu0 %v4207
    %4435 = vmatprep.subr.bf16.mxu0 %v4214
    %4436 = vmatpush1.bf16.msra.mxu0 %v4213
    %4437 = vmatprep.subr.bf16.mxu0 %v4220
    %4438 = vmatpush1.bf16.msra.mxu0 %v4219
    %4439 = vmatprep.subr.bf16.mxu0 %v4226
    %4440 = vmatpush1.bf16.msra.mxu0 %v4225
    %4441 = vmatprep.subr.bf16.mxu0 %v4232
    %4442 = vmatpush1.bf16.msra.mxu0 %v4231
    %4443 = vmatprep.mubr.bf16.mxu0 %v1248
    %4444 = vmatmul.mubr.bf16.gmra.mrb[0].mxu0 %v1248
    %v4445 = vpop.f32.mrb[0].mxu0
    %v4446 = vadd.f32 %v3838, %v4445
    %v4447 = vpop.f32.mrb[0].mxu0
    %v4448 = vadd.f32 %v3842, %v4447
    %v4449 = vpop.f32.mrb[0].mxu0
    %v4450 = vpop.f32.mrb[0].mxu0
    %4451 = vdwg.mxu0
    %v4452 = vld [vmem:[#allocation3] sm:$0xff]
    %v4453 = vld [vmem:[#allocation3 + $0x8] sm:$0xff]
    %v4454 = vld [vmem:[#allocation3 + $0x10] sm:$0xff]
    %v4455 = vld [vmem:[#allocation3 + $0x168] sm:$0xff]
    %v4456 = vld [vmem:[#allocation3 + $0x170] sm:$0xff]
    %v4457 = vld [vmem:[#allocation3 + $0x178] sm:$0xff]
    %v4458 = vadd.f32 %v4452, %v4364
    %v4459 = vmul.f32 %v4458, 0.5
    %v4460 = vtanh.pop %v4459
    %v4461 = vadd.f32 %v4460, 1.0
    %v4462 = vmul.f32 %v4461, 0.5
    %v4463 = vadd.f32 %v4453, %v4366
    %v4464 = vmul.f32 %v4463, 0.5
    %v4465 = vtanh.pop %v4464
    %v4466 = vadd.f32 %v4465, 1.0
    %v4467 = vmul.f32 %v4466, 0.5
    %v4468 = vmul.f32 %v4462, %v4405
    %v4469 = vadd.f32 %v4454, %v4468
    %v4470 = vtanh.pop %v4469
    %v4471 = vsub.f32 1.0, %v4467
    %v4472 = vmul.f32 %v4471, %v4470
    %v4473 = vmul.f32 %v4467, 0.0
    %v4474 = vadd.f32 %v4472, %v4473
    %v4475 = vadd.f32 %v4455, %v4407
    %v4476 = vmul.f32 %v4475, 0.5
    %v4477 = vtanh.pop %v4476
    %v4478 = vadd.f32 %v4477, 1.0
    %v4479 = vmul.f32 %v4478, 0.5
    %v4480 = vadd.f32 %v4456, %v4446
    %v4481 = vmul.f32 %v4480, 0.5
    %v4482 = vtanh.pop %v4481
    %v4483 = vadd.f32 %v4482, 1.0
    %v4484 = vmul.f32 %v4483, 0.5
    %v4485 = vmul.f32 %v4479, %v4448
    %v4486 = vadd.f32 %v4457, %v4485
    %v4487 = vtanh.pop %v4486
    %v4488 = vsub.f32 1.0, %v4484
    %v4489 = vmul.f32 %v4488, %v4487
    %v4490 = vmul.f32 %v4484, 0.0
    %v4491 = vadd.f32 %v4489, %v4490
    %4492 = vst [vmem:[#allocation4] sm:$0xff] %v4474
    %4493 = vst [vmem:[#allocation4 + $0x78] sm:$0xff] %v4491
    %v4494 = vpack.c.bf16 %v4474, %v4474
    %v4495 = vpack.c.bf16 %v4491, %v4491
    %4496 = vmatprep.subr.bf16.mxu0 %v4138
    %4497 = vmatpush1.bf16.msra.mxu0 %v4137
    %4498 = vmatprep.subr.bf16.mxu0 %v4144
    %4499 = vmatpush1.bf16.msra.mxu0 %v4143
    %4500 = vmatprep.subr.bf16.mxu0 %v4150
    %4501 = vmatpush1.bf16.msra.mxu0 %v4149
    %4502 = vmatprep.subr.bf16.mxu0 %v4156
    %4503 = vmatpush1.bf16.msra.mxu0 %v4155
    %4504 = vmatprep.subr.bf16.mxu0 %v4162
    %4505 = vmatpush1.bf16.msra.mxu0 %v4161
    %4506 = vmatprep.subr.bf16.mxu0 %v4168
    %4507 = vmatpush1.bf16.msra.mxu0 %v4167
    %4508 = vmatprep.subr.bf16.mxu0 %v4174
    %4509 = vmatpush1.bf16.msra.mxu0 %v4173
    %4510 = vmatprep.subr.bf16.mxu0 %v4180
    %4511 = vmatpush1.bf16.msra.mxu0 %v4179
    %4512 = vmatprep.subr.bf16.mxu0 %v4186
    %4513 = vmatpush1.bf16.msra.mxu0 %v4185
    %4514 = vmatprep.subr.bf16.mxu0 %v4192
    %4515 = vmatpush1.bf16.msra.mxu0 %v4191
    %4516 = vmatprep.subr.bf16.mxu0 %v4198
    %4517 = vmatpush1.bf16.msra.mxu0 %v4197
    %4518 = vmatprep.subr.bf16.mxu0 %v4204
    %4519 = vmatpush1.bf16.msra.mxu0 %v4203
    %4520 = vmatprep.subr.bf16.mxu0 %v4210
    %4521 = vmatpush1.bf16.msra.mxu0 %v4209
    %4522 = vmatprep.subr.bf16.mxu0 %v4216
    %4523 = vmatpush1.bf16.msra.mxu0 %v4215
    %4524 = vmatprep.subr.bf16.mxu0 %v4222
    %4525 = vmatpush1.bf16.msra.mxu0 %v4221
    %4526 = vmatprep.subr.bf16.mxu0 %v4228
    %4527 = vmatpush1.bf16.msra.mxu0 %v4227
    %4528 = vmatprep.mubr.bf16.mxu0 %v4495
    %4529 = vmatmul.mubr.bf16.gmra.mrb[0].mxu0 %v4494
    %v4530 = vpop.f32.mrb[0].mxu0
    %v4531 = vadd.f32 %v3822, %v4530
    %v4532 = vpop.f32.mrb[0].mxu0
    %v4533 = vadd.f32 %v3826, %v4532
    %v4534 = vpop.f32.mrb[0].mxu0
    %v4535 = vpop.f32.mrb[0].mxu0
    %4536 = vdwg.mxu0
    %4537 = vmatprep.subr.bf16.mxu0 %v4140
    %4538 = vmatpush1.bf16.msra.mxu0 %v4139
    %4539 = vmatprep.subr.bf16.mxu0 %v4146
    %4540 = vmatpush1.bf16.msra.mxu0 %v4145
    %4541 = vmatprep.subr.bf16.mxu0 %v4152
    %4542 = vmatpush1.bf16.msra.mxu0 %v4151
    %4543 = vmatprep.subr.bf16.mxu0 %v4158
    %4544 = vmatpush1.bf16.msra.mxu0 %v4157
    %4545 = vmatprep.subr.bf16.mxu0 %v4164
    %4546 = vmatpush1.bf16.msra.mxu0 %v4163
    %4547 = vmatprep.subr.bf16.mxu0 %v4170
    %4548 = vmatpush1.bf16.msra.mxu0 %v4169
    %4549 = vmatprep.subr.bf16.mxu0 %v4176
    %4550 = vmatpush1.bf16.msra.mxu0 %v4175
    %4551 = vmatprep.subr.bf16.mxu0 %v4182
    %4552 = vmatpush1.bf16.msra.mxu0 %v4181
    %4553 = vmatprep.subr.bf16.mxu0 %v4188
    %4554 = vmatpush1.bf16.msra.mxu0 %v4187
    %4555 = vmatprep.subr.bf16.mxu0 %v4194
    %4556 = vmatpush1.bf16.msra.mxu0 %v4193
    %4557 = vmatprep.subr.bf16.mxu0 %v4200
    %4558 = vmatpush1.bf16.msra.mxu0 %v4199
    %4559 = vmatprep.subr.bf16.mxu0 %v4206
    %4560 = vmatpush1.bf16.msra.mxu0 %v4205
    %4561 = vmatprep.subr.bf16.mxu0 %v4212
    %4562 = vmatpush1.bf16.msra.mxu0 %v4211
    %4563 = vmatprep.subr.bf16.mxu0 %v4218
    %4564 = vmatpush1.bf16.msra.mxu0 %v4217
    %4565 = vmatprep.subr.bf16.mxu0 %v4224
    %4566 = vmatpush1.bf16.msra.mxu0 %v4223
    %4567 = vmatprep.subr.bf16.mxu0 %v4230
    %4568 = vmatpush1.bf16.msra.mxu0 %v4229
    %4569 = vmatprep.mubr.bf16.mxu0 %v4495
    %4570 = vmatmul.mubr.bf16.gmra.mrb[0].mxu0 %v4494
    %v4571 = vpop.f32.mrb[0].mxu0
    %v4572 = vadd.f32 %v3830, %v4571
    %v4573 = vpop.f32.mrb[0].mxu0
    %v4574 = vadd.f32 %v3834, %v4573
    %v4575 = vpop.f32.mrb[0].mxu0
    %v4576 = vpop.f32.mrb[0].mxu0
    %4577 = vdwg.mxu0
    %4578 = vmatprep.subr.bf16.mxu0 %v4142
    %4579 = vmatpush1.bf16.msra.mxu0 %v4141
    %4580 = vmatprep.subr.bf16.mxu0 %v4148
    %4581 = vmatpush1.bf16.msra.mxu0 %v4147
    %4582 = vmatprep.subr.bf16.mxu0 %v4154
    %4583 = vmatpush1.bf16.msra.mxu0 %v4153
    %4584 = vmatprep.subr.bf16.mxu0 %v4160
    %4585 = vmatpush1.bf16.msra.mxu0 %v4159
    %4586 = vmatprep.subr.bf16.mxu0 %v4166
    %4587 = vmatpush1.bf16.msra.mxu0 %v4165
    %4588 = vmatprep.subr.bf16.mxu0 %v4172
    %4589 = vmatpush1.bf16.msra.mxu0 %v4171
    %4590 = vmatprep.subr.bf16.mxu0 %v4178
    %4591 = vmatpush1.bf16.msra.mxu0 %v4177
    %4592 = vmatprep.subr.bf16.mxu0 %v4184
    %4593 = vmatpush1.bf16.msra.mxu0 %v4183
    %4594 = vmatprep.subr.bf16.mxu0 %v4190
    %4595 = vmatpush1.bf16.msra.mxu0 %v4189
    %4596 = vmatprep.subr.bf16.mxu0 %v4196
    %4597 = vmatpush1.bf16.msra.mxu0 %v4195
    %4598 = vmatprep.subr.bf16.mxu0 %v4202
    %4599 = vmatpush1.bf16.msra.mxu0 %v4201
    %4600 = vmatprep.subr.bf16.mxu0 %v4208
    %4601 = vmatpush1.bf16.msra.mxu0 %v4207
    %4602 = vmatprep.subr.bf16.mxu0 %v4214
    %4603 = vmatpush1.bf16.msra.mxu0 %v4213
    %4604 = vmatprep.subr.bf16.mxu0 %v4220
    %4605 = vmatpush1.bf16.msra.mxu0 %v4219
    %4606 = vmatprep.subr.bf16.mxu0 %v4226
    %4607 = vmatpush1.bf16.msra.mxu0 %v4225
    %4608 = vmatprep.subr.bf16.mxu0 %v4232
    %4609 = vmatpush1.bf16.msra.mxu0 %v4231
    %4610 = vmatprep.mubr.bf16.mxu0 %v4495
    %4611 = vmatmul.mubr.bf16.gmra.mrb[0].mxu0 %v4494
    %v4612 = vpop.f32.mrb[0].mxu0
    %v4613 = vadd.f32 %v3838, %v4612
    %v4614 = vpop.f32.mrb[0].mxu0
    %v4615 = vadd.f32 %v3842, %v4614
    %v4616 = vpop.f32.mrb[0].mxu0
    %v4617 = vpop.f32.mrb[0].mxu0
    %4618 = vdwg.mxu0
    %v4619 = vld [vmem:[#allocation3 + $0x30] sm:$0xff]
    %v4620 = vld [vmem:[#allocation3 + $0x38] sm:$0xff]
    %v4621 = vld [vmem:[#allocation3 + $0x40] sm:$0xff]
    %v4622 = vld [vmem:[#allocation3 + $0x138] sm:$0xff]
    %v4623 = vld [vmem:[#allocation3 + $0x140] sm:$0xff]
    %v4624 = vld [vmem:[#allocation3 + $0x148] sm:$0xff]
    %v4625 = vadd.f32 %v4619, %v4531
    %v4626 = vmul.f32 %v4625, 0.5
    %v4627 = vtanh.pop %v4626
    %v4628 = vadd.f32 %v4627, 1.0
    %v4629 = vmul.f32 %v4628, 0.5
    %v4630 = vadd.f32 %v4620, %v4533
    %v4631 = vmul.f32 %v4630, 0.5
    %v4632 = vtanh.pop %v4631
    %v4633 = vadd.f32 %v4632, 1.0
    %v4634 = vmul.f32 %v4633, 0.5
    %v4635 = vmul.f32 %v4629, %v4572
    %v4636 = vadd.f32 %v4621, %v4635
    %v4637 = vtanh.pop %v4636
    %v4638 = vsub.f32 1.0, %v4634
    %v4639 = vmul.f32 %v4638, %v4637
    %v4640 = vmul.f32 %v4634, %v4474
    %v4641 = vadd.f32 %v4639, %v4640
    %v4642 = vadd.f32 %v4622, %v4574
    %v4643 = vmul.f32 %v4642, 0.5
    %v4644 = vtanh.pop %v4643
    %v4645 = vadd.f32 %v4644, 1.0
    %v4646 = vmul.f32 %v4645, 0.5
    %v4647 = vadd.f32 %v4623, %v4613
    %v4648 = vmul.f32 %v4647, 0.5
    %v4649 = vtanh.pop %v4648
    %v4650 = vadd.f32 %v4649, 1.0
    %v4651 = vmul.f32 %v4650, 0.5
    %v4652 = vmul.f32 %v4646, %v4615
    %v4653 = vadd.f32 %v4624, %v4652
    %v4654 = vtanh.pop %v4653
    %v4655 = vsub.f32 1.0, %v4651
    %v4656 = vmul.f32 %v4655, %v4654
    %v4657 = vmul.f32 %v4651, %v4491
    %v4658 = vadd.f32 %v4656, %v4657
    %4659 = vst [vmem:[#allocation4 + $0x10] sm:$0xff] %v4641
    %4660 = vst [vmem:[#allocation4 + $0x68] sm:$0xff] %v4658
    %v4661 = vpack.c.bf16 %v4641, %v4641
    %v4662 = vpack.c.bf16 %v4658, %v4658
    %4663 = vmatprep.subr.bf16.mxu0 %v4138
    %4664 = vmatpush1.bf16.msra.mxu0 %v4137
    %4665 = vmatprep.subr.bf16.mxu0 %v4144
    %4666 = vmatpush1.bf16.msra.mxu0 %v4143
    %4667 = vmatprep.subr.bf16.mxu0 %v4150
    %4668 = vmatpush1.bf16.msra.mxu0 %v4149
    %4669 = vmatprep.subr.bf16.mxu0 %v4156
    %4670 = vmatpush1.bf16.msra.mxu0 %v4155
    %4671 = vmatprep.subr.bf16.mxu0 %v4162
    %4672 = vmatpush1.bf16.msra.mxu0 %v4161
    %4673 = vmatprep.subr.bf16.mxu0 %v4168
    %4674 = vmatpush1.bf16.msra.mxu0 %v4167
    %4675 = vmatprep.subr.bf16.mxu0 %v4174
    %4676 = vmatpush1.bf16.msra.mxu0 %v4173
    %4677 = vmatprep.subr.bf16.mxu0 %v4180
    %4678 = vmatpush1.bf16.msra.mxu0 %v4179
    %4679 = vmatprep.subr.bf16.mxu0 %v4186
    %4680 = vmatpush1.bf16.msra.mxu0 %v4185
    %4681 = vmatprep.subr.bf16.mxu0 %v4192
    %4682 = vmatpush1.bf16.msra.mxu0 %v4191
    %4683 = vmatprep.subr.bf16.mxu0 %v4198
    %4684 = vmatpush1.bf16.msra.mxu0 %v4197
    %4685 = vmatprep.subr.bf16.mxu0 %v4204
    %4686 = vmatpush1.bf16.msra.mxu0 %v4203
    %4687 = vmatprep.subr.bf16.mxu0 %v4210
    %4688 = vmatpush1.bf16.msra.mxu0 %v4209
    %4689 = vmatprep.subr.bf16.mxu0 %v4216
    %4690 = vmatpush1.bf16.msra.mxu0 %v4215
    %4691 = vmatprep.subr.bf16.mxu0 %v4222
    %4692 = vmatpush1.bf16.msra.mxu0 %v4221
    %4693 = vmatprep.subr.bf16.mxu0 %v4228
    %4694 = vmatpush1.bf16.msra.mxu0 %v4227
    %4695 = vmatprep.mubr.bf16.mxu0 %v4662
    %4696 = vmatmul.mubr.bf16.gmra.mrb[0].mxu0 %v4661
    %v4697 = vpop.f32.mrb[0].mxu0
    %v4698 = vadd.f32 %v3822, %v4697
    %v4699 = vpop.f32.mrb[0].mxu0
    %v4700 = vadd.f32 %v3826, %v4699
    %v4701 = vpop.f32.mrb[0].mxu0
    %v4702 = vpop.f32.mrb[0].mxu0
    %4703 = vdwg.mxu0
    %4704 = vmatprep.subr.bf16.mxu0 %v4140
    %4705 = vmatpush1.bf16.msra.mxu0 %v4139
    %4706 = vmatprep.subr.bf16.mxu0 %v4146
    %4707 = vmatpush1.bf16.msra.mxu0 %v4145
    %4708 = vmatprep.subr.bf16.mxu0 %v4152
    %4709 = vmatpush1.bf16.msra.mxu0 %v4151
    %4710 = vmatprep.subr.bf16.mxu0 %v4158
    %4711 = vmatpush1.bf16.msra.mxu0 %v4157
    %4712 = vmatprep.subr.bf16.mxu0 %v4164
    %4713 = vmatpush1.bf16.msra.mxu0 %v4163
    %4714 = vmatprep.subr.bf16.mxu0 %v4170
    %4715 = vmatpush1.bf16.msra.mxu0 %v4169
    %4716 = vmatprep.subr.bf16.mxu0 %v4176
    %4717 = vmatpush1.bf16.msra.mxu0 %v4175
    %4718 = vmatprep.subr.bf16.mxu0 %v4182
    %4719 = vmatpush1.bf16.msra.mxu0 %v4181
    %4720 = vmatprep.subr.bf16.mxu0 %v4188
    %4721 = vmatpush1.bf16.msra.mxu0 %v4187
    %4722 = vmatprep.subr.bf16.mxu0 %v4194
    %4723 = vmatpush1.bf16.msra.mxu0 %v4193
    %4724 = vmatprep.subr.bf16.mxu0 %v4200
    %4725 = vmatpush1.bf16.msra.mxu0 %v4199
    %4726 = vmatprep.subr.bf16.mxu0 %v4206
    %4727 = vmatpush1.bf16.msra.mxu0 %v4205
    %4728 = vmatprep.subr.bf16.mxu0 %v4212
    %4729 = vmatpush1.bf16.msra.mxu0 %v4211
    %4730 = vmatprep.subr.bf16.mxu0 %v4218
    %4731 = vmatpush1.bf16.msra.mxu0 %v4217
    %4732 = vmatprep.subr.bf16.mxu0 %v4224
    %4733 = vmatpush1.bf16.msra.mxu0 %v4223
    %4734 = vmatprep.subr.bf16.mxu0 %v4230
    %4735 = vmatpush1.bf16.msra.mxu0 %v4229
    %4736 = vmatprep.mubr.bf16.mxu0 %v4662
    %4737 = vmatmul.mubr.bf16.gmra.mrb[0].mxu0 %v4661
    %v4738 = vpop.f32.mrb[0].mxu0
    %v4739 = vadd.f32 %v3830, %v4738
    %v4740 = vpop.f32.mrb[0].mxu0
    %v4741 = vadd.f32 %v3834, %v4740
    %v4742 = vpop.f32.mrb[0].mxu0
    %v4743 = vpop.f32.mrb[0].mxu0
    %4744 = vdwg.mxu0
    %4745 = vmatprep.subr.bf16.mxu0 %v4142
    %4746 = vmatpush1.bf16.msra.mxu0 %v4141
    %4747 = vmatprep.subr.bf16.mxu0 %v4148
    %4748 = vmatpush1.bf16.msra.mxu0 %v4147
    %4749 = vmatprep.subr.bf16.mxu0 %v4154
    %4750 = vmatpush1.bf16.msra.mxu0 %v4153
    %4751 = vmatprep.subr.bf16.mxu0 %v4160
    %4752 = vmatpush1.bf16.msra.mxu0 %v4159
    %4753 = vmatprep.subr.bf16.mxu0 %v4166
    %4754 = vmatpush1.bf16.msra.mxu0 %v4165
    %4755 = vmatprep.subr.bf16.mxu0 %v4172
    %4756 = vmatpush1.bf16.msra.mxu0 %v4171
    %4757 = vmatprep.subr.bf16.mxu0 %v4178
    %4758 = vmatpush1.bf16.msra.mxu0 %v4177
    %4759 = vmatprep.subr.bf16.mxu0 %v4184
    %4760 = vmatpush1.bf16.msra.mxu0 %v4183
    %4761 = vmatprep.subr.bf16.mxu0 %v4190
    %4762 = vmatpush1.bf16.msra.mxu0 %v4189
    %4763 = vmatprep.subr.bf16.mxu0 %v4196
    %4764 = vmatpush1.bf16.msra.mxu0 %v4195
    %4765 = vmatprep.subr.bf16.mxu0 %v4202
    %4766 = vmatpush1.bf16.msra.mxu0 %v4201
    %4767 = vmatprep.subr.bf16.mxu0 %v4208
    %4768 = vmatpush1.bf16.msra.mxu0 %v4207
    %4769 = vmatprep.subr.bf16.mxu0 %v4214
    %4770 = vmatpush1.bf16.msra.mxu0 %v4213
    %4771 = vmatprep.subr.bf16.mxu0 %v4220
    %4772 = vmatpush1.bf16.msra.mxu0 %v4219
    %4773 = vmatprep.subr.bf16.mxu0 %v4226
    %4774 = vmatpush1.bf16.msra.mxu0 %v4225
    %4775 = vmatprep.subr.bf16.mxu0 %v4232
    %4776 = vmatpush1.bf16.msra.mxu0 %v4231
    %4777 = vmatprep.mubr.bf16.mxu0 %v4662
    %4778 = vmatmul.mubr.bf16.gmra.mrb[0].mxu0 %v4661
    %v4779 = vpop.f32.mrb[0].mxu0
    %v4780 = vadd.f32 %v3838, %v4779
    %v4781 = vpop.f32.mrb[0].mxu0
    %v4782 = vadd.f32 %v3842, %v4781
    %v4783 = vpop.f32.mrb[0].mxu0
    %v4784 = vpop.f32.mrb[0].mxu0
    %4785 = vdwg.mxu0
    %v4786 = vld [vmem:[#allocation3 + $0x60] sm:$0xff]
    %v4787 = vld [vmem:[#allocation3 + $0x68] sm:$0xff]
    %v4788 = vld [vmem:[#allocation3 + $0x70] sm:$0xff]
    %v4789 = vld [vmem:[#allocation3 + $0x108] sm:$0xff]
    %v4790 = vld [vmem:[#allocation3 + $0x110] sm:$0xff]
    %v4791 = vld [vmem:[#allocation3 + $0x118] sm:$0xff]
    %v4792 = vadd.f32 %v4786, %v4698
    %v4793 = vmul.f32 %v4792, 0.5
    %v4794 = vtanh.pop %v4793
    %v4795 = vadd.f32 %v4794, 1.0
    %v4796 = vmul.f32 %v4795, 0.5
    %v4797 = vadd.f32 %v4787, %v4700
    %v4798 = vmul.f32 %v4797, 0.5
    %v4799 = vtanh.pop %v4798
    %v4800 = vadd.f32 %v4799, 1.0
    %v4801 = vmul.f32 %v4800, 0.5
    %v4802 = vmul.f32 %v4796, %v4739
    %v4803 = vadd.f32 %v4788, %v4802
    %v4804 = vtanh.pop %v4803
    %v4805 = vsub.f32 1.0, %v4801
    %v4806 = vmul.f32 %v4805, %v4804
    %v4807 = vmul.f32 %v4801, %v4641
    %v4808 = vadd.f32 %v4806, %v4807
    %v4809 = vadd.f32 %v4789, %v4741
    %v4810 = vmul.f32 %v4809, 0.5
    %v4811 = vtanh.pop %v4810
    %v4812 = vadd.f32 %v4811, 1.0
    %v4813 = vmul.f32 %v4812, 0.5
    %v4814 = vadd.f32 %v4790, %v4780
    %v4815 = vmul.f32 %v4814, 0.5
    %v4816 = vtanh.pop %v4815
    %v4817 = vadd.f32 %v4816, 1.0
    %v4818 = vmul.f32 %v4817, 0.5
    %v4819 = vmul.f32 %v4813, %v4782
    %v4820 = vadd.f32 %v4791, %v4819
    %v4821 = vtanh.pop %v4820
    %v4822 = vsub.f32 1.0, %v4818
    %v4823 = vmul.f32 %v4822, %v4821
    %v4824 = vmul.f32 %v4818, %v4658
    %v4825 = vadd.f32 %v4823, %v4824
    %4826 = vst [vmem:[#allocation4 + $0x20] sm:$0xff] %v4808
    %4827 = vst [vmem:[#allocation4 + $0x58] sm:$0xff] %v4825
    %v4828 = vpack.c.bf16 %v4808, %v4808
    %v4829 = vpack.c.bf16 %v4825, %v4825
    %4830 = vmatprep.subr.bf16.mxu0 %v4138
    %4831 = vmatpush1.bf16.msra.mxu0 %v4137
    %4832 = vmatprep.subr.bf16.mxu0 %v4144
    %4833 = vmatpush1.bf16.msra.mxu0 %v4143
    %4834 = vmatprep.subr.bf16.mxu0 %v4150
    %4835 = vmatpush1.bf16.msra.mxu0 %v4149
    %4836 = vmatprep.subr.bf16.mxu0 %v4156
    %4837 = vmatpush1.bf16.msra.mxu0 %v4155
    %4838 = vmatprep.subr.bf16.mxu0 %v4162
    %4839 = vmatpush1.bf16.msra.mxu0 %v4161
    %4840 = vmatprep.subr.bf16.mxu0 %v4168
    %4841 = vmatpush1.bf16.msra.mxu0 %v4167
    %4842 = vmatprep.subr.bf16.mxu0 %v4174
    %4843 = vmatpush1.bf16.msra.mxu0 %v4173
    %4844 = vmatprep.subr.bf16.mxu0 %v4180
    %4845 = vmatpush1.bf16.msra.mxu0 %v4179
    %4846 = vmatprep.subr.bf16.mxu0 %v4186
    %4847 = vmatpush1.bf16.msra.mxu0 %v4185
    %4848 = vmatprep.subr.bf16.mxu0 %v4192
    %4849 = vmatpush1.bf16.msra.mxu0 %v4191
    %4850 = vmatprep.subr.bf16.mxu0 %v4198
    %4851 = vmatpush1.bf16.msra.mxu0 %v4197
    %4852 = vmatprep.subr.bf16.mxu0 %v4204
    %4853 = vmatpush1.bf16.msra.mxu0 %v4203
    %4854 = vmatprep.subr.bf16.mxu0 %v4210
    %4855 = vmatpush1.bf16.msra.mxu0 %v4209
    %4856 = vmatprep.subr.bf16.mxu0 %v4216
    %4857 = vmatpush1.bf16.msra.mxu0 %v4215
    %4858 = vmatprep.subr.bf16.mxu0 %v4222
    %4859 = vmatpush1.bf16.msra.mxu0 %v4221
    %4860 = vmatprep.subr.bf16.mxu0 %v4228
    %4861 = vmatpush1.bf16.msra.mxu0 %v4227
    %4862 = vmatprep.mubr.bf16.mxu0 %v4829
    %4863 = vmatmul.mubr.bf16.gmra.mrb[0].mxu0 %v4828
    %v4864 = vpop.f32.mrb[0].mxu0
    %v4865 = vadd.f32 %v3822, %v4864
    %v4866 = vpop.f32.mrb[0].mxu0
    %v4867 = vadd.f32 %v3826, %v4866
    %v4868 = vpop.f32.mrb[0].mxu0
    %v4869 = vpop.f32.mrb[0].mxu0
    %4870 = vdwg.mxu0
    %4871 = vmatprep.subr.bf16.mxu0 %v4140
    %4872 = vmatpush1.bf16.msra.mxu0 %v4139
    %4873 = vmatprep.subr.bf16.mxu0 %v4146
    %4874 = vmatpush1.bf16.msra.mxu0 %v4145
    %4875 = vmatprep.subr.bf16.mxu0 %v4152
    %4876 = vmatpush1.bf16.msra.mxu0 %v4151
    %4877 = vmatprep.subr.bf16.mxu0 %v4158
    %4878 = vmatpush1.bf16.msra.mxu0 %v4157
    %4879 = vmatprep.subr.bf16.mxu0 %v4164
    %4880 = vmatpush1.bf16.msra.mxu0 %v4163
    %4881 = vmatprep.subr.bf16.mxu0 %v4170
    %4882 = vmatpush1.bf16.msra.mxu0 %v4169
    %4883 = vmatprep.subr.bf16.mxu0 %v4176
    %4884 = vmatpush1.bf16.msra.mxu0 %v4175
    %4885 = vmatprep.subr.bf16.mxu0 %v4182
    %4886 = vmatpush1.bf16.msra.mxu0 %v4181
    %4887 = vmatprep.subr.bf16.mxu0 %v4188
    %4888 = vmatpush1.bf16.msra.mxu0 %v4187
    %4889 = vmatprep.subr.bf16.mxu0 %v4194
    %4890 = vmatpush1.bf16.msra.mxu0 %v4193
    %4891 = vmatprep.subr.bf16.mxu0 %v4200
    %4892 = vmatpush1.bf16.msra.mxu0 %v4199
    %4893 = vmatprep.subr.bf16.mxu0 %v4206
    %4894 = vmatpush1.bf16.msra.mxu0 %v4205
    %4895 = vmatprep.subr.bf16.mxu0 %v4212
    %4896 = vmatpush1.bf16.msra.mxu0 %v4211
    %4897 = vmatprep.subr.bf16.mxu0 %v4218
    %4898 = vmatpush1.bf16.msra.mxu0 %v4217
    %4899 = vmatprep.subr.bf16.mxu0 %v4224
    %4900 = vmatpush1.bf16.msra.mxu0 %v4223
    %4901 = vmatprep.subr.bf16.mxu0 %v4230
    %4902 = vmatpush1.bf16.msra.mxu0 %v4229
    %4903 = vmatprep.mubr.bf16.mxu0 %v4829
    %4904 = vmatmul.mubr.bf16.gmra.mrb[0].mxu0 %v4828
    %v4905 = vpop.f32.mrb[0].mxu0
    %v4906 = vadd.f32 %v3830, %v4905
    %v4907 = vpop.f32.mrb[0].mxu0
    %v4908 = vadd.f32 %v3834, %v4907
    %v4909 = vpop.f32.mrb[0].mxu0
    %v4910 = vpop.f32.mrb[0].mxu0
    %4911 = vdwg.mxu0
    %4912 = vmatprep.subr.bf16.mxu0 %v4142
    %4913 = vmatpush1.bf16.msra.mxu0 %v4141
    %4914 = vmatprep.subr.bf16.mxu0 %v4148
    %4915 = vmatpush1.bf16.msra.mxu0 %v4147
    %4916 = vmatprep.subr.bf16.mxu0 %v4154
    %4917 = vmatpush1.bf16.msra.mxu0 %v4153
    %4918 = vmatprep.subr.bf16.mxu0 %v4160
    %4919 = vmatpush1.bf16.msra.mxu0 %v4159
    %4920 = vmatprep.subr.bf16.mxu0 %v4166
    %4921 = vmatpush1.bf16.msra.mxu0 %v4165
    %4922 = vmatprep.subr.bf16.mxu0 %v4172
    %4923 = vmatpush1.bf16.msra.mxu0 %v4171
    %4924 = vmatprep.subr.bf16.mxu0 %v4178
    %4925 = vmatpush1.bf16.msra.mxu0 %v4177
    %4926 = vmatprep.subr.bf16.mxu0 %v4184
    %4927 = vmatpush1.bf16.msra.mxu0 %v4183
    %4928 = vmatprep.subr.bf16.mxu0 %v4190
    %4929 = vmatpush1.bf16.msra.mxu0 %v4189
    %4930 = vmatprep.subr.bf16.mxu0 %v4196
    %4931 = vmatpush1.bf16.msra.mxu0 %v4195
    %4932 = vmatprep.subr.bf16.mxu0 %v4202
    %4933 = vmatpush1.bf16.msra.mxu0 %v4201
    %4934 = vmatprep.subr.bf16.mxu0 %v4208
    %4935 = vmatpush1.bf16.msra.mxu0 %v4207
    %4936 = vmatprep.subr.bf16.mxu0 %v4214
    %4937 = vmatpush1.bf16.msra.mxu0 %v4213
    %4938 = vmatprep.subr.bf16.mxu0 %v4220
    %4939 = vmatpush1.bf16.msra.mxu0 %v4219
    %4940 = vmatprep.subr.bf16.mxu0 %v4226
    %4941 = vmatpush1.bf16.msra.mxu0 %v4225
    %4942 = vmatprep.subr.bf16.mxu0 %v4232
    %4943 = vmatpush1.bf16.msra.mxu0 %v4231
    %4944 = vmatprep.mubr.bf16.mxu0 %v4829
    %4945 = vmatmul.mubr.bf16.gmra.mrb[0].mxu0 %v4828
    %v4946 = vpop.f32.mrb[0].mxu0
    %v4947 = vadd.f32 %v3838, %v4946
    %v4948 = vpop.f32.mrb[0].mxu0
    %v4949 = vadd.f32 %v3842, %v4948
    %v4950 = vpop.f32.mrb[0].mxu0
    %v4951 = vpop.f32.mrb[0].mxu0
    %4952 = vdwg.mxu0
    %v4953 = vld [vmem:[#allocation3 + $0x90] sm:$0xff]
    %v4954 = vld [vmem:[#allocation3 + $0x98] sm:$0xff]
    %v4955 = vld [vmem:[#allocation3 + $0xa0] sm:$0xff]
    %v4956 = vld [vmem:[#allocation3 + $0xd8] sm:$0xff]
    %v4957 = vld [vmem:[#allocation3 + $0xe0] sm:$0xff]
    %v4958 = vld [vmem:[#allocation3 + $0xe8] sm:$0xff]
    %v4959 = vadd.f32 %v4953, %v4865
    %v4960 = vmul.f32 %v4959, 0.5
    %v4961 = vtanh.pop %v4960
    %v4962 = vadd.f32 %v4961, 1.0
    %v4963 = vmul.f32 %v4962, 0.5
    %v4964 = vadd.f32 %v4954, %v4867
    %v4965 = vmul.f32 %v4964, 0.5
    %v4966 = vtanh.pop %v4965
    %v4967 = vadd.f32 %v4966, 1.0
    %v4968 = vmul.f32 %v4967, 0.5
    %v4969 = vmul.f32 %v4963, %v4906
    %v4970 = vadd.f32 %v4955, %v4969
    %v4971 = vtanh.pop %v4970
    %v4972 = vsub.f32 1.0, %v4968
    %v4973 = vmul.f32 %v4972, %v4971
    %v4974 = vmul.f32 %v4968, %v4808
    %v4975 = vadd.f32 %v4973, %v4974
    %v4976 = vadd.f32 %v4956, %v4908
    %v4977 = vmul.f32 %v4976, 0.5
    %v4978 = vtanh.pop %v4977
    %v4979 = vadd.f32 %v4978, 1.0
    %v4980 = vmul.f32 %v4979, 0.5
    %v4981 = vadd.f32 %v4957, %v4947
    %v4982 = vmul.f32 %v4981, 0.5
    %v4983 = vtanh.pop %v4982
    %v4984 = vadd.f32 %v4983, 1.0
    %v4985 = vmul.f32 %v4984, 0.5
    %v4986 = vmul.f32 %v4980, %v4949
    %v4987 = vadd.f32 %v4958, %v4986
    %v4988 = vtanh.pop %v4987
    %v4989 = vsub.f32 1.0, %v4985
    %v4990 = vmul.f32 %v4989, %v4988
    %v4991 = vmul.f32 %v4985, %v4825
    %v4992 = vadd.f32 %v4990, %v4991
    %4993 = vst [vmem:[#allocation4 + $0x30] sm:$0xff] %v4975
    %4994 = vst [vmem:[#allocation4 + $0x48] sm:$0xff] %v4992
    %v4995 = vpack.c.bf16 %v4975, %v4975
    %v4996 = vpack.c.bf16 %v4992, %v4992
    %4997 = vmatprep.subr.bf16.mxu0 %v4138
    %4998 = vmatpush1.bf16.msra.mxu0 %v4137
    %4999 = vmatprep.subr.bf16.mxu0 %v4144
    %5000 = vmatpush1.bf16.msra.mxu0 %v4143
    %5001 = vmatprep.subr.bf16.mxu0 %v4150
    %5002 = vmatpush1.bf16.msra.mxu0 %v4149
    %5003 = vmatprep.subr.bf16.mxu0 %v4156
    %5004 = vmatpush1.bf16.msra.mxu0 %v4155
    %5005 = vmatprep.subr.bf16.mxu0 %v4162
    %5006 = vmatpush1.bf16.msra.mxu0 %v4161
    %5007 = vmatprep.subr.bf16.mxu0 %v4168
    %5008 = vmatpush1.bf16.msra.mxu0 %v4167
    %5009 = vmatprep.subr.bf16.mxu0 %v4174
    %5010 = vmatpush1.bf16.msra.mxu0 %v4173
    %5011 = vmatprep.subr.bf16.mxu0 %v4180
    %5012 = vmatpush1.bf16.msra.mxu0 %v4179
    %5013 = vmatprep.subr.bf16.mxu0 %v4186
    %5014 = vmatpush1.bf16.msra.mxu0 %v4185
    %5015 = vmatprep.subr.bf16.mxu0 %v4192
    %5016 = vmatpush1.bf16.msra.mxu0 %v4191
    %5017 = vmatprep.subr.bf16.mxu0 %v4198
    %5018 = vmatpush1.bf16.msra.mxu0 %v4197
    %5019 = vmatprep.subr.bf16.mxu0 %v4204
    %5020 = vmatpush1.bf16.msra.mxu0 %v4203
    %5021 = vmatprep.subr.bf16.mxu0 %v4210
    %5022 = vmatpush1.bf16.msra.mxu0 %v4209
    %5023 = vmatprep.subr.bf16.mxu0 %v4216
    %5024 = vmatpush1.bf16.msra.mxu0 %v4215
    %5025 = vmatprep.subr.bf16.mxu0 %v4222
    %5026 = vmatpush1.bf16.msra.mxu0 %v4221
    %5027 = vmatprep.subr.bf16.mxu0 %v4228
    %5028 = vmatpush1.bf16.msra.mxu0 %v4227
    %5029 = vmatprep.mubr.bf16.mxu0 %v4996
    %5030 = vmatmul.mubr.bf16.gmra.mrb[0].mxu0 %v4995
    %v5031 = vpop.f32.mrb[0].mxu0
    %v5032 = vadd.f32 %v3822, %v5031
    %v5033 = vpop.f32.mrb[0].mxu0
    %v5034 = vadd.f32 %v3826, %v5033
    %v5035 = vpop.f32.mrb[0].mxu0
    %v5036 = vpop.f32.mrb[0].mxu0
    %5037 = vdwg.mxu0
    %5038 = vmatprep.subr.bf16.mxu0 %v4140
    %5039 = vmatpush1.bf16.msra.mxu0 %v4139
    %5040 = vmatprep.subr.bf16.mxu0 %v4146
    %5041 = vmatpush1.bf16.msra.mxu0 %v4145
    %5042 = vmatprep.subr.bf16.mxu0 %v4152
    %5043 = vmatpush1.bf16.msra.mxu0 %v4151
    %5044 = vmatprep.subr.bf16.mxu0 %v4158
    %5045 = vmatpush1.bf16.msra.mxu0 %v4157
    %5046 = vmatprep.subr.bf16.mxu0 %v4164
    %5047 = vmatpush1.bf16.msra.mxu0 %v4163
    %5048 = vmatprep.subr.bf16.mxu0 %v4170
    %5049 = vmatpush1.bf16.msra.mxu0 %v4169
    %5050 = vmatprep.subr.bf16.mxu0 %v4176
    %5051 = vmatpush1.bf16.msra.mxu0 %v4175
    %5052 = vmatprep.subr.bf16.mxu0 %v4182
    %5053 = vmatpush1.bf16.msra.mxu0 %v4181
    %5054 = vmatprep.subr.bf16.mxu0 %v4188
    %5055 = vmatpush1.bf16.msra.mxu0 %v4187
    %5056 = vmatprep.subr.bf16.mxu0 %v4194
    %5057 = vmatpush1.bf16.msra.mxu0 %v4193
    %5058 = vmatprep.subr.bf16.mxu0 %v4200
    %5059 = vmatpush1.bf16.msra.mxu0 %v4199
    %5060 = vmatprep.subr.bf16.mxu0 %v4206
    %5061 = vmatpush1.bf16.msra.mxu0 %v4205
    %5062 = vmatprep.subr.bf16.mxu0 %v4212
    %5063 = vmatpush1.bf16.msra.mxu0 %v4211
    %5064 = vmatprep.subr.bf16.mxu0 %v4218
    %5065 = vmatpush1.bf16.msra.mxu0 %v4217
    %5066 = vmatprep.subr.bf16.mxu0 %v4224
    %5067 = vmatpush1.bf16.msra.mxu0 %v4223
    %5068 = vmatprep.subr.bf16.mxu0 %v4230
    %5069 = vmatpush1.bf16.msra.mxu0 %v4229
    %5070 = vmatprep.mubr.bf16.mxu0 %v4996
    %5071 = vmatmul.mubr.bf16.gmra.mrb[0].mxu0 %v4995
    %v5072 = vpop.f32.mrb[0].mxu0
    %v5073 = vadd.f32 %v3830, %v5072
    %v5074 = vpop.f32.mrb[0].mxu0
    %v5075 = vadd.f32 %v3834, %v5074
    %v5076 = vpop.f32.mrb[0].mxu0
    %v5077 = vpop.f32.mrb[0].mxu0
    %5078 = vdwg.mxu0
    %5079 = vmatprep.subr.bf16.mxu0 %v4142
    %5080 = vmatpush1.bf16.msra.mxu0 %v4141
    %5081 = vmatprep.subr.bf16.mxu0 %v4148
    %5082 = vmatpush1.bf16.msra.mxu0 %v4147
    %5083 = vmatprep.subr.bf16.mxu0 %v4154
    %5084 = vmatpush1.bf16.msra.mxu0 %v4153
    %5085 = vmatprep.subr.bf16.mxu0 %v4160
    %5086 = vmatpush1.bf16.msra.mxu0 %v4159
    %5087 = vmatprep.subr.bf16.mxu0 %v4166
    %5088 = vmatpush1.bf16.msra.mxu0 %v4165
    %5089 = vmatprep.subr.bf16.mxu0 %v4172
    %5090 = vmatpush1.bf16.msra.mxu0 %v4171
    %5091 = vmatprep.subr.bf16.mxu0 %v4178
    %5092 = vmatpush1.bf16.msra.mxu0 %v4177
    %5093 = vmatprep.subr.bf16.mxu0 %v4184
    %5094 = vmatpush1.bf16.msra.mxu0 %v4183
    %5095 = vmatprep.subr.bf16.mxu0 %v4190
    %5096 = vmatpush1.bf16.msra.mxu0 %v4189
    %5097 = vmatprep.subr.bf16.mxu0 %v4196
    %5098 = vmatpush1.bf16.msra.mxu0 %v4195
    %5099 = vmatprep.subr.bf16.mxu0 %v4202
    %5100 = vmatpush1.bf16.msra.mxu0 %v4201
    %5101 = vmatprep.subr.bf16.mxu0 %v4208
    %5102 = vmatpush1.bf16.msra.mxu0 %v4207
    %5103 = vmatprep.subr.bf16.mxu0 %v4214
    %5104 = vmatpush1.bf16.msra.mxu0 %v4213
    %5105 = vmatprep.subr.bf16.mxu0 %v4220
    %5106 = vmatpush1.bf16.msra.mxu0 %v4219
    %5107 = vmatprep.subr.bf16.mxu0 %v4226
    %5108 = vmatpush1.bf16.msra.mxu0 %v4225
    %5109 = vmatprep.subr.bf16.mxu0 %v4232
    %5110 = vmatpush1.bf16.msra.mxu0 %v4231
    %5111 = vmatprep.mubr.bf16.mxu0 %v4996
    %5112 = vmatmul.mubr.bf16.gmra.mrb[0].mxu0 %v4995
    %v5113 = vpop.f32.mrb[0].mxu0
    %v5114 = vadd.f32 %v3838, %v5113
    %v5115 = vpop.f32.mrb[0].mxu0
    %v5116 = vadd.f32 %v3842, %v5115
    %v5117 = vpop.f32.mrb[0].mxu0
    %v5118 = vpop.f32.mrb[0].mxu0
    %5119 = vdwg.mxu0
    %v5120 = vld [vmem:[#allocation3 + $0xc0] sm:$0xff]
    %v5121 = vld [vmem:[#allocation3 + $0xc8] sm:$0xff]
    %v5122 = vld [vmem:[#allocation3 + $0xd0] sm:$0xff]
    %v5123 = vld [vmem:[#allocation3 + $0xa8] sm:$0xff]
    %v5124 = vld [vmem:[#allocation3 + $0xb0] sm:$0xff]
    %v5125 = vld [vmem:[#allocation3 + $0xb8] sm:$0xff]
    %v5126 = vadd.f32 %v5120, %v5032
    %v5127 = vmul.f32 %v5126, 0.5
    %v5128 = vtanh.pop %v5127
    %v5129 = vadd.f32 %v5128, 1.0
    %v5130 = vmul.f32 %v5129, 0.5
    %v5131 = vadd.f32 %v5121, %v5034
    %v5132 = vmul.f32 %v5131, 0.5
    %v5133 = vtanh.pop %v5132
    %v5134 = vadd.f32 %v5133, 1.0
    %v5135 = vmul.f32 %v5134, 0.5
    %v5136 = vmul.f32 %v5130, %v5073
    %v5137 = vadd.f32 %v5122, %v5136
    %v5138 = vtanh.pop %v5137
    %v5139 = vsub.f32 1.0, %v5135
    %v5140 = vmul.f32 %v5139, %v5138
    %v5141 = vmul.f32 %v5135, %v4975
    %v5142 = vadd.f32 %v5140, %v5141
    %v5143 = vadd.f32 %v5123, %v5075
    %v5144 = vmul.f32 %v5143, 0.5
    %v5145 = vtanh.pop %v5144
    %v5146 = vadd.f32 %v5145, 1.0
    %v5147 = vmul.f32 %v5146, 0.5
    %v5148 = vadd.f32 %v5124, %v5114
    %v5149 = vmul.f32 %v5148, 0.5
    %v5150 = vtanh.pop %v5149
    %v5151 = vadd.f32 %v5150, 1.0
    %v5152 = vmul.f32 %v5151, 0.5
    %v5153 = vmul.f32 %v5147, %v5116
    %v5154 = vadd.f32 %v5125, %v5153
    %v5155 = vtanh.pop %v5154
    %v5156 = vsub.f32 1.0, %v5152
    %v5157 = vmul.f32 %v5156, %v5155
    %v5158 = vmul.f32 %v5152, %v4992
    %v5159 = vadd.f32 %v5157, %v5158
    %5160 = vst [vmem:[#allocation4 + $0x40] sm:$0xff] %v5142
    %5161 = vst [vmem:[#allocation4 + $0x38] sm:$0xff] %v5159
    %v5162 = vpack.c.bf16 %v5142, %v5142
    %v5163 = vpack.c.bf16 %v5159, %v5159
    %5164 = vmatprep.subr.bf16.mxu0 %v4138
    %5165 = vmatpush1.bf16.msra.mxu0 %v4137
    %5166 = vmatprep.subr.bf16.mxu0 %v4144
    %5167 = vmatpush1.bf16.msra.mxu0 %v4143
    %5168 = vmatprep.subr.bf16.mxu0 %v4150
    %5169 = vmatpush1.bf16.msra.mxu0 %v4149
    %5170 = vmatprep.subr.bf16.mxu0 %v4156
    %5171 = vmatpush1.bf16.msra.mxu0 %v4155
    %5172 = vmatprep.subr.bf16.mxu0 %v4162
    %5173 = vmatpush1.bf16.msra.mxu0 %v4161
    %5174 = vmatprep.subr.bf16.mxu0 %v4168
    %5175 = vmatpush1.bf16.msra.mxu0 %v4167
    %5176 = vmatprep.subr.bf16.mxu0 %v4174
    %5177 = vmatpush1.bf16.msra.mxu0 %v4173
    %5178 = vmatprep.subr.bf16.mxu0 %v4180
    %5179 = vmatpush1.bf16.msra.mxu0 %v4179
    %5180 = vmatprep.subr.bf16.mxu0 %v4186
    %5181 = vmatpush1.bf16.msra.mxu0 %v4185
    %5182 = vmatprep.subr.bf16.mxu0 %v4192
    %5183 = vmatpush1.bf16.msra.mxu0 %v4191
    %5184 = vmatprep.subr.bf16.mxu0 %v4198
    %5185 = vmatpush1.bf16.msra.mxu0 %v4197
    %5186 = vmatprep.subr.bf16.mxu0 %v4204
    %5187 = vmatpush1.bf16.msra.mxu0 %v4203
    %5188 = vmatprep.subr.bf16.mxu0 %v4210
    %5189 = vmatpush1.bf16.msra.mxu0 %v4209
    %5190 = vmatprep.subr.bf16.mxu0 %v4216
    %5191 = vmatpush1.bf16.msra.mxu0 %v4215
    %5192 = vmatprep.subr.bf16.mxu0 %v4222
    %5193 = vmatpush1.bf16.msra.mxu0 %v4221
    %5194 = vmatprep.subr.bf16.mxu0 %v4228
    %5195 = vmatpush1.bf16.msra.mxu0 %v4227
    %5196 = vmatprep.mubr.bf16.mxu0 %v5163
    %5197 = vmatmul.mubr.bf16.gmra.mrb[0].mxu0 %v5162
    %v5198 = vpop.f32.mrb[0].mxu0
    %v5199 = vadd.f32 %v3822, %v5198
    %v5200 = vpop.f32.mrb[0].mxu0
    %v5201 = vadd.f32 %v3826, %v5200
    %v5202 = vpop.f32.mrb[0].mxu0
    %v5203 = vpop.f32.mrb[0].mxu0
    %5204 = vdwg.mxu0
    %5205 = vmatprep.subr.bf16.mxu0 %v4140
    %5206 = vmatpush1.bf16.msra.mxu0 %v4139
    %5207 = vmatprep.subr.bf16.mxu0 %v4146
    %5208 = vmatpush1.bf16.msra.mxu0 %v4145
    %5209 = vmatprep.subr.bf16.mxu0 %v4152
    %5210 = vmatpush1.bf16.msra.mxu0 %v4151
    %5211 = vmatprep.subr.bf16.mxu0 %v4158
    %5212 = vmatpush1.bf16.msra.mxu0 %v4157
    %5213 = vmatprep.subr.bf16.mxu0 %v4164
    %5214 = vmatpush1.bf16.msra.mxu0 %v4163
    %5215 = vmatprep.subr.bf16.mxu0 %v4170
    %5216 = vmatpush1.bf16.msra.mxu0 %v4169
    %5217 = vmatprep.subr.bf16.mxu0 %v4176
    %5218 = vmatpush1.bf16.msra.mxu0 %v4175
    %5219 = vmatprep.subr.bf16.mxu0 %v4182
    %5220 = vmatpush1.bf16.msra.mxu0 %v4181
    %5221 = vmatprep.subr.bf16.mxu0 %v4188
    %5222 = vmatpush1.bf16.msra.mxu0 %v4187
    %5223 = vmatprep.subr.bf16.mxu0 %v4194
    %5224 = vmatpush1.bf16.msra.mxu0 %v4193
    %5225 = vmatprep.subr.bf16.mxu0 %v4200
    %5226 = vmatpush1.bf16.msra.mxu0 %v4199
    %5227 = vmatprep.subr.bf16.mxu0 %v4206
    %5228 = vmatpush1.bf16.msra.mxu0 %v4205
    %5229 = vmatprep.subr.bf16.mxu0 %v4212
    %5230 = vmatpush1.bf16.msra.mxu0 %v4211
    %5231 = vmatprep.subr.bf16.mxu0 %v4218
    %5232 = vmatpush1.bf16.msra.mxu0 %v4217
    %5233 = vmatprep.subr.bf16.mxu0 %v4224
    %5234 = vmatpush1.bf16.msra.mxu0 %v4223
    %5235 = vmatprep.subr.bf16.mxu0 %v4230
    %5236 = vmatpush1.bf16.msra.mxu0 %v4229
    %5237 = vmatprep.mubr.bf16.mxu0 %v5163
    %5238 = vmatmul.mubr.bf16.gmra.mrb[0].mxu0 %v5162
    %v5239 = vpop.f32.mrb[0].mxu0
    %v5240 = vadd.f32 %v3830, %v5239
    %v5241 = vpop.f32.mrb[0].mxu0
    %v5242 = vadd.f32 %v3834, %v5241
    %v5243 = vpop.f32.mrb[0].mxu0
    %v5244 = vpop.f32.mrb[0].mxu0
    %5245 = vdwg.mxu0
    %5246 = vmatprep.subr.bf16.mxu0 %v4142
    %5247 = vmatpush1.bf16.msra.mxu0 %v4141
    %5248 = vmatprep.subr.bf16.mxu0 %v4148
    %5249 = vmatpush1.bf16.msra.mxu0 %v4147
    %5250 = vmatprep.subr.bf16.mxu0 %v4154
    %5251 = vmatpush1.bf16.msra.mxu0 %v4153
    %5252 = vmatprep.subr.bf16.mxu0 %v4160
    %5253 = vmatpush1.bf16.msra.mxu0 %v4159
    %5254 = vmatprep.subr.bf16.mxu0 %v4166
    %5255 = vmatpush1.bf16.msra.mxu0 %v4165
    %5256 = vmatprep.subr.bf16.mxu0 %v4172
    %5257 = vmatpush1.bf16.msra.mxu0 %v4171
    %5258 = vmatprep.subr.bf16.mxu0 %v4178
    %5259 = vmatpush1.bf16.msra.mxu0 %v4177
    %5260 = vmatprep.subr.bf16.mxu0 %v4184
    %5261 = vmatpush1.bf16.msra.mxu0 %v4183
    %5262 = vmatprep.subr.bf16.mxu0 %v4190
    %5263 = vmatpush1.bf16.msra.mxu0 %v4189
    %5264 = vmatprep.subr.bf16.mxu0 %v4196
    %5265 = vmatpush1.bf16.msra.mxu0 %v4195
    %5266 = vmatprep.subr.bf16.mxu0 %v4202
    %5267 = vmatpush1.bf16.msra.mxu0 %v4201
    %5268 = vmatprep.subr.bf16.mxu0 %v4208
    %5269 = vmatpush1.bf16.msra.mxu0 %v4207
    %5270 = vmatprep.subr.bf16.mxu0 %v4214
    %5271 = vmatpush1.bf16.msra.mxu0 %v4213
    %5272 = vmatprep.subr.bf16.mxu0 %v4220
    %5273 = vmatpush1.bf16.msra.mxu0 %v4219
    %5274 = vmatprep.subr.bf16.mxu0 %v4226
    %5275 = vmatpush1.bf16.msra.mxu0 %v4225
    %5276 = vmatprep.subr.bf16.mxu0 %v4232
    %5277 = vmatpush1.bf16.msra.mxu0 %v4231
    %5278 = vmatprep.mubr.bf16.mxu0 %v5163
    %5279 = vmatmul.mubr.bf16.gmra.mrb[0].mxu0 %v5162
    %v5280 = vpop.f32.mrb[0].mxu0
    %v5281 = vadd.f32 %v3838, %v5280
    %v5282 = vpop.f32.mrb[0].mxu0
    %v5283 = vadd.f32 %v3842, %v5282
    %v5284 = vpop.f32.mrb[0].mxu0
    %v5285 = vpop.f32.mrb[0].mxu0
    %5286 = vdwg.mxu0
    %v5287 = vld [vmem:[#allocation3 + $0xf0] sm:$0xff]
    %v5288 = vld [vmem:[#allocation3 + $0xf8] sm:$0xff]
    %v5289 = vld [vmem:[#allocation3 + $0x100] sm:$0xff]
    %v5290 = vld [vmem:[#allocation3 + $0x78] sm:$0xff]
    %v5291 = vld [vmem:[#allocation3 + $0x80] sm:$0xff]
    %v5292 = vld [vmem:[#allocation3 + $0x88] sm:$0xff]
    %v5293 = vadd.f32 %v5287, %v5199
    %v5294 = vmul.f32 %v5293, 0.5
    %v5295 = vtanh.pop %v5294
    %v5296 = vadd.f32 %v5295, 1.0
    %v5297 = vmul.f32 %v5296, 0.5
    %v5298 = vadd.f32 %v5288, %v5201
    %v5299 = vmul.f32 %v5298, 0.5
    %v5300 = vtanh.pop %v5299
    %v5301 = vadd.f32 %v5300, 1.0
    %v5302 = vmul.f32 %v5301, 0.5
    %v5303 = vmul.f32 %v5297, %v5240
    %v5304 = vadd.f32 %v5289, %v5303
    %v5305 = vtanh.pop %v5304
    %v5306 = vsub.f32 1.0, %v5302
    %v5307 = vmul.f32 %v5306, %v5305
    %v5308 = vmul.f32 %v5302, %v5142
    %v5309 = vadd.f32 %v5307, %v5308
    %v5310 = vadd.f32 %v5290, %v5242
    %v5311 = vmul.f32 %v5310, 0.5
    %v5312 = vtanh.pop %v5311
    %v5313 = vadd.f32 %v5312, 1.0
    %v5314 = vmul.f32 %v5313, 0.5
    %v5315 = vadd.f32 %v5291, %v5281
    %v5316 = vmul.f32 %v5315, 0.5
    %v5317 = vtanh.pop %v5316
    %v5318 = vadd.f32 %v5317, 1.0
    %v5319 = vmul.f32 %v5318, 0.5
    %v5320 = vmul.f32 %v5314, %v5283
    %v5321 = vadd.f32 %v5292, %v5320
    %v5322 = vtanh.pop %v5321
    %v5323 = vsub.f32 1.0, %v5319
    %v5324 = vmul.f32 %v5323, %v5322
    %v5325 = vmul.f32 %v5319, %v5159
    %v5326 = vadd.f32 %v5324, %v5325
    %5327 = vst [vmem:[#allocation4 + $0x50] sm:$0xff] %v5309
    %5328 = vst [vmem:[#allocation4 + $0x28] sm:$0xff] %v5326
    %v5329 = vpack.c.bf16 %v5309, %v5309
    %v5330 = vpack.c.bf16 %v5326, %v5326
    %5331 = vmatprep.subr.bf16.mxu0 %v4138
    %5332 = vmatpush1.bf16.msra.mxu0 %v4137
    %5333 = vmatprep.subr.bf16.mxu0 %v4144
    %5334 = vmatpush1.bf16.msra.mxu0 %v4143
    %5335 = vmatprep.subr.bf16.mxu0 %v4150
    %5336 = vmatpush1.bf16.msra.mxu0 %v4149
    %5337 = vmatprep.subr.bf16.mxu0 %v4156
    %5338 = vmatpush1.bf16.msra.mxu0 %v4155
    %5339 = vmatprep.subr.bf16.mxu0 %v4162
    %5340 = vmatpush1.bf16.msra.mxu0 %v4161
    %5341 = vmatprep.subr.bf16.mxu0 %v4168
    %5342 = vmatpush1.bf16.msra.mxu0 %v4167
    %5343 = vmatprep.subr.bf16.mxu0 %v4174
    %5344 = vmatpush1.bf16.msra.mxu0 %v4173
    %5345 = vmatprep.subr.bf16.mxu0 %v4180
    %5346 = vmatpush1.bf16.msra.mxu0 %v4179
    %5347 = vmatprep.subr.bf16.mxu0 %v4186
    %5348 = vmatpush1.bf16.msra.mxu0 %v4185
    %5349 = vmatprep.subr.bf16.mxu0 %v4192
    %5350 = vmatpush1.bf16.msra.mxu0 %v4191
    %5351 = vmatprep.subr.bf16.mxu0 %v4198
    %5352 = vmatpush1.bf16.msra.mxu0 %v4197
    %5353 = vmatprep.subr.bf16.mxu0 %v4204
    %5354 = vmatpush1.bf16.msra.mxu0 %v4203
    %5355 = vmatprep.subr.bf16.mxu0 %v4210
    %5356 = vmatpush1.bf16.msra.mxu0 %v4209
    %5357 = vmatprep.subr.bf16.mxu0 %v4216
    %5358 = vmatpush1.bf16.msra.mxu0 %v4215
    %5359 = vmatprep.subr.bf16.mxu0 %v4222
    %5360 = vmatpush1.bf16.msra.mxu0 %v4221
    %5361 = vmatprep.subr.bf16.mxu0 %v4228
    %5362 = vmatpush1.bf16.msra.mxu0 %v4227
    %5363 = vmatprep.mubr.bf16.mxu0 %v5330
    %5364 = vmatmul.mubr.bf16.gmra.mrb[0].mxu0 %v5329
    %v5365 = vpop.f32.mrb[0].mxu0
    %v5366 = vadd.f32 %v3822, %v5365
    %v5367 = vpop.f32.mrb[0].mxu0
    %v5368 = vadd.f32 %v3826, %v5367
    %v5369 = vpop.f32.mrb[0].mxu0
    %v5370 = vpop.f32.mrb[0].mxu0
    %5371 = vdwg.mxu0
    %5372 = vmatprep.subr.bf16.mxu0 %v4140
    %5373 = vmatpush1.bf16.msra.mxu0 %v4139
    %5374 = vmatprep.subr.bf16.mxu0 %v4146
    %5375 = vmatpush1.bf16.msra.mxu0 %v4145
    %5376 = vmatprep.subr.bf16.mxu0 %v4152
    %5377 = vmatpush1.bf16.msra.mxu0 %v4151
    %5378 = vmatprep.subr.bf16.mxu0 %v4158
    %5379 = vmatpush1.bf16.msra.mxu0 %v4157
    %5380 = vmatprep.subr.bf16.mxu0 %v4164
    %5381 = vmatpush1.bf16.msra.mxu0 %v4163
    %5382 = vmatprep.subr.bf16.mxu0 %v4170
    %5383 = vmatpush1.bf16.msra.mxu0 %v4169
    %5384 = vmatprep.subr.bf16.mxu0 %v4176
    %5385 = vmatpush1.bf16.msra.mxu0 %v4175
    %5386 = vmatprep.subr.bf16.mxu0 %v4182
    %5387 = vmatpush1.bf16.msra.mxu0 %v4181
    %5388 = vmatprep.subr.bf16.mxu0 %v4188
    %5389 = vmatpush1.bf16.msra.mxu0 %v4187
    %5390 = vmatprep.subr.bf16.mxu0 %v4194
    %5391 = vmatpush1.bf16.msra.mxu0 %v4193
    %5392 = vmatprep.subr.bf16.mxu0 %v4200
    %5393 = vmatpush1.bf16.msra.mxu0 %v4199
    %5394 = vmatprep.subr.bf16.mxu0 %v4206
    %5395 = vmatpush1.bf16.msra.mxu0 %v4205
    %5396 = vmatprep.subr.bf16.mxu0 %v4212
    %5397 = vmatpush1.bf16.msra.mxu0 %v4211
    %5398 = vmatprep.subr.bf16.mxu0 %v4218
    %5399 = vmatpush1.bf16.msra.mxu0 %v4217
    %5400 = vmatprep.subr.bf16.mxu0 %v4224
    %5401 = vmatpush1.bf16.msra.mxu0 %v4223
    %5402 = vmatprep.subr.bf16.mxu0 %v4230
    %5403 = vmatpush1.bf16.msra.mxu0 %v4229
    %5404 = vmatprep.mubr.bf16.mxu0 %v5330
    %5405 = vmatmul.mubr.bf16.gmra.mrb[0].mxu0 %v5329
    %v5406 = vpop.f32.mrb[0].mxu0
    %v5407 = vadd.f32 %v3830, %v5406
    %v5408 = vpop.f32.mrb[0].mxu0
    %v5409 = vadd.f32 %v3834, %v5408
    %v5410 = vpop.f32.mrb[0].mxu0
    %v5411 = vpop.f32.mrb[0].mxu0
    %5412 = vdwg.mxu0
    %5413 = vmatprep.subr.bf16.mxu0 %v4142
    %5414 = vmatpush1.bf16.msra.mxu0 %v4141
    %5415 = vmatprep.subr.bf16.mxu0 %v4148
    %5416 = vmatpush1.bf16.msra.mxu0 %v4147
    %5417 = vmatprep.subr.bf16.mxu0 %v4154
    %5418 = vmatpush1.bf16.msra.mxu0 %v4153
    %5419 = vmatprep.subr.bf16.mxu0 %v4160
    %5420 = vmatpush1.bf16.msra.mxu0 %v4159
    %5421 = vmatprep.subr.bf16.mxu0 %v4166
    %5422 = vmatpush1.bf16.msra.mxu0 %v4165
    %5423 = vmatprep.subr.bf16.mxu0 %v4172
    %5424 = vmatpush1.bf16.msra.mxu0 %v4171
    %5425 = vmatprep.subr.bf16.mxu0 %v4178
    %5426 = vmatpush1.bf16.msra.mxu0 %v4177
    %5427 = vmatprep.subr.bf16.mxu0 %v4184
    %5428 = vmatpush1.bf16.msra.mxu0 %v4183
    %5429 = vmatprep.subr.bf16.mxu0 %v4190
    %5430 = vmatpush1.bf16.msra.mxu0 %v4189
    %5431 = vmatprep.subr.bf16.mxu0 %v4196
    %5432 = vmatpush1.bf16.msra.mxu0 %v4195
    %5433 = vmatprep.subr.bf16.mxu0 %v4202
    %5434 = vmatpush1.bf16.msra.mxu0 %v4201
    %5435 = vmatprep.subr.bf16.mxu0 %v4208
    %5436 = vmatpush1.bf16.msra.mxu0 %v4207
    %5437 = vmatprep.subr.bf16.mxu0 %v4214
    %5438 = vmatpush1.bf16.msra.mxu0 %v4213
    %5439 = vmatprep.subr.bf16.mxu0 %v4220
    %5440 = vmatpush1.bf16.msra.mxu0 %v4219
    %5441 = vmatprep.subr.bf16.mxu0 %v4226
    %5442 = vmatpush1.bf16.msra.mxu0 %v4225
    %5443 = vmatprep.subr.bf16.mxu0 %v4232
    %5444 = vmatpush1.bf16.msra.mxu0 %v4231
    %5445 = vmatprep.mubr.bf16.mxu0 %v5330
    %5446 = vmatmul.mubr.bf16.gmra.mrb[0].mxu0 %v5329
    %v5447 = vpop.f32.mrb[0].mxu0
    %v5448 = vadd.f32 %v3838, %v5447
    %v5449 = vpop.f32.mrb[0].mxu0
    %v5450 = vadd.f32 %v3842, %v5449
    %v5451 = vpop.f32.mrb[0].mxu0
    %v5452 = vpop.f32.mrb[0].mxu0
    %5453 = vdwg.mxu0
    %v5454 = vld [vmem:[#allocation3 + $0x120] sm:$0xff]
    %v5455 = vld [vmem:[#allocation3 + $0x128] sm:$0xff]
    %v5456 = vld [vmem:[#allocation3 + $0x130] sm:$0xff]
    %v5457 = vld [vmem:[#allocation3 + $0x48] sm:$0xff]
    %v5458 = vld [vmem:[#allocation3 + $0x50] sm:$0xff]
    %v5459 = vld [vmem:[#allocation3 + $0x58] sm:$0xff]
    %v5460 = vadd.f32 %v5454, %v5366
    %v5461 = vmul.f32 %v5460, 0.5
    %v5462 = vtanh.pop %v5461
    %v5463 = vadd.f32 %v5462, 1.0
    %v5464 = vmul.f32 %v5463, 0.5
    %v5465 = vadd.f32 %v5455, %v5368
    %v5466 = vmul.f32 %v5465, 0.5
    %v5467 = vtanh.pop %v5466
    %v5468 = vadd.f32 %v5467, 1.0
    %v5469 = vmul.f32 %v5468, 0.5
    %v5470 = vmul.f32 %v5464, %v5407
    %v5471 = vadd.f32 %v5456, %v5470
    %v5472 = vtanh.pop %v5471
    %v5473 = vsub.f32 1.0, %v5469
    %v5474 = vmul.f32 %v5473, %v5472
    %v5475 = vmul.f32 %v5469, %v5309
    %v5476 = vadd.f32 %v5474, %v5475
    %v5477 = vadd.f32 %v5457, %v5409
    %v5478 = vmul.f32 %v5477, 0.5
    %v5479 = vtanh.pop %v5478
    %v5480 = vadd.f32 %v5479, 1.0
    %v5481 = vmul.f32 %v5480, 0.5
    %v5482 = vadd.f32 %v5458, %v5448
    %v5483 = vmul.f32 %v5482, 0.5
    %v5484 = vtanh.pop %v5483
    %v5485 = vadd.f32 %v5484, 1.0
    %v5486 = vmul.f32 %v5485, 0.5
    %v5487 = vmul.f32 %v5481, %v5450
    %v5488 = vadd.f32 %v5459, %v5487
    %v5489 = vtanh.pop %v5488
    %v5490 = vsub.f32 1.0, %v5486
    %v5491 = vmul.f32 %v5490, %v5489
    %v5492 = vmul.f32 %v5486, %v5326
    %v5493 = vadd.f32 %v5491, %v5492
    %5494 = vst [vmem:[#allocation4 + $0x60] sm:$0xff] %v5476
    %5495 = vst [vmem:[#allocation4 + $0x18] sm:$0xff] %v5493
    %v5496 = vpack.c.bf16 %v5476, %v5476
    %v5497 = vpack.c.bf16 %v5493, %v5493
    %5498 = vmatprep.subr.bf16.mxu0 %v4138
    %5499 = vmatpush1.bf16.msra.mxu0 %v4137
    %5500 = vmatprep.subr.bf16.mxu0 %v4144
    %5501 = vmatpush1.bf16.msra.mxu0 %v4143
    %5502 = vmatprep.subr.bf16.mxu0 %v4150
    %5503 = vmatpush1.bf16.msra.mxu0 %v4149
    %5504 = vmatprep.subr.bf16.mxu0 %v4156
    %5505 = vmatpush1.bf16.msra.mxu0 %v4155
    %5506 = vmatprep.subr.bf16.mxu0 %v4162
    %5507 = vmatpush1.bf16.msra.mxu0 %v4161
    %5508 = vmatprep.subr.bf16.mxu0 %v4168
    %5509 = vmatpush1.bf16.msra.mxu0 %v4167
    %5510 = vmatprep.subr.bf16.mxu0 %v4174
    %5511 = vmatpush1.bf16.msra.mxu0 %v4173
    %5512 = vmatprep.subr.bf16.mxu0 %v4180
    %5513 = vmatpush1.bf16.msra.mxu0 %v4179
    %5514 = vmatprep.subr.bf16.mxu0 %v4186
    %5515 = vmatpush1.bf16.msra.mxu0 %v4185
    %5516 = vmatprep.subr.bf16.mxu0 %v4192
    %5517 = vmatpush1.bf16.msra.mxu0 %v4191
    %5518 = vmatprep.subr.bf16.mxu0 %v4198
    %5519 = vmatpush1.bf16.msra.mxu0 %v4197
    %5520 = vmatprep.subr.bf16.mxu0 %v4204
    %5521 = vmatpush1.bf16.msra.mxu0 %v4203
    %5522 = vmatprep.subr.bf16.mxu0 %v4210
    %5523 = vmatpush1.bf16.msra.mxu0 %v4209
    %5524 = vmatprep.subr.bf16.mxu0 %v4216
    %5525 = vmatpush1.bf16.msra.mxu0 %v4215
    %5526 = vmatprep.subr.bf16.mxu0 %v4222
    %5527 = vmatpush1.bf16.msra.mxu0 %v4221
    %5528 = vmatprep.subr.bf16.mxu0 %v4228
    %5529 = vmatpush1.bf16.msra.mxu0 %v4227
    %5530 = vmatprep.mubr.bf16.mxu0 %v5497
    %5531 = vmatmul.mubr.bf16.gmra.mrb[0].mxu0 %v5496
    %v5532 = vpop.f32.mrb[0].mxu0
    %v5533 = vadd.f32 %v3822, %v5532
    %v5534 = vpop.f32.mrb[0].mxu0
    %v5535 = vadd.f32 %v3826, %v5534
    %v5536 = vpop.f32.mrb[0].mxu0
    %v5537 = vpop.f32.mrb[0].mxu0
    %5538 = vdwg.mxu0
    %5539 = vmatprep.subr.bf16.mxu0 %v4140
    %5540 = vmatpush1.bf16.msra.mxu0 %v4139
    %5541 = vmatprep.subr.bf16.mxu0 %v4146
    %5542 = vmatpush1.bf16.msra.mxu0 %v4145
    %5543 = vmatprep.subr.bf16.mxu0 %v4152
    %5544 = vmatpush1.bf16.msra.mxu0 %v4151
    %5545 = vmatprep.subr.bf16.mxu0 %v4158
    %5546 = vmatpush1.bf16.msra.mxu0 %v4157
    %5547 = vmatprep.subr.bf16.mxu0 %v4164
    %5548 = vmatpush1.bf16.msra.mxu0 %v4163
    %5549 = vmatprep.subr.bf16.mxu0 %v4170
    %5550 = vmatpush1.bf16.msra.mxu0 %v4169
    %5551 = vmatprep.subr.bf16.mxu0 %v4176
    %5552 = vmatpush1.bf16.msra.mxu0 %v4175
    %5553 = vmatprep.subr.bf16.mxu0 %v4182
    %5554 = vmatpush1.bf16.msra.mxu0 %v4181
    %5555 = vmatprep.subr.bf16.mxu0 %v4188
    %5556 = vmatpush1.bf16.msra.mxu0 %v4187
    %5557 = vmatprep.subr.bf16.mxu0 %v4194
    %5558 = vmatpush1.bf16.msra.mxu0 %v4193
    %5559 = vmatprep.subr.bf16.mxu0 %v4200
    %5560 = vmatpush1.bf16.msra.mxu0 %v4199
    %5561 = vmatprep.subr.bf16.mxu0 %v4206
    %5562 = vmatpush1.bf16.msra.mxu0 %v4205
    %5563 = vmatprep.subr.bf16.mxu0 %v4212
    %5564 = vmatpush1.bf16.msra.mxu0 %v4211
    %5565 = vmatprep.subr.bf16.mxu0 %v4218
    %5566 = vmatpush1.bf16.msra.mxu0 %v4217
    %5567 = vmatprep.subr.bf16.mxu0 %v4224
    %5568 = vmatpush1.bf16.msra.mxu0 %v4223
    %5569 = vmatprep.subr.bf16.mxu0 %v4230
    %5570 = vmatpush1.bf16.msra.mxu0 %v4229
    %5571 = vmatprep.mubr.bf16.mxu0 %v5497
    %5572 = vmatmul.mubr.bf16.gmra.mrb[0].mxu0 %v5496
    %v5573 = vpop.f32.mrb[0].mxu0
    %v5574 = vadd.f32 %v3830, %v5573
    %v5575 = vpop.f32.mrb[0].mxu0
    %v5576 = vadd.f32 %v3834, %v5575
    %v5577 = vpop.f32.mrb[0].mxu0
    %v5578 = vpop.f32.mrb[0].mxu0
    %5579 = vdwg.mxu0
    %5580 = vmatprep.subr.bf16.mxu0 %v4142
    %5581 = vmatpush1.bf16.msra.mxu0 %v4141
    %5582 = vmatprep.subr.bf16.mxu0 %v4148
    %5583 = vmatpush1.bf16.msra.mxu0 %v4147
    %5584 = vmatprep.subr.bf16.mxu0 %v4154
    %5585 = vmatpush1.bf16.msra.mxu0 %v4153
    %5586 = vmatprep.subr.bf16.mxu0 %v4160
    %5587 = vmatpush1.bf16.msra.mxu0 %v4159
    %5588 = vmatprep.subr.bf16.mxu0 %v4166
    %5589 = vmatpush1.bf16.msra.mxu0 %v4165
    %5590 = vmatprep.subr.bf16.mxu0 %v4172
    %5591 = vmatpush1.bf16.msra.mxu0 %v4171
    %5592 = vmatprep.subr.bf16.mxu0 %v4178
    %5593 = vmatpush1.bf16.msra.mxu0 %v4177
    %5594 = vmatprep.subr.bf16.mxu0 %v4184
    %5595 = vmatpush1.bf16.msra.mxu0 %v4183
    %5596 = vmatprep.subr.bf16.mxu0 %v4190
    %5597 = vmatpush1.bf16.msra.mxu0 %v4189
    %5598 = vmatprep.subr.bf16.mxu0 %v4196
    %5599 = vmatpush1.bf16.msra.mxu0 %v4195
    %5600 = vmatprep.subr.bf16.mxu0 %v4202
    %5601 = vmatpush1.bf16.msra.mxu0 %v4201
    %5602 = vmatprep.subr.bf16.mxu0 %v4208
    %5603 = vmatpush1.bf16.msra.mxu0 %v4207
    %5604 = vmatprep.subr.bf16.mxu0 %v4214
    %5605 = vmatpush1.bf16.msra.mxu0 %v4213
    %5606 = vmatprep.subr.bf16.mxu0 %v4220
    %5607 = vmatpush1.bf16.msra.mxu0 %v4219
    %5608 = vmatprep.subr.bf16.mxu0 %v4226
    %5609 = vmatpush1.bf16.msra.mxu0 %v4225
    %5610 = vmatprep.subr.bf16.mxu0 %v4232
    %5611 = vmatpush1.bf16.msra.mxu0 %v4231
    %5612 = vmatprep.mubr.bf16.mxu0 %v5497
    %5613 = vmatmul.mubr.bf16.gmra.mrb[0].mxu0 %v5496
    %v5614 = vpop.f32.mrb[0].mxu0
    %v5615 = vadd.f32 %v3838, %v5614
    %v5616 = vpop.f32.mrb[0].mxu0
    %v5617 = vadd.f32 %v3842, %v5616
    %v5618 = vpop.f32.mrb[0].mxu0
    %v5619 = vpop.f32.mrb[0].mxu0
    %5620 = vdwg.mxu0
    %v5621 = vld [vmem:[#allocation3 + $0x150] sm:$0xff]
    %v5622 = vld [vmem:[#allocation3 + $0x158] sm:$0xff]
    %v5623 = vld [vmem:[#allocation3 + $0x160] sm:$0xff]
    %v5624 = vld [vmem:[#allocation3 + $0x18] sm:$0xff]
    %v5625 = vld [vmem:[#allocation3 + $0x20] sm:$0xff]
    %v5626 = vld [vmem:[#allocation3 + $0x28] sm:$0xff]
    %v5627 = vadd.f32 %v5621, %v5533
    %v5628 = vmul.f32 %v5627, 0.5
    %v5629 = vtanh.pop %v5628
    %v5630 = vadd.f32 %v5629, 1.0
    %v5631 = vmul.f32 %v5630, 0.5
    %v5632 = vadd.f32 %v5622, %v5535
    %v5633 = vmul.f32 %v5632, 0.5
    %v5634 = vtanh.pop %v5633
    %v5635 = vadd.f32 %v5634, 1.0
    %v5636 = vmul.f32 %v5635, 0.5
    %v5637 = vmul.f32 %v5631, %v5574
    %v5638 = vadd.f32 %v5623, %v5637
    %v5639 = vtanh.pop %v5638
    %v5640 = vsub.f32 1.0, %v5636
    %v5641 = vmul.f32 %v5640, %v5639
    %v5642 = vmul.f32 %v5636, %v5476
    %v5643 = vadd.f32 %v5641, %v5642
    %v5644 = vadd.f32 %v5624, %v5576
    %v5645 = vmul.f32 %v5644, 0.5
    %v5646 = vtanh.pop %v5645
    %v5647 = vadd.f32 %v5646, 1.0
    %v5648 = vmul.f32 %v5647, 0.5
    %v5649 = vadd.f32 %v5625, %v5615
    %v5650 = vmul.f32 %v5649, 0.5
    %v5651 = vtanh.pop %v5650
    %v5652 = vadd.f32 %v5651, 1.0
    %v5653 = vmul.f32 %v5652, 0.5
    %v5654 = vmul.f32 %v5648, %v5617
    %v5655 = vadd.f32 %v5626, %v5654
    %v5656 = vtanh.pop %v5655
    %v5657 = vsub.f32 1.0, %v5653
    %v5658 = vmul.f32 %v5657, %v5656
    %v5659 = vmul.f32 %v5653, %v5493
    %v5660 = vadd.f32 %v5658, %v5659
    %5661 = vst [vmem:[#allocation4 + $0x70] sm:$0xff] %v5643
    %5662 = vst [vmem:[#allocation4 + $0x8] sm:$0xff] %v5660
    %v5663 = vld [vmem:[#allocation4] sm:$0xff]
    %v5664 = vld [vmem:[#allocation4 + $0x8] sm:$0xff]
    %v5665 = vld [vmem:[#allocation4 + $0x10] sm:$0xff]
    %v5666 = vld [vmem:[#allocation4 + $0x18] sm:$0xff]
    %v5667 = vld [vmem:[#allocation4 + $0x20] sm:$0xff]
    %v5668 = vld [vmem:[#allocation4 + $0x28] sm:$0xff]
    %v5669 = vld [vmem:[#allocation4 + $0x30] sm:$0xff]
    %v5670 = vld [vmem:[#allocation4 + $0x38] sm:$0xff]
    %v5671 = vld [vmem:[#allocation4 + $0x40] sm:$0xff]
    %v5672 = vld [vmem:[#allocation4 + $0x48] sm:$0xff]
    %v5673 = vld [vmem:[#allocation4 + $0x50] sm:$0xff]
    %v5674 = vld [vmem:[#allocation4 + $0x58] sm:$0xff]
    %v5675 = vld [vmem:[#allocation4 + $0x60] sm:$0xff]
    %v5676 = vld [vmem:[#allocation4 + $0x68] sm:$0xff]
    %v5677 = vld [vmem:[#allocation4 + $0x70] sm:$0xff]
    %v5678 = vld [vmem:[#allocation4 + $0x78] sm:$0xff]
    %v5679 = vld [vmem:[%s11] sm:$0x3]
    %v5681 = vlaneseq
    %v5682 = vshrl.u32 %v5681, 7
    %v5683 = vsub.s32 0, %v5682
    %v5684 = vrot.slane %v5679, %v5683
    %v5685 = vlaneseq
    %v5686 = vshrl.u32 %v5685, 7
    %v5687 = vsub.s32 1, %v5686
    %v5688 = vrot.slane %v5679, %v5687
    %v5691 = vmul.f32 %v5663, %v5684
    %v5692 = vmul.f32 %v5664, %v5688
    %v5693 = vmul.f32 %v5665, %v5684
    %v5694 = vmul.f32 %v5666, %v5688
    %v5695 = vmul.f32 %v5667, %v5684
    %v5696 = vmul.f32 %v5668, %v5688
    %v5697 = vmul.f32 %v5669, %v5684
    %v5698 = vmul.f32 %v5670, %v5688
    %v5699 = vmul.f32 %v5671, %v5684
    %v5700 = vmul.f32 %v5672, %v5688
    %v5701 = vmul.f32 %v5673, %v5684
    %v5702 = vmul.f32 %v5674, %v5688
    %v5703 = vmul.f32 %v5675, %v5684
    %v5704 = vmul.f32 %v5676, %v5688
    %v5705 = vmul.f32 %v5677, %v5684
    %v5706 = vmul.f32 %v5678, %v5688
    %v5707 = vadd.f32 %v5691, %v5692
    %5708 = vadd.xlane.f32.xlu0 %v5707
    %v5709 = vpop.xlane.xlu0 %5708
    %v5710 = vadd.f32 %v5693, %v5694
    %5711 = vadd.xlane.f32.xlu0 %v5710
    %v5712 = vpop.xlane.xlu0 %5711
    %v5713 = vadd.f32 %v5695, %v5696
    %5714 = vadd.xlane.f32.xlu0 %v5713
    %v5715 = vpop.xlane.xlu0 %5714
    %v5716 = vadd.f32 %v5697, %v5698
    %5717 = vadd.xlane.f32.xlu0 %v5716
    %v5718 = vpop.xlane.xlu0 %5717
    %v5719 = vadd.f32 %v5699, %v5700
    %5720 = vadd.xlane.f32.xlu0 %v5719
    %v5721 = vpop.xlane.xlu0 %5720
    %v5722 = vadd.f32 %v5701, %v5702
    %5723 = vadd.xlane.f32.xlu0 %v5722
    %v5724 = vpop.xlane.xlu0 %5723
    %v5725 = vadd.f32 %v5703, %v5704
    %5726 = vadd.xlane.f32.xlu0 %v5725
    %v5727 = vpop.xlane.xlu0 %5726
    %v5728 = vadd.f32 %v5705, %v5706
    %5729 = vadd.xlane.f32.xlu0 %v5728
    %v5730 = vpop.xlane.xlu0 %5729
    %v5731 = vld [vmem:[#allocation5] sm:$0x1]
    %v5733 = vlaneseq
    %v5734 = vshrl.u32 %v5733, 7
    %v5735 = vsub.s32 0, %v5734
    %v5736 = vrot.slane %v5731, %v5735
    %v5738 = vadd.f32 %v5709, %v5736
    %v5739 = vadd.f32 %v5712, %v5736
    %v5740 = vadd.f32 %v5715, %v5736
    %v5741 = vadd.f32 %v5718, %v5736
    %v5742 = vadd.f32 %v5721, %v5736
    %v5743 = vadd.f32 %v5724, %v5736
    %v5744 = vadd.f32 %v5727, %v5736
    %v5745 = vadd.f32 %v5730, %v5736
    %5747 = vrot.lane.b32.xlu0 %v5739, 1
    %v5748 = vpop.permute.xlu0 %5747
    %5751 = vrot.lane.b32.xlu0 %v5740, 2
    %v5752 = vpop.permute.xlu0 %5751
    %5755 = vrot.lane.b32.xlu0 %v5741, 3
    %v5756 = vpop.permute.xlu0 %5755
    %5759 = vrot.lane.b32.xlu0 %v5742, 4
    %v5760 = vpop.permute.xlu0 %5759
    %5763 = vrot.lane.b32.xlu0 %v5743, 5
    %v5764 = vpop.permute.xlu0 %5763
    %5767 = vrot.lane.b32.xlu0 %v5744, 6
    %v5768 = vpop.permute.xlu0 %5767
    %5771 = vrot.lane.b32.xlu0 %v5745, 7
    %v5772 = vpop.permute.xlu0 %5771
    %vm5774 = vcmask 7168
    %v5775 = vsel %vm5774, %v5738, %v5748
    %vm5776 = vcmask 15360
    %v5777 = vsel %vm5776, %v5775, %v5752
    %vm5778 = vcmask 23552
    %v5779 = vsel %vm5778, %v5777, %v5756
    %vm5780 = vcmask 31744
    %v5781 = vsel %vm5780, %v5779, %v5760
    %vm5782 = vcmask 39936
    %v5783 = vsel %vm5782, %v5781, %v5764
    %vm5784 = vcmask 48128
    %v5785 = vsel %vm5784, %v5783, %v5768
    %vm5786 = vcmask 56320
    %v5787 = vsel %vm5786, %v5785, %v5772
    %vm5788 = vcmask 58368
    %5789 = vst.msk [vmem:[#allocation20] sm:$0x3] %vm5788, %v5787
    %v5790 = vmul.f32 %v5787, 0.5
    %v5791 = vtanh.pop %v5790
    %v5792 = vadd.f32 %v5791, 1.0
    %v5793 = vmul.f32 %v5792, 0.5
    %5794 = vst.msk [vmem:[#allocation21] sm:$0x3] %vm5788, %v5793
    // Predicated region
    $region86: #{detection_net_forward.1} parent=1 // pred_check
      _
    $region87: #{detection_net_forward.1} parent=1 // pred_check_branch
      %5796 = sbr.rel (0) target = $region89
    $region88: #{detection_net_forward.1} parent=1 // pred_region
      %s5798 = ssub.s32 32, 32
      %5799 = vsyncadd [#allocation8], %s5798
      %s5801 = sshll.u32 [#allocation20], 4
      %s5802 = int_to_ptr.vmem [resolvable:$true] %s5801
      %5804 = dma.vmem_to_hbm [thread:$0]  %s5802, 32, %s13, [#allocation8]
    $region89: #{detection_net_forward.1} parent=1 // pred_fallthru
      _
    // Predicated region
    $region90: #{detection_net_forward.1} parent=1 // pred_check
      _
    $region91: #{detection_net_forward.1} parent=1 // pred_check_branch
      %5806 = sbr.rel (0) target = $region93
    $region92: #{detection_net_forward.1} parent=1 // pred_region
      %s5808 = ssub.s32 32, 32
      %5809 = vsyncadd [#allocation22], %s5808
      %s5811 = sshll.u32 [#allocation21], 4
      %s5812 = int_to_ptr.vmem [resolvable:$true] %s5811
      %5814 = dma.vmem_to_hbm [thread:$0]  %s5812, 32, %s14, [#allocation22]
    $region93: #{detection_net_forward.1} parent=1 // pred_fallthru
      _
    // Predicated region
    $region94: #{detection_net_forward.1} parent=1 // pred_check
      _
    $region95: #{detection_net_forward.1} parent=1 // pred_check_branch
      %5816 = sbr.rel (0) target = $region97
    $region96: #{detection_net_forward.1} parent=1 // pred_region
      %5817 = dma.done [#allocation8], 32
    $region97: #{detection_net_forward.1} parent=1 // pred_fallthru
      _
    // Predicated region
    $region98: #{detection_net_forward.1} parent=1 // pred_check
      _
    $region99: #{detection_net_forward.1} parent=1 // pred_check_branch
      %5819 = sbr.rel (0) target = $region101
    $region100: #{detection_net_forward.1} parent=1 // pred_region
      %5820 = dma.done [#allocation22], 32
    $region101: #{detection_net_forward.1} parent=1 // pred_fallthru
      _
    %5821 = vsyncpa [#allocation7], 1
    %5822 = vsyncpa [#allocation10], 1
    %5823 = vsyncpa [#allocation13], 1
    %5824 = vsyncpa [#allocation16], 1
    %5825 = vsyncpa [#allocation19], 1
    %5826 = vsyncpa [#allocation8], 1
    %5827 = vsyncpa [#allocation22], 1

</llo_original>
